<compile_context>
chip_gen: v7x
topology: tpu7x:2x2x1
jax: 0.10.0
libtpu: 0.0.40
codegen_flags: <defaults>
</compile_context>

<pallas_src>
import functools

import jax
import jax.numpy as jnp
from jax import lax
from jax.experimental import pallas as pl
from jax.experimental.pallas import tpu as pltpu

EPS = 1e-5


# ------------------------------ Pallas kernel ------------------------------ #

def _vnet_out_kernel(x_ref, br_ref, wup_ref, g_ref, w5_ref, w1_ref, eps_ref,
                     mask_ref, o_ref, catp_ref, *, w2, pad):
    # x_ref:    (nb, Cin, H*W)        NCHW input, spatial flattened
    # br_ref:   (nb, Cbr, S)          NCHW bridge, spatial flattened (S=H2*W2)
    # wup_ref:  (4*Cout, Cin)         convT taps, rows (ky,kx,co), BN-scaled
    # g_ref:    (4, H*W, S)           0/1 scatter matrices (upsample placement)
    # w5_ref:   (25, Cout, C)         5x5 taps, BN-scaled
    # w1_ref:   (classes, Cout)       1x1 conv, BN-scaled
    # eps_ref:  (Cmax, 6)             [sh_up, a_up, sh5, a5, sh1, a1] columns
    # mask_ref: (25, nb*S)            per-tap edge validity (0/1)
    # o_ref:    (nb, classes, S)      NCHW result, spatial flattened
    # catp_ref: (C, nb*S + 2*pad)     zero-haloed [up | bridge] scratch
    nb = x_ref.shape[0]
    s = br_ref.shape[2]
    cout = w5_ref.shape[1]
    c = w5_ref.shape[2]
    classes = w1_ref.shape[0]
    s_all = nb * s

    # Per-channel epilogue vectors (BN scale already folded into the weights).
    sh_up = eps_ref[0:cout, 0:1]
    a_up = eps_ref[0:cout, 1:2]
    sh5 = eps_ref[0:cout, 2:3]
    a5 = eps_ref[0:cout, 3:4]
    sh1 = eps_ref[0:classes, 4:5]
    a1 = eps_ref[0:classes, 5:6]

    # Only the halo strips are zeroed (interior is fully overwritten below).
    # Done every step (2 small stores) so it is also correct if the batch grid
    # axis is split across cores and a core never sees iteration 0.
    catp_ref[:, 0:pad] = jnp.zeros((c, pad), jnp.float32)
    catp_ref[:, pad + s_all:pad + s_all + pad] = jnp.zeros((c, pad), jnp.float32)

    # ---- stage 1: ConvTranspose2d(k=2,s=2) + shift + PReLU, channel-major ----
    for b in range(nb):
        xb = x_ref[b]                                              # (Cin, H*W)
        y4 = jnp.dot(wup_ref[...], xb,
                     preferred_element_type=jnp.float32)           # (4*Cout, H*W)
        up_b = jnp.dot(y4[0:cout, :], g_ref[0],
                       preferred_element_type=jnp.float32)         # (Cout, S)
        for t in range(1, 4):
            up_b = up_b + jnp.dot(y4[t * cout:(t + 1) * cout, :], g_ref[t],
                                  preferred_element_type=jnp.float32)
        up_b = up_b + sh_up
        up_b = jnp.where(up_b >= 0.0, up_b, a_up * up_b)           # PReLU
        base = pad + b * s
        catp_ref[0:cout, base:base + s] = up_b                     # cat: up part
        catp_ref[cout:c, base:base + s] = br_ref[b]                # cat: bridge

    up_all = catp_ref[0:cout, pad:pad + s_all]                     # residual term

    # ---- stage 2: 5x5 conv (pad=2) via 25 shift-and-accumulate matmuls ----
    acc = None
    for dy in range(5):
        for dx in range(5):
            t = dy * 5 + dx
            k = (dy - 2) * w2 + (dx - 2)
            shifted = catp_ref[:, pad + k:pad + k + s_all]         # (C, nb*S)
            r = jnp.dot(w5_ref[t], shifted,
                        preferred_element_type=jnp.float32)        # (Cout, nb*S)
            if not (dy == 2 and dx == 2):                          # center: no mask
                r = r * mask_ref[t:t + 1, :]
            acc = r if acc is None else acc + r

    y5 = acc + sh5
    y5 = jnp.where(y5 >= 0.0, y5, a5 * y5)                         # PReLU
    y5 = y5 + up_all                                               # residual add

    # ---- stage 3: 1x1 conv + shift + PReLU (lane-dense output) ----
    z = jnp.dot(w1_ref[...], y5, preferred_element_type=jnp.float32)
    z = z + sh1
    z = jnp.where(z >= 0.0, z, a1 * z)
    for b in range(nb):
        o_ref[b] = z[:, b * s:(b + 1) * s]


# ------------------------------- JAX wrapper -------------------------------- #

def _fold_bn(conv_bias, bn):
    gamma, beta, mean, var = bn
    scale = gamma * lax.rsqrt(var + EPS)
    shift = (conv_bias - mean) * scale + beta
    return scale, shift


def vnet_out_block(x_nchw, bridge_nchw, p):
    N, Cin, H, W = x_nchw.shape
    Cbr = bridge_nchw.shape[1]
    Cout = p['w_up'].shape[1]
    classes = p['w1'].shape[0]
    H2, W2 = 2 * H, 2 * W
    HW = H * W
    S = H2 * W2
    C = Cout + Cbr

    # batch elements per grid step: largest divisor of N that is <= 8
    nb = 1
    for d in range(2, 9):
        if N % d == 0:
            nb = d
    S_all = nb * S
    PAD = max(128, ((2 * W2 + 2 + 127) // 128) * 128)

    # flatten spatial (free reshapes; stays NCHW -> no HBM transposes)
    x = x_nchw.reshape(N, Cin, HW)
    bridge = bridge_nchw.reshape(N, Cbr, S)

    # fold BN scale into conv weights; shift + PReLU stay in-kernel
    s_up, sh_up = _fold_bn(p['b_up'], p['bn_up'])
    s5, sh5 = _fold_bn(p['b5'], p['bn5'])
    s1, sh1 = _fold_bn(p['b1'], p['bn1'])

    # stage-1 weights: rows ordered (ky, kx, cout), cols cin, scaled per cout
    wup = jnp.transpose(p['w_up'], (2, 3, 1, 0)).reshape(4 * Cout, Cin)
    wup = wup * jnp.tile(s_up, 4)[:, None]

    # stage-1 scatter matrices: G[tap, h*W+w, (2h+ky)*W2 + 2w+kx] = 1
    hh, ww = jnp.meshgrid(jnp.arange(H), jnp.arange(W), indexing='ij')
    g_taps = []
    for ky in range(2):
        for kx in range(2):
            pflat = ((2 * hh + ky) * W2 + 2 * ww + kx).reshape(-1)
            g_taps.append(jax.nn.one_hot(pflat, S, dtype=jnp.float32))
    g = jnp.stack(g_taps)                                          # (4, HW, S)

    # stage-2 5x5 conv as 25 (Cout, C) taps, scaled per cout
    w5 = jnp.transpose(p['w5'], (2, 3, 0, 1)).reshape(25, Cout, C)
    w5 = w5 * s5[None, :, None]

    # per-tap edge-validity masks over the nb lane-concatenated images
    pp = jnp.arange(S_all)
    yy = (pp % S) // W2
    xx = pp % W2
    m_taps = []
    for dy in range(5):
        for dx in range(5):
            sy, sx = dy - 2, dx - 2
            m = ((yy + sy >= 0) & (yy + sy < H2) &
                 (xx + sx >= 0) & (xx + sx < W2))
            m_taps.append(m.astype(jnp.float32))
    masks = jnp.stack(m_taps)                                      # (25, nb*S)

    # stage-3 1x1 conv, scaled per class
    w1 = p['w1'][:, :, 0, 0] * s1[:, None]

    # packed epilogue vectors: columns [sh_up, a_up, sh5, a5, sh1, a1]
    cmax = max(Cout, classes)

    def _padto(v):
        return jnp.pad(v, (0, cmax - v.shape[0]))

    eps_pack = jnp.stack([_padto(sh_up), _padto(p['a_up']),
                          _padto(sh5), _padto(p['a5']),
                          _padto(sh1), _padto(p['a1'])], axis=1)   # (cmax, 6)

    kernel = functools.partial(_vnet_out_kernel, w2=W2, pad=PAD)

    flops = int(2 * N * (Cin * 4 * Cout * HW + 4 * Cout * HW * S
                         + 25 * Cout * C * S + classes * Cout * S))
    bytes_accessed = int(4 * (x.size + bridge.size + N * classes * S
                              + wup.size + g.size + w5.size + w1.size
                              + eps_pack.size + masks.size))

    blk_bytes = 4 * (nb * Cin * HW + nb * Cbr * S + 4 * Cout * Cin
                     + 4 * HW * S + 25 * Cout * C + classes * Cout
                     + cmax * 6 + 25 * S_all + nb * classes * S)
    scratch_bytes = 4 * C * (S_all + 2 * PAD)
    vmem_limit = int(min(2 * blk_bytes + scratch_bytes + (8 << 20), 128 << 20))

    out = pl.pallas_call(
        kernel,
        out_shape=jax.ShapeDtypeStruct((N, classes, S), jnp.float32),
        grid_spec=pltpu.PrefetchScalarGridSpec(
            num_scalar_prefetch=0,
            grid=(N // nb,),
            in_specs=[
                pl.BlockSpec((nb, Cin, HW), lambda n: (n, 0, 0)),
                pl.BlockSpec((nb, Cbr, S), lambda n: (n, 0, 0)),
                pl.BlockSpec((4 * Cout, Cin), lambda n: (0, 0)),
                pl.BlockSpec((4, HW, S), lambda n: (0, 0, 0)),
                pl.BlockSpec((25, Cout, C), lambda n: (0, 0, 0)),
                pl.BlockSpec((classes, Cout), lambda n: (0, 0)),
                pl.BlockSpec((cmax, 6), lambda n: (0, 0)),
                pl.BlockSpec((25, S_all), lambda n: (0, 0)),
            ],
            out_specs=pl.BlockSpec((nb, classes, S), lambda n: (n, 0, 0)),
            scratch_shapes=[
                pltpu.VMEM((C, S_all + 2 * PAD), jnp.float32),
            ],
        ),
        compiler_params=pltpu.CompilerParams(
            dimension_semantics=("parallel",),
            vmem_limit_bytes=vmem_limit,
        ),
        cost_estimate=pl.CostEstimate(
            flops=flops, transcendentals=0, bytes_accessed=bytes_accessed),
    )(x, bridge, wup, g, w5, w1, eps_pack, masks)

    # (N, classes, H2*W2) is the NCHW result flattened; reshape is free.
    return out.reshape(N, classes, H2, W2)


# ---------------------- parameters & pure-JAX reference --------------------- #

def _bn_init(key, c):
    k1, k2, k3, k4 = jax.random.split(key, 4)
    gamma = 1.0 + 0.1 * jax.random.normal(k1, (c,), jnp.float32)
    beta = 0.1 * jax.random.normal(k2, (c,), jnp.float32)
    mean = 0.1 * jax.random.normal(k3, (c,), jnp.float32)
    var = 0.5 + jnp.abs(jax.random.normal(k4, (c,), jnp.float32))
    return (gamma, beta, mean, var)


def init_params(key, in_ch, br_ch, out_ch, classes):
    ks = jax.random.split(key, 12)
    p = {}
    p['w_up'] = 0.1 * jax.random.normal(ks[0], (in_ch, out_ch, 2, 2), jnp.float32)
    p['b_up'] = 0.1 * jax.random.normal(ks[1], (out_ch,), jnp.float32)
    p['bn_up'] = _bn_init(ks[2], out_ch)
    p['a_up'] = 0.25 + 0.05 * jax.random.normal(ks[3], (out_ch,), jnp.float32)
    p['w5'] = 0.05 * jax.random.normal(ks[4], (out_ch, out_ch + br_ch, 5, 5), jnp.float32)
    p['b5'] = 0.1 * jax.random.normal(ks[5], (out_ch,), jnp.float32)
    p['bn5'] = _bn_init(ks[6], out_ch)
    p['a5'] = 0.25 + 0.05 * jax.random.normal(ks[7], (out_ch,), jnp.float32)
    p['w1'] = 0.1 * jax.random.normal(ks[8], (classes, out_ch, 1, 1), jnp.float32)
    p['b1'] = 0.1 * jax.random.normal(ks[9], (classes,), jnp.float32)
    p['bn1'] = _bn_init(ks[10], classes)
    p['a1'] = 0.25 + 0.05 * jax.random.normal(ks[11], (classes,), jnp.float32)
    return p


def _bn_ref(x, bn):
    g, b, m, v = bn
    return ((x - m[None, :, None, None]) * (g * lax.rsqrt(v + EPS))[None, :, None, None]
            + b[None, :, None, None])


def _prelu_ref(x, a):
    return jnp.where(x >= 0, x, a[None, :, None, None] * x)


def reference(x, bridge, p):
    # ConvTranspose2d(k=2, s=2)
    t = jnp.einsum('nchw,cokl->nohwkl', x, p['w_up'])
    N, Co, H, W, _, _ = t.shape
    up = (t.transpose(0, 1, 2, 4, 3, 5).reshape(N, Co, 2 * H, 2 * W)
          + p['b_up'][None, :, None, None])
    up = _prelu_ref(_bn_ref(up, p['bn_up']), p['a_up'])
    cat = jnp.concatenate([up, bridge], axis=1)
    c = lax.conv_general_dilated(cat, p['w5'], (1, 1), ((2, 2), (2, 2)),
                                 dimension_numbers=('NCHW', 'OIHW', 'NCHW'))
    c = c + p['b5'][None, :, None, None]
    c = _prelu_ref(_bn_ref(c, p['bn5']), p['a5'])
    c = c + up
    o = jnp.einsum('nchw,kc->nkhw', c, p['w1'][:, :, 0, 0]) + p['b1'][None, :, None, None]
    o = _prelu_ref(_bn_ref(o, p['bn1']), p['a1'])
    return o


if __name__ == "__main__":
    key = jax.random.PRNGKey(0)
    kx, kb, kp = jax.random.split(key, 3)
    N, in_ch, br_ch, out_ch, classes, H, W = 2, 8, 6, 8, 4, 8, 8

    x = jax.random.normal(kx, (N, in_ch, H, W), jnp.float32)            # NCHW
    bridge = jax.random.normal(kb, (N, br_ch, 2 * H, 2 * W), jnp.float32)
    params = init_params(kp, in_ch, br_ch, out_ch, classes)

    out = jax.block_until_ready(vnet_out_block(x, bridge, params))
    ref = jax.block_until_ready(reference(x, bridge, params))

    assert out.shape == (N, classes, 2 * H, 2 * W), out.shape
    assert jnp.allclose(out, ref, atol=1e-3, rtol=1e-3), \
        float(jnp.max(jnp.abs(out - ref)))
    print("KERNEL_OK")
</pallas_src>

<mosaic_0001>
module attributes {stable_mosaic.version = 11 : i64} {
  func.func @_vnet_out_kernel(%arg0: i32, %arg1: memref<2x8x64xf32, #tpu.memory_space<vmem>>, %arg2: memref<2x6x256xf32, #tpu.memory_space<vmem>>, %arg3: memref<32x8xf32, #tpu.memory_space<vmem>>, %arg4: memref<4x64x256xf32, #tpu.memory_space<vmem>>, %arg5: memref<25x8x14xf32, #tpu.memory_space<vmem>>, %arg6: memref<4x8xf32, #tpu.memory_space<vmem>>, %arg7: memref<8x6xf32, #tpu.memory_space<vmem>>, %arg8: memref<25x512xf32, #tpu.memory_space<vmem>>, %arg9: memref<2x4x256xf32, #tpu.memory_space<vmem>>, %arg10: memref<14x768xf32, #tpu.memory_space<vmem>>) attributes {dimension_semantics = [#tpu.dimension_semantics<parallel>], iteration_bounds = array<i64: 1>, scalar_prefetch = 0 : i64, scratch_operands = 1 : i64, tpu.core_type = #tpu.core_type<tc>, window_params = [{transform_indices = @transform_0, window_bounds = array<i64: 2, 8, 64>}, {transform_indices = @transform_1, window_bounds = array<i64: 2, 6, 256>}, {pipeline_mode = #tpu.pipeline_mode<synchronous>, transform_indices = @transform_2, window_bounds = array<i64: 32, 8>}, {pipeline_mode = #tpu.pipeline_mode<synchronous>, transform_indices = @transform_3, window_bounds = array<i64: 4, 64, 256>}, {pipeline_mode = #tpu.pipeline_mode<synchronous>, transform_indices = @transform_4, window_bounds = array<i64: 25, 8, 14>}, {pipeline_mode = #tpu.pipeline_mode<synchronous>, transform_indices = @transform_5, window_bounds = array<i64: 4, 8>}, {pipeline_mode = #tpu.pipeline_mode<synchronous>, transform_indices = @transform_6, window_bounds = array<i64: 8, 6>}, {pipeline_mode = #tpu.pipeline_mode<synchronous>, transform_indices = @transform_7, window_bounds = array<i64: 25, 512>}, {transform_indices = @transform_8, window_bounds = array<i64: 2, 4, 256>}]} {
    %c0 = arith.constant 0 : index
    %c0_0 = arith.constant 0 : index
    %0 = vector.load %arg7[%c0, %c0_0] : memref<8x6xf32, #tpu.memory_space<vmem>>, vector<8x1xf32>
    %c0_1 = arith.constant 0 : index
    %c1 = arith.constant 1 : index
    %1 = vector.load %arg7[%c0_1, %c1] : memref<8x6xf32, #tpu.memory_space<vmem>>, vector<8x1xf32>
    %c0_2 = arith.constant 0 : index
    %c2 = arith.constant 2 : index
    %2 = vector.load %arg7[%c0_2, %c2] : memref<8x6xf32, #tpu.memory_space<vmem>>, vector<8x1xf32>
    %c0_3 = arith.constant 0 : index
    %c3 = arith.constant 3 : index
    %3 = vector.load %arg7[%c0_3, %c3] : memref<8x6xf32, #tpu.memory_space<vmem>>, vector<8x1xf32>
    %c0_4 = arith.constant 0 : index
    %c4 = arith.constant 4 : index
    %4 = vector.load %arg7[%c0_4, %c4] : memref<8x6xf32, #tpu.memory_space<vmem>>, vector<4x1xf32>
    %c0_5 = arith.constant 0 : index
    %c5 = arith.constant 5 : index
    %5 = vector.load %arg7[%c0_5, %c5] : memref<8x6xf32, #tpu.memory_space<vmem>>, vector<4x1xf32>
    %cst = arith.constant 0.000000e+00 : f32
    %6 = vector.broadcast %cst : f32 to vector<14x128xf32>
    %c0_6 = arith.constant 0 : index
    %c0_7 = arith.constant 0 : index
    %7 = vector.load %arg10[%c0_6, %c0_7] : memref<14x768xf32, #tpu.memory_space<vmem>>, vector<14x128xf32>
    tpu.vector_store %arg10[%c0_6, %c0_7], %6 {strides = array<i32>} : memref<14x768xf32, #tpu.memory_space<vmem>>, vector<14x128xf32>,
    %cst_8 = arith.constant 0.000000e+00 : f32
    %8 = vector.broadcast %cst_8 : f32 to vector<14x128xf32>
    %c0_9 = arith.constant 0 : index
    %c640 = arith.constant 640 : index
    %9 = vector.load %arg10[%c0_9, %c640] : memref<14x768xf32, #tpu.memory_space<vmem>>, vector<14x128xf32>
    tpu.vector_store %arg10[%c0_9, %c640], %8 {strides = array<i32>} : memref<14x768xf32, #tpu.memory_space<vmem>>, vector<14x128xf32>,
    %c0_10 = arith.constant 0 : index
    %c0_11 = arith.constant 0 : index
    %c0_12 = arith.constant 0 : index
    %10 = vector.load %arg1[%c0_10, %c0_11, %c0_12] : memref<2x8x64xf32, #tpu.memory_space<vmem>>, vector<1x8x64xf32>
    %11 = vector.shape_cast %10 : vector<1x8x64xf32> to vector<8x64xf32>
    %c0_13 = arith.constant 0 : index
    %c0_14 = arith.constant 0 : index
    %12 = vector.load %arg3[%c0_13, %c0_14] : memref<32x8xf32, #tpu.memory_space<vmem>>, vector<32x8xf32>
    %cst_15 = arith.constant dense<0.000000e+00> : vector<32x64xf32>
    %13 = tpu.matmul %12, %11, %cst_15 {dimension_numbers = #tpu.dot_dimension_numbers<[1], [0], [0], [1], [0, 0, 1, 1], [], []>} : vector<32x8xf32>, vector<8x64xf32>, vector<32x64xf32> -> vector<32x64xf32>
    %14 = vector.extract_strided_slice %13 {offsets = [0, 0], sizes = [8, 64], strides = [1, 1]} : vector<32x64xf32> to vector<8x64xf32>
    %c0_16 = arith.constant 0 : index
    %c0_17 = arith.constant 0 : index
    %c0_18 = arith.constant 0 : index
    %15 = vector.load %arg4[%c0_16, %c0_17, %c0_18] : memref<4x64x256xf32, #tpu.memory_space<vmem>>, vector<1x64x256xf32>
    %16 = vector.shape_cast %15 : vector<1x64x256xf32> to vector<64x256xf32>
    %cst_19 = arith.constant dense<0.000000e+00> : vector<8x256xf32>
    %17 = tpu.matmul %14, %16, %cst_19 {dimension_numbers = #tpu.dot_dimension_numbers<[1], [0], [0], [1], [0, 0, 1, 1], [], []>} : vector<8x64xf32>, vector<64x256xf32>, vector<8x256xf32> -> vector<8x256xf32>
    %18 = vector.extract_strided_slice %13 {offsets = [8, 0], sizes = [8, 64], strides = [1, 1]} : vector<32x64xf32> to vector<8x64xf32>
    %c1_20 = arith.constant 1 : index
    %c0_21 = arith.constant 0 : index
    %c0_22 = arith.constant 0 : index
    %19 = vector.load %arg4[%c1_20, %c0_21, %c0_22] : memref<4x64x256xf32, #tpu.memory_space<vmem>>, vector<1x64x256xf32>
    %20 = vector.shape_cast %19 : vector<1x64x256xf32> to vector<64x256xf32>
    %cst_23 = arith.constant dense<0.000000e+00> : vector<8x256xf32>
    %21 = tpu.matmul %18, %20, %cst_23 {dimension_numbers = #tpu.dot_dimension_numbers<[1], [0], [0], [1], [0, 0, 1, 1], [], []>} : vector<8x64xf32>, vector<64x256xf32>, vector<8x256xf32> -> vector<8x256xf32>
    %22 = arith.addf %17, %21 : vector<8x256xf32>
    %23 = vector.extract_strided_slice %13 {offsets = [16, 0], sizes = [8, 64], strides = [1, 1]} : vector<32x64xf32> to vector<8x64xf32>
    %c2_24 = arith.constant 2 : index
    %c0_25 = arith.constant 0 : index
    %c0_26 = arith.constant 0 : index
    %24 = vector.load %arg4[%c2_24, %c0_25, %c0_26] : memref<4x64x256xf32, #tpu.memory_space<vmem>>, vector<1x64x256xf32>
    %25 = vector.shape_cast %24 : vector<1x64x256xf32> to vector<64x256xf32>
    %cst_27 = arith.constant dense<0.000000e+00> : vector<8x256xf32>
    %26 = tpu.matmul %23, %25, %cst_27 {dimension_numbers = #tpu.dot_dimension_numbers<[1], [0], [0], [1], [0, 0, 1, 1], [], []>} : vector<8x64xf32>, vector<64x256xf32>, vector<8x256xf32> -> vector<8x256xf32>
    %27 = arith.addf %22, %26 : vector<8x256xf32>
    %28 = vector.extract_strided_slice %13 {offsets = [24, 0], sizes = [8, 64], strides = [1, 1]} : vector<32x64xf32> to vector<8x64xf32>
    %c3_28 = arith.constant 3 : index
    %c0_29 = arith.constant 0 : index
    %c0_30 = arith.constant 0 : index
    %29 = vector.load %arg4[%c3_28, %c0_29, %c0_30] : memref<4x64x256xf32, #tpu.memory_space<vmem>>, vector<1x64x256xf32>
    %30 = vector.shape_cast %29 : vector<1x64x256xf32> to vector<64x256xf32>
    %cst_31 = arith.constant dense<0.000000e+00> : vector<8x256xf32>
    %31 = tpu.matmul %28, %30, %cst_31 {dimension_numbers = #tpu.dot_dimension_numbers<[1], [0], [0], [1], [0, 0, 1, 1], [], []>} : vector<8x64xf32>, vector<64x256xf32>, vector<8x256xf32> -> vector<8x256xf32>
    %32 = arith.addf %27, %31 : vector<8x256xf32>
    %33 = vector.broadcast %0 : vector<8x1xf32> to vector<8x256xf32>
    %34 = arith.addf %32, %33 : vector<8x256xf32>
    %cst_32 = arith.constant 0.000000e+00 : f32
    %35 = vector.broadcast %cst_32 : f32 to vector<8x256xf32>
    %36 = arith.cmpf oge, %34, %35 : vector<8x256xf32>
    %37 = vector.broadcast %1 : vector<8x1xf32> to vector<8x256xf32>
    %38 = arith.mulf %37, %34 : vector<8x256xf32>
    %39 = arith.select %36, %34, %38 : vector<8x256xi1>, vector<8x256xf32>
    %c0_33 = arith.constant 0 : index
    %c128 = arith.constant 128 : index
    %40 = vector.load %arg10[%c0_33, %c128] : memref<14x768xf32, #tpu.memory_space<vmem>>, vector<8x256xf32>
    tpu.vector_store %arg10[%c0_33, %c128], %39 {strides = array<i32>} : memref<14x768xf32, #tpu.memory_space<vmem>>, vector<8x256xf32>,
    %c0_34 = arith.constant 0 : index
    %c0_35 = arith.constant 0 : index
    %c0_36 = arith.constant 0 : index
    %41 = vector.load %arg2[%c0_34, %c0_35, %c0_36] : memref<2x6x256xf32, #tpu.memory_space<vmem>>, vector<1x6x256xf32>
    %42 = vector.shape_cast %41 : vector<1x6x256xf32> to vector<6x256xf32>
    %c8 = arith.constant 8 : index
    %c128_37 = arith.constant 128 : index
    %43 = vector.load %arg10[%c8, %c128_37] : memref<14x768xf32, #tpu.memory_space<vmem>>, vector<6x256xf32>
    tpu.vector_store %arg10[%c8, %c128_37], %42 {strides = array<i32>} : memref<14x768xf32, #tpu.memory_space<vmem>>, vector<6x256xf32>,
    %c1_38 = arith.constant 1 : index
    %c0_39 = arith.constant 0 : index
    %c0_40 = arith.constant 0 : index
    %44 = vector.load %arg1[%c1_38, %c0_39, %c0_40] : memref<2x8x64xf32, #tpu.memory_space<vmem>>, vector<1x8x64xf32>
    %45 = vector.shape_cast %44 : vector<1x8x64xf32> to vector<8x64xf32>
    %c0_41 = arith.constant 0 : index
    %c0_42 = arith.constant 0 : index
    %46 = vector.load %arg3[%c0_41, %c0_42] : memref<32x8xf32, #tpu.memory_space<vmem>>, vector<32x8xf32>
    %cst_43 = arith.constant dense<0.000000e+00> : vector<32x64xf32>
    %47 = tpu.matmul %46, %45, %cst_43 {dimension_numbers = #tpu.dot_dimension_numbers<[1], [0], [0], [1], [0, 0, 1, 1], [], []>} : vector<32x8xf32>, vector<8x64xf32>, vector<32x64xf32> -> vector<32x64xf32>
    %48 = vector.extract_strided_slice %47 {offsets = [0, 0], sizes = [8, 64], strides = [1, 1]} : vector<32x64xf32> to vector<8x64xf32>
    %c0_44 = arith.constant 0 : index
    %c0_45 = arith.constant 0 : index
    %c0_46 = arith.constant 0 : index
    %49 = vector.load %arg4[%c0_44, %c0_45, %c0_46] : memref<4x64x256xf32, #tpu.memory_space<vmem>>, vector<1x64x256xf32>
    %50 = vector.shape_cast %49 : vector<1x64x256xf32> to vector<64x256xf32>
    %cst_47 = arith.constant dense<0.000000e+00> : vector<8x256xf32>
    %51 = tpu.matmul %48, %50, %cst_47 {dimension_numbers = #tpu.dot_dimension_numbers<[1], [0], [0], [1], [0, 0, 1, 1], [], []>} : vector<8x64xf32>, vector<64x256xf32>, vector<8x256xf32> -> vector<8x256xf32>
    %52 = vector.extract_strided_slice %47 {offsets = [8, 0], sizes = [8, 64], strides = [1, 1]} : vector<32x64xf32> to vector<8x64xf32>
    %c1_48 = arith.constant 1 : index
    %c0_49 = arith.constant 0 : index
    %c0_50 = arith.constant 0 : index
    %53 = vector.load %arg4[%c1_48, %c0_49, %c0_50] : memref<4x64x256xf32, #tpu.memory_space<vmem>>, vector<1x64x256xf32>
    %54 = vector.shape_cast %53 : vector<1x64x256xf32> to vector<64x256xf32>
    %cst_51 = arith.constant dense<0.000000e+00> : vector<8x256xf32>
    %55 = tpu.matmul %52, %54, %cst_51 {dimension_numbers = #tpu.dot_dimension_numbers<[1], [0], [0], [1], [0, 0, 1, 1], [], []>} : vector<8x64xf32>, vector<64x256xf32>, vector<8x256xf32> -> vector<8x256xf32>
    %56 = arith.addf %51, %55 : vector<8x256xf32>
    %57 = vector.extract_strided_slice %47 {offsets = [16, 0], sizes = [8, 64], strides = [1, 1]} : vector<32x64xf32> to vector<8x64xf32>
    %c2_52 = arith.constant 2 : index
    %c0_53 = arith.constant 0 : index
    %c0_54 = arith.constant 0 : index
    %58 = vector.load %arg4[%c2_52, %c0_53, %c0_54] : memref<4x64x256xf32, #tpu.memory_space<vmem>>, vector<1x64x256xf32>
    %59 = vector.shape_cast %58 : vector<1x64x256xf32> to vector<64x256xf32>
    %cst_55 = arith.constant dense<0.000000e+00> : vector<8x256xf32>
    %60 = tpu.matmul %57, %59, %cst_55 {dimension_numbers = #tpu.dot_dimension_numbers<[1], [0], [0], [1], [0, 0, 1, 1], [], []>} : vector<8x64xf32>, vector<64x256xf32>, vector<8x256xf32> -> vector<8x256xf32>
    %61 = arith.addf %56, %60 : vector<8x256xf32>
    %62 = vector.extract_strided_slice %47 {offsets = [24, 0], sizes = [8, 64], strides = [1, 1]} : vector<32x64xf32> to vector<8x64xf32>
    %c3_56 = arith.constant 3 : index
    %c0_57 = arith.constant 0 : index
    %c0_58 = arith.constant 0 : index
    %63 = vector.load %arg4[%c3_56, %c0_57, %c0_58] : memref<4x64x256xf32, #tpu.memory_space<vmem>>, vector<1x64x256xf32>
    %64 = vector.shape_cast %63 : vector<1x64x256xf32> to vector<64x256xf32>
    %cst_59 = arith.constant dense<0.000000e+00> : vector<8x256xf32>
    %65 = tpu.matmul %62, %64, %cst_59 {dimension_numbers = #tpu.dot_dimension_numbers<[1], [0], [0], [1], [0, 0, 1, 1], [], []>} : vector<8x64xf32>, vector<64x256xf32>, vector<8x256xf32> -> vector<8x256xf32>
    %66 = arith.addf %61, %65 : vector<8x256xf32>
    %67 = vector.broadcast %0 : vector<8x1xf32> to vector<8x256xf32>
    %68 = arith.addf %66, %67 : vector<8x256xf32>
    %cst_60 = arith.constant 0.000000e+00 : f32
    %69 = vector.broadcast %cst_60 : f32 to vector<8x256xf32>
    %70 = arith.cmpf oge, %68, %69 : vector<8x256xf32>
    %71 = vector.broadcast %1 : vector<8x1xf32> to vector<8x256xf32>
    %72 = arith.mulf %71, %68 : vector<8x256xf32>
    %73 = arith.select %70, %68, %72 : vector<8x256xi1>, vector<8x256xf32>
    %c0_61 = arith.constant 0 : index
    %c384 = arith.constant 384 : index
    %74 = vector.load %arg10[%c0_61, %c384] : memref<14x768xf32, #tpu.memory_space<vmem>>, vector<8x256xf32>
    tpu.vector_store %arg10[%c0_61, %c384], %73 {strides = array<i32>} : memref<14x768xf32, #tpu.memory_space<vmem>>, vector<8x256xf32>,
    %c1_62 = arith.constant 1 : index
    %c0_63 = arith.constant 0 : index
    %c0_64 = arith.constant 0 : index
    %75 = vector.load %arg2[%c1_62, %c0_63, %c0_64] : memref<2x6x256xf32, #tpu.memory_space<vmem>>, vector<1x6x256xf32>
    %76 = vector.shape_cast %75 : vector<1x6x256xf32> to vector<6x256xf32>
    %c8_65 = arith.constant 8 : index
    %c384_66 = arith.constant 384 : index
    %77 = vector.load %arg10[%c8_65, %c384_66] : memref<14x768xf32, #tpu.memory_space<vmem>>, vector<6x256xf32>
    tpu.vector_store %arg10[%c8_65, %c384_66], %76 {strides = array<i32>} : memref<14x768xf32, #tpu.memory_space<vmem>>, vector<6x256xf32>,
    %c0_67 = arith.constant 0 : index
    %c128_68 = arith.constant 128 : index
    %78 = vector.load %arg10[%c0_67, %c128_68] : memref<14x768xf32, #tpu.memory_space<vmem>>, vector<8x512xf32>
    %c0_69 = arith.constant 0 : index
    %c94 = arith.constant 94 : index
    %79 = vector.load %arg10[%c0_69, %c94] : memref<14x768xf32, #tpu.memory_space<vmem>>, vector<14x512xf32>
    %c0_70 = arith.constant 0 : index
    %c0_71 = arith.constant 0 : index
    %c0_72 = arith.constant 0 : index
    %80 = vector.load %arg5[%c0_70, %c0_71, %c0_72] : memref<25x8x14xf32, #tpu.memory_space<vmem>>, vector<1x8x14xf32>
    %81 = vector.shape_cast %80 : vector<1x8x14xf32> to vector<8x14xf32>
    %cst_73 = arith.constant dense<0.000000e+00> : vector<8x512xf32>
    %82 = tpu.matmul %81, %79, %cst_73 {dimension_numbers = #tpu.dot_dimension_numbers<[1], [0], [0], [1], [0, 0, 1, 1], [], []>} : vector<8x14xf32>, vector<14x512xf32>, vector<8x512xf32> -> vector<8x512xf32>
    %c0_74 = arith.constant 0 : index
    %c0_75 = arith.constant 0 : index
    %83 = vector.load %arg8[%c0_74, %c0_75] : memref<25x512xf32, #tpu.memory_space<vmem>>, vector<1x512xf32>
    %84 = vector.broadcast %83 : vector<1x512xf32> to vector<8x512xf32>
    %85 = arith.mulf %82, %84 : vector<8x512xf32>
    %c0_76 = arith.constant 0 : index
    %c95 = arith.constant 95 : index
    %86 = vector.load %arg10[%c0_76, %c95] : memref<14x768xf32, #tpu.memory_space<vmem>>, vector<14x512xf32>
    %c1_77 = arith.constant 1 : index
    %c0_78 = arith.constant 0 : index
    %c0_79 = arith.constant 0 : index
    %87 = vector.load %arg5[%c1_77, %c0_78, %c0_79] : memref<25x8x14xf32, #tpu.memory_space<vmem>>, vector<1x8x14xf32>
    %88 = vector.shape_cast %87 : vector<1x8x14xf32> to vector<8x14xf32>
    %cst_80 = arith.constant dense<0.000000e+00> : vector<8x512xf32>
    %89 = tpu.matmul %88, %86, %cst_80 {dimension_numbers = #tpu.dot_dimension_numbers<[1], [0], [0], [1], [0, 0, 1, 1], [], []>} : vector<8x14xf32>, vector<14x512xf32>, vector<8x512xf32> -> vector<8x512xf32>
    %c1_81 = arith.constant 1 : index
    %c0_82 = arith.constant 0 : index
    %90 = vector.load %arg8[%c1_81, %c0_82] : memref<25x512xf32, #tpu.memory_space<vmem>>, vector<1x512xf32>
    %91 = vector.broadcast %90 : vector<1x512xf32> to vector<8x512xf32>
    %92 = arith.mulf %89, %91 : vector<8x512xf32>
    %93 = arith.addf %85, %92 : vector<8x512xf32>
    %c0_83 = arith.constant 0 : index
    %c96 = arith.constant 96 : index
    %94 = vector.load %arg10[%c0_83, %c96] : memref<14x768xf32, #tpu.memory_space<vmem>>, vector<14x512xf32>
    %c2_84 = arith.constant 2 : index
    %c0_85 = arith.constant 0 : index
    %c0_86 = arith.constant 0 : index
    %95 = vector.load %arg5[%c2_84, %c0_85, %c0_86] : memref<25x8x14xf32, #tpu.memory_space<vmem>>, vector<1x8x14xf32>
    %96 = vector.shape_cast %95 : vector<1x8x14xf32> to vector<8x14xf32>
    %cst_87 = arith.constant dense<0.000000e+00> : vector<8x512xf32>
    %97 = tpu.matmul %96, %94, %cst_87 {dimension_numbers = #tpu.dot_dimension_numbers<[1], [0], [0], [1], [0, 0, 1, 1], [], []>} : vector<8x14xf32>, vector<14x512xf32>, vector<8x512xf32> -> vector<8x512xf32>
    %c2_88 = arith.constant 2 : index
    %c0_89 = arith.constant 0 : index
    %98 = vector.load %arg8[%c2_88, %c0_89] : memref<25x512xf32, #tpu.memory_space<vmem>>, vector<1x512xf32>
    %99 = vector.broadcast %98 : vector<1x512xf32> to vector<8x512xf32>
    %100 = arith.mulf %97, %99 : vector<8x512xf32>
    %101 = arith.addf %93, %100 : vector<8x512xf32>
    %c0_90 = arith.constant 0 : index
    %c97 = arith.constant 97 : index
    %102 = vector.load %arg10[%c0_90, %c97] : memref<14x768xf32, #tpu.memory_space<vmem>>, vector<14x512xf32>
    %c3_91 = arith.constant 3 : index
    %c0_92 = arith.constant 0 : index
    %c0_93 = arith.constant 0 : index
    %103 = vector.load %arg5[%c3_91, %c0_92, %c0_93] : memref<25x8x14xf32, #tpu.memory_space<vmem>>, vector<1x8x14xf32>
    %104 = vector.shape_cast %103 : vector<1x8x14xf32> to vector<8x14xf32>
    %cst_94 = arith.constant dense<0.000000e+00> : vector<8x512xf32>
    %105 = tpu.matmul %104, %102, %cst_94 {dimension_numbers = #tpu.dot_dimension_numbers<[1], [0], [0], [1], [0, 0, 1, 1], [], []>} : vector<8x14xf32>, vector<14x512xf32>, vector<8x512xf32> -> vector<8x512xf32>
    %c3_95 = arith.constant 3 : index
    %c0_96 = arith.constant 0 : index
    %106 = vector.load %arg8[%c3_95, %c0_96] : memref<25x512xf32, #tpu.memory_space<vmem>>, vector<1x512xf32>
    %107 = vector.broadcast %106 : vector<1x512xf32> to vector<8x512xf32>
    %108 = arith.mulf %105, %107 : vector<8x512xf32>
    %109 = arith.addf %101, %108 : vector<8x512xf32>
    %c0_97 = arith.constant 0 : index
    %c98 = arith.constant 98 : index
    %110 = vector.load %arg10[%c0_97, %c98] : memref<14x768xf32, #tpu.memory_space<vmem>>, vector<14x512xf32>
    %c4_98 = arith.constant 4 : index
    %c0_99 = arith.constant 0 : index
    %c0_100 = arith.constant 0 : index
    %111 = vector.load %arg5[%c4_98, %c0_99, %c0_100] : memref<25x8x14xf32, #tpu.memory_space<vmem>>, vector<1x8x14xf32>
    %112 = vector.shape_cast %111 : vector<1x8x14xf32> to vector<8x14xf32>
    %cst_101 = arith.constant dense<0.000000e+00> : vector<8x512xf32>
    %113 = tpu.matmul %112, %110, %cst_101 {dimension_numbers = #tpu.dot_dimension_numbers<[1], [0], [0], [1], [0, 0, 1, 1], [], []>} : vector<8x14xf32>, vector<14x512xf32>, vector<8x512xf32> -> vector<8x512xf32>
    %c4_102 = arith.constant 4 : index
    %c0_103 = arith.constant 0 : index
    %114 = vector.load %arg8[%c4_102, %c0_103] : memref<25x512xf32, #tpu.memory_space<vmem>>, vector<1x512xf32>
    %115 = vector.broadcast %114 : vector<1x512xf32> to vector<8x512xf32>
    %116 = arith.mulf %113, %115 : vector<8x512xf32>
    %117 = arith.addf %109, %116 : vector<8x512xf32>
    %c0_104 = arith.constant 0 : index
    %c110 = arith.constant 110 : index
    %118 = vector.load %arg10[%c0_104, %c110] : memref<14x768xf32, #tpu.memory_space<vmem>>, vector<14x512xf32>
    %c5_105 = arith.constant 5 : index
    %c0_106 = arith.constant 0 : index
    %c0_107 = arith.constant 0 : index
    %119 = vector.load %arg5[%c5_105, %c0_106, %c0_107] : memref<25x8x14xf32, #tpu.memory_space<vmem>>, vector<1x8x14xf32>
    %120 = vector.shape_cast %119 : vector<1x8x14xf32> to vector<8x14xf32>
    %cst_108 = arith.constant dense<0.000000e+00> : vector<8x512xf32>
    %121 = tpu.matmul %120, %118, %cst_108 {dimension_numbers = #tpu.dot_dimension_numbers<[1], [0], [0], [1], [0, 0, 1, 1], [], []>} : vector<8x14xf32>, vector<14x512xf32>, vector<8x512xf32> -> vector<8x512xf32>
    %c5_109 = arith.constant 5 : index
    %c0_110 = arith.constant 0 : index
    %122 = vector.load %arg8[%c5_109, %c0_110] : memref<25x512xf32, #tpu.memory_space<vmem>>, vector<1x512xf32>
    %123 = vector.broadcast %122 : vector<1x512xf32> to vector<8x512xf32>
    %124 = arith.mulf %121, %123 : vector<8x512xf32>
    %125 = arith.addf %117, %124 : vector<8x512xf32>
    %c0_111 = arith.constant 0 : index
    %c111 = arith.constant 111 : index
    %126 = vector.load %arg10[%c0_111, %c111] : memref<14x768xf32, #tpu.memory_space<vmem>>, vector<14x512xf32>
    %c6 = arith.constant 6 : index
    %c0_112 = arith.constant 0 : index
    %c0_113 = arith.constant 0 : index
    %127 = vector.load %arg5[%c6, %c0_112, %c0_113] : memref<25x8x14xf32, #tpu.memory_space<vmem>>, vector<1x8x14xf32>
    %128 = vector.shape_cast %127 : vector<1x8x14xf32> to vector<8x14xf32>
    %cst_114 = arith.constant dense<0.000000e+00> : vector<8x512xf32>
    %129 = tpu.matmul %128, %126, %cst_114 {dimension_numbers = #tpu.dot_dimension_numbers<[1], [0], [0], [1], [0, 0, 1, 1], [], []>} : vector<8x14xf32>, vector<14x512xf32>, vector<8x512xf32> -> vector<8x512xf32>
    %c6_115 = arith.constant 6 : index
    %c0_116 = arith.constant 0 : index
    %130 = vector.load %arg8[%c6_115, %c0_116] : memref<25x512xf32, #tpu.memory_space<vmem>>, vector<1x512xf32>
    %131 = vector.broadcast %130 : vector<1x512xf32> to vector<8x512xf32>
    %132 = arith.mulf %129, %131 : vector<8x512xf32>
    %133 = arith.addf %125, %132 : vector<8x512xf32>
    %c0_117 = arith.constant 0 : index
    %c112 = arith.constant 112 : index
    %134 = vector.load %arg10[%c0_117, %c112] : memref<14x768xf32, #tpu.memory_space<vmem>>, vector<14x512xf32>
    %c7 = arith.constant 7 : index
    %c0_118 = arith.constant 0 : index
    %c0_119 = arith.constant 0 : index
    %135 = vector.load %arg5[%c7, %c0_118, %c0_119] : memref<25x8x14xf32, #tpu.memory_space<vmem>>, vector<1x8x14xf32>
    %136 = vector.shape_cast %135 : vector<1x8x14xf32> to vector<8x14xf32>
    %cst_120 = arith.constant dense<0.000000e+00> : vector<8x512xf32>
    %137 = tpu.matmul %136, %134, %cst_120 {dimension_numbers = #tpu.dot_dimension_numbers<[1], [0], [0], [1], [0, 0, 1, 1], [], []>} : vector<8x14xf32>, vector<14x512xf32>, vector<8x512xf32> -> vector<8x512xf32>
    %c7_121 = arith.constant 7 : index
    %c0_122 = arith.constant 0 : index
    %138 = vector.load %arg8[%c7_121, %c0_122] : memref<25x512xf32, #tpu.memory_space<vmem>>, vector<1x512xf32>
    %139 = vector.broadcast %138 : vector<1x512xf32> to vector<8x512xf32>
    %140 = arith.mulf %137, %139 : vector<8x512xf32>
    %141 = arith.addf %133, %140 : vector<8x512xf32>
    %c0_123 = arith.constant 0 : index
    %c113 = arith.constant 113 : index
    %142 = vector.load %arg10[%c0_123, %c113] : memref<14x768xf32, #tpu.memory_space<vmem>>, vector<14x512xf32>
    %c8_124 = arith.constant 8 : index
    %c0_125 = arith.constant 0 : index
    %c0_126 = arith.constant 0 : index
    %143 = vector.load %arg5[%c8_124, %c0_125, %c0_126] : memref<25x8x14xf32, #tpu.memory_space<vmem>>, vector<1x8x14xf32>
    %144 = vector.shape_cast %143 : vector<1x8x14xf32> to vector<8x14xf32>
    %cst_127 = arith.constant dense<0.000000e+00> : vector<8x512xf32>
    %145 = tpu.matmul %144, %142, %cst_127 {dimension_numbers = #tpu.dot_dimension_numbers<[1], [0], [0], [1], [0, 0, 1, 1], [], []>} : vector<8x14xf32>, vector<14x512xf32>, vector<8x512xf32> -> vector<8x512xf32>
    %c8_128 = arith.constant 8 : index
    %c0_129 = arith.constant 0 : index
    %146 = vector.load %arg8[%c8_128, %c0_129] : memref<25x512xf32, #tpu.memory_space<vmem>>, vector<1x512xf32>
    %147 = vector.broadcast %146 : vector<1x512xf32> to vector<8x512xf32>
    %148 = arith.mulf %145, %147 : vector<8x512xf32>
    %149 = arith.addf %141, %148 : vector<8x512xf32>
    %c0_130 = arith.constant 0 : index
    %c114 = arith.constant 114 : index
    %150 = vector.load %arg10[%c0_130, %c114] : memref<14x768xf32, #tpu.memory_space<vmem>>, vector<14x512xf32>
    %c9 = arith.constant 9 : index
    %c0_131 = arith.constant 0 : index
    %c0_132 = arith.constant 0 : index
    %151 = vector.load %arg5[%c9, %c0_131, %c0_132] : memref<25x8x14xf32, #tpu.memory_space<vmem>>, vector<1x8x14xf32>
    %152 = vector.shape_cast %151 : vector<1x8x14xf32> to vector<8x14xf32>
    %cst_133 = arith.constant dense<0.000000e+00> : vector<8x512xf32>
    %153 = tpu.matmul %152, %150, %cst_133 {dimension_numbers = #tpu.dot_dimension_numbers<[1], [0], [0], [1], [0, 0, 1, 1], [], []>} : vector<8x14xf32>, vector<14x512xf32>, vector<8x512xf32> -> vector<8x512xf32>
    %c9_134 = arith.constant 9 : index
    %c0_135 = arith.constant 0 : index
    %154 = vector.load %arg8[%c9_134, %c0_135] : memref<25x512xf32, #tpu.memory_space<vmem>>, vector<1x512xf32>
    %155 = vector.broadcast %154 : vector<1x512xf32> to vector<8x512xf32>
    %156 = arith.mulf %153, %155 : vector<8x512xf32>
    %157 = arith.addf %149, %156 : vector<8x512xf32>
    %c0_136 = arith.constant 0 : index
    %c126 = arith.constant 126 : index
    %158 = vector.load %arg10[%c0_136, %c126] : memref<14x768xf32, #tpu.memory_space<vmem>>, vector<14x512xf32>
    %c10 = arith.constant 10 : index
    %c0_137 = arith.constant 0 : index
    %c0_138 = arith.constant 0 : index
    %159 = vector.load %arg5[%c10, %c0_137, %c0_138] : memref<25x8x14xf32, #tpu.memory_space<vmem>>, vector<1x8x14xf32>
    %160 = vector.shape_cast %159 : vector<1x8x14xf32> to vector<8x14xf32>
    %cst_139 = arith.constant dense<0.000000e+00> : vector<8x512xf32>
    %161 = tpu.matmul %160, %158, %cst_139 {dimension_numbers = #tpu.dot_dimension_numbers<[1], [0], [0], [1], [0, 0, 1, 1], [], []>} : vector<8x14xf32>, vector<14x512xf32>, vector<8x512xf32> -> vector<8x512xf32>
    %c10_140 = arith.constant 10 : index
    %c0_141 = arith.constant 0 : index
    %162 = vector.load %arg8[%c10_140, %c0_141] : memref<25x512xf32, #tpu.memory_space<vmem>>, vector<1x512xf32>
    %163 = vector.broadcast %162 : vector<1x512xf32> to vector<8x512xf32>
    %164 = arith.mulf %161, %163 : vector<8x512xf32>
    %165 = arith.addf %157, %164 : vector<8x512xf32>
    %c0_142 = arith.constant 0 : index
    %c127 = arith.constant 127 : index
    %166 = vector.load %arg10[%c0_142, %c127] : memref<14x768xf32, #tpu.memory_space<vmem>>, vector<14x512xf32>
    %c11 = arith.constant 11 : index
    %c0_143 = arith.constant 0 : index
    %c0_144 = arith.constant 0 : index
    %167 = vector.load %arg5[%c11, %c0_143, %c0_144] : memref<25x8x14xf32, #tpu.memory_space<vmem>>, vector<1x8x14xf32>
    %168 = vector.shape_cast %167 : vector<1x8x14xf32> to vector<8x14xf32>
    %cst_145 = arith.constant dense<0.000000e+00> : vector<8x512xf32>
    %169 = tpu.matmul %168, %166, %cst_145 {dimension_numbers = #tpu.dot_dimension_numbers<[1], [0], [0], [1], [0, 0, 1, 1], [], []>} : vector<8x14xf32>, vector<14x512xf32>, vector<8x512xf32> -> vector<8x512xf32>
    %c11_146 = arith.constant 11 : index
    %c0_147 = arith.constant 0 : index
    %170 = vector.load %arg8[%c11_146, %c0_147] : memref<25x512xf32, #tpu.memory_space<vmem>>, vector<1x512xf32>
    %171 = vector.broadcast %170 : vector<1x512xf32> to vector<8x512xf32>
    %172 = arith.mulf %169, %171 : vector<8x512xf32>
    %173 = arith.addf %165, %172 : vector<8x512xf32>
    %c0_148 = arith.constant 0 : index
    %c128_149 = arith.constant 128 : index
    %174 = vector.load %arg10[%c0_148, %c128_149] : memref<14x768xf32, #tpu.memory_space<vmem>>, vector<14x512xf32>
    %c12 = arith.constant 12 : index
    %c0_150 = arith.constant 0 : index
    %c0_151 = arith.constant 0 : index
    %175 = vector.load %arg5[%c12, %c0_150, %c0_151] : memref<25x8x14xf32, #tpu.memory_space<vmem>>, vector<1x8x14xf32>
    %176 = vector.shape_cast %175 : vector<1x8x14xf32> to vector<8x14xf32>
    %cst_152 = arith.constant dense<0.000000e+00> : vector<8x512xf32>
    %177 = tpu.matmul %176, %174, %cst_152 {dimension_numbers = #tpu.dot_dimension_numbers<[1], [0], [0], [1], [0, 0, 1, 1], [], []>} : vector<8x14xf32>, vector<14x512xf32>, vector<8x512xf32> -> vector<8x512xf32>
    %178 = arith.addf %173, %177 : vector<8x512xf32>
    %c0_153 = arith.constant 0 : index
    %c129 = arith.constant 129 : index
    %179 = vector.load %arg10[%c0_153, %c129] : memref<14x768xf32, #tpu.memory_space<vmem>>, vector<14x512xf32>
    %c13 = arith.constant 13 : index
    %c0_154 = arith.constant 0 : index
    %c0_155 = arith.constant 0 : index
    %180 = vector.load %arg5[%c13, %c0_154, %c0_155] : memref<25x8x14xf32, #tpu.memory_space<vmem>>, vector<1x8x14xf32>
    %181 = vector.shape_cast %180 : vector<1x8x14xf32> to vector<8x14xf32>
    %cst_156 = arith.constant dense<0.000000e+00> : vector<8x512xf32>
    %182 = tpu.matmul %181, %179, %cst_156 {dimension_numbers = #tpu.dot_dimension_numbers<[1], [0], [0], [1], [0, 0, 1, 1], [], []>} : vector<8x14xf32>, vector<14x512xf32>, vector<8x512xf32> -> vector<8x512xf32>
    %c13_157 = arith.constant 13 : index
    %c0_158 = arith.constant 0 : index
    %183 = vector.load %arg8[%c13_157, %c0_158] : memref<25x512xf32, #tpu.memory_space<vmem>>, vector<1x512xf32>
    %184 = vector.broadcast %183 : vector<1x512xf32> to vector<8x512xf32>
    %185 = arith.mulf %182, %184 : vector<8x512xf32>
    %186 = arith.addf %178, %185 : vector<8x512xf32>
    %c0_159 = arith.constant 0 : index
    %c130 = arith.constant 130 : index
    %187 = vector.load %arg10[%c0_159, %c130] : memref<14x768xf32, #tpu.memory_space<vmem>>, vector<14x512xf32>
    %c14 = arith.constant 14 : index
    %c0_160 = arith.constant 0 : index
    %c0_161 = arith.constant 0 : index
    %188 = vector.load %arg5[%c14, %c0_160, %c0_161] : memref<25x8x14xf32, #tpu.memory_space<vmem>>, vector<1x8x14xf32>
    %189 = vector.shape_cast %188 : vector<1x8x14xf32> to vector<8x14xf32>
    %cst_162 = arith.constant dense<0.000000e+00> : vector<8x512xf32>
    %190 = tpu.matmul %189, %187, %cst_162 {dimension_numbers = #tpu.dot_dimension_numbers<[1], [0], [0], [1], [0, 0, 1, 1], [], []>} : vector<8x14xf32>, vector<14x512xf32>, vector<8x512xf32> -> vector<8x512xf32>
    %c14_163 = arith.constant 14 : index
    %c0_164 = arith.constant 0 : index
    %191 = vector.load %arg8[%c14_163, %c0_164] : memref<25x512xf32, #tpu.memory_space<vmem>>, vector<1x512xf32>
    %192 = vector.broadcast %191 : vector<1x512xf32> to vector<8x512xf32>
    %193 = arith.mulf %190, %192 : vector<8x512xf32>
    %194 = arith.addf %186, %193 : vector<8x512xf32>
    %c0_165 = arith.constant 0 : index
    %c142 = arith.constant 142 : index
    %195 = vector.load %arg10[%c0_165, %c142] : memref<14x768xf32, #tpu.memory_space<vmem>>, vector<14x512xf32>
    %c15 = arith.constant 15 : index
    %c0_166 = arith.constant 0 : index
    %c0_167 = arith.constant 0 : index
    %196 = vector.load %arg5[%c15, %c0_166, %c0_167] : memref<25x8x14xf32, #tpu.memory_space<vmem>>, vector<1x8x14xf32>
    %197 = vector.shape_cast %196 : vector<1x8x14xf32> to vector<8x14xf32>
    %cst_168 = arith.constant dense<0.000000e+00> : vector<8x512xf32>
    %198 = tpu.matmul %197, %195, %cst_168 {dimension_numbers = #tpu.dot_dimension_numbers<[1], [0], [0], [1], [0, 0, 1, 1], [], []>} : vector<8x14xf32>, vector<14x512xf32>, vector<8x512xf32> -> vector<8x512xf32>
    %c15_169 = arith.constant 15 : index
    %c0_170 = arith.constant 0 : index
    %199 = vector.load %arg8[%c15_169, %c0_170] : memref<25x512xf32, #tpu.memory_space<vmem>>, vector<1x512xf32>
    %200 = vector.broadcast %199 : vector<1x512xf32> to vector<8x512xf32>
    %201 = arith.mulf %198, %200 : vector<8x512xf32>
    %202 = arith.addf %194, %201 : vector<8x512xf32>
    %c0_171 = arith.constant 0 : index
    %c143 = arith.constant 143 : index
    %203 = vector.load %arg10[%c0_171, %c143] : memref<14x768xf32, #tpu.memory_space<vmem>>, vector<14x512xf32>
    %c16 = arith.constant 16 : index
    %c0_172 = arith.constant 0 : index
    %c0_173 = arith.constant 0 : index
    %204 = vector.load %arg5[%c16, %c0_172, %c0_173] : memref<25x8x14xf32, #tpu.memory_space<vmem>>, vector<1x8x14xf32>
    %205 = vector.shape_cast %204 : vector<1x8x14xf32> to vector<8x14xf32>
    %cst_174 = arith.constant dense<0.000000e+00> : vector<8x512xf32>
    %206 = tpu.matmul %205, %203, %cst_174 {dimension_numbers = #tpu.dot_dimension_numbers<[1], [0], [0], [1], [0, 0, 1, 1], [], []>} : vector<8x14xf32>, vector<14x512xf32>, vector<8x512xf32> -> vector<8x512xf32>
    %c16_175 = arith.constant 16 : index
    %c0_176 = arith.constant 0 : index
    %207 = vector.load %arg8[%c16_175, %c0_176] : memref<25x512xf32, #tpu.memory_space<vmem>>, vector<1x512xf32>
    %208 = vector.broadcast %207 : vector<1x512xf32> to vector<8x512xf32>
    %209 = arith.mulf %206, %208 : vector<8x512xf32>
    %210 = arith.addf %202, %209 : vector<8x512xf32>
    %c0_177 = arith.constant 0 : index
    %c144 = arith.constant 144 : index
    %211 = vector.load %arg10[%c0_177, %c144] : memref<14x768xf32, #tpu.memory_space<vmem>>, vector<14x512xf32>
    %c17 = arith.constant 17 : index
    %c0_178 = arith.constant 0 : index
    %c0_179 = arith.constant 0 : index
    %212 = vector.load %arg5[%c17, %c0_178, %c0_179] : memref<25x8x14xf32, #tpu.memory_space<vmem>>, vector<1x8x14xf32>
    %213 = vector.shape_cast %212 : vector<1x8x14xf32> to vector<8x14xf32>
    %cst_180 = arith.constant dense<0.000000e+00> : vector<8x512xf32>
    %214 = tpu.matmul %213, %211, %cst_180 {dimension_numbers = #tpu.dot_dimension_numbers<[1], [0], [0], [1], [0, 0, 1, 1], [], []>} : vector<8x14xf32>, vector<14x512xf32>, vector<8x512xf32> -> vector<8x512xf32>
    %c17_181 = arith.constant 17 : index
    %c0_182 = arith.constant 0 : index
    %215 = vector.load %arg8[%c17_181, %c0_182] : memref<25x512xf32, #tpu.memory_space<vmem>>, vector<1x512xf32>
    %216 = vector.broadcast %215 : vector<1x512xf32> to vector<8x512xf32>
    %217 = arith.mulf %214, %216 : vector<8x512xf32>
    %218 = arith.addf %210, %217 : vector<8x512xf32>
    %c0_183 = arith.constant 0 : index
    %c145 = arith.constant 145 : index
    %219 = vector.load %arg10[%c0_183, %c145] : memref<14x768xf32, #tpu.memory_space<vmem>>, vector<14x512xf32>
    %c18 = arith.constant 18 : index
    %c0_184 = arith.constant 0 : index
    %c0_185 = arith.constant 0 : index
    %220 = vector.load %arg5[%c18, %c0_184, %c0_185] : memref<25x8x14xf32, #tpu.memory_space<vmem>>, vector<1x8x14xf32>
    %221 = vector.shape_cast %220 : vector<1x8x14xf32> to vector<8x14xf32>
    %cst_186 = arith.constant dense<0.000000e+00> : vector<8x512xf32>
    %222 = tpu.matmul %221, %219, %cst_186 {dimension_numbers = #tpu.dot_dimension_numbers<[1], [0], [0], [1], [0, 0, 1, 1], [], []>} : vector<8x14xf32>, vector<14x512xf32>, vector<8x512xf32> -> vector<8x512xf32>
    %c18_187 = arith.constant 18 : index
    %c0_188 = arith.constant 0 : index
    %223 = vector.load %arg8[%c18_187, %c0_188] : memref<25x512xf32, #tpu.memory_space<vmem>>, vector<1x512xf32>
    %224 = vector.broadcast %223 : vector<1x512xf32> to vector<8x512xf32>
    %225 = arith.mulf %222, %224 : vector<8x512xf32>
    %226 = arith.addf %218, %225 : vector<8x512xf32>
    %c0_189 = arith.constant 0 : index
    %c146 = arith.constant 146 : index
    %227 = vector.load %arg10[%c0_189, %c146] : memref<14x768xf32, #tpu.memory_space<vmem>>, vector<14x512xf32>
    %c19 = arith.constant 19 : index
    %c0_190 = arith.constant 0 : index
    %c0_191 = arith.constant 0 : index
    %228 = vector.load %arg5[%c19, %c0_190, %c0_191] : memref<25x8x14xf32, #tpu.memory_space<vmem>>, vector<1x8x14xf32>
    %229 = vector.shape_cast %228 : vector<1x8x14xf32> to vector<8x14xf32>
    %cst_192 = arith.constant dense<0.000000e+00> : vector<8x512xf32>
    %230 = tpu.matmul %229, %227, %cst_192 {dimension_numbers = #tpu.dot_dimension_numbers<[1], [0], [0], [1], [0, 0, 1, 1], [], []>} : vector<8x14xf32>, vector<14x512xf32>, vector<8x512xf32> -> vector<8x512xf32>
    %c19_193 = arith.constant 19 : index
    %c0_194 = arith.constant 0 : index
    %231 = vector.load %arg8[%c19_193, %c0_194] : memref<25x512xf32, #tpu.memory_space<vmem>>, vector<1x512xf32>
    %232 = vector.broadcast %231 : vector<1x512xf32> to vector<8x512xf32>
    %233 = arith.mulf %230, %232 : vector<8x512xf32>
    %234 = arith.addf %226, %233 : vector<8x512xf32>
    %c0_195 = arith.constant 0 : index
    %c158 = arith.constant 158 : index
    %235 = vector.load %arg10[%c0_195, %c158] : memref<14x768xf32, #tpu.memory_space<vmem>>, vector<14x512xf32>
    %c20 = arith.constant 20 : index
    %c0_196 = arith.constant 0 : index
    %c0_197 = arith.constant 0 : index
    %236 = vector.load %arg5[%c20, %c0_196, %c0_197] : memref<25x8x14xf32, #tpu.memory_space<vmem>>, vector<1x8x14xf32>
    %237 = vector.shape_cast %236 : vector<1x8x14xf32> to vector<8x14xf32>
    %cst_198 = arith.constant dense<0.000000e+00> : vector<8x512xf32>
    %238 = tpu.matmul %237, %235, %cst_198 {dimension_numbers = #tpu.dot_dimension_numbers<[1], [0], [0], [1], [0, 0, 1, 1], [], []>} : vector<8x14xf32>, vector<14x512xf32>, vector<8x512xf32> -> vector<8x512xf32>
    %c20_199 = arith.constant 20 : index
    %c0_200 = arith.constant 0 : index
    %239 = vector.load %arg8[%c20_199, %c0_200] : memref<25x512xf32, #tpu.memory_space<vmem>>, vector<1x512xf32>
    %240 = vector.broadcast %239 : vector<1x512xf32> to vector<8x512xf32>
    %241 = arith.mulf %238, %240 : vector<8x512xf32>
    %242 = arith.addf %234, %241 : vector<8x512xf32>
    %c0_201 = arith.constant 0 : index
    %c159 = arith.constant 159 : index
    %243 = vector.load %arg10[%c0_201, %c159] : memref<14x768xf32, #tpu.memory_space<vmem>>, vector<14x512xf32>
    %c21 = arith.constant 21 : index
    %c0_202 = arith.constant 0 : index
    %c0_203 = arith.constant 0 : index
    %244 = vector.load %arg5[%c21, %c0_202, %c0_203] : memref<25x8x14xf32, #tpu.memory_space<vmem>>, vector<1x8x14xf32>
    %245 = vector.shape_cast %244 : vector<1x8x14xf32> to vector<8x14xf32>
    %cst_204 = arith.constant dense<0.000000e+00> : vector<8x512xf32>
    %246 = tpu.matmul %245, %243, %cst_204 {dimension_numbers = #tpu.dot_dimension_numbers<[1], [0], [0], [1], [0, 0, 1, 1], [], []>} : vector<8x14xf32>, vector<14x512xf32>, vector<8x512xf32> -> vector<8x512xf32>
    %c21_205 = arith.constant 21 : index
    %c0_206 = arith.constant 0 : index
    %247 = vector.load %arg8[%c21_205, %c0_206] : memref<25x512xf32, #tpu.memory_space<vmem>>, vector<1x512xf32>
    %248 = vector.broadcast %247 : vector<1x512xf32> to vector<8x512xf32>
    %249 = arith.mulf %246, %248 : vector<8x512xf32>
    %250 = arith.addf %242, %249 : vector<8x512xf32>
    %c0_207 = arith.constant 0 : index
    %c160 = arith.constant 160 : index
    %251 = vector.load %arg10[%c0_207, %c160] : memref<14x768xf32, #tpu.memory_space<vmem>>, vector<14x512xf32>
    %c22 = arith.constant 22 : index
    %c0_208 = arith.constant 0 : index
    %c0_209 = arith.constant 0 : index
    %252 = vector.load %arg5[%c22, %c0_208, %c0_209] : memref<25x8x14xf32, #tpu.memory_space<vmem>>, vector<1x8x14xf32>
    %253 = vector.shape_cast %252 : vector<1x8x14xf32> to vector<8x14xf32>
    %cst_210 = arith.constant dense<0.000000e+00> : vector<8x512xf32>
    %254 = tpu.matmul %253, %251, %cst_210 {dimension_numbers = #tpu.dot_dimension_numbers<[1], [0], [0], [1], [0, 0, 1, 1], [], []>} : vector<8x14xf32>, vector<14x512xf32>, vector<8x512xf32> -> vector<8x512xf32>
    %c22_211 = arith.constant 22 : index
    %c0_212 = arith.constant 0 : index
    %255 = vector.load %arg8[%c22_211, %c0_212] : memref<25x512xf32, #tpu.memory_space<vmem>>, vector<1x512xf32>
    %256 = vector.broadcast %255 : vector<1x512xf32> to vector<8x512xf32>
    %257 = arith.mulf %254, %256 : vector<8x512xf32>
    %258 = arith.addf %250, %257 : vector<8x512xf32>
    %c0_213 = arith.constant 0 : index
    %c161 = arith.constant 161 : index
    %259 = vector.load %arg10[%c0_213, %c161] : memref<14x768xf32, #tpu.memory_space<vmem>>, vector<14x512xf32>
    %c23 = arith.constant 23 : index
    %c0_214 = arith.constant 0 : index
    %c0_215 = arith.constant 0 : index
    %260 = vector.load %arg5[%c23, %c0_214, %c0_215] : memref<25x8x14xf32, #tpu.memory_space<vmem>>, vector<1x8x14xf32>
    %261 = vector.shape_cast %260 : vector<1x8x14xf32> to vector<8x14xf32>
    %cst_216 = arith.constant dense<0.000000e+00> : vector<8x512xf32>
    %262 = tpu.matmul %261, %259, %cst_216 {dimension_numbers = #tpu.dot_dimension_numbers<[1], [0], [0], [1], [0, 0, 1, 1], [], []>} : vector<8x14xf32>, vector<14x512xf32>, vector<8x512xf32> -> vector<8x512xf32>
    %c23_217 = arith.constant 23 : index
    %c0_218 = arith.constant 0 : index
    %263 = vector.load %arg8[%c23_217, %c0_218] : memref<25x512xf32, #tpu.memory_space<vmem>>, vector<1x512xf32>
    %264 = vector.broadcast %263 : vector<1x512xf32> to vector<8x512xf32>
    %265 = arith.mulf %262, %264 : vector<8x512xf32>
    %266 = arith.addf %258, %265 : vector<8x512xf32>
    %c0_219 = arith.constant 0 : index
    %c162 = arith.constant 162 : index
    %267 = vector.load %arg10[%c0_219, %c162] : memref<14x768xf32, #tpu.memory_space<vmem>>, vector<14x512xf32>
    %c24 = arith.constant 24 : index
    %c0_220 = arith.constant 0 : index
    %c0_221 = arith.constant 0 : index
    %268 = vector.load %arg5[%c24, %c0_220, %c0_221] : memref<25x8x14xf32, #tpu.memory_space<vmem>>, vector<1x8x14xf32>
    %269 = vector.shape_cast %268 : vector<1x8x14xf32> to vector<8x14xf32>
    %cst_222 = arith.constant dense<0.000000e+00> : vector<8x512xf32>
    %270 = tpu.matmul %269, %267, %cst_222 {dimension_numbers = #tpu.dot_dimension_numbers<[1], [0], [0], [1], [0, 0, 1, 1], [], []>} : vector<8x14xf32>, vector<14x512xf32>, vector<8x512xf32> -> vector<8x512xf32>
    %c24_223 = arith.constant 24 : index
    %c0_224 = arith.constant 0 : index
    %271 = vector.load %arg8[%c24_223, %c0_224] : memref<25x512xf32, #tpu.memory_space<vmem>>, vector<1x512xf32>
    %272 = vector.broadcast %271 : vector<1x512xf32> to vector<8x512xf32>
    %273 = arith.mulf %270, %272 : vector<8x512xf32>
    %274 = arith.addf %266, %273 : vector<8x512xf32>
    %275 = vector.broadcast %2 : vector<8x1xf32> to vector<8x512xf32>
    %276 = arith.addf %274, %275 : vector<8x512xf32>
    %cst_225 = arith.constant 0.000000e+00 : f32
    %277 = vector.broadcast %cst_225 : f32 to vector<8x512xf32>
    %278 = arith.cmpf oge, %276, %277 : vector<8x512xf32>
    %279 = vector.broadcast %3 : vector<8x1xf32> to vector<8x512xf32>
    %280 = arith.mulf %279, %276 : vector<8x512xf32>
    %281 = arith.select %278, %276, %280 : vector<8x512xi1>, vector<8x512xf32>
    %282 = arith.addf %281, %78 : vector<8x512xf32>
    %c0_226 = arith.constant 0 : index
    %c0_227 = arith.constant 0 : index
    %283 = vector.load %arg6[%c0_226, %c0_227] : memref<4x8xf32, #tpu.memory_space<vmem>>, vector<4x8xf32>
    %cst_228 = arith.constant dense<0.000000e+00> : vector<4x512xf32>
    %284 = tpu.matmul %283, %282, %cst_228 {dimension_numbers = #tpu.dot_dimension_numbers<[1], [0], [0], [1], [0, 0, 1, 1], [], []>} : vector<4x8xf32>, vector<8x512xf32>, vector<4x512xf32> -> vector<4x512xf32>
    %285 = vector.broadcast %4 : vector<4x1xf32> to vector<4x512xf32>
    %286 = arith.addf %284, %285 : vector<4x512xf32>
    %cst_229 = arith.constant 0.000000e+00 : f32
    %287 = vector.broadcast %cst_229 : f32 to vector<4x512xf32>
    %288 = arith.cmpf oge, %286, %287 : vector<4x512xf32>
    %289 = vector.broadcast %5 : vector<4x1xf32> to vector<4x512xf32>
    %290 = arith.mulf %289, %286 : vector<4x512xf32>
    %291 = arith.select %288, %286, %290 : vector<4x512xi1>, vector<4x512xf32>
    %292 = vector.extract_strided_slice %291 {offsets = [0, 0], sizes = [4, 256], strides = [1, 1]} : vector<4x512xf32> to vector<4x256xf32>
    %c0_230 = arith.constant 0 : index
    %c0_231 = arith.constant 0 : index
    %c0_232 = arith.constant 0 : index
    %293 = vector.load %arg9[%c0_230, %c0_231, %c0_232] : memref<2x4x256xf32, #tpu.memory_space<vmem>>, vector<1x4x256xf32>
    %294 = vector.shape_cast %293 : vector<1x4x256xf32> to vector<4x256xf32>
    %295 = vector.shape_cast %292 : vector<4x256xf32> to vector<1x4x256xf32>
    tpu.vector_store %arg9[%c0_230, %c0_231, %c0_232], %295 {strides = array<i32>} : memref<2x4x256xf32, #tpu.memory_space<vmem>>, vector<1x4x256xf32>,
    %296 = vector.extract_strided_slice %291 {offsets = [0, 256], sizes = [4, 256], strides = [1, 1]} : vector<4x512xf32> to vector<4x256xf32>
    %c1_233 = arith.constant 1 : index
    %c0_234 = arith.constant 0 : index
    %c0_235 = arith.constant 0 : index
    %297 = vector.load %arg9[%c1_233, %c0_234, %c0_235] : memref<2x4x256xf32, #tpu.memory_space<vmem>>, vector<1x4x256xf32>
    %298 = vector.shape_cast %297 : vector<1x4x256xf32> to vector<4x256xf32>
    %299 = vector.shape_cast %296 : vector<4x256xf32> to vector<1x4x256xf32>
    tpu.vector_store %arg9[%c1_233, %c0_234, %c0_235], %299 {strides = array<i32>} : memref<2x4x256xf32, #tpu.memory_space<vmem>>, vector<1x4x256xf32>,
    return
  }
  func.func @transform_0(%arg0: i32) -> (i32, i32, i32) {
    %c0_i32 = arith.constant 0 : i32
    %c0_i32_0 = arith.constant 0 : i32
    %c0_i32_1 = arith.constant 0 : i32
    return %arg0, %c0_i32, %c0_i32_0 : i32, i32, i32
  }
  func.func @transform_1(%arg0: i32) -> (i32, i32, i32) {
    %c0_i32 = arith.constant 0 : i32
    %c0_i32_0 = arith.constant 0 : i32
    %c0_i32_1 = arith.constant 0 : i32
    return %arg0, %c0_i32, %c0_i32_0 : i32, i32, i32
  }
  func.func @transform_2(%arg0: i32) -> (i32, i32) {
    %c0_i32 = arith.constant 0 : i32
    %c0_i32_0 = arith.constant 0 : i32
    %c0_i32_1 = arith.constant 0 : i32
    return %c0_i32, %c0_i32_0 : i32, i32
  }
  func.func @transform_3(%arg0: i32) -> (i32, i32, i32) {
    %c0_i32 = arith.constant 0 : i32
    %c0_i32_0 = arith.constant 0 : i32
    %c0_i32_1 = arith.constant 0 : i32
    %c0_i32_2 = arith.constant 0 : i32
    return %c0_i32, %c0_i32_0, %c0_i32_1 : i32, i32, i32
  }
  func.func @transform_4(%arg0: i32) -> (i32, i32, i32) {
    %c0_i32 = arith.constant 0 : i32
    %c0_i32_0 = arith.constant 0 : i32
    %c0_i32_1 = arith.constant 0 : i32
    %c0_i32_2 = arith.constant 0 : i32
    return %c0_i32, %c0_i32_0, %c0_i32_1 : i32, i32, i32
  }
  func.func @transform_5(%arg0: i32) -> (i32, i32) {
    %c0_i32 = arith.constant 0 : i32
    %c0_i32_0 = arith.constant 0 : i32
    %c0_i32_1 = arith.constant 0 : i32
    return %c0_i32, %c0_i32_0 : i32, i32
  }
  func.func @transform_6(%arg0: i32) -> (i32, i32) {
    %c0_i32 = arith.constant 0 : i32
    %c0_i32_0 = arith.constant 0 : i32
    %c0_i32_1 = arith.constant 0 : i32
    return %c0_i32, %c0_i32_0 : i32, i32
  }
  func.func @transform_7(%arg0: i32) -> (i32, i32) {
    %c0_i32 = arith.constant 0 : i32
    %c0_i32_0 = arith.constant 0 : i32
    %c0_i32_1 = arith.constant 0 : i32
    return %c0_i32, %c0_i32_0 : i32, i32
  }
  func.func @transform_8(%arg0: i32) -> (i32, i32, i32) {
    %c0_i32 = arith.constant 0 : i32
    %c0_i32_0 = arith.constant 0 : i32
    %c0_i32_1 = arith.constant 0 : i32
    return %arg0, %c0_i32, %c0_i32_0 : i32, i32, i32
  }
}

</mosaic_0001>

<llo_original>
// kernel: tpu_custom_call.1
$region0: #{tpu_custom_call.1}
  #allocation0 [shape = 'u32[]', space=smem, size = 0x4, offset = 0x4, fixed_abs, tag = 'smem constant byte address 0x4 - core index']
  #allocation1 [shape = 'u32[144,128]{1,0:T(1,128)}', space=vmem, size = 0x12000, scoped, tag = 'internal scratch']
  #allocation2 [shape = 'f32[14,768]{1,0:T(8,128)}', space=vmem, size = 0xc000, scoped, tag = 'scratch operand']
  %s0 = inlined_call_operand.vmem [shape: f32[2,8,64], index: 0, kind: input, shape index: {}]
  %s1 = inlined_call_operand.vmem [shape: f32[2,6,256], index: 1, kind: input, shape index: {}]
  %s2 = inlined_call_operand.vmem [shape: f32[32,8], index: 2, kind: input, shape index: {}]
  %s3 = inlined_call_operand.hbm [shape: f32[4,64,256], index: 3, kind: input, shape index: {}]
  %s4 = inlined_call_operand.vmem [shape: f32[25,8,14], index: 4, kind: input, shape index: {}]
  %s5 = inlined_call_operand.vmem [shape: f32[4,8], index: 5, kind: input, shape index: {}]
  %s6 = inlined_call_operand.vmem [shape: f32[8,6], index: 6, kind: input, shape index: {}]
  %s7 = inlined_call_operand.vmem [shape: f32[25,512], index: 7, kind: input, shape index: {}]
  %s8 = inlined_call_operand.hbm [shape: f32[2,4,256], index: 8, kind: output, shape index: {}]
  %s9 = sld [smem:[#allocation0]]
  $region46: #{tpu_custom_call.1} parent=0
    _
  %s11 = ssub.s32 1, %s9
  %s12 = scalar_select 0, %s11, %s9
  $region1: #{tpu_custom_call.1} parent=0
    #allocation3 [shape = 'u8[262144]{0}', space=vmem, size = 0x40000, scoped, tag = 'input window, operand 3, single buffered']
    #allocation4 [shape = 's32[1]{0}', space=sflag, size = 0x4, scoped, tag = 'scoped memory for tpu_custom_call.1']
    #allocation5 [shape = 's32[1]{0}', space=sflag, size = 0x4, scoped, tag = 'scoped memory for tpu_custom_call.1']
    #allocation6 [shape = 'u8[8192]{0}', space=vmem, size = 0x2000, scoped, tag = 'output window, operand 0, single buffered']
    %13 = vsyncpa [#allocation4], 0
    %14 = vsyncpa [#allocation5], 0
    // Predicated region
    $region2: #{tpu_custom_call.1} parent=1 // pred_check
      _
    $region3: #{tpu_custom_call.1} parent=1 // pred_check_branch
      %16 = sbr.rel (0) target = $region5
    $region4: #{tpu_custom_call.1} parent=1 // pred_region
      _
    $region5: #{tpu_custom_call.1} parent=1 // pred_fallthru
      _
    // Predicated region
    $region6: #{tpu_custom_call.1} parent=1 // pred_check
      _
    $region7: #{tpu_custom_call.1} parent=1 // pred_check_branch
      %18 = sbr.rel (0) target = $region9
    $region8: #{tpu_custom_call.1} parent=1 // pred_region
      _
    $region9: #{tpu_custom_call.1} parent=1 // pred_fallthru
      _
    // Predicated region
    $region10: #{tpu_custom_call.1} parent=1 // pred_check
      _
    $region11: #{tpu_custom_call.1} parent=1 // pred_check_branch
      %20 = sbr.rel (0) target = $region13
    $region12: #{tpu_custom_call.1} parent=1 // pred_region
      _
    $region13: #{tpu_custom_call.1} parent=1 // pred_fallthru
      _
    // Predicated region
    $region14: #{tpu_custom_call.1} parent=1 // pred_check
      _
    $region15: #{tpu_custom_call.1} parent=1 // pred_check_branch
      %22 = sbr.rel (0) target = $region17
    $region16: #{tpu_custom_call.1} parent=1 // pred_region
      %s24 = ssub.s32 8192, 8192
      %25 = vsyncadd [#allocation4], %s24
      %s26 = sshll.u32 [#allocation3], 4
      %s27 = int_to_ptr.vmem [resolvable:$true] %s26
      %32 = dma.hbm_to_vmem [thread:$0]  %s3, 8192, %s27, [#allocation4], 256, 256, 16
    $region17: #{tpu_custom_call.1} parent=1 // pred_fallthru
      _
    // Predicated region
    $region18: #{tpu_custom_call.1} parent=1 // pred_check
      _
    $region19: #{tpu_custom_call.1} parent=1 // pred_check_branch
      %34 = sbr.rel (0) target = $region21
    $region20: #{tpu_custom_call.1} parent=1 // pred_region
      _
    $region21: #{tpu_custom_call.1} parent=1 // pred_fallthru
      _
    // Predicated region
    $region22: #{tpu_custom_call.1} parent=1 // pred_check
      _
    $region23: #{tpu_custom_call.1} parent=1 // pred_check_branch
      %36 = sbr.rel (0) target = $region25
    $region24: #{tpu_custom_call.1} parent=1 // pred_region
      _
    $region25: #{tpu_custom_call.1} parent=1 // pred_fallthru
      _
    // Predicated region
    $region26: #{tpu_custom_call.1} parent=1 // pred_check
      _
    $region27: #{tpu_custom_call.1} parent=1 // pred_check_branch
      %38 = sbr.rel (0) target = $region29
    $region28: #{tpu_custom_call.1} parent=1 // pred_region
      _
    $region29: #{tpu_custom_call.1} parent=1 // pred_fallthru
      _
    // Predicated region
    $region30: #{tpu_custom_call.1} parent=1 // pred_check
      _
    $region31: #{tpu_custom_call.1} parent=1 // pred_check_branch
      %40 = sbr.rel (0) target = $region33
    $region32: #{tpu_custom_call.1} parent=1 // pred_region
      _
    $region33: #{tpu_custom_call.1} parent=1 // pred_fallthru
      _
    // Predicated region
    $region34: #{tpu_custom_call.1} parent=1 // pred_check
      _
    $region35: #{tpu_custom_call.1} parent=1 // pred_check_branch
      %42 = sbr.rel (0) target = $region37
    $region36: #{tpu_custom_call.1} parent=1 // pred_region
      %43 = dma.done [#allocation4], 8192
    $region37: #{tpu_custom_call.1} parent=1 // pred_fallthru
      _
    %v44 = vld [vmem:[%s6] sm:$0xff]
    %v45 = vld [vmem:[%s6] sm:$0xf]
    %46 = vst [vmem:[#allocation2] sm:$0xff] 0.0
    %47 = vst [vmem:[#allocation2 + $0x30] sm:$0x3f] 0.0
    %48 = vst [vmem:[#allocation2 + $0x28] sm:$0xff] 0.0
    %49 = vst [vmem:[#allocation2 + $0x58] sm:$0x3f] 0.0
    %v50 = vld [vmem:[%s0] sm:$0xff]
    %v51 = vld [vmem:[%s2] sm:$0xff]
    %v52 = vld [vmem:[%s2 + $0x8] sm:$0xff]
    %v53 = vld [vmem:[%s2 + $0x10] sm:$0xff]
    %v54 = vld [vmem:[%s2 + $0x18] sm:$0xff]
    %vm55 = vcmask 64512
    %v57 = vsel %vm55, %v51, 0
    %v60 = vsel %vm55, %v52, 0
    %v63 = vsel %vm55, %v53, 0
    %v66 = vsel %vm55, %v54, 0
    %68 = vmatprep.subr.mxu0 0.0
    %69 = vmatpush1.msra.mxu0 %v50
    %70 = vmatprep.subr.mxu0 0.0
    %71 = vmatpush1.msra.mxu0 0.0
    %72 = vmatprep.subr.mxu0 0.0
    %73 = vmatpush1.msra.mxu0 0.0
    %74 = vmatprep.subr.mxu0 0.0
    %75 = vmatpush1.msra.mxu0 0.0
    %76 = vmatprep.subr.mxu0 0.0
    %77 = vmatpush1.msra.mxu0 0.0
    %78 = vmatprep.subr.mxu0 0.0
    %79 = vmatpush1.msra.mxu0 0.0
    %80 = vmatprep.subr.mxu0 0.0
    %81 = vmatpush1.msra.mxu0 0.0
    %82 = vmatprep.subr.mxu0 0.0
    %83 = vmatpush1.msra.mxu0 0.0
    %84 = vmatprep.subr.mxu0 0.0
    %85 = vmatpush1.msra.mxu0 0.0
    %86 = vmatprep.subr.mxu0 0.0
    %87 = vmatpush1.msra.mxu0 0.0
    %88 = vmatprep.subr.mxu0 0.0
    %89 = vmatpush1.msra.mxu0 0.0
    %90 = vmatprep.subr.mxu0 0.0
    %91 = vmatpush1.msra.mxu0 0.0
    %92 = vmatprep.subr.mxu0 0.0
    %93 = vmatpush1.msra.mxu0 0.0
    %94 = vmatprep.subr.mxu0 0.0
    %95 = vmatpush1.msra.mxu0 0.0
    %96 = vmatprep.subr.mxu0 0.0
    %97 = vmatpush1.msra.mxu0 0.0
    %98 = vmatprep.subr.mxu0 0.0
    %99 = vmatpush1.msra.mxu0 0.0
    %100 = vmatprep.subr.mxu0 0.0
    %101 = vmatpush1.msra.mxu0 0.0
    %102 = vmatprep.subr.mxu0 0.0
    %103 = vmatpush1.msra.mxu0 0.0
    %104 = vmatprep.subr.mxu0 0.0
    %105 = vmatpush1.msra.mxu0 0.0
    %106 = vmatprep.subr.mxu0 0.0
    %107 = vmatpush1.msra.mxu0 0.0
    %108 = vmatprep.subr.mxu0 0.0
    %109 = vmatpush1.msra.mxu0 0.0
    %110 = vmatprep.subr.mxu0 0.0
    %111 = vmatpush1.msra.mxu0 0.0
    %112 = vmatprep.subr.mxu0 0.0
    %113 = vmatpush1.msra.mxu0 0.0
    %114 = vmatprep.subr.mxu0 0.0
    %115 = vmatpush1.msra.mxu0 0.0
    %116 = vmatprep.subr.mxu0 0.0
    %117 = vmatpush1.msra.mxu0 0.0
    %118 = vmatprep.subr.mxu0 0.0
    %119 = vmatpush1.msra.mxu0 0.0
    %120 = vmatprep.subr.mxu0 0.0
    %121 = vmatpush1.msra.mxu0 0.0
    %122 = vmatprep.subr.mxu0 0.0
    %123 = vmatpush1.msra.mxu0 0.0
    %124 = vmatprep.subr.mxu0 0.0
    %125 = vmatpush1.msra.mxu0 0.0
    %126 = vmatprep.subr.mxu0 0.0
    %127 = vmatpush1.msra.mxu0 0.0
    %128 = vmatprep.subr.mxu0 0.0
    %129 = vmatpush1.msra.mxu0 0.0
    %130 = vmatprep.subr.mxu0 0.0
    %131 = vmatpush1.msra.mxu0 0.0
    %132 = vmatprep.mubr.f32.mxu0 0.0
    %133 = vmatmul.mubr.f32.gmra.mrb[0].mxu0 %v57
    %v134 = vpop.f32.mrb[0].mxu0
    %v135 = vadd.f32 0.0, %v134
    %v136 = vpop.f32.mrb[0].mxu0
    %137 = vmatprep.mubr.f32.mxu0 0.0
    %138 = vmatmul.mubr.f32.gmra.mrb[0].mxu0 %v60
    %v139 = vpop.f32.mrb[0].mxu0
    %v140 = vadd.f32 0.0, %v139
    %v141 = vpop.f32.mrb[0].mxu0
    %142 = vmatprep.mubr.f32.mxu0 0.0
    %143 = vmatmul.mubr.f32.gmra.mrb[0].mxu0 %v63
    %v144 = vpop.f32.mrb[0].mxu0
    %v145 = vadd.f32 0.0, %v144
    %v146 = vpop.f32.mrb[0].mxu0
    %147 = vmatprep.mubr.f32.mxu0 0.0
    %148 = vmatmul.mubr.f32.gmra.mrb[0].mxu0 %v66
    %v149 = vpop.f32.mrb[0].mxu0
    %v150 = vadd.f32 0.0, %v149
    %v151 = vpop.f32.mrb[0].mxu0
    %152 = vdwg.mxu0
    %v153 = vld [vmem:[#allocation3] sm:$0xff]
    %v154 = vld [vmem:[#allocation3 + $0x8] sm:$0xff]
    %v155 = vld [vmem:[#allocation3 + $0x10] sm:$0xff]
    %v156 = vld [vmem:[#allocation3 + $0x18] sm:$0xff]
    %v157 = vld [vmem:[#allocation3 + $0x20] sm:$0xff]
    %v158 = vld [vmem:[#allocation3 + $0x28] sm:$0xff]
    %v159 = vld [vmem:[#allocation3 + $0x30] sm:$0xff]
    %v160 = vld [vmem:[#allocation3 + $0x38] sm:$0xff]
    %v161 = vld [vmem:[#allocation3 + $0x40] sm:$0xff]
    %v162 = vld [vmem:[#allocation3 + $0x48] sm:$0xff]
    %v163 = vld [vmem:[#allocation3 + $0x50] sm:$0xff]
    %v164 = vld [vmem:[#allocation3 + $0x58] sm:$0xff]
    %v165 = vld [vmem:[#allocation3 + $0x60] sm:$0xff]
    %v166 = vld [vmem:[#allocation3 + $0x68] sm:$0xff]
    %v167 = vld [vmem:[#allocation3 + $0x70] sm:$0xff]
    %v168 = vld [vmem:[#allocation3 + $0x78] sm:$0xff]
    %s169 = scalar_lea.vmem [#allocation3], 128
    %v170 = vld [vmem:[%s169] sm:$0xff]
    %v171 = vld [vmem:[%s169 + $0x8] sm:$0xff]
    %v172 = vld [vmem:[%s169 + $0x10] sm:$0xff]
    %v173 = vld [vmem:[%s169 + $0x18] sm:$0xff]
    %v174 = vld [vmem:[%s169 + $0x20] sm:$0xff]
    %v175 = vld [vmem:[%s169 + $0x28] sm:$0xff]
    %v176 = vld [vmem:[%s169 + $0x30] sm:$0xff]
    %v177 = vld [vmem:[%s169 + $0x38] sm:$0xff]
    %v178 = vld [vmem:[%s169 + $0x40] sm:$0xff]
    %v179 = vld [vmem:[%s169 + $0x48] sm:$0xff]
    %v180 = vld [vmem:[%s169 + $0x50] sm:$0xff]
    %v181 = vld [vmem:[%s169 + $0x58] sm:$0xff]
    %v182 = vld [vmem:[%s169 + $0x60] sm:$0xff]
    %v183 = vld [vmem:[%s169 + $0x68] sm:$0xff]
    %v184 = vld [vmem:[%s169 + $0x70] sm:$0xff]
    %v185 = vld [vmem:[%s169 + $0x78] sm:$0xff]
    %vm186 = vcmask 523264
    %v188 = vsel %vm186, %v140, 0
    %190 = vmatprep.subr.mxu0 %v171
    %191 = vmatpush1.msra.mxu0 %v170
    %192 = vmatprep.subr.mxu0 %v173
    %193 = vmatpush1.msra.mxu0 %v172
    %194 = vmatprep.subr.mxu0 %v175
    %195 = vmatpush1.msra.mxu0 %v174
    %196 = vmatprep.subr.mxu0 %v177
    %197 = vmatpush1.msra.mxu0 %v176
    %198 = vmatprep.subr.mxu0 %v179
    %199 = vmatpush1.msra.mxu0 %v178
    %200 = vmatprep.subr.mxu0 %v181
    %201 = vmatpush1.msra.mxu0 %v180
    %202 = vmatprep.subr.mxu0 %v183
    %203 = vmatpush1.msra.mxu0 %v182
    %204 = vmatprep.subr.mxu0 %v185
    %205 = vmatpush1.msra.mxu0 %v184
    %206 = vmatprep.subr.mxu0 0.0
    %207 = vmatpush1.msra.mxu0 0.0
    %208 = vmatprep.subr.mxu0 0.0
    %209 = vmatpush1.msra.mxu0 0.0
    %210 = vmatprep.subr.mxu0 0.0
    %211 = vmatpush1.msra.mxu0 0.0
    %212 = vmatprep.subr.mxu0 0.0
    %213 = vmatpush1.msra.mxu0 0.0
    %214 = vmatprep.subr.mxu0 0.0
    %215 = vmatpush1.msra.mxu0 0.0
    %216 = vmatprep.subr.mxu0 0.0
    %217 = vmatpush1.msra.mxu0 0.0
    %218 = vmatprep.subr.mxu0 0.0
    %219 = vmatpush1.msra.mxu0 0.0
    %220 = vmatprep.subr.mxu0 0.0
    %221 = vmatpush1.msra.mxu0 0.0
    %222 = vmatprep.subr.mxu0 0.0
    %223 = vmatpush1.msra.mxu0 0.0
    %224 = vmatprep.subr.mxu0 0.0
    %225 = vmatpush1.msra.mxu0 0.0
    %226 = vmatprep.subr.mxu0 0.0
    %227 = vmatpush1.msra.mxu0 0.0
    %228 = vmatprep.subr.mxu0 0.0
    %229 = vmatpush1.msra.mxu0 0.0
    %230 = vmatprep.subr.mxu0 0.0
    %231 = vmatpush1.msra.mxu0 0.0
    %232 = vmatprep.subr.mxu0 0.0
    %233 = vmatpush1.msra.mxu0 0.0
    %234 = vmatprep.subr.mxu0 0.0
    %235 = vmatpush1.msra.mxu0 0.0
    %236 = vmatprep.subr.mxu0 0.0
    %237 = vmatpush1.msra.mxu0 0.0
    %238 = vmatprep.subr.mxu0 0.0
    %239 = vmatpush1.msra.mxu0 0.0
    %240 = vmatprep.subr.mxu0 0.0
    %241 = vmatpush1.msra.mxu0 0.0
    %242 = vmatprep.subr.mxu0 0.0
    %243 = vmatpush1.msra.mxu0 0.0
    %244 = vmatprep.subr.mxu0 0.0
    %245 = vmatpush1.msra.mxu0 0.0
    %246 = vmatprep.subr.mxu0 0.0
    %247 = vmatpush1.msra.mxu0 0.0
    %248 = vmatprep.subr.mxu0 0.0
    %249 = vmatpush1.msra.mxu0 0.0
    %250 = vmatprep.subr.mxu0 0.0
    %251 = vmatpush1.msra.mxu0 0.0
    %252 = vmatprep.subr.mxu0 0.0
    %253 = vmatpush1.msra.mxu0 0.0
    %254 = vmatprep.mubr.f32.mxu0 0.0
    %255 = vmatmul.mubr.f32.gmra.mrb[0].mxu0 %v188
    %v256 = vpop.f32.mrb[0].mxu0
    %v257 = vadd.f32 0.0, %v256
    %v258 = vpop.f32.mrb[0].mxu0
    %v259 = vadd.f32 0.0, %v258
    %260 = vdwg.mxu0
    %v262 = vsel %vm186, %v135, 0
    %264 = vmatprep.subr.mxu0 %v154
    %265 = vmatpush1.msra.mxu0 %v153
    %266 = vmatprep.subr.mxu0 %v156
    %267 = vmatpush1.msra.mxu0 %v155
    %268 = vmatprep.subr.mxu0 %v158
    %269 = vmatpush1.msra.mxu0 %v157
    %270 = vmatprep.subr.mxu0 %v160
    %271 = vmatpush1.msra.mxu0 %v159
    %272 = vmatprep.subr.mxu0 %v162
    %273 = vmatpush1.msra.mxu0 %v161
    %274 = vmatprep.subr.mxu0 %v164
    %275 = vmatpush1.msra.mxu0 %v163
    %276 = vmatprep.subr.mxu0 %v166
    %277 = vmatpush1.msra.mxu0 %v165
    %278 = vmatprep.subr.mxu0 %v168
    %279 = vmatpush1.msra.mxu0 %v167
    %280 = vmatprep.subr.mxu0 0.0
    %281 = vmatpush1.msra.mxu0 0.0
    %282 = vmatprep.subr.mxu0 0.0
    %283 = vmatpush1.msra.mxu0 0.0
    %284 = vmatprep.subr.mxu0 0.0
    %285 = vmatpush1.msra.mxu0 0.0
    %286 = vmatprep.subr.mxu0 0.0
    %287 = vmatpush1.msra.mxu0 0.0
    %288 = vmatprep.subr.mxu0 0.0
    %289 = vmatpush1.msra.mxu0 0.0
    %290 = vmatprep.subr.mxu0 0.0
    %291 = vmatpush1.msra.mxu0 0.0
    %292 = vmatprep.subr.mxu0 0.0
    %293 = vmatpush1.msra.mxu0 0.0
    %294 = vmatprep.subr.mxu0 0.0
    %295 = vmatpush1.msra.mxu0 0.0
    %296 = vmatprep.subr.mxu0 0.0
    %297 = vmatpush1.msra.mxu0 0.0
    %298 = vmatprep.subr.mxu0 0.0
    %299 = vmatpush1.msra.mxu0 0.0
    %300 = vmatprep.subr.mxu0 0.0
    %301 = vmatpush1.msra.mxu0 0.0
    %302 = vmatprep.subr.mxu0 0.0
    %303 = vmatpush1.msra.mxu0 0.0
    %304 = vmatprep.subr.mxu0 0.0
    %305 = vmatpush1.msra.mxu0 0.0
    %306 = vmatprep.subr.mxu0 0.0
    %307 = vmatpush1.msra.mxu0 0.0
    %308 = vmatprep.subr.mxu0 0.0
    %309 = vmatpush1.msra.mxu0 0.0
    %310 = vmatprep.subr.mxu0 0.0
    %311 = vmatpush1.msra.mxu0 0.0
    %312 = vmatprep.subr.mxu0 0.0
    %313 = vmatpush1.msra.mxu0 0.0
    %314 = vmatprep.subr.mxu0 0.0
    %315 = vmatpush1.msra.mxu0 0.0
    %316 = vmatprep.subr.mxu0 0.0
    %317 = vmatpush1.msra.mxu0 0.0
    %318 = vmatprep.subr.mxu0 0.0
    %319 = vmatpush1.msra.mxu0 0.0
    %320 = vmatprep.subr.mxu0 0.0
    %321 = vmatpush1.msra.mxu0 0.0
    %322 = vmatprep.subr.mxu0 0.0
    %323 = vmatpush1.msra.mxu0 0.0
    %324 = vmatprep.subr.mxu0 0.0
    %325 = vmatpush1.msra.mxu0 0.0
    %326 = vmatprep.subr.mxu0 0.0
    %327 = vmatpush1.msra.mxu0 0.0
    %328 = vmatprep.mubr.f32.mxu0 0.0
    %329 = vmatmul.mubr.f32.gmra.mrb[0].mxu0 %v262
    %v330 = vpop.f32.mrb[0].mxu0
    %v331 = vadd.f32 %v257, %v330
    %v332 = vpop.f32.mrb[0].mxu0
    %v333 = vadd.f32 %v259, %v332
    %334 = vdwg.mxu0
    %s335 = scalar_lea.vmem [#allocation3], 256
    %v336 = vld [vmem:[%s335] sm:$0xff]
    %v337 = vld [vmem:[%s335 + $0x8] sm:$0xff]
    %v338 = vld [vmem:[%s335 + $0x10] sm:$0xff]
    %v339 = vld [vmem:[%s335 + $0x18] sm:$0xff]
    %v340 = vld [vmem:[%s335 + $0x20] sm:$0xff]
    %v341 = vld [vmem:[%s335 + $0x28] sm:$0xff]
    %v342 = vld [vmem:[%s335 + $0x30] sm:$0xff]
    %v343 = vld [vmem:[%s335 + $0x38] sm:$0xff]
    %v344 = vld [vmem:[%s335 + $0x40] sm:$0xff]
    %v345 = vld [vmem:[%s335 + $0x48] sm:$0xff]
    %v346 = vld [vmem:[%s335 + $0x50] sm:$0xff]
    %v347 = vld [vmem:[%s335 + $0x58] sm:$0xff]
    %v348 = vld [vmem:[%s335 + $0x60] sm:$0xff]
    %v349 = vld [vmem:[%s335 + $0x68] sm:$0xff]
    %v350 = vld [vmem:[%s335 + $0x70] sm:$0xff]
    %v351 = vld [vmem:[%s335 + $0x78] sm:$0xff]
    %v353 = vsel %vm186, %v145, 0
    %355 = vmatprep.subr.mxu0 %v337
    %356 = vmatpush1.msra.mxu0 %v336
    %357 = vmatprep.subr.mxu0 %v339
    %358 = vmatpush1.msra.mxu0 %v338
    %359 = vmatprep.subr.mxu0 %v341
    %360 = vmatpush1.msra.mxu0 %v340
    %361 = vmatprep.subr.mxu0 %v343
    %362 = vmatpush1.msra.mxu0 %v342
    %363 = vmatprep.subr.mxu0 %v345
    %364 = vmatpush1.msra.mxu0 %v344
    %365 = vmatprep.subr.mxu0 %v347
    %366 = vmatpush1.msra.mxu0 %v346
    %367 = vmatprep.subr.mxu0 %v349
    %368 = vmatpush1.msra.mxu0 %v348
    %369 = vmatprep.subr.mxu0 %v351
    %370 = vmatpush1.msra.mxu0 %v350
    %371 = vmatprep.subr.mxu0 0.0
    %372 = vmatpush1.msra.mxu0 0.0
    %373 = vmatprep.subr.mxu0 0.0
    %374 = vmatpush1.msra.mxu0 0.0
    %375 = vmatprep.subr.mxu0 0.0
    %376 = vmatpush1.msra.mxu0 0.0
    %377 = vmatprep.subr.mxu0 0.0
    %378 = vmatpush1.msra.mxu0 0.0
    %379 = vmatprep.subr.mxu0 0.0
    %380 = vmatpush1.msra.mxu0 0.0
    %381 = vmatprep.subr.mxu0 0.0
    %382 = vmatpush1.msra.mxu0 0.0
    %383 = vmatprep.subr.mxu0 0.0
    %384 = vmatpush1.msra.mxu0 0.0
    %385 = vmatprep.subr.mxu0 0.0
    %386 = vmatpush1.msra.mxu0 0.0
    %387 = vmatprep.subr.mxu0 0.0
    %388 = vmatpush1.msra.mxu0 0.0
    %389 = vmatprep.subr.mxu0 0.0
    %390 = vmatpush1.msra.mxu0 0.0
    %391 = vmatprep.subr.mxu0 0.0
    %392 = vmatpush1.msra.mxu0 0.0
    %393 = vmatprep.subr.mxu0 0.0
    %394 = vmatpush1.msra.mxu0 0.0
    %395 = vmatprep.subr.mxu0 0.0
    %396 = vmatpush1.msra.mxu0 0.0
    %397 = vmatprep.subr.mxu0 0.0
    %398 = vmatpush1.msra.mxu0 0.0
    %399 = vmatprep.subr.mxu0 0.0
    %400 = vmatpush1.msra.mxu0 0.0
    %401 = vmatprep.subr.mxu0 0.0
    %402 = vmatpush1.msra.mxu0 0.0
    %403 = vmatprep.subr.mxu0 0.0
    %404 = vmatpush1.msra.mxu0 0.0
    %405 = vmatprep.subr.mxu0 0.0
    %406 = vmatpush1.msra.mxu0 0.0
    %407 = vmatprep.subr.mxu0 0.0
    %408 = vmatpush1.msra.mxu0 0.0
    %409 = vmatprep.subr.mxu0 0.0
    %410 = vmatpush1.msra.mxu0 0.0
    %411 = vmatprep.subr.mxu0 0.0
    %412 = vmatpush1.msra.mxu0 0.0
    %413 = vmatprep.subr.mxu0 0.0
    %414 = vmatpush1.msra.mxu0 0.0
    %415 = vmatprep.subr.mxu0 0.0
    %416 = vmatpush1.msra.mxu0 0.0
    %417 = vmatprep.subr.mxu0 0.0
    %418 = vmatpush1.msra.mxu0 0.0
    %419 = vmatprep.mubr.f32.mxu0 0.0
    %420 = vmatmul.mubr.f32.gmra.mrb[0].mxu0 %v353
    %v421 = vpop.f32.mrb[0].mxu0
    %v422 = vadd.f32 0.0, %v421
    %v423 = vpop.f32.mrb[0].mxu0
    %v424 = vadd.f32 0.0, %v423
    %425 = vdwg.mxu0
    %v426 = vadd.f32 %v331, %v422
    %v427 = vadd.f32 %v333, %v424
    %s428 = scalar_lea.vmem [#allocation3], 384
    %v429 = vld [vmem:[%s428] sm:$0xff]
    %v430 = vld [vmem:[%s428 + $0x8] sm:$0xff]
    %v431 = vld [vmem:[%s428 + $0x10] sm:$0xff]
    %v432 = vld [vmem:[%s428 + $0x18] sm:$0xff]
    %v433 = vld [vmem:[%s428 + $0x20] sm:$0xff]
    %v434 = vld [vmem:[%s428 + $0x28] sm:$0xff]
    %v435 = vld [vmem:[%s428 + $0x30] sm:$0xff]
    %v436 = vld [vmem:[%s428 + $0x38] sm:$0xff]
    %v437 = vld [vmem:[%s428 + $0x40] sm:$0xff]
    %v438 = vld [vmem:[%s428 + $0x48] sm:$0xff]
    %v439 = vld [vmem:[%s428 + $0x50] sm:$0xff]
    %v440 = vld [vmem:[%s428 + $0x58] sm:$0xff]
    %v441 = vld [vmem:[%s428 + $0x60] sm:$0xff]
    %v442 = vld [vmem:[%s428 + $0x68] sm:$0xff]
    %v443 = vld [vmem:[%s428 + $0x70] sm:$0xff]
    %v444 = vld [vmem:[%s428 + $0x78] sm:$0xff]
    %v446 = vsel %vm186, %v150, 0
    %448 = vmatprep.subr.mxu0 %v430
    %449 = vmatpush1.msra.mxu0 %v429
    %450 = vmatprep.subr.mxu0 %v432
    %451 = vmatpush1.msra.mxu0 %v431
    %452 = vmatprep.subr.mxu0 %v434
    %453 = vmatpush1.msra.mxu0 %v433
    %454 = vmatprep.subr.mxu0 %v436
    %455 = vmatpush1.msra.mxu0 %v435
    %456 = vmatprep.subr.mxu0 %v438
    %457 = vmatpush1.msra.mxu0 %v437
    %458 = vmatprep.subr.mxu0 %v440
    %459 = vmatpush1.msra.mxu0 %v439
    %460 = vmatprep.subr.mxu0 %v442
    %461 = vmatpush1.msra.mxu0 %v441
    %462 = vmatprep.subr.mxu0 %v444
    %463 = vmatpush1.msra.mxu0 %v443
    %464 = vmatprep.subr.mxu0 0.0
    %465 = vmatpush1.msra.mxu0 0.0
    %466 = vmatprep.subr.mxu0 0.0
    %467 = vmatpush1.msra.mxu0 0.0
    %468 = vmatprep.subr.mxu0 0.0
    %469 = vmatpush1.msra.mxu0 0.0
    %470 = vmatprep.subr.mxu0 0.0
    %471 = vmatpush1.msra.mxu0 0.0
    %472 = vmatprep.subr.mxu0 0.0
    %473 = vmatpush1.msra.mxu0 0.0
    %474 = vmatprep.subr.mxu0 0.0
    %475 = vmatpush1.msra.mxu0 0.0
    %476 = vmatprep.subr.mxu0 0.0
    %477 = vmatpush1.msra.mxu0 0.0
    %478 = vmatprep.subr.mxu0 0.0
    %479 = vmatpush1.msra.mxu0 0.0
    %480 = vmatprep.subr.mxu0 0.0
    %481 = vmatpush1.msra.mxu0 0.0
    %482 = vmatprep.subr.mxu0 0.0
    %483 = vmatpush1.msra.mxu0 0.0
    %484 = vmatprep.subr.mxu0 0.0
    %485 = vmatpush1.msra.mxu0 0.0
    %486 = vmatprep.subr.mxu0 0.0
    %487 = vmatpush1.msra.mxu0 0.0
    %488 = vmatprep.subr.mxu0 0.0
    %489 = vmatpush1.msra.mxu0 0.0
    %490 = vmatprep.subr.mxu0 0.0
    %491 = vmatpush1.msra.mxu0 0.0
    %492 = vmatprep.subr.mxu0 0.0
    %493 = vmatpush1.msra.mxu0 0.0
    %494 = vmatprep.subr.mxu0 0.0
    %495 = vmatpush1.msra.mxu0 0.0
    %496 = vmatprep.subr.mxu0 0.0
    %497 = vmatpush1.msra.mxu0 0.0
    %498 = vmatprep.subr.mxu0 0.0
    %499 = vmatpush1.msra.mxu0 0.0
    %500 = vmatprep.subr.mxu0 0.0
    %501 = vmatpush1.msra.mxu0 0.0
    %502 = vmatprep.subr.mxu0 0.0
    %503 = vmatpush1.msra.mxu0 0.0
    %504 = vmatprep.subr.mxu0 0.0
    %505 = vmatpush1.msra.mxu0 0.0
    %506 = vmatprep.subr.mxu0 0.0
    %507 = vmatpush1.msra.mxu0 0.0
    %508 = vmatprep.subr.mxu0 0.0
    %509 = vmatpush1.msra.mxu0 0.0
    %510 = vmatprep.subr.mxu0 0.0
    %511 = vmatpush1.msra.mxu0 0.0
    %512 = vmatprep.mubr.f32.mxu0 0.0
    %513 = vmatmul.mubr.f32.gmra.mrb[0].mxu0 %v446
    %v514 = vpop.f32.mrb[0].mxu0
    %v515 = vadd.f32 0.0, %v514
    %v516 = vpop.f32.mrb[0].mxu0
    %v517 = vadd.f32 0.0, %v516
    %518 = vdwg.mxu0
    %v519 = vadd.f32 %v426, %v515
    %v520 = vadd.f32 %v427, %v517
    %522 = vset.pattern.permute.xlu0 0
    %523 = vperm.xlu0 %522, %v44
    %v524 = vpop.permute.xlu0 %523
    %v526 = vadd.f32 %v519, %v524
    %v527 = vadd.f32 %v520, %v524
    %vm528 = vcmp.ge.f32.partialorder %v526, 0.0
    %vm529 = vcmp.ge.f32.partialorder %v527, 0.0
    %530 = vset.pattern.permute.xlu0 1
    %531 = vperm.xlu0 %530, %v44
    %v532 = vpop.permute.xlu0 %531
    %v534 = vmul.f32 %v532, %v526
    %v535 = vmul.f32 %v532, %v527
    %v536 = vsel %vm528, %v526, %v534
    %v537 = vsel %vm529, %v527, %v535
    %538 = vst [vmem:[#allocation2 + $0x8] sm:$0xff] %v536
    %539 = vst [vmem:[#allocation2 + $0x10] sm:$0xff] %v537
    %v540 = vld [vmem:[%s1] sm:$0x3f]
    %v541 = vld [vmem:[%s1 + $0x8] sm:$0x3f]
    %542 = vst [vmem:[#allocation2 + $0x38] sm:$0x3f] %v540
    %543 = vst [vmem:[#allocation2 + $0x40] sm:$0x3f] %v541
    %s544 = scalar_lea.vmem %s0, 8
    %v545 = vld [vmem:[%s544] sm:$0xff]
    %v546 = vld [vmem:[%s2] sm:$0xff]
    %v547 = vld [vmem:[%s2 + $0x8] sm:$0xff]
    %v548 = vld [vmem:[%s2 + $0x10] sm:$0xff]
    %v549 = vld [vmem:[%s2 + $0x18] sm:$0xff]
    %v551 = vsel %vm55, %v546, 0
    %v554 = vsel %vm55, %v547, 0
    %v557 = vsel %vm55, %v548, 0
    %v560 = vsel %vm55, %v549, 0
    %562 = vmatprep.subr.mxu0 0.0
    %563 = vmatpush1.msra.mxu0 %v545
    %564 = vmatprep.subr.mxu0 0.0
    %565 = vmatpush1.msra.mxu0 0.0
    %566 = vmatprep.subr.mxu0 0.0
    %567 = vmatpush1.msra.mxu0 0.0
    %568 = vmatprep.subr.mxu0 0.0
    %569 = vmatpush1.msra.mxu0 0.0
    %570 = vmatprep.subr.mxu0 0.0
    %571 = vmatpush1.msra.mxu0 0.0
    %572 = vmatprep.subr.mxu0 0.0
    %573 = vmatpush1.msra.mxu0 0.0
    %574 = vmatprep.subr.mxu0 0.0
    %575 = vmatpush1.msra.mxu0 0.0
    %576 = vmatprep.subr.mxu0 0.0
    %577 = vmatpush1.msra.mxu0 0.0
    %578 = vmatprep.subr.mxu0 0.0
    %579 = vmatpush1.msra.mxu0 0.0
    %580 = vmatprep.subr.mxu0 0.0
    %581 = vmatpush1.msra.mxu0 0.0
    %582 = vmatprep.subr.mxu0 0.0
    %583 = vmatpush1.msra.mxu0 0.0
    %584 = vmatprep.subr.mxu0 0.0
    %585 = vmatpush1.msra.mxu0 0.0
    %586 = vmatprep.subr.mxu0 0.0
    %587 = vmatpush1.msra.mxu0 0.0
    %588 = vmatprep.subr.mxu0 0.0
    %589 = vmatpush1.msra.mxu0 0.0
    %590 = vmatprep.subr.mxu0 0.0
    %591 = vmatpush1.msra.mxu0 0.0
    %592 = vmatprep.subr.mxu0 0.0
    %593 = vmatpush1.msra.mxu0 0.0
    %594 = vmatprep.subr.mxu0 0.0
    %595 = vmatpush1.msra.mxu0 0.0
    %596 = vmatprep.subr.mxu0 0.0
    %597 = vmatpush1.msra.mxu0 0.0
    %598 = vmatprep.subr.mxu0 0.0
    %599 = vmatpush1.msra.mxu0 0.0
    %600 = vmatprep.subr.mxu0 0.0
    %601 = vmatpush1.msra.mxu0 0.0
    %602 = vmatprep.subr.mxu0 0.0
    %603 = vmatpush1.msra.mxu0 0.0
    %604 = vmatprep.subr.mxu0 0.0
    %605 = vmatpush1.msra.mxu0 0.0
    %606 = vmatprep.subr.mxu0 0.0
    %607 = vmatpush1.msra.mxu0 0.0
    %608 = vmatprep.subr.mxu0 0.0
    %609 = vmatpush1.msra.mxu0 0.0
    %610 = vmatprep.subr.mxu0 0.0
    %611 = vmatpush1.msra.mxu0 0.0
    %612 = vmatprep.subr.mxu0 0.0
    %613 = vmatpush1.msra.mxu0 0.0
    %614 = vmatprep.subr.mxu0 0.0
    %615 = vmatpush1.msra.mxu0 0.0
    %616 = vmatprep.subr.mxu0 0.0
    %617 = vmatpush1.msra.mxu0 0.0
    %618 = vmatprep.subr.mxu0 0.0
    %619 = vmatpush1.msra.mxu0 0.0
    %620 = vmatprep.subr.mxu0 0.0
    %621 = vmatpush1.msra.mxu0 0.0
    %622 = vmatprep.subr.mxu0 0.0
    %623 = vmatpush1.msra.mxu0 0.0
    %624 = vmatprep.subr.mxu0 0.0
    %625 = vmatpush1.msra.mxu0 0.0
    %626 = vmatprep.mubr.f32.mxu0 0.0
    %627 = vmatmul.mubr.f32.gmra.mrb[0].mxu0 %v551
    %v628 = vpop.f32.mrb[0].mxu0
    %v629 = vadd.f32 0.0, %v628
    %v630 = vpop.f32.mrb[0].mxu0
    %631 = vmatprep.mubr.f32.mxu0 0.0
    %632 = vmatmul.mubr.f32.gmra.mrb[0].mxu0 %v554
    %v633 = vpop.f32.mrb[0].mxu0
    %v634 = vadd.f32 0.0, %v633
    %v635 = vpop.f32.mrb[0].mxu0
    %636 = vmatprep.mubr.f32.mxu0 0.0
    %637 = vmatmul.mubr.f32.gmra.mrb[0].mxu0 %v557
    %v638 = vpop.f32.mrb[0].mxu0
    %v639 = vadd.f32 0.0, %v638
    %v640 = vpop.f32.mrb[0].mxu0
    %641 = vmatprep.mubr.f32.mxu0 0.0
    %642 = vmatmul.mubr.f32.gmra.mrb[0].mxu0 %v560
    %v643 = vpop.f32.mrb[0].mxu0
    %v644 = vadd.f32 0.0, %v643
    %v645 = vpop.f32.mrb[0].mxu0
    %646 = vdwg.mxu0
    %v647 = vld [vmem:[#allocation3] sm:$0xff]
    %v648 = vld [vmem:[#allocation3 + $0x8] sm:$0xff]
    %v649 = vld [vmem:[#allocation3 + $0x10] sm:$0xff]
    %v650 = vld [vmem:[#allocation3 + $0x18] sm:$0xff]
    %v651 = vld [vmem:[#allocation3 + $0x20] sm:$0xff]
    %v652 = vld [vmem:[#allocation3 + $0x28] sm:$0xff]
    %v653 = vld [vmem:[#allocation3 + $0x30] sm:$0xff]
    %v654 = vld [vmem:[#allocation3 + $0x38] sm:$0xff]
    %v655 = vld [vmem:[#allocation3 + $0x40] sm:$0xff]
    %v656 = vld [vmem:[#allocation3 + $0x48] sm:$0xff]
    %v657 = vld [vmem:[#allocation3 + $0x50] sm:$0xff]
    %v658 = vld [vmem:[#allocation3 + $0x58] sm:$0xff]
    %v659 = vld [vmem:[#allocation3 + $0x60] sm:$0xff]
    %v660 = vld [vmem:[#allocation3 + $0x68] sm:$0xff]
    %v661 = vld [vmem:[#allocation3 + $0x70] sm:$0xff]
    %v662 = vld [vmem:[#allocation3 + $0x78] sm:$0xff]
    %v663 = vld [vmem:[%s169] sm:$0xff]
    %v664 = vld [vmem:[%s169 + $0x8] sm:$0xff]
    %v665 = vld [vmem:[%s169 + $0x10] sm:$0xff]
    %v666 = vld [vmem:[%s169 + $0x18] sm:$0xff]
    %v667 = vld [vmem:[%s169 + $0x20] sm:$0xff]
    %v668 = vld [vmem:[%s169 + $0x28] sm:$0xff]
    %v669 = vld [vmem:[%s169 + $0x30] sm:$0xff]
    %v670 = vld [vmem:[%s169 + $0x38] sm:$0xff]
    %v671 = vld [vmem:[%s169 + $0x40] sm:$0xff]
    %v672 = vld [vmem:[%s169 + $0x48] sm:$0xff]
    %v673 = vld [vmem:[%s169 + $0x50] sm:$0xff]
    %v674 = vld [vmem:[%s169 + $0x58] sm:$0xff]
    %v675 = vld [vmem:[%s169 + $0x60] sm:$0xff]
    %v676 = vld [vmem:[%s169 + $0x68] sm:$0xff]
    %v677 = vld [vmem:[%s169 + $0x70] sm:$0xff]
    %v678 = vld [vmem:[%s169 + $0x78] sm:$0xff]
    %v680 = vsel %vm186, %v634, 0
    %682 = vmatprep.subr.mxu0 %v664
    %683 = vmatpush1.msra.mxu0 %v663
    %684 = vmatprep.subr.mxu0 %v666
    %685 = vmatpush1.msra.mxu0 %v665
    %686 = vmatprep.subr.mxu0 %v668
    %687 = vmatpush1.msra.mxu0 %v667
    %688 = vmatprep.subr.mxu0 %v670
    %689 = vmatpush1.msra.mxu0 %v669
    %690 = vmatprep.subr.mxu0 %v672
    %691 = vmatpush1.msra.mxu0 %v671
    %692 = vmatprep.subr.mxu0 %v674
    %693 = vmatpush1.msra.mxu0 %v673
    %694 = vmatprep.subr.mxu0 %v676
    %695 = vmatpush1.msra.mxu0 %v675
    %696 = vmatprep.subr.mxu0 %v678
    %697 = vmatpush1.msra.mxu0 %v677
    %698 = vmatprep.subr.mxu0 0.0
    %699 = vmatpush1.msra.mxu0 0.0
    %700 = vmatprep.subr.mxu0 0.0
    %701 = vmatpush1.msra.mxu0 0.0
    %702 = vmatprep.subr.mxu0 0.0
    %703 = vmatpush1.msra.mxu0 0.0
    %704 = vmatprep.subr.mxu0 0.0
    %705 = vmatpush1.msra.mxu0 0.0
    %706 = vmatprep.subr.mxu0 0.0
    %707 = vmatpush1.msra.mxu0 0.0
    %708 = vmatprep.subr.mxu0 0.0
    %709 = vmatpush1.msra.mxu0 0.0
    %710 = vmatprep.subr.mxu0 0.0
    %711 = vmatpush1.msra.mxu0 0.0
    %712 = vmatprep.subr.mxu0 0.0
    %713 = vmatpush1.msra.mxu0 0.0
    %714 = vmatprep.subr.mxu0 0.0
    %715 = vmatpush1.msra.mxu0 0.0
    %716 = vmatprep.subr.mxu0 0.0
    %717 = vmatpush1.msra.mxu0 0.0
    %718 = vmatprep.subr.mxu0 0.0
    %719 = vmatpush1.msra.mxu0 0.0
    %720 = vmatprep.subr.mxu0 0.0
    %721 = vmatpush1.msra.mxu0 0.0
    %722 = vmatprep.subr.mxu0 0.0
    %723 = vmatpush1.msra.mxu0 0.0
    %724 = vmatprep.subr.mxu0 0.0
    %725 = vmatpush1.msra.mxu0 0.0
    %726 = vmatprep.subr.mxu0 0.0
    %727 = vmatpush1.msra.mxu0 0.0
    %728 = vmatprep.subr.mxu0 0.0
    %729 = vmatpush1.msra.mxu0 0.0
    %730 = vmatprep.subr.mxu0 0.0
    %731 = vmatpush1.msra.mxu0 0.0
    %732 = vmatprep.subr.mxu0 0.0
    %733 = vmatpush1.msra.mxu0 0.0
    %734 = vmatprep.subr.mxu0 0.0
    %735 = vmatpush1.msra.mxu0 0.0
    %736 = vmatprep.subr.mxu0 0.0
    %737 = vmatpush1.msra.mxu0 0.0
    %738 = vmatprep.subr.mxu0 0.0
    %739 = vmatpush1.msra.mxu0 0.0
    %740 = vmatprep.subr.mxu0 0.0
    %741 = vmatpush1.msra.mxu0 0.0
    %742 = vmatprep.subr.mxu0 0.0
    %743 = vmatpush1.msra.mxu0 0.0
    %744 = vmatprep.subr.mxu0 0.0
    %745 = vmatpush1.msra.mxu0 0.0
    %746 = vmatprep.mubr.f32.mxu0 0.0
    %747 = vmatmul.mubr.f32.gmra.mrb[0].mxu0 %v680
    %v748 = vpop.f32.mrb[0].mxu0
    %v749 = vadd.f32 0.0, %v748
    %v750 = vpop.f32.mrb[0].mxu0
    %v751 = vadd.f32 0.0, %v750
    %752 = vdwg.mxu0
    %v754 = vsel %vm186, %v629, 0
    %756 = vmatprep.subr.mxu0 %v648
    %757 = vmatpush1.msra.mxu0 %v647
    %758 = vmatprep.subr.mxu0 %v650
    %759 = vmatpush1.msra.mxu0 %v649
    %760 = vmatprep.subr.mxu0 %v652
    %761 = vmatpush1.msra.mxu0 %v651
    %762 = vmatprep.subr.mxu0 %v654
    %763 = vmatpush1.msra.mxu0 %v653
    %764 = vmatprep.subr.mxu0 %v656
    %765 = vmatpush1.msra.mxu0 %v655
    %766 = vmatprep.subr.mxu0 %v658
    %767 = vmatpush1.msra.mxu0 %v657
    %768 = vmatprep.subr.mxu0 %v660
    %769 = vmatpush1.msra.mxu0 %v659
    %770 = vmatprep.subr.mxu0 %v662
    %771 = vmatpush1.msra.mxu0 %v661
    %772 = vmatprep.subr.mxu0 0.0
    %773 = vmatpush1.msra.mxu0 0.0
    %774 = vmatprep.subr.mxu0 0.0
    %775 = vmatpush1.msra.mxu0 0.0
    %776 = vmatprep.subr.mxu0 0.0
    %777 = vmatpush1.msra.mxu0 0.0
    %778 = vmatprep.subr.mxu0 0.0
    %779 = vmatpush1.msra.mxu0 0.0
    %780 = vmatprep.subr.mxu0 0.0
    %781 = vmatpush1.msra.mxu0 0.0
    %782 = vmatprep.subr.mxu0 0.0
    %783 = vmatpush1.msra.mxu0 0.0
    %784 = vmatprep.subr.mxu0 0.0
    %785 = vmatpush1.msra.mxu0 0.0
    %786 = vmatprep.subr.mxu0 0.0
    %787 = vmatpush1.msra.mxu0 0.0
    %788 = vmatprep.subr.mxu0 0.0
    %789 = vmatpush1.msra.mxu0 0.0
    %790 = vmatprep.subr.mxu0 0.0
    %791 = vmatpush1.msra.mxu0 0.0
    %792 = vmatprep.subr.mxu0 0.0
    %793 = vmatpush1.msra.mxu0 0.0
    %794 = vmatprep.subr.mxu0 0.0
    %795 = vmatpush1.msra.mxu0 0.0
    %796 = vmatprep.subr.mxu0 0.0
    %797 = vmatpush1.msra.mxu0 0.0
    %798 = vmatprep.subr.mxu0 0.0
    %799 = vmatpush1.msra.mxu0 0.0
    %800 = vmatprep.subr.mxu0 0.0
    %801 = vmatpush1.msra.mxu0 0.0
    %802 = vmatprep.subr.mxu0 0.0
    %803 = vmatpush1.msra.mxu0 0.0
    %804 = vmatprep.subr.mxu0 0.0
    %805 = vmatpush1.msra.mxu0 0.0
    %806 = vmatprep.subr.mxu0 0.0
    %807 = vmatpush1.msra.mxu0 0.0
    %808 = vmatprep.subr.mxu0 0.0
    %809 = vmatpush1.msra.mxu0 0.0
    %810 = vmatprep.subr.mxu0 0.0
    %811 = vmatpush1.msra.mxu0 0.0
    %812 = vmatprep.subr.mxu0 0.0
    %813 = vmatpush1.msra.mxu0 0.0
    %814 = vmatprep.subr.mxu0 0.0
    %815 = vmatpush1.msra.mxu0 0.0
    %816 = vmatprep.subr.mxu0 0.0
    %817 = vmatpush1.msra.mxu0 0.0
    %818 = vmatprep.subr.mxu0 0.0
    %819 = vmatpush1.msra.mxu0 0.0
    %820 = vmatprep.mubr.f32.mxu0 0.0
    %821 = vmatmul.mubr.f32.gmra.mrb[0].mxu0 %v754
    %v822 = vpop.f32.mrb[0].mxu0
    %v823 = vadd.f32 %v749, %v822
    %v824 = vpop.f32.mrb[0].mxu0
    %v825 = vadd.f32 %v751, %v824
    %826 = vdwg.mxu0
    %v827 = vld [vmem:[%s335] sm:$0xff]
    %v828 = vld [vmem:[%s335 + $0x8] sm:$0xff]
    %v829 = vld [vmem:[%s335 + $0x10] sm:$0xff]
    %v830 = vld [vmem:[%s335 + $0x18] sm:$0xff]
    %v831 = vld [vmem:[%s335 + $0x20] sm:$0xff]
    %v832 = vld [vmem:[%s335 + $0x28] sm:$0xff]
    %v833 = vld [vmem:[%s335 + $0x30] sm:$0xff]
    %v834 = vld [vmem:[%s335 + $0x38] sm:$0xff]
    %v835 = vld [vmem:[%s335 + $0x40] sm:$0xff]
    %v836 = vld [vmem:[%s335 + $0x48] sm:$0xff]
    %v837 = vld [vmem:[%s335 + $0x50] sm:$0xff]
    %v838 = vld [vmem:[%s335 + $0x58] sm:$0xff]
    %v839 = vld [vmem:[%s335 + $0x60] sm:$0xff]
    %v840 = vld [vmem:[%s335 + $0x68] sm:$0xff]
    %v841 = vld [vmem:[%s335 + $0x70] sm:$0xff]
    %v842 = vld [vmem:[%s335 + $0x78] sm:$0xff]
    %v844 = vsel %vm186, %v639, 0
    %846 = vmatprep.subr.mxu0 %v828
    %847 = vmatpush1.msra.mxu0 %v827
    %848 = vmatprep.subr.mxu0 %v830
    %849 = vmatpush1.msra.mxu0 %v829
    %850 = vmatprep.subr.mxu0 %v832
    %851 = vmatpush1.msra.mxu0 %v831
    %852 = vmatprep.subr.mxu0 %v834
    %853 = vmatpush1.msra.mxu0 %v833
    %854 = vmatprep.subr.mxu0 %v836
    %855 = vmatpush1.msra.mxu0 %v835
    %856 = vmatprep.subr.mxu0 %v838
    %857 = vmatpush1.msra.mxu0 %v837
    %858 = vmatprep.subr.mxu0 %v840
    %859 = vmatpush1.msra.mxu0 %v839
    %860 = vmatprep.subr.mxu0 %v842
    %861 = vmatpush1.msra.mxu0 %v841
    %862 = vmatprep.subr.mxu0 0.0
    %863 = vmatpush1.msra.mxu0 0.0
    %864 = vmatprep.subr.mxu0 0.0
    %865 = vmatpush1.msra.mxu0 0.0
    %866 = vmatprep.subr.mxu0 0.0
    %867 = vmatpush1.msra.mxu0 0.0
    %868 = vmatprep.subr.mxu0 0.0
    %869 = vmatpush1.msra.mxu0 0.0
    %870 = vmatprep.subr.mxu0 0.0
    %871 = vmatpush1.msra.mxu0 0.0
    %872 = vmatprep.subr.mxu0 0.0
    %873 = vmatpush1.msra.mxu0 0.0
    %874 = vmatprep.subr.mxu0 0.0
    %875 = vmatpush1.msra.mxu0 0.0
    %876 = vmatprep.subr.mxu0 0.0
    %877 = vmatpush1.msra.mxu0 0.0
    %878 = vmatprep.subr.mxu0 0.0
    %879 = vmatpush1.msra.mxu0 0.0
    %880 = vmatprep.subr.mxu0 0.0
    %881 = vmatpush1.msra.mxu0 0.0
    %882 = vmatprep.subr.mxu0 0.0
    %883 = vmatpush1.msra.mxu0 0.0
    %884 = vmatprep.subr.mxu0 0.0
    %885 = vmatpush1.msra.mxu0 0.0
    %886 = vmatprep.subr.mxu0 0.0
    %887 = vmatpush1.msra.mxu0 0.0
    %888 = vmatprep.subr.mxu0 0.0
    %889 = vmatpush1.msra.mxu0 0.0
    %890 = vmatprep.subr.mxu0 0.0
    %891 = vmatpush1.msra.mxu0 0.0
    %892 = vmatprep.subr.mxu0 0.0
    %893 = vmatpush1.msra.mxu0 0.0
    %894 = vmatprep.subr.mxu0 0.0
    %895 = vmatpush1.msra.mxu0 0.0
    %896 = vmatprep.subr.mxu0 0.0
    %897 = vmatpush1.msra.mxu0 0.0
    %898 = vmatprep.subr.mxu0 0.0
    %899 = vmatpush1.msra.mxu0 0.0
    %900 = vmatprep.subr.mxu0 0.0
    %901 = vmatpush1.msra.mxu0 0.0
    %902 = vmatprep.subr.mxu0 0.0
    %903 = vmatpush1.msra.mxu0 0.0
    %904 = vmatprep.subr.mxu0 0.0
    %905 = vmatpush1.msra.mxu0 0.0
    %906 = vmatprep.subr.mxu0 0.0
    %907 = vmatpush1.msra.mxu0 0.0
    %908 = vmatprep.subr.mxu0 0.0
    %909 = vmatpush1.msra.mxu0 0.0
    %910 = vmatprep.mubr.f32.mxu0 0.0
    %911 = vmatmul.mubr.f32.gmra.mrb[0].mxu0 %v844
    %v912 = vpop.f32.mrb[0].mxu0
    %v913 = vadd.f32 0.0, %v912
    %v914 = vpop.f32.mrb[0].mxu0
    %v915 = vadd.f32 0.0, %v914
    %916 = vdwg.mxu0
    %v917 = vadd.f32 %v823, %v913
    %v918 = vadd.f32 %v825, %v915
    %v919 = vld [vmem:[%s428] sm:$0xff]
    %v920 = vld [vmem:[%s428 + $0x8] sm:$0xff]
    %v921 = vld [vmem:[%s428 + $0x10] sm:$0xff]
    %v922 = vld [vmem:[%s428 + $0x18] sm:$0xff]
    %v923 = vld [vmem:[%s428 + $0x20] sm:$0xff]
    %v924 = vld [vmem:[%s428 + $0x28] sm:$0xff]
    %v925 = vld [vmem:[%s428 + $0x30] sm:$0xff]
    %v926 = vld [vmem:[%s428 + $0x38] sm:$0xff]
    %v927 = vld [vmem:[%s428 + $0x40] sm:$0xff]
    %v928 = vld [vmem:[%s428 + $0x48] sm:$0xff]
    %v929 = vld [vmem:[%s428 + $0x50] sm:$0xff]
    %v930 = vld [vmem:[%s428 + $0x58] sm:$0xff]
    %v931 = vld [vmem:[%s428 + $0x60] sm:$0xff]
    %v932 = vld [vmem:[%s428 + $0x68] sm:$0xff]
    %v933 = vld [vmem:[%s428 + $0x70] sm:$0xff]
    %v934 = vld [vmem:[%s428 + $0x78] sm:$0xff]
    %v936 = vsel %vm186, %v644, 0
    %938 = vmatprep.subr.mxu0 %v920
    %939 = vmatpush1.msra.mxu0 %v919
    %940 = vmatprep.subr.mxu0 %v922
    %941 = vmatpush1.msra.mxu0 %v921
    %942 = vmatprep.subr.mxu0 %v924
    %943 = vmatpush1.msra.mxu0 %v923
    %944 = vmatprep.subr.mxu0 %v926
    %945 = vmatpush1.msra.mxu0 %v925
    %946 = vmatprep.subr.mxu0 %v928
    %947 = vmatpush1.msra.mxu0 %v927
    %948 = vmatprep.subr.mxu0 %v930
    %949 = vmatpush1.msra.mxu0 %v929
    %950 = vmatprep.subr.mxu0 %v932
    %951 = vmatpush1.msra.mxu0 %v931
    %952 = vmatprep.subr.mxu0 %v934
    %953 = vmatpush1.msra.mxu0 %v933
    %954 = vmatprep.subr.mxu0 0.0
    %955 = vmatpush1.msra.mxu0 0.0
    %956 = vmatprep.subr.mxu0 0.0
    %957 = vmatpush1.msra.mxu0 0.0
    %958 = vmatprep.subr.mxu0 0.0
    %959 = vmatpush1.msra.mxu0 0.0
    %960 = vmatprep.subr.mxu0 0.0
    %961 = vmatpush1.msra.mxu0 0.0
    %962 = vmatprep.subr.mxu0 0.0
    %963 = vmatpush1.msra.mxu0 0.0
    %964 = vmatprep.subr.mxu0 0.0
    %965 = vmatpush1.msra.mxu0 0.0
    %966 = vmatprep.subr.mxu0 0.0
    %967 = vmatpush1.msra.mxu0 0.0
    %968 = vmatprep.subr.mxu0 0.0
    %969 = vmatpush1.msra.mxu0 0.0
    %970 = vmatprep.subr.mxu0 0.0
    %971 = vmatpush1.msra.mxu0 0.0
    %972 = vmatprep.subr.mxu0 0.0
    %973 = vmatpush1.msra.mxu0 0.0
    %974 = vmatprep.subr.mxu0 0.0
    %975 = vmatpush1.msra.mxu0 0.0
    %976 = vmatprep.subr.mxu0 0.0
    %977 = vmatpush1.msra.mxu0 0.0
    %978 = vmatprep.subr.mxu0 0.0
    %979 = vmatpush1.msra.mxu0 0.0
    %980 = vmatprep.subr.mxu0 0.0
    %981 = vmatpush1.msra.mxu0 0.0
    %982 = vmatprep.subr.mxu0 0.0
    %983 = vmatpush1.msra.mxu0 0.0
    %984 = vmatprep.subr.mxu0 0.0
    %985 = vmatpush1.msra.mxu0 0.0
    %986 = vmatprep.subr.mxu0 0.0
    %987 = vmatpush1.msra.mxu0 0.0
    %988 = vmatprep.subr.mxu0 0.0
    %989 = vmatpush1.msra.mxu0 0.0
    %990 = vmatprep.subr.mxu0 0.0
    %991 = vmatpush1.msra.mxu0 0.0
    %992 = vmatprep.subr.mxu0 0.0
    %993 = vmatpush1.msra.mxu0 0.0
    %994 = vmatprep.subr.mxu0 0.0
    %995 = vmatpush1.msra.mxu0 0.0
    %996 = vmatprep.subr.mxu0 0.0
    %997 = vmatpush1.msra.mxu0 0.0
    %998 = vmatprep.subr.mxu0 0.0
    %999 = vmatpush1.msra.mxu0 0.0
    %1000 = vmatprep.subr.mxu0 0.0
    %1001 = vmatpush1.msra.mxu0 0.0
    %1002 = vmatprep.mubr.f32.mxu0 0.0
    %1003 = vmatmul.mubr.f32.gmra.mrb[0].mxu0 %v936
    %v1004 = vpop.f32.mrb[0].mxu0
    %v1005 = vadd.f32 0.0, %v1004
    %v1006 = vpop.f32.mrb[0].mxu0
    %v1007 = vadd.f32 0.0, %v1006
    %1008 = vdwg.mxu0
    %v1009 = vadd.f32 %v917, %v1005
    %v1010 = vadd.f32 %v918, %v1007
    %v1011 = vadd.f32 %v1009, %v524
    %v1012 = vadd.f32 %v1010, %v524
    %vm1013 = vcmp.ge.f32.partialorder %v1011, 0.0
    %vm1014 = vcmp.ge.f32.partialorder %v1012, 0.0
    %v1015 = vmul.f32 %v532, %v1011
    %v1016 = vmul.f32 %v532, %v1012
    %v1017 = vsel %vm1013, %v1011, %v1015
    %v1018 = vsel %vm1014, %v1012, %v1016
    %1019 = vst [vmem:[#allocation2 + $0x18] sm:$0xff] %v1017
    %1020 = vst [vmem:[#allocation2 + $0x20] sm:$0xff] %v1018
    %s1021 = scalar_lea.vmem %s1, 16
    %v1022 = vld [vmem:[%s1021] sm:$0x3f]
    %v1023 = vld [vmem:[%s1021 + $0x8] sm:$0x3f]
    %1024 = vst [vmem:[#allocation2 + $0x48] sm:$0x3f] %v1022
    %1025 = vst [vmem:[#allocation2 + $0x50] sm:$0x3f] %v1023
    %v1026 = vld [vmem:[#allocation2 + $0x8] sm:$0xff]
    %v1027 = vld [vmem:[#allocation2 + $0x10] sm:$0xff]
    %v1028 = vld [vmem:[#allocation2 + $0x18] sm:$0xff]
    %v1029 = vld [vmem:[#allocation2 + $0x20] sm:$0xff]
    %v1030 = vld [vmem:[#allocation2] sm:$0xff]
    %v1031 = vld [vmem:[#allocation2 + $0x30] sm:$0x3f]
    %v1032 = vld [vmem:[#allocation2 + $0x38] sm:$0x3f]
    %v1033 = vld [vmem:[#allocation2 + $0x40] sm:$0x3f]
    %v1034 = vld [vmem:[#allocation2 + $0x48] sm:$0x3f]
    %v1035 = vld [vmem:[#allocation2 + $0x50] sm:$0x3f]
    %v1036 = vld [vmem:[%s4] sm:$0xff]
    %1047 = vrot.lane.b32.xlu0 %v1030, 34
    %v1048 = vpop.permute.xlu0 %1047
    %1049 = vrot.lane.b32.xlu0 %v1026, 34
    %v1050 = vpop.permute.xlu0 %1049
    %1051 = vrot.lane.b32.xlu0 %v1027, 34
    %v1052 = vpop.permute.xlu0 %1051
    %1053 = vrot.lane.b32.xlu0 %v1028, 34
    %v1054 = vpop.permute.xlu0 %1053
    %1055 = vrot.lane.b32.xlu0 %v1029, 34
    %v1056 = vpop.permute.xlu0 %1055
    %1057 = vrot.lane.b32.xlu0 %v1031, 34
    %v1058 = vpop.permute.xlu0 %1057
    %1059 = vrot.lane.b32.xlu0 %v1032, 34
    %v1060 = vpop.permute.xlu0 %1059
    %1061 = vrot.lane.b32.xlu0 %v1033, 34
    %v1062 = vpop.permute.xlu0 %1061
    %1063 = vrot.lane.b32.xlu0 %v1034, 34
    %v1064 = vpop.permute.xlu0 %1063
    %1065 = vrot.lane.b32.xlu0 %v1035, 34
    %v1066 = vpop.permute.xlu0 %1065
    %vm1067 = vcmask 277504
    %v1068 = vsel %vm1067, %v1048, %v1050
    %v1069 = vsel %vm1067, %v1050, %v1052
    %v1070 = vsel %vm1067, %v1052, %v1054
    %v1071 = vsel %vm1067, %v1054, %v1056
    %v1072 = vsel %vm1067, %v1058, %v1060
    %v1073 = vsel %vm1067, %v1060, %v1062
    %v1074 = vsel %vm1067, %v1062, %v1064
    %v1075 = vsel %vm1067, %v1064, %v1066
    %vm1080 = vcmask 113664
    %v1082 = vsel %vm1080, %v1036, 0
    %vm1084 = vcmask 1045504
    %v1085 = vsel %vm1084, %v1072, 0
    %v1087 = vsel %vm1084, %v1073, 0
    %v1089 = vsel %vm1084, %v1074, 0
    %v1091 = vsel %vm1084, %v1075, 0
    %1093 = vmatprep.subr.mxu0 %v1069
    %1094 = vmatpush1.msra.mxu0 %v1068
    %1095 = vmatprep.subr.mxu0 %v1087
    %1096 = vmatpush1.msra.mxu0 %v1085
    %1097 = vmatprep.subr.mxu0 0.0
    %1098 = vmatpush1.msra.mxu0 0.0
    %1099 = vmatprep.subr.mxu0 0.0
    %1100 = vmatpush1.msra.mxu0 0.0
    %1101 = vmatprep.subr.mxu0 0.0
    %1102 = vmatpush1.msra.mxu0 0.0
    %1103 = vmatprep.subr.mxu0 0.0
    %1104 = vmatpush1.msra.mxu0 0.0
    %1105 = vmatprep.subr.mxu0 0.0
    %1106 = vmatpush1.msra.mxu0 0.0
    %1107 = vmatprep.subr.mxu0 0.0
    %1108 = vmatpush1.msra.mxu0 0.0
    %1109 = vmatprep.subr.mxu0 0.0
    %1110 = vmatpush1.msra.mxu0 0.0
    %1111 = vmatprep.subr.mxu0 0.0
    %1112 = vmatpush1.msra.mxu0 0.0
    %1113 = vmatprep.subr.mxu0 0.0
    %1114 = vmatpush1.msra.mxu0 0.0
    %1115 = vmatprep.subr.mxu0 0.0
    %1116 = vmatpush1.msra.mxu0 0.0
    %1117 = vmatprep.subr.mxu0 0.0
    %1118 = vmatpush1.msra.mxu0 0.0
    %1119 = vmatprep.subr.mxu0 0.0
    %1120 = vmatpush1.msra.mxu0 0.0
    %1121 = vmatprep.subr.mxu0 0.0
    %1122 = vmatpush1.msra.mxu0 0.0
    %1123 = vmatprep.subr.mxu0 0.0
    %1124 = vmatpush1.msra.mxu0 0.0
    %1125 = vmatprep.subr.mxu0 0.0
    %1126 = vmatpush1.msra.mxu0 0.0
    %1127 = vmatprep.subr.mxu0 0.0
    %1128 = vmatpush1.msra.mxu0 0.0
    %1129 = vmatprep.subr.mxu0 0.0
    %1130 = vmatpush1.msra.mxu0 0.0
    %1131 = vmatprep.subr.mxu0 0.0
    %1132 = vmatpush1.msra.mxu0 0.0
    %1133 = vmatprep.subr.mxu0 0.0
    %1134 = vmatpush1.msra.mxu0 0.0
    %1135 = vmatprep.subr.mxu0 0.0
    %1136 = vmatpush1.msra.mxu0 0.0
    %1137 = vmatprep.subr.mxu0 0.0
    %1138 = vmatpush1.msra.mxu0 0.0
    %1139 = vmatprep.subr.mxu0 0.0
    %1140 = vmatpush1.msra.mxu0 0.0
    %1141 = vmatprep.subr.mxu0 0.0
    %1142 = vmatpush1.msra.mxu0 0.0
    %1143 = vmatprep.subr.mxu0 0.0
    %1144 = vmatpush1.msra.mxu0 0.0
    %1145 = vmatprep.subr.mxu0 0.0
    %1146 = vmatpush1.msra.mxu0 0.0
    %1147 = vmatprep.subr.mxu0 0.0
    %1148 = vmatpush1.msra.mxu0 0.0
    %1149 = vmatprep.subr.mxu0 0.0
    %1150 = vmatpush1.msra.mxu0 0.0
    %1151 = vmatprep.subr.mxu0 0.0
    %1152 = vmatpush1.msra.mxu0 0.0
    %1153 = vmatprep.subr.mxu0 0.0
    %1154 = vmatpush1.msra.mxu0 0.0
    %1155 = vmatprep.subr.mxu0 0.0
    %1156 = vmatpush1.msra.mxu0 0.0
    %1157 = vmatprep.mubr.f32.mxu0 0.0
    %1158 = vmatmul.mubr.f32.gmra.mrb[0].mxu0 %v1082
    %v1159 = vpop.f32.mrb[0].mxu0
    %v1160 = vadd.f32 0.0, %v1159
    %v1161 = vpop.f32.mrb[0].mxu0
    %v1162 = vadd.f32 0.0, %v1161
    %1163 = vdwg.mxu0
    %1164 = vmatprep.subr.mxu0 %v1071
    %1165 = vmatpush1.msra.mxu0 %v1070
    %1166 = vmatprep.subr.mxu0 %v1091
    %1167 = vmatpush1.msra.mxu0 %v1089
    %1168 = vmatprep.subr.mxu0 0.0
    %1169 = vmatpush1.msra.mxu0 0.0
    %1170 = vmatprep.subr.mxu0 0.0
    %1171 = vmatpush1.msra.mxu0 0.0
    %1172 = vmatprep.subr.mxu0 0.0
    %1173 = vmatpush1.msra.mxu0 0.0
    %1174 = vmatprep.subr.mxu0 0.0
    %1175 = vmatpush1.msra.mxu0 0.0
    %1176 = vmatprep.subr.mxu0 0.0
    %1177 = vmatpush1.msra.mxu0 0.0
    %1178 = vmatprep.subr.mxu0 0.0
    %1179 = vmatpush1.msra.mxu0 0.0
    %1180 = vmatprep.subr.mxu0 0.0
    %1181 = vmatpush1.msra.mxu0 0.0
    %1182 = vmatprep.subr.mxu0 0.0
    %1183 = vmatpush1.msra.mxu0 0.0
    %1184 = vmatprep.subr.mxu0 0.0
    %1185 = vmatpush1.msra.mxu0 0.0
    %1186 = vmatprep.subr.mxu0 0.0
    %1187 = vmatpush1.msra.mxu0 0.0
    %1188 = vmatprep.subr.mxu0 0.0
    %1189 = vmatpush1.msra.mxu0 0.0
    %1190 = vmatprep.subr.mxu0 0.0
    %1191 = vmatpush1.msra.mxu0 0.0
    %1192 = vmatprep.subr.mxu0 0.0
    %1193 = vmatpush1.msra.mxu0 0.0
    %1194 = vmatprep.subr.mxu0 0.0
    %1195 = vmatpush1.msra.mxu0 0.0
    %1196 = vmatprep.subr.mxu0 0.0
    %1197 = vmatpush1.msra.mxu0 0.0
    %1198 = vmatprep.subr.mxu0 0.0
    %1199 = vmatpush1.msra.mxu0 0.0
    %1200 = vmatprep.subr.mxu0 0.0
    %1201 = vmatpush1.msra.mxu0 0.0
    %1202 = vmatprep.subr.mxu0 0.0
    %1203 = vmatpush1.msra.mxu0 0.0
    %1204 = vmatprep.subr.mxu0 0.0
    %1205 = vmatpush1.msra.mxu0 0.0
    %1206 = vmatprep.subr.mxu0 0.0
    %1207 = vmatpush1.msra.mxu0 0.0
    %1208 = vmatprep.subr.mxu0 0.0
    %1209 = vmatpush1.msra.mxu0 0.0
    %1210 = vmatprep.subr.mxu0 0.0
    %1211 = vmatpush1.msra.mxu0 0.0
    %1212 = vmatprep.subr.mxu0 0.0
    %1213 = vmatpush1.msra.mxu0 0.0
    %1214 = vmatprep.subr.mxu0 0.0
    %1215 = vmatpush1.msra.mxu0 0.0
    %1216 = vmatprep.subr.mxu0 0.0
    %1217 = vmatpush1.msra.mxu0 0.0
    %1218 = vmatprep.subr.mxu0 0.0
    %1219 = vmatpush1.msra.mxu0 0.0
    %1220 = vmatprep.subr.mxu0 0.0
    %1221 = vmatpush1.msra.mxu0 0.0
    %1222 = vmatprep.subr.mxu0 0.0
    %1223 = vmatpush1.msra.mxu0 0.0
    %1224 = vmatprep.subr.mxu0 0.0
    %1225 = vmatpush1.msra.mxu0 0.0
    %1226 = vmatprep.subr.mxu0 0.0
    %1227 = vmatpush1.msra.mxu0 0.0
    %1228 = vmatprep.mubr.f32.mxu0 0.0
    %1229 = vmatmul.mubr.f32.gmra.mrb[0].mxu0 %v1082
    %v1230 = vpop.f32.mrb[0].mxu0
    %v1231 = vadd.f32 0.0, %v1230
    %v1232 = vpop.f32.mrb[0].mxu0
    %v1233 = vadd.f32 0.0, %v1232
    %1234 = vdwg.mxu0
    %v1235 = vld [vmem:[%s7] ss:$8 sm:$0xf]
    %v1237 = vlaneseq
    %v1238 = vshrl.u32 %v1237, 7
    %v1239 = vsub.s32 0, %v1238
    %v1240 = vrot.slane %v1235, %v1239
    %v1241 = vlaneseq
    %v1242 = vshrl.u32 %v1241, 7
    %v1243 = vsub.s32 1, %v1242
    %v1244 = vrot.slane %v1235, %v1243
    %v1245 = vlaneseq
    %v1246 = vshrl.u32 %v1245, 7
    %v1247 = vsub.s32 2, %v1246
    %v1248 = vrot.slane %v1235, %v1247
    %v1249 = vlaneseq
    %v1250 = vshrl.u32 %v1249, 7
    %v1251 = vsub.s32 3, %v1250
    %v1252 = vrot.slane %v1235, %v1251
    %v1257 = vmul.f32 %v1160, %v1240
    %v1258 = vmul.f32 %v1162, %v1244
    %v1259 = vmul.f32 %v1231, %v1248
    %v1260 = vmul.f32 %v1233, %v1252
    %s1261 = scalar_lea.vmem %s4, 8
    %v1262 = vld [vmem:[%s1261] sm:$0xff]
    %1263 = vrot.lane.b32.xlu0 %v1030, 33
    %v1264 = vpop.permute.xlu0 %1263
    %1265 = vrot.lane.b32.xlu0 %v1026, 33
    %v1266 = vpop.permute.xlu0 %1265
    %1267 = vrot.lane.b32.xlu0 %v1027, 33
    %v1268 = vpop.permute.xlu0 %1267
    %1269 = vrot.lane.b32.xlu0 %v1028, 33
    %v1270 = vpop.permute.xlu0 %1269
    %1271 = vrot.lane.b32.xlu0 %v1029, 33
    %v1272 = vpop.permute.xlu0 %1271
    %1273 = vrot.lane.b32.xlu0 %v1031, 33
    %v1274 = vpop.permute.xlu0 %1273
    %1275 = vrot.lane.b32.xlu0 %v1032, 33
    %v1276 = vpop.permute.xlu0 %1275
    %1277 = vrot.lane.b32.xlu0 %v1033, 33
    %v1278 = vpop.permute.xlu0 %1277
    %1279 = vrot.lane.b32.xlu0 %v1034, 33
    %v1280 = vpop.permute.xlu0 %1279
    %1281 = vrot.lane.b32.xlu0 %v1035, 33
    %v1282 = vpop.permute.xlu0 %1281
    %vm1283 = vcmask 269312
    %v1284 = vsel %vm1283, %v1264, %v1266
    %v1285 = vsel %vm1283, %v1266, %v1268
    %v1286 = vsel %vm1283, %v1268, %v1270
    %v1287 = vsel %vm1283, %v1270, %v1272
    %v1288 = vsel %vm1283, %v1274, %v1276
    %v1289 = vsel %vm1283, %v1276, %v1278
    %v1290 = vsel %vm1283, %v1278, %v1280
    %v1291 = vsel %vm1283, %v1280, %v1282
    %v1297 = vsel %vm1080, %v1262, 0
    %v1299 = vsel %vm1084, %v1288, 0
    %v1301 = vsel %vm1084, %v1289, 0
    %v1303 = vsel %vm1084, %v1290, 0
    %v1305 = vsel %vm1084, %v1291, 0
    %1307 = vmatprep.subr.mxu0 %v1285
    %1308 = vmatpush1.msra.mxu0 %v1284
    %1309 = vmatprep.subr.mxu0 %v1301
    %1310 = vmatpush1.msra.mxu0 %v1299
    %1311 = vmatprep.subr.mxu0 0.0
    %1312 = vmatpush1.msra.mxu0 0.0
    %1313 = vmatprep.subr.mxu0 0.0
    %1314 = vmatpush1.msra.mxu0 0.0
    %1315 = vmatprep.subr.mxu0 0.0
    %1316 = vmatpush1.msra.mxu0 0.0
    %1317 = vmatprep.subr.mxu0 0.0
    %1318 = vmatpush1.msra.mxu0 0.0
    %1319 = vmatprep.subr.mxu0 0.0
    %1320 = vmatpush1.msra.mxu0 0.0
    %1321 = vmatprep.subr.mxu0 0.0
    %1322 = vmatpush1.msra.mxu0 0.0
    %1323 = vmatprep.subr.mxu0 0.0
    %1324 = vmatpush1.msra.mxu0 0.0
    %1325 = vmatprep.subr.mxu0 0.0
    %1326 = vmatpush1.msra.mxu0 0.0
    %1327 = vmatprep.subr.mxu0 0.0
    %1328 = vmatpush1.msra.mxu0 0.0
    %1329 = vmatprep.subr.mxu0 0.0
    %1330 = vmatpush1.msra.mxu0 0.0
    %1331 = vmatprep.subr.mxu0 0.0
    %1332 = vmatpush1.msra.mxu0 0.0
    %1333 = vmatprep.subr.mxu0 0.0
    %1334 = vmatpush1.msra.mxu0 0.0
    %1335 = vmatprep.subr.mxu0 0.0
    %1336 = vmatpush1.msra.mxu0 0.0
    %1337 = vmatprep.subr.mxu0 0.0
    %1338 = vmatpush1.msra.mxu0 0.0
    %1339 = vmatprep.subr.mxu0 0.0
    %1340 = vmatpush1.msra.mxu0 0.0
    %1341 = vmatprep.subr.mxu0 0.0
    %1342 = vmatpush1.msra.mxu0 0.0
    %1343 = vmatprep.subr.mxu0 0.0
    %1344 = vmatpush1.msra.mxu0 0.0
    %1345 = vmatprep.subr.mxu0 0.0
    %1346 = vmatpush1.msra.mxu0 0.0
    %1347 = vmatprep.subr.mxu0 0.0
    %1348 = vmatpush1.msra.mxu0 0.0
    %1349 = vmatprep.subr.mxu0 0.0
    %1350 = vmatpush1.msra.mxu0 0.0
    %1351 = vmatprep.subr.mxu0 0.0
    %1352 = vmatpush1.msra.mxu0 0.0
    %1353 = vmatprep.subr.mxu0 0.0
    %1354 = vmatpush1.msra.mxu0 0.0
    %1355 = vmatprep.subr.mxu0 0.0
    %1356 = vmatpush1.msra.mxu0 0.0
    %1357 = vmatprep.subr.mxu0 0.0
    %1358 = vmatpush1.msra.mxu0 0.0
    %1359 = vmatprep.subr.mxu0 0.0
    %1360 = vmatpush1.msra.mxu0 0.0
    %1361 = vmatprep.subr.mxu0 0.0
    %1362 = vmatpush1.msra.mxu0 0.0
    %1363 = vmatprep.subr.mxu0 0.0
    %1364 = vmatpush1.msra.mxu0 0.0
    %1365 = vmatprep.subr.mxu0 0.0
    %1366 = vmatpush1.msra.mxu0 0.0
    %1367 = vmatprep.subr.mxu0 0.0
    %1368 = vmatpush1.msra.mxu0 0.0
    %1369 = vmatprep.subr.mxu0 0.0
    %1370 = vmatpush1.msra.mxu0 0.0
    %1371 = vmatprep.mubr.f32.mxu0 0.0
    %1372 = vmatmul.mubr.f32.gmra.mrb[0].mxu0 %v1297
    %v1373 = vpop.f32.mrb[0].mxu0
    %v1374 = vadd.f32 0.0, %v1373
    %v1375 = vpop.f32.mrb[0].mxu0
    %v1376 = vadd.f32 0.0, %v1375
    %1377 = vdwg.mxu0
    %1378 = vmatprep.subr.mxu0 %v1287
    %1379 = vmatpush1.msra.mxu0 %v1286
    %1380 = vmatprep.subr.mxu0 %v1305
    %1381 = vmatpush1.msra.mxu0 %v1303
    %1382 = vmatprep.subr.mxu0 0.0
    %1383 = vmatpush1.msra.mxu0 0.0
    %1384 = vmatprep.subr.mxu0 0.0
    %1385 = vmatpush1.msra.mxu0 0.0
    %1386 = vmatprep.subr.mxu0 0.0
    %1387 = vmatpush1.msra.mxu0 0.0
    %1388 = vmatprep.subr.mxu0 0.0
    %1389 = vmatpush1.msra.mxu0 0.0
    %1390 = vmatprep.subr.mxu0 0.0
    %1391 = vmatpush1.msra.mxu0 0.0
    %1392 = vmatprep.subr.mxu0 0.0
    %1393 = vmatpush1.msra.mxu0 0.0
    %1394 = vmatprep.subr.mxu0 0.0
    %1395 = vmatpush1.msra.mxu0 0.0
    %1396 = vmatprep.subr.mxu0 0.0
    %1397 = vmatpush1.msra.mxu0 0.0
    %1398 = vmatprep.subr.mxu0 0.0
    %1399 = vmatpush1.msra.mxu0 0.0
    %1400 = vmatprep.subr.mxu0 0.0
    %1401 = vmatpush1.msra.mxu0 0.0
    %1402 = vmatprep.subr.mxu0 0.0
    %1403 = vmatpush1.msra.mxu0 0.0
    %1404 = vmatprep.subr.mxu0 0.0
    %1405 = vmatpush1.msra.mxu0 0.0
    %1406 = vmatprep.subr.mxu0 0.0
    %1407 = vmatpush1.msra.mxu0 0.0
    %1408 = vmatprep.subr.mxu0 0.0
    %1409 = vmatpush1.msra.mxu0 0.0
    %1410 = vmatprep.subr.mxu0 0.0
    %1411 = vmatpush1.msra.mxu0 0.0
    %1412 = vmatprep.subr.mxu0 0.0
    %1413 = vmatpush1.msra.mxu0 0.0
    %1414 = vmatprep.subr.mxu0 0.0
    %1415 = vmatpush1.msra.mxu0 0.0
    %1416 = vmatprep.subr.mxu0 0.0
    %1417 = vmatpush1.msra.mxu0 0.0
    %1418 = vmatprep.subr.mxu0 0.0
    %1419 = vmatpush1.msra.mxu0 0.0
    %1420 = vmatprep.subr.mxu0 0.0
    %1421 = vmatpush1.msra.mxu0 0.0
    %1422 = vmatprep.subr.mxu0 0.0
    %1423 = vmatpush1.msra.mxu0 0.0
    %1424 = vmatprep.subr.mxu0 0.0
    %1425 = vmatpush1.msra.mxu0 0.0
    %1426 = vmatprep.subr.mxu0 0.0
    %1427 = vmatpush1.msra.mxu0 0.0
    %1428 = vmatprep.subr.mxu0 0.0
    %1429 = vmatpush1.msra.mxu0 0.0
    %1430 = vmatprep.subr.mxu0 0.0
    %1431 = vmatpush1.msra.mxu0 0.0
    %1432 = vmatprep.subr.mxu0 0.0
    %1433 = vmatpush1.msra.mxu0 0.0
    %1434 = vmatprep.subr.mxu0 0.0
    %1435 = vmatpush1.msra.mxu0 0.0
    %1436 = vmatprep.subr.mxu0 0.0
    %1437 = vmatpush1.msra.mxu0 0.0
    %1438 = vmatprep.subr.mxu0 0.0
    %1439 = vmatpush1.msra.mxu0 0.0
    %1440 = vmatprep.subr.mxu0 0.0
    %1441 = vmatpush1.msra.mxu0 0.0
    %1442 = vmatprep.mubr.f32.mxu0 0.0
    %1443 = vmatmul.mubr.f32.gmra.mrb[0].mxu0 %v1297
    %v1444 = vpop.f32.mrb[0].mxu0
    %v1445 = vadd.f32 0.0, %v1444
    %v1446 = vpop.f32.mrb[0].mxu0
    %v1447 = vadd.f32 0.0, %v1446
    %1448 = vdwg.mxu0
    %s1449 = scalar_lea.vmem %s7, 1
    %v1450 = vld [vmem:[%s1449] ss:$8 sm:$0xf]
    %v1452 = vlaneseq
    %v1453 = vshrl.u32 %v1452, 7
    %v1454 = vsub.s32 0, %v1453
    %v1455 = vrot.slane %v1450, %v1454
    %v1456 = vlaneseq
    %v1457 = vshrl.u32 %v1456, 7
    %v1458 = vsub.s32 1, %v1457
    %v1459 = vrot.slane %v1450, %v1458
    %v1460 = vlaneseq
    %v1461 = vshrl.u32 %v1460, 7
    %v1462 = vsub.s32 2, %v1461
    %v1463 = vrot.slane %v1450, %v1462
    %v1464 = vlaneseq
    %v1465 = vshrl.u32 %v1464, 7
    %v1466 = vsub.s32 3, %v1465
    %v1467 = vrot.slane %v1450, %v1466
    %v1472 = vmul.f32 %v1374, %v1455
    %v1473 = vmul.f32 %v1376, %v1459
    %v1474 = vmul.f32 %v1445, %v1463
    %v1475 = vmul.f32 %v1447, %v1467
    %v1476 = vadd.f32 %v1257, %v1472
    %v1477 = vadd.f32 %v1258, %v1473
    %v1478 = vadd.f32 %v1259, %v1474
    %v1479 = vadd.f32 %v1260, %v1475
    %s1480 = scalar_lea.vmem %s4, 16
    %v1481 = vld [vmem:[%s1480] sm:$0xff]
    %1482 = vrot.lane.b32.xlu0 %v1030, 32
    %v1483 = vpop.permute.xlu0 %1482
    %1484 = vrot.lane.b32.xlu0 %v1026, 32
    %v1485 = vpop.permute.xlu0 %1484
    %1486 = vrot.lane.b32.xlu0 %v1027, 32
    %v1487 = vpop.permute.xlu0 %1486
    %1488 = vrot.lane.b32.xlu0 %v1028, 32
    %v1489 = vpop.permute.xlu0 %1488
    %1490 = vrot.lane.b32.xlu0 %v1029, 32
    %v1491 = vpop.permute.xlu0 %1490
    %1492 = vrot.lane.b32.xlu0 %v1031, 32
    %v1493 = vpop.permute.xlu0 %1492
    %1494 = vrot.lane.b32.xlu0 %v1032, 32
    %v1495 = vpop.permute.xlu0 %1494
    %1496 = vrot.lane.b32.xlu0 %v1033, 32
    %v1497 = vpop.permute.xlu0 %1496
    %1498 = vrot.lane.b32.xlu0 %v1034, 32
    %v1499 = vpop.permute.xlu0 %1498
    %1500 = vrot.lane.b32.xlu0 %v1035, 32
    %v1501 = vpop.permute.xlu0 %1500
    %vm1502 = vcmask 261120
    %v1503 = vsel %vm1502, %v1483, %v1485
    %v1504 = vsel %vm1502, %v1485, %v1487
    %v1505 = vsel %vm1502, %v1487, %v1489
    %v1506 = vsel %vm1502, %v1489, %v1491
    %v1507 = vsel %vm1502, %v1493, %v1495
    %v1508 = vsel %vm1502, %v1495, %v1497
    %v1509 = vsel %vm1502, %v1497, %v1499
    %v1510 = vsel %vm1502, %v1499, %v1501
    %v1516 = vsel %vm1080, %v1481, 0
    %v1518 = vsel %vm1084, %v1507, 0
    %v1520 = vsel %vm1084, %v1508, 0
    %v1522 = vsel %vm1084, %v1509, 0
    %v1524 = vsel %vm1084, %v1510, 0
    %1526 = vmatprep.subr.mxu0 %v1504
    %1527 = vmatpush1.msra.mxu0 %v1503
    %1528 = vmatprep.subr.mxu0 %v1520
    %1529 = vmatpush1.msra.mxu0 %v1518
    %1530 = vmatprep.subr.mxu0 0.0
    %1531 = vmatpush1.msra.mxu0 0.0
    %1532 = vmatprep.subr.mxu0 0.0
    %1533 = vmatpush1.msra.mxu0 0.0
    %1534 = vmatprep.subr.mxu0 0.0
    %1535 = vmatpush1.msra.mxu0 0.0
    %1536 = vmatprep.subr.mxu0 0.0
    %1537 = vmatpush1.msra.mxu0 0.0
    %1538 = vmatprep.subr.mxu0 0.0
    %1539 = vmatpush1.msra.mxu0 0.0
    %1540 = vmatprep.subr.mxu0 0.0
    %1541 = vmatpush1.msra.mxu0 0.0
    %1542 = vmatprep.subr.mxu0 0.0
    %1543 = vmatpush1.msra.mxu0 0.0
    %1544 = vmatprep.subr.mxu0 0.0
    %1545 = vmatpush1.msra.mxu0 0.0
    %1546 = vmatprep.subr.mxu0 0.0
    %1547 = vmatpush1.msra.mxu0 0.0
    %1548 = vmatprep.subr.mxu0 0.0
    %1549 = vmatpush1.msra.mxu0 0.0
    %1550 = vmatprep.subr.mxu0 0.0
    %1551 = vmatpush1.msra.mxu0 0.0
    %1552 = vmatprep.subr.mxu0 0.0
    %1553 = vmatpush1.msra.mxu0 0.0
    %1554 = vmatprep.subr.mxu0 0.0
    %1555 = vmatpush1.msra.mxu0 0.0
    %1556 = vmatprep.subr.mxu0 0.0
    %1557 = vmatpush1.msra.mxu0 0.0
    %1558 = vmatprep.subr.mxu0 0.0
    %1559 = vmatpush1.msra.mxu0 0.0
    %1560 = vmatprep.subr.mxu0 0.0
    %1561 = vmatpush1.msra.mxu0 0.0
    %1562 = vmatprep.subr.mxu0 0.0
    %1563 = vmatpush1.msra.mxu0 0.0
    %1564 = vmatprep.subr.mxu0 0.0
    %1565 = vmatpush1.msra.mxu0 0.0
    %1566 = vmatprep.subr.mxu0 0.0
    %1567 = vmatpush1.msra.mxu0 0.0
    %1568 = vmatprep.subr.mxu0 0.0
    %1569 = vmatpush1.msra.mxu0 0.0
    %1570 = vmatprep.subr.mxu0 0.0
    %1571 = vmatpush1.msra.mxu0 0.0
    %1572 = vmatprep.subr.mxu0 0.0
    %1573 = vmatpush1.msra.mxu0 0.0
    %1574 = vmatprep.subr.mxu0 0.0
    %1575 = vmatpush1.msra.mxu0 0.0
    %1576 = vmatprep.subr.mxu0 0.0
    %1577 = vmatpush1.msra.mxu0 0.0
    %1578 = vmatprep.subr.mxu0 0.0
    %1579 = vmatpush1.msra.mxu0 0.0
    %1580 = vmatprep.subr.mxu0 0.0
    %1581 = vmatpush1.msra.mxu0 0.0
    %1582 = vmatprep.subr.mxu0 0.0
    %1583 = vmatpush1.msra.mxu0 0.0
    %1584 = vmatprep.subr.mxu0 0.0
    %1585 = vmatpush1.msra.mxu0 0.0
    %1586 = vmatprep.subr.mxu0 0.0
    %1587 = vmatpush1.msra.mxu0 0.0
    %1588 = vmatprep.subr.mxu0 0.0
    %1589 = vmatpush1.msra.mxu0 0.0
    %1590 = vmatprep.mubr.f32.mxu0 0.0
    %1591 = vmatmul.mubr.f32.gmra.mrb[0].mxu0 %v1516
    %v1592 = vpop.f32.mrb[0].mxu0
    %v1593 = vadd.f32 0.0, %v1592
    %v1594 = vpop.f32.mrb[0].mxu0
    %v1595 = vadd.f32 0.0, %v1594
    %1596 = vdwg.mxu0
    %1597 = vmatprep.subr.mxu0 %v1506
    %1598 = vmatpush1.msra.mxu0 %v1505
    %1599 = vmatprep.subr.mxu0 %v1524
    %1600 = vmatpush1.msra.mxu0 %v1522
    %1601 = vmatprep.subr.mxu0 0.0
    %1602 = vmatpush1.msra.mxu0 0.0
    %1603 = vmatprep.subr.mxu0 0.0
    %1604 = vmatpush1.msra.mxu0 0.0
    %1605 = vmatprep.subr.mxu0 0.0
    %1606 = vmatpush1.msra.mxu0 0.0
    %1607 = vmatprep.subr.mxu0 0.0
    %1608 = vmatpush1.msra.mxu0 0.0
    %1609 = vmatprep.subr.mxu0 0.0
    %1610 = vmatpush1.msra.mxu0 0.0
    %1611 = vmatprep.subr.mxu0 0.0
    %1612 = vmatpush1.msra.mxu0 0.0
    %1613 = vmatprep.subr.mxu0 0.0
    %1614 = vmatpush1.msra.mxu0 0.0
    %1615 = vmatprep.subr.mxu0 0.0
    %1616 = vmatpush1.msra.mxu0 0.0
    %1617 = vmatprep.subr.mxu0 0.0
    %1618 = vmatpush1.msra.mxu0 0.0
    %1619 = vmatprep.subr.mxu0 0.0
    %1620 = vmatpush1.msra.mxu0 0.0
    %1621 = vmatprep.subr.mxu0 0.0
    %1622 = vmatpush1.msra.mxu0 0.0
    %1623 = vmatprep.subr.mxu0 0.0
    %1624 = vmatpush1.msra.mxu0 0.0
    %1625 = vmatprep.subr.mxu0 0.0
    %1626 = vmatpush1.msra.mxu0 0.0
    %1627 = vmatprep.subr.mxu0 0.0
    %1628 = vmatpush1.msra.mxu0 0.0
    %1629 = vmatprep.subr.mxu0 0.0
    %1630 = vmatpush1.msra.mxu0 0.0
    %1631 = vmatprep.subr.mxu0 0.0
    %1632 = vmatpush1.msra.mxu0 0.0
    %1633 = vmatprep.subr.mxu0 0.0
    %1634 = vmatpush1.msra.mxu0 0.0
    %1635 = vmatprep.subr.mxu0 0.0
    %1636 = vmatpush1.msra.mxu0 0.0
    %1637 = vmatprep.subr.mxu0 0.0
    %1638 = vmatpush1.msra.mxu0 0.0
    %1639 = vmatprep.subr.mxu0 0.0
    %1640 = vmatpush1.msra.mxu0 0.0
    %1641 = vmatprep.subr.mxu0 0.0
    %1642 = vmatpush1.msra.mxu0 0.0
    %1643 = vmatprep.subr.mxu0 0.0
    %1644 = vmatpush1.msra.mxu0 0.0
    %1645 = vmatprep.subr.mxu0 0.0
    %1646 = vmatpush1.msra.mxu0 0.0
    %1647 = vmatprep.subr.mxu0 0.0
    %1648 = vmatpush1.msra.mxu0 0.0
    %1649 = vmatprep.subr.mxu0 0.0
    %1650 = vmatpush1.msra.mxu0 0.0
    %1651 = vmatprep.subr.mxu0 0.0
    %1652 = vmatpush1.msra.mxu0 0.0
    %1653 = vmatprep.subr.mxu0 0.0
    %1654 = vmatpush1.msra.mxu0 0.0
    %1655 = vmatprep.subr.mxu0 0.0
    %1656 = vmatpush1.msra.mxu0 0.0
    %1657 = vmatprep.subr.mxu0 0.0
    %1658 = vmatpush1.msra.mxu0 0.0
    %1659 = vmatprep.subr.mxu0 0.0
    %1660 = vmatpush1.msra.mxu0 0.0
    %1661 = vmatprep.mubr.f32.mxu0 0.0
    %1662 = vmatmul.mubr.f32.gmra.mrb[0].mxu0 %v1516
    %v1663 = vpop.f32.mrb[0].mxu0
    %v1664 = vadd.f32 0.0, %v1663
    %v1665 = vpop.f32.mrb[0].mxu0
    %v1666 = vadd.f32 0.0, %v1665
    %1667 = vdwg.mxu0
    %s1668 = scalar_lea.vmem %s7, 2
    %v1669 = vld [vmem:[%s1668] ss:$8 sm:$0xf]
    %v1671 = vlaneseq
    %v1672 = vshrl.u32 %v1671, 7
    %v1673 = vsub.s32 0, %v1672
    %v1674 = vrot.slane %v1669, %v1673
    %v1675 = vlaneseq
    %v1676 = vshrl.u32 %v1675, 7
    %v1677 = vsub.s32 1, %v1676
    %v1678 = vrot.slane %v1669, %v1677
    %v1679 = vlaneseq
    %v1680 = vshrl.u32 %v1679, 7
    %v1681 = vsub.s32 2, %v1680
    %v1682 = vrot.slane %v1669, %v1681
    %v1683 = vlaneseq
    %v1684 = vshrl.u32 %v1683, 7
    %v1685 = vsub.s32 3, %v1684
    %v1686 = vrot.slane %v1669, %v1685
    %v1691 = vmul.f32 %v1593, %v1674
    %v1692 = vmul.f32 %v1595, %v1678
    %v1693 = vmul.f32 %v1664, %v1682
    %v1694 = vmul.f32 %v1666, %v1686
    %v1695 = vadd.f32 %v1476, %v1691
    %v1696 = vadd.f32 %v1477, %v1692
    %v1697 = vadd.f32 %v1478, %v1693
    %v1698 = vadd.f32 %v1479, %v1694
    %s1699 = scalar_lea.vmem %s4, 24
    %v1700 = vld [vmem:[%s1699] sm:$0xff]
    %1701 = vrot.lane.b32.xlu0 %v1030, 31
    %v1702 = vpop.permute.xlu0 %1701
    %1703 = vrot.lane.b32.xlu0 %v1026, 31
    %v1704 = vpop.permute.xlu0 %1703
    %1705 = vrot.lane.b32.xlu0 %v1027, 31
    %v1706 = vpop.permute.xlu0 %1705
    %1707 = vrot.lane.b32.xlu0 %v1028, 31
    %v1708 = vpop.permute.xlu0 %1707
    %1709 = vrot.lane.b32.xlu0 %v1029, 31
    %v1710 = vpop.permute.xlu0 %1709
    %1711 = vrot.lane.b32.xlu0 %v1031, 31
    %v1712 = vpop.permute.xlu0 %1711
    %1713 = vrot.lane.b32.xlu0 %v1032, 31
    %v1714 = vpop.permute.xlu0 %1713
    %1715 = vrot.lane.b32.xlu0 %v1033, 31
    %v1716 = vpop.permute.xlu0 %1715
    %1717 = vrot.lane.b32.xlu0 %v1034, 31
    %v1718 = vpop.permute.xlu0 %1717
    %1719 = vrot.lane.b32.xlu0 %v1035, 31
    %v1720 = vpop.permute.xlu0 %1719
    %vm1721 = vcmask 252928
    %v1722 = vsel %vm1721, %v1702, %v1704
    %v1723 = vsel %vm1721, %v1704, %v1706
    %v1724 = vsel %vm1721, %v1706, %v1708
    %v1725 = vsel %vm1721, %v1708, %v1710
    %v1726 = vsel %vm1721, %v1712, %v1714
    %v1727 = vsel %vm1721, %v1714, %v1716
    %v1728 = vsel %vm1721, %v1716, %v1718
    %v1729 = vsel %vm1721, %v1718, %v1720
    %v1735 = vsel %vm1080, %v1700, 0
    %v1737 = vsel %vm1084, %v1726, 0
    %v1739 = vsel %vm1084, %v1727, 0
    %v1741 = vsel %vm1084, %v1728, 0
    %v1743 = vsel %vm1084, %v1729, 0
    %1745 = vmatprep.subr.mxu0 %v1723
    %1746 = vmatpush1.msra.mxu0 %v1722
    %1747 = vmatprep.subr.mxu0 %v1739
    %1748 = vmatpush1.msra.mxu0 %v1737
    %1749 = vmatprep.subr.mxu0 0.0
    %1750 = vmatpush1.msra.mxu0 0.0
    %1751 = vmatprep.subr.mxu0 0.0
    %1752 = vmatpush1.msra.mxu0 0.0
    %1753 = vmatprep.subr.mxu0 0.0
    %1754 = vmatpush1.msra.mxu0 0.0
    %1755 = vmatprep.subr.mxu0 0.0
    %1756 = vmatpush1.msra.mxu0 0.0
    %1757 = vmatprep.subr.mxu0 0.0
    %1758 = vmatpush1.msra.mxu0 0.0
    %1759 = vmatprep.subr.mxu0 0.0
    %1760 = vmatpush1.msra.mxu0 0.0
    %1761 = vmatprep.subr.mxu0 0.0
    %1762 = vmatpush1.msra.mxu0 0.0
    %1763 = vmatprep.subr.mxu0 0.0
    %1764 = vmatpush1.msra.mxu0 0.0
    %1765 = vmatprep.subr.mxu0 0.0
    %1766 = vmatpush1.msra.mxu0 0.0
    %1767 = vmatprep.subr.mxu0 0.0
    %1768 = vmatpush1.msra.mxu0 0.0
    %1769 = vmatprep.subr.mxu0 0.0
    %1770 = vmatpush1.msra.mxu0 0.0
    %1771 = vmatprep.subr.mxu0 0.0
    %1772 = vmatpush1.msra.mxu0 0.0
    %1773 = vmatprep.subr.mxu0 0.0
    %1774 = vmatpush1.msra.mxu0 0.0
    %1775 = vmatprep.subr.mxu0 0.0
    %1776 = vmatpush1.msra.mxu0 0.0
    %1777 = vmatprep.subr.mxu0 0.0
    %1778 = vmatpush1.msra.mxu0 0.0
    %1779 = vmatprep.subr.mxu0 0.0
    %1780 = vmatpush1.msra.mxu0 0.0
    %1781 = vmatprep.subr.mxu0 0.0
    %1782 = vmatpush1.msra.mxu0 0.0
    %1783 = vmatprep.subr.mxu0 0.0
    %1784 = vmatpush1.msra.mxu0 0.0
    %1785 = vmatprep.subr.mxu0 0.0
    %1786 = vmatpush1.msra.mxu0 0.0
    %1787 = vmatprep.subr.mxu0 0.0
    %1788 = vmatpush1.msra.mxu0 0.0
    %1789 = vmatprep.subr.mxu0 0.0
    %1790 = vmatpush1.msra.mxu0 0.0
    %1791 = vmatprep.subr.mxu0 0.0
    %1792 = vmatpush1.msra.mxu0 0.0
    %1793 = vmatprep.subr.mxu0 0.0
    %1794 = vmatpush1.msra.mxu0 0.0
    %1795 = vmatprep.subr.mxu0 0.0
    %1796 = vmatpush1.msra.mxu0 0.0
    %1797 = vmatprep.subr.mxu0 0.0
    %1798 = vmatpush1.msra.mxu0 0.0
    %1799 = vmatprep.subr.mxu0 0.0
    %1800 = vmatpush1.msra.mxu0 0.0
    %1801 = vmatprep.subr.mxu0 0.0
    %1802 = vmatpush1.msra.mxu0 0.0
    %1803 = vmatprep.subr.mxu0 0.0
    %1804 = vmatpush1.msra.mxu0 0.0
    %1805 = vmatprep.subr.mxu0 0.0
    %1806 = vmatpush1.msra.mxu0 0.0
    %1807 = vmatprep.subr.mxu0 0.0
    %1808 = vmatpush1.msra.mxu0 0.0
    %1809 = vmatprep.mubr.f32.mxu0 0.0
    %1810 = vmatmul.mubr.f32.gmra.mrb[0].mxu0 %v1735
    %v1811 = vpop.f32.mrb[0].mxu0
    %v1812 = vadd.f32 0.0, %v1811
    %v1813 = vpop.f32.mrb[0].mxu0
    %v1814 = vadd.f32 0.0, %v1813
    %1815 = vdwg.mxu0
    %1816 = vmatprep.subr.mxu0 %v1725
    %1817 = vmatpush1.msra.mxu0 %v1724
    %1818 = vmatprep.subr.mxu0 %v1743
    %1819 = vmatpush1.msra.mxu0 %v1741
    %1820 = vmatprep.subr.mxu0 0.0
    %1821 = vmatpush1.msra.mxu0 0.0
    %1822 = vmatprep.subr.mxu0 0.0
    %1823 = vmatpush1.msra.mxu0 0.0
    %1824 = vmatprep.subr.mxu0 0.0
    %1825 = vmatpush1.msra.mxu0 0.0
    %1826 = vmatprep.subr.mxu0 0.0
    %1827 = vmatpush1.msra.mxu0 0.0
    %1828 = vmatprep.subr.mxu0 0.0
    %1829 = vmatpush1.msra.mxu0 0.0
    %1830 = vmatprep.subr.mxu0 0.0
    %1831 = vmatpush1.msra.mxu0 0.0
    %1832 = vmatprep.subr.mxu0 0.0
    %1833 = vmatpush1.msra.mxu0 0.0
    %1834 = vmatprep.subr.mxu0 0.0
    %1835 = vmatpush1.msra.mxu0 0.0
    %1836 = vmatprep.subr.mxu0 0.0
    %1837 = vmatpush1.msra.mxu0 0.0
    %1838 = vmatprep.subr.mxu0 0.0
    %1839 = vmatpush1.msra.mxu0 0.0
    %1840 = vmatprep.subr.mxu0 0.0
    %1841 = vmatpush1.msra.mxu0 0.0
    %1842 = vmatprep.subr.mxu0 0.0
    %1843 = vmatpush1.msra.mxu0 0.0
    %1844 = vmatprep.subr.mxu0 0.0
    %1845 = vmatpush1.msra.mxu0 0.0
    %1846 = vmatprep.subr.mxu0 0.0
    %1847 = vmatpush1.msra.mxu0 0.0
    %1848 = vmatprep.subr.mxu0 0.0
    %1849 = vmatpush1.msra.mxu0 0.0
    %1850 = vmatprep.subr.mxu0 0.0
    %1851 = vmatpush1.msra.mxu0 0.0
    %1852 = vmatprep.subr.mxu0 0.0
    %1853 = vmatpush1.msra.mxu0 0.0
    %1854 = vmatprep.subr.mxu0 0.0
    %1855 = vmatpush1.msra.mxu0 0.0
    %1856 = vmatprep.subr.mxu0 0.0
    %1857 = vmatpush1.msra.mxu0 0.0
    %1858 = vmatprep.subr.mxu0 0.0
    %1859 = vmatpush1.msra.mxu0 0.0
    %1860 = vmatprep.subr.mxu0 0.0
    %1861 = vmatpush1.msra.mxu0 0.0
    %1862 = vmatprep.subr.mxu0 0.0
    %1863 = vmatpush1.msra.mxu0 0.0
    %1864 = vmatprep.subr.mxu0 0.0
    %1865 = vmatpush1.msra.mxu0 0.0
    %1866 = vmatprep.subr.mxu0 0.0
    %1867 = vmatpush1.msra.mxu0 0.0
    %1868 = vmatprep.subr.mxu0 0.0
    %1869 = vmatpush1.msra.mxu0 0.0
    %1870 = vmatprep.subr.mxu0 0.0
    %1871 = vmatpush1.msra.mxu0 0.0
    %1872 = vmatprep.subr.mxu0 0.0
    %1873 = vmatpush1.msra.mxu0 0.0
    %1874 = vmatprep.subr.mxu0 0.0
    %1875 = vmatpush1.msra.mxu0 0.0
    %1876 = vmatprep.subr.mxu0 0.0
    %1877 = vmatpush1.msra.mxu0 0.0
    %1878 = vmatprep.subr.mxu0 0.0
    %1879 = vmatpush1.msra.mxu0 0.0
    %1880 = vmatprep.mubr.f32.mxu0 0.0
    %1881 = vmatmul.mubr.f32.gmra.mrb[0].mxu0 %v1735
    %v1882 = vpop.f32.mrb[0].mxu0
    %v1883 = vadd.f32 0.0, %v1882
    %v1884 = vpop.f32.mrb[0].mxu0
    %v1885 = vadd.f32 0.0, %v1884
    %1886 = vdwg.mxu0
    %s1887 = scalar_lea.vmem %s7, 3
    %v1888 = vld [vmem:[%s1887] ss:$8 sm:$0xf]
    %v1890 = vlaneseq
    %v1891 = vshrl.u32 %v1890, 7
    %v1892 = vsub.s32 0, %v1891
    %v1893 = vrot.slane %v1888, %v1892
    %v1894 = vlaneseq
    %v1895 = vshrl.u32 %v1894, 7
    %v1896 = vsub.s32 1, %v1895
    %v1897 = vrot.slane %v1888, %v1896
    %v1898 = vlaneseq
    %v1899 = vshrl.u32 %v1898, 7
    %v1900 = vsub.s32 2, %v1899
    %v1901 = vrot.slane %v1888, %v1900
    %v1902 = vlaneseq
    %v1903 = vshrl.u32 %v1902, 7
    %v1904 = vsub.s32 3, %v1903
    %v1905 = vrot.slane %v1888, %v1904
    %v1910 = vmul.f32 %v1812, %v1893
    %v1911 = vmul.f32 %v1814, %v1897
    %v1912 = vmul.f32 %v1883, %v1901
    %v1913 = vmul.f32 %v1885, %v1905
    %v1914 = vadd.f32 %v1695, %v1910
    %v1915 = vadd.f32 %v1696, %v1911
    %v1916 = vadd.f32 %v1697, %v1912
    %v1917 = vadd.f32 %v1698, %v1913
    %s1918 = scalar_lea.vmem %s4, 32
    %v1919 = vld [vmem:[%s1918] sm:$0xff]
    %1920 = vrot.lane.b32.xlu0 %v1030, 30
    %v1921 = vpop.permute.xlu0 %1920
    %1922 = vrot.lane.b32.xlu0 %v1026, 30
    %v1923 = vpop.permute.xlu0 %1922
    %1924 = vrot.lane.b32.xlu0 %v1027, 30
    %v1925 = vpop.permute.xlu0 %1924
    %1926 = vrot.lane.b32.xlu0 %v1028, 30
    %v1927 = vpop.permute.xlu0 %1926
    %1928 = vrot.lane.b32.xlu0 %v1029, 30
    %v1929 = vpop.permute.xlu0 %1928
    %1930 = vrot.lane.b32.xlu0 %v1031, 30
    %v1931 = vpop.permute.xlu0 %1930
    %1932 = vrot.lane.b32.xlu0 %v1032, 30
    %v1933 = vpop.permute.xlu0 %1932
    %1934 = vrot.lane.b32.xlu0 %v1033, 30
    %v1935 = vpop.permute.xlu0 %1934
    %1936 = vrot.lane.b32.xlu0 %v1034, 30
    %v1937 = vpop.permute.xlu0 %1936
    %1938 = vrot.lane.b32.xlu0 %v1035, 30
    %v1939 = vpop.permute.xlu0 %1938
    %vm1940 = vcmask 244736
    %v1941 = vsel %vm1940, %v1921, %v1923
    %v1942 = vsel %vm1940, %v1923, %v1925
    %v1943 = vsel %vm1940, %v1925, %v1927
    %v1944 = vsel %vm1940, %v1927, %v1929
    %v1945 = vsel %vm1940, %v1931, %v1933
    %v1946 = vsel %vm1940, %v1933, %v1935
    %v1947 = vsel %vm1940, %v1935, %v1937
    %v1948 = vsel %vm1940, %v1937, %v1939
    %v1954 = vsel %vm1080, %v1919, 0
    %v1956 = vsel %vm1084, %v1945, 0
    %v1958 = vsel %vm1084, %v1946, 0
    %v1960 = vsel %vm1084, %v1947, 0
    %v1962 = vsel %vm1084, %v1948, 0
    %1964 = vmatprep.subr.mxu0 %v1942
    %1965 = vmatpush1.msra.mxu0 %v1941
    %1966 = vmatprep.subr.mxu0 %v1958
    %1967 = vmatpush1.msra.mxu0 %v1956
    %1968 = vmatprep.subr.mxu0 0.0
    %1969 = vmatpush1.msra.mxu0 0.0
    %1970 = vmatprep.subr.mxu0 0.0
    %1971 = vmatpush1.msra.mxu0 0.0
    %1972 = vmatprep.subr.mxu0 0.0
    %1973 = vmatpush1.msra.mxu0 0.0
    %1974 = vmatprep.subr.mxu0 0.0
    %1975 = vmatpush1.msra.mxu0 0.0
    %1976 = vmatprep.subr.mxu0 0.0
    %1977 = vmatpush1.msra.mxu0 0.0
    %1978 = vmatprep.subr.mxu0 0.0
    %1979 = vmatpush1.msra.mxu0 0.0
    %1980 = vmatprep.subr.mxu0 0.0
    %1981 = vmatpush1.msra.mxu0 0.0
    %1982 = vmatprep.subr.mxu0 0.0
    %1983 = vmatpush1.msra.mxu0 0.0
    %1984 = vmatprep.subr.mxu0 0.0
    %1985 = vmatpush1.msra.mxu0 0.0
    %1986 = vmatprep.subr.mxu0 0.0
    %1987 = vmatpush1.msra.mxu0 0.0
    %1988 = vmatprep.subr.mxu0 0.0
    %1989 = vmatpush1.msra.mxu0 0.0
    %1990 = vmatprep.subr.mxu0 0.0
    %1991 = vmatpush1.msra.mxu0 0.0
    %1992 = vmatprep.subr.mxu0 0.0
    %1993 = vmatpush1.msra.mxu0 0.0
    %1994 = vmatprep.subr.mxu0 0.0
    %1995 = vmatpush1.msra.mxu0 0.0
    %1996 = vmatprep.subr.mxu0 0.0
    %1997 = vmatpush1.msra.mxu0 0.0
    %1998 = vmatprep.subr.mxu0 0.0
    %1999 = vmatpush1.msra.mxu0 0.0
    %2000 = vmatprep.subr.mxu0 0.0
    %2001 = vmatpush1.msra.mxu0 0.0
    %2002 = vmatprep.subr.mxu0 0.0
    %2003 = vmatpush1.msra.mxu0 0.0
    %2004 = vmatprep.subr.mxu0 0.0
    %2005 = vmatpush1.msra.mxu0 0.0
    %2006 = vmatprep.subr.mxu0 0.0
    %2007 = vmatpush1.msra.mxu0 0.0
    %2008 = vmatprep.subr.mxu0 0.0
    %2009 = vmatpush1.msra.mxu0 0.0
    %2010 = vmatprep.subr.mxu0 0.0
    %2011 = vmatpush1.msra.mxu0 0.0
    %2012 = vmatprep.subr.mxu0 0.0
    %2013 = vmatpush1.msra.mxu0 0.0
    %2014 = vmatprep.subr.mxu0 0.0
    %2015 = vmatpush1.msra.mxu0 0.0
    %2016 = vmatprep.subr.mxu0 0.0
    %2017 = vmatpush1.msra.mxu0 0.0
    %2018 = vmatprep.subr.mxu0 0.0
    %2019 = vmatpush1.msra.mxu0 0.0
    %2020 = vmatprep.subr.mxu0 0.0
    %2021 = vmatpush1.msra.mxu0 0.0
    %2022 = vmatprep.subr.mxu0 0.0
    %2023 = vmatpush1.msra.mxu0 0.0
    %2024 = vmatprep.subr.mxu0 0.0
    %2025 = vmatpush1.msra.mxu0 0.0
    %2026 = vmatprep.subr.mxu0 0.0
    %2027 = vmatpush1.msra.mxu0 0.0
    %2028 = vmatprep.mubr.f32.mxu0 0.0
    %2029 = vmatmul.mubr.f32.gmra.mrb[0].mxu0 %v1954
    %v2030 = vpop.f32.mrb[0].mxu0
    %v2031 = vadd.f32 0.0, %v2030
    %v2032 = vpop.f32.mrb[0].mxu0
    %v2033 = vadd.f32 0.0, %v2032
    %2034 = vdwg.mxu0
    %2035 = vmatprep.subr.mxu0 %v1944
    %2036 = vmatpush1.msra.mxu0 %v1943
    %2037 = vmatprep.subr.mxu0 %v1962
    %2038 = vmatpush1.msra.mxu0 %v1960
    %2039 = vmatprep.subr.mxu0 0.0
    %2040 = vmatpush1.msra.mxu0 0.0
    %2041 = vmatprep.subr.mxu0 0.0
    %2042 = vmatpush1.msra.mxu0 0.0
    %2043 = vmatprep.subr.mxu0 0.0
    %2044 = vmatpush1.msra.mxu0 0.0
    %2045 = vmatprep.subr.mxu0 0.0
    %2046 = vmatpush1.msra.mxu0 0.0
    %2047 = vmatprep.subr.mxu0 0.0
    %2048 = vmatpush1.msra.mxu0 0.0
    %2049 = vmatprep.subr.mxu0 0.0
    %2050 = vmatpush1.msra.mxu0 0.0
    %2051 = vmatprep.subr.mxu0 0.0
    %2052 = vmatpush1.msra.mxu0 0.0
    %2053 = vmatprep.subr.mxu0 0.0
    %2054 = vmatpush1.msra.mxu0 0.0
    %2055 = vmatprep.subr.mxu0 0.0
    %2056 = vmatpush1.msra.mxu0 0.0
    %2057 = vmatprep.subr.mxu0 0.0
    %2058 = vmatpush1.msra.mxu0 0.0
    %2059 = vmatprep.subr.mxu0 0.0
    %2060 = vmatpush1.msra.mxu0 0.0
    %2061 = vmatprep.subr.mxu0 0.0
    %2062 = vmatpush1.msra.mxu0 0.0
    %2063 = vmatprep.subr.mxu0 0.0
    %2064 = vmatpush1.msra.mxu0 0.0
    %2065 = vmatprep.subr.mxu0 0.0
    %2066 = vmatpush1.msra.mxu0 0.0
    %2067 = vmatprep.subr.mxu0 0.0
    %2068 = vmatpush1.msra.mxu0 0.0
    %2069 = vmatprep.subr.mxu0 0.0
    %2070 = vmatpush1.msra.mxu0 0.0
    %2071 = vmatprep.subr.mxu0 0.0
    %2072 = vmatpush1.msra.mxu0 0.0
    %2073 = vmatprep.subr.mxu0 0.0
    %2074 = vmatpush1.msra.mxu0 0.0
    %2075 = vmatprep.subr.mxu0 0.0
    %2076 = vmatpush1.msra.mxu0 0.0
    %2077 = vmatprep.subr.mxu0 0.0
    %2078 = vmatpush1.msra.mxu0 0.0
    %2079 = vmatprep.subr.mxu0 0.0
    %2080 = vmatpush1.msra.mxu0 0.0
    %2081 = vmatprep.subr.mxu0 0.0
    %2082 = vmatpush1.msra.mxu0 0.0
    %2083 = vmatprep.subr.mxu0 0.0
    %2084 = vmatpush1.msra.mxu0 0.0
    %2085 = vmatprep.subr.mxu0 0.0
    %2086 = vmatpush1.msra.mxu0 0.0
    %2087 = vmatprep.subr.mxu0 0.0
    %2088 = vmatpush1.msra.mxu0 0.0
    %2089 = vmatprep.subr.mxu0 0.0
    %2090 = vmatpush1.msra.mxu0 0.0
    %2091 = vmatprep.subr.mxu0 0.0
    %2092 = vmatpush1.msra.mxu0 0.0
    %2093 = vmatprep.subr.mxu0 0.0
    %2094 = vmatpush1.msra.mxu0 0.0
    %2095 = vmatprep.subr.mxu0 0.0
    %2096 = vmatpush1.msra.mxu0 0.0
    %2097 = vmatprep.subr.mxu0 0.0
    %2098 = vmatpush1.msra.mxu0 0.0
    %2099 = vmatprep.mubr.f32.mxu0 0.0
    %2100 = vmatmul.mubr.f32.gmra.mrb[0].mxu0 %v1954
    %v2101 = vpop.f32.mrb[0].mxu0
    %v2102 = vadd.f32 0.0, %v2101
    %v2103 = vpop.f32.mrb[0].mxu0
    %v2104 = vadd.f32 0.0, %v2103
    %2105 = vdwg.mxu0
    %s2106 = scalar_lea.vmem %s7, 4
    %v2107 = vld [vmem:[%s2106] ss:$8 sm:$0xf]
    %v2109 = vlaneseq
    %v2110 = vshrl.u32 %v2109, 7
    %v2111 = vsub.s32 0, %v2110
    %v2112 = vrot.slane %v2107, %v2111
    %v2113 = vlaneseq
    %v2114 = vshrl.u32 %v2113, 7
    %v2115 = vsub.s32 1, %v2114
    %v2116 = vrot.slane %v2107, %v2115
    %v2117 = vlaneseq
    %v2118 = vshrl.u32 %v2117, 7
    %v2119 = vsub.s32 2, %v2118
    %v2120 = vrot.slane %v2107, %v2119
    %v2121 = vlaneseq
    %v2122 = vshrl.u32 %v2121, 7
    %v2123 = vsub.s32 3, %v2122
    %v2124 = vrot.slane %v2107, %v2123
    %v2129 = vmul.f32 %v2031, %v2112
    %v2130 = vmul.f32 %v2033, %v2116
    %v2131 = vmul.f32 %v2102, %v2120
    %v2132 = vmul.f32 %v2104, %v2124
    %v2133 = vadd.f32 %v1914, %v2129
    %v2134 = vadd.f32 %v1915, %v2130
    %v2135 = vadd.f32 %v1916, %v2131
    %v2136 = vadd.f32 %v1917, %v2132
    %s2137 = scalar_lea.vmem %s4, 40
    %v2138 = vld [vmem:[%s2137] sm:$0xff]
    %2139 = vrot.lane.b32.xlu0 %v1030, 18
    %v2140 = vpop.permute.xlu0 %2139
    %2141 = vrot.lane.b32.xlu0 %v1026, 18
    %v2142 = vpop.permute.xlu0 %2141
    %2143 = vrot.lane.b32.xlu0 %v1027, 18
    %v2144 = vpop.permute.xlu0 %2143
    %2145 = vrot.lane.b32.xlu0 %v1028, 18
    %v2146 = vpop.permute.xlu0 %2145
    %2147 = vrot.lane.b32.xlu0 %v1029, 18
    %v2148 = vpop.permute.xlu0 %2147
    %2149 = vrot.lane.b32.xlu0 %v1031, 18
    %v2150 = vpop.permute.xlu0 %2149
    %2151 = vrot.lane.b32.xlu0 %v1032, 18
    %v2152 = vpop.permute.xlu0 %2151
    %2153 = vrot.lane.b32.xlu0 %v1033, 18
    %v2154 = vpop.permute.xlu0 %2153
    %2155 = vrot.lane.b32.xlu0 %v1034, 18
    %v2156 = vpop.permute.xlu0 %2155
    %2157 = vrot.lane.b32.xlu0 %v1035, 18
    %v2158 = vpop.permute.xlu0 %2157
    %vm2159 = vcmask 146432
    %v2160 = vsel %vm2159, %v2140, %v2142
    %v2161 = vsel %vm2159, %v2142, %v2144
    %v2162 = vsel %vm2159, %v2144, %v2146
    %v2163 = vsel %vm2159, %v2146, %v2148
    %v2164 = vsel %vm2159, %v2150, %v2152
    %v2165 = vsel %vm2159, %v2152, %v2154
    %v2166 = vsel %vm2159, %v2154, %v2156
    %v2167 = vsel %vm2159, %v2156, %v2158
    %v2173 = vsel %vm1080, %v2138, 0
    %v2175 = vsel %vm1084, %v2164, 0
    %v2177 = vsel %vm1084, %v2165, 0
    %v2179 = vsel %vm1084, %v2166, 0
    %v2181 = vsel %vm1084, %v2167, 0
    %2183 = vmatprep.subr.mxu0 %v2161
    %2184 = vmatpush1.msra.mxu0 %v2160
    %2185 = vmatprep.subr.mxu0 %v2177
    %2186 = vmatpush1.msra.mxu0 %v2175
    %2187 = vmatprep.subr.mxu0 0.0
    %2188 = vmatpush1.msra.mxu0 0.0
    %2189 = vmatprep.subr.mxu0 0.0
    %2190 = vmatpush1.msra.mxu0 0.0
    %2191 = vmatprep.subr.mxu0 0.0
    %2192 = vmatpush1.msra.mxu0 0.0
    %2193 = vmatprep.subr.mxu0 0.0
    %2194 = vmatpush1.msra.mxu0 0.0
    %2195 = vmatprep.subr.mxu0 0.0
    %2196 = vmatpush1.msra.mxu0 0.0
    %2197 = vmatprep.subr.mxu0 0.0
    %2198 = vmatpush1.msra.mxu0 0.0
    %2199 = vmatprep.subr.mxu0 0.0
    %2200 = vmatpush1.msra.mxu0 0.0
    %2201 = vmatprep.subr.mxu0 0.0
    %2202 = vmatpush1.msra.mxu0 0.0
    %2203 = vmatprep.subr.mxu0 0.0
    %2204 = vmatpush1.msra.mxu0 0.0
    %2205 = vmatprep.subr.mxu0 0.0
    %2206 = vmatpush1.msra.mxu0 0.0
    %2207 = vmatprep.subr.mxu0 0.0
    %2208 = vmatpush1.msra.mxu0 0.0
    %2209 = vmatprep.subr.mxu0 0.0
    %2210 = vmatpush1.msra.mxu0 0.0
    %2211 = vmatprep.subr.mxu0 0.0
    %2212 = vmatpush1.msra.mxu0 0.0
    %2213 = vmatprep.subr.mxu0 0.0
    %2214 = vmatpush1.msra.mxu0 0.0
    %2215 = vmatprep.subr.mxu0 0.0
    %2216 = vmatpush1.msra.mxu0 0.0
    %2217 = vmatprep.subr.mxu0 0.0
    %2218 = vmatpush1.msra.mxu0 0.0
    %2219 = vmatprep.subr.mxu0 0.0
    %2220 = vmatpush1.msra.mxu0 0.0
    %2221 = vmatprep.subr.mxu0 0.0
    %2222 = vmatpush1.msra.mxu0 0.0
    %2223 = vmatprep.subr.mxu0 0.0
    %2224 = vmatpush1.msra.mxu0 0.0
    %2225 = vmatprep.subr.mxu0 0.0
    %2226 = vmatpush1.msra.mxu0 0.0
    %2227 = vmatprep.subr.mxu0 0.0
    %2228 = vmatpush1.msra.mxu0 0.0
    %2229 = vmatprep.subr.mxu0 0.0
    %2230 = vmatpush1.msra.mxu0 0.0
    %2231 = vmatprep.subr.mxu0 0.0
    %2232 = vmatpush1.msra.mxu0 0.0
    %2233 = vmatprep.subr.mxu0 0.0
    %2234 = vmatpush1.msra.mxu0 0.0
    %2235 = vmatprep.subr.mxu0 0.0
    %2236 = vmatpush1.msra.mxu0 0.0
    %2237 = vmatprep.subr.mxu0 0.0
    %2238 = vmatpush1.msra.mxu0 0.0
    %2239 = vmatprep.subr.mxu0 0.0
    %2240 = vmatpush1.msra.mxu0 0.0
    %2241 = vmatprep.subr.mxu0 0.0
    %2242 = vmatpush1.msra.mxu0 0.0
    %2243 = vmatprep.subr.mxu0 0.0
    %2244 = vmatpush1.msra.mxu0 0.0
    %2245 = vmatprep.subr.mxu0 0.0
    %2246 = vmatpush1.msra.mxu0 0.0
    %2247 = vmatprep.mubr.f32.mxu0 0.0
    %2248 = vmatmul.mubr.f32.gmra.mrb[0].mxu0 %v2173
    %v2249 = vpop.f32.mrb[0].mxu0
    %v2250 = vadd.f32 0.0, %v2249
    %v2251 = vpop.f32.mrb[0].mxu0
    %v2252 = vadd.f32 0.0, %v2251
    %2253 = vdwg.mxu0
    %2254 = vmatprep.subr.mxu0 %v2163
    %2255 = vmatpush1.msra.mxu0 %v2162
    %2256 = vmatprep.subr.mxu0 %v2181
    %2257 = vmatpush1.msra.mxu0 %v2179
    %2258 = vmatprep.subr.mxu0 0.0
    %2259 = vmatpush1.msra.mxu0 0.0
    %2260 = vmatprep.subr.mxu0 0.0
    %2261 = vmatpush1.msra.mxu0 0.0
    %2262 = vmatprep.subr.mxu0 0.0
    %2263 = vmatpush1.msra.mxu0 0.0
    %2264 = vmatprep.subr.mxu0 0.0
    %2265 = vmatpush1.msra.mxu0 0.0
    %2266 = vmatprep.subr.mxu0 0.0
    %2267 = vmatpush1.msra.mxu0 0.0
    %2268 = vmatprep.subr.mxu0 0.0
    %2269 = vmatpush1.msra.mxu0 0.0
    %2270 = vmatprep.subr.mxu0 0.0
    %2271 = vmatpush1.msra.mxu0 0.0
    %2272 = vmatprep.subr.mxu0 0.0
    %2273 = vmatpush1.msra.mxu0 0.0
    %2274 = vmatprep.subr.mxu0 0.0
    %2275 = vmatpush1.msra.mxu0 0.0
    %2276 = vmatprep.subr.mxu0 0.0
    %2277 = vmatpush1.msra.mxu0 0.0
    %2278 = vmatprep.subr.mxu0 0.0
    %2279 = vmatpush1.msra.mxu0 0.0
    %2280 = vmatprep.subr.mxu0 0.0
    %2281 = vmatpush1.msra.mxu0 0.0
    %2282 = vmatprep.subr.mxu0 0.0
    %2283 = vmatpush1.msra.mxu0 0.0
    %2284 = vmatprep.subr.mxu0 0.0
    %2285 = vmatpush1.msra.mxu0 0.0
    %2286 = vmatprep.subr.mxu0 0.0
    %2287 = vmatpush1.msra.mxu0 0.0
    %2288 = vmatprep.subr.mxu0 0.0
    %2289 = vmatpush1.msra.mxu0 0.0
    %2290 = vmatprep.subr.mxu0 0.0
    %2291 = vmatpush1.msra.mxu0 0.0
    %2292 = vmatprep.subr.mxu0 0.0
    %2293 = vmatpush1.msra.mxu0 0.0
    %2294 = vmatprep.subr.mxu0 0.0
    %2295 = vmatpush1.msra.mxu0 0.0
    %2296 = vmatprep.subr.mxu0 0.0
    %2297 = vmatpush1.msra.mxu0 0.0
    %2298 = vmatprep.subr.mxu0 0.0
    %2299 = vmatpush1.msra.mxu0 0.0
    %2300 = vmatprep.subr.mxu0 0.0
    %2301 = vmatpush1.msra.mxu0 0.0
    %2302 = vmatprep.subr.mxu0 0.0
    %2303 = vmatpush1.msra.mxu0 0.0
    %2304 = vmatprep.subr.mxu0 0.0
    %2305 = vmatpush1.msra.mxu0 0.0
    %2306 = vmatprep.subr.mxu0 0.0
    %2307 = vmatpush1.msra.mxu0 0.0
    %2308 = vmatprep.subr.mxu0 0.0
    %2309 = vmatpush1.msra.mxu0 0.0
    %2310 = vmatprep.subr.mxu0 0.0
    %2311 = vmatpush1.msra.mxu0 0.0
    %2312 = vmatprep.subr.mxu0 0.0
    %2313 = vmatpush1.msra.mxu0 0.0
    %2314 = vmatprep.subr.mxu0 0.0
    %2315 = vmatpush1.msra.mxu0 0.0
    %2316 = vmatprep.subr.mxu0 0.0
    %2317 = vmatpush1.msra.mxu0 0.0
    %2318 = vmatprep.mubr.f32.mxu0 0.0
    %2319 = vmatmul.mubr.f32.gmra.mrb[0].mxu0 %v2173
    %v2320 = vpop.f32.mrb[0].mxu0
    %v2321 = vadd.f32 0.0, %v2320
    %v2322 = vpop.f32.mrb[0].mxu0
    %v2323 = vadd.f32 0.0, %v2322
    %2324 = vdwg.mxu0
    %s2325 = scalar_lea.vmem %s7, 5
    %v2326 = vld [vmem:[%s2325] ss:$8 sm:$0xf]
    %v2328 = vlaneseq
    %v2329 = vshrl.u32 %v2328, 7
    %v2330 = vsub.s32 0, %v2329
    %v2331 = vrot.slane %v2326, %v2330
    %v2332 = vlaneseq
    %v2333 = vshrl.u32 %v2332, 7
    %v2334 = vsub.s32 1, %v2333
    %v2335 = vrot.slane %v2326, %v2334
    %v2336 = vlaneseq
    %v2337 = vshrl.u32 %v2336, 7
    %v2338 = vsub.s32 2, %v2337
    %v2339 = vrot.slane %v2326, %v2338
    %v2340 = vlaneseq
    %v2341 = vshrl.u32 %v2340, 7
    %v2342 = vsub.s32 3, %v2341
    %v2343 = vrot.slane %v2326, %v2342
    %v2348 = vmul.f32 %v2250, %v2331
    %v2349 = vmul.f32 %v2252, %v2335
    %v2350 = vmul.f32 %v2321, %v2339
    %v2351 = vmul.f32 %v2323, %v2343
    %v2352 = vadd.f32 %v2133, %v2348
    %v2353 = vadd.f32 %v2134, %v2349
    %v2354 = vadd.f32 %v2135, %v2350
    %v2355 = vadd.f32 %v2136, %v2351
    %s2356 = scalar_lea.vmem %s4, 48
    %v2357 = vld [vmem:[%s2356] sm:$0xff]
    %2358 = vrot.lane.b32.xlu0 %v1030, 17
    %v2359 = vpop.permute.xlu0 %2358
    %2360 = vrot.lane.b32.xlu0 %v1026, 17
    %v2361 = vpop.permute.xlu0 %2360
    %2362 = vrot.lane.b32.xlu0 %v1027, 17
    %v2363 = vpop.permute.xlu0 %2362
    %2364 = vrot.lane.b32.xlu0 %v1028, 17
    %v2365 = vpop.permute.xlu0 %2364
    %2366 = vrot.lane.b32.xlu0 %v1029, 17
    %v2367 = vpop.permute.xlu0 %2366
    %2368 = vrot.lane.b32.xlu0 %v1031, 17
    %v2369 = vpop.permute.xlu0 %2368
    %2370 = vrot.lane.b32.xlu0 %v1032, 17
    %v2371 = vpop.permute.xlu0 %2370
    %2372 = vrot.lane.b32.xlu0 %v1033, 17
    %v2373 = vpop.permute.xlu0 %2372
    %2374 = vrot.lane.b32.xlu0 %v1034, 17
    %v2375 = vpop.permute.xlu0 %2374
    %2376 = vrot.lane.b32.xlu0 %v1035, 17
    %v2377 = vpop.permute.xlu0 %2376
    %vm2378 = vcmask 138240
    %v2379 = vsel %vm2378, %v2359, %v2361
    %v2380 = vsel %vm2378, %v2361, %v2363
    %v2381 = vsel %vm2378, %v2363, %v2365
    %v2382 = vsel %vm2378, %v2365, %v2367
    %v2383 = vsel %vm2378, %v2369, %v2371
    %v2384 = vsel %vm2378, %v2371, %v2373
    %v2385 = vsel %vm2378, %v2373, %v2375
    %v2386 = vsel %vm2378, %v2375, %v2377
    %v2392 = vsel %vm1080, %v2357, 0
    %v2394 = vsel %vm1084, %v2383, 0
    %v2396 = vsel %vm1084, %v2384, 0
    %v2398 = vsel %vm1084, %v2385, 0
    %v2400 = vsel %vm1084, %v2386, 0
    %2402 = vmatprep.subr.mxu0 %v2380
    %2403 = vmatpush1.msra.mxu0 %v2379
    %2404 = vmatprep.subr.mxu0 %v2396
    %2405 = vmatpush1.msra.mxu0 %v2394
    %2406 = vmatprep.subr.mxu0 0.0
    %2407 = vmatpush1.msra.mxu0 0.0
    %2408 = vmatprep.subr.mxu0 0.0
    %2409 = vmatpush1.msra.mxu0 0.0
    %2410 = vmatprep.subr.mxu0 0.0
    %2411 = vmatpush1.msra.mxu0 0.0
    %2412 = vmatprep.subr.mxu0 0.0
    %2413 = vmatpush1.msra.mxu0 0.0
    %2414 = vmatprep.subr.mxu0 0.0
    %2415 = vmatpush1.msra.mxu0 0.0
    %2416 = vmatprep.subr.mxu0 0.0
    %2417 = vmatpush1.msra.mxu0 0.0
    %2418 = vmatprep.subr.mxu0 0.0
    %2419 = vmatpush1.msra.mxu0 0.0
    %2420 = vmatprep.subr.mxu0 0.0
    %2421 = vmatpush1.msra.mxu0 0.0
    %2422 = vmatprep.subr.mxu0 0.0
    %2423 = vmatpush1.msra.mxu0 0.0
    %2424 = vmatprep.subr.mxu0 0.0
    %2425 = vmatpush1.msra.mxu0 0.0
    %2426 = vmatprep.subr.mxu0 0.0
    %2427 = vmatpush1.msra.mxu0 0.0
    %2428 = vmatprep.subr.mxu0 0.0
    %2429 = vmatpush1.msra.mxu0 0.0
    %2430 = vmatprep.subr.mxu0 0.0
    %2431 = vmatpush1.msra.mxu0 0.0
    %2432 = vmatprep.subr.mxu0 0.0
    %2433 = vmatpush1.msra.mxu0 0.0
    %2434 = vmatprep.subr.mxu0 0.0
    %2435 = vmatpush1.msra.mxu0 0.0
    %2436 = vmatprep.subr.mxu0 0.0
    %2437 = vmatpush1.msra.mxu0 0.0
    %2438 = vmatprep.subr.mxu0 0.0
    %2439 = vmatpush1.msra.mxu0 0.0
    %2440 = vmatprep.subr.mxu0 0.0
    %2441 = vmatpush1.msra.mxu0 0.0
    %2442 = vmatprep.subr.mxu0 0.0
    %2443 = vmatpush1.msra.mxu0 0.0
    %2444 = vmatprep.subr.mxu0 0.0
    %2445 = vmatpush1.msra.mxu0 0.0
    %2446 = vmatprep.subr.mxu0 0.0
    %2447 = vmatpush1.msra.mxu0 0.0
    %2448 = vmatprep.subr.mxu0 0.0
    %2449 = vmatpush1.msra.mxu0 0.0
    %2450 = vmatprep.subr.mxu0 0.0
    %2451 = vmatpush1.msra.mxu0 0.0
    %2452 = vmatprep.subr.mxu0 0.0
    %2453 = vmatpush1.msra.mxu0 0.0
    %2454 = vmatprep.subr.mxu0 0.0
    %2455 = vmatpush1.msra.mxu0 0.0
    %2456 = vmatprep.subr.mxu0 0.0
    %2457 = vmatpush1.msra.mxu0 0.0
    %2458 = vmatprep.subr.mxu0 0.0
    %2459 = vmatpush1.msra.mxu0 0.0
    %2460 = vmatprep.subr.mxu0 0.0
    %2461 = vmatpush1.msra.mxu0 0.0
    %2462 = vmatprep.subr.mxu0 0.0
    %2463 = vmatpush1.msra.mxu0 0.0
    %2464 = vmatprep.subr.mxu0 0.0
    %2465 = vmatpush1.msra.mxu0 0.0
    %2466 = vmatprep.mubr.f32.mxu0 0.0
    %2467 = vmatmul.mubr.f32.gmra.mrb[0].mxu0 %v2392
    %v2468 = vpop.f32.mrb[0].mxu0
    %v2469 = vadd.f32 0.0, %v2468
    %v2470 = vpop.f32.mrb[0].mxu0
    %v2471 = vadd.f32 0.0, %v2470
    %2472 = vdwg.mxu0
    %2473 = vmatprep.subr.mxu0 %v2382
    %2474 = vmatpush1.msra.mxu0 %v2381
    %2475 = vmatprep.subr.mxu0 %v2400
    %2476 = vmatpush1.msra.mxu0 %v2398
    %2477 = vmatprep.subr.mxu0 0.0
    %2478 = vmatpush1.msra.mxu0 0.0
    %2479 = vmatprep.subr.mxu0 0.0
    %2480 = vmatpush1.msra.mxu0 0.0
    %2481 = vmatprep.subr.mxu0 0.0
    %2482 = vmatpush1.msra.mxu0 0.0
    %2483 = vmatprep.subr.mxu0 0.0
    %2484 = vmatpush1.msra.mxu0 0.0
    %2485 = vmatprep.subr.mxu0 0.0
    %2486 = vmatpush1.msra.mxu0 0.0
    %2487 = vmatprep.subr.mxu0 0.0
    %2488 = vmatpush1.msra.mxu0 0.0
    %2489 = vmatprep.subr.mxu0 0.0
    %2490 = vmatpush1.msra.mxu0 0.0
    %2491 = vmatprep.subr.mxu0 0.0
    %2492 = vmatpush1.msra.mxu0 0.0
    %2493 = vmatprep.subr.mxu0 0.0
    %2494 = vmatpush1.msra.mxu0 0.0
    %2495 = vmatprep.subr.mxu0 0.0
    %2496 = vmatpush1.msra.mxu0 0.0
    %2497 = vmatprep.subr.mxu0 0.0
    %2498 = vmatpush1.msra.mxu0 0.0
    %2499 = vmatprep.subr.mxu0 0.0
    %2500 = vmatpush1.msra.mxu0 0.0
    %2501 = vmatprep.subr.mxu0 0.0
    %2502 = vmatpush1.msra.mxu0 0.0
    %2503 = vmatprep.subr.mxu0 0.0
    %2504 = vmatpush1.msra.mxu0 0.0
    %2505 = vmatprep.subr.mxu0 0.0
    %2506 = vmatpush1.msra.mxu0 0.0
    %2507 = vmatprep.subr.mxu0 0.0
    %2508 = vmatpush1.msra.mxu0 0.0
    %2509 = vmatprep.subr.mxu0 0.0
    %2510 = vmatpush1.msra.mxu0 0.0
    %2511 = vmatprep.subr.mxu0 0.0
    %2512 = vmatpush1.msra.mxu0 0.0
    %2513 = vmatprep.subr.mxu0 0.0
    %2514 = vmatpush1.msra.mxu0 0.0
    %2515 = vmatprep.subr.mxu0 0.0
    %2516 = vmatpush1.msra.mxu0 0.0
    %2517 = vmatprep.subr.mxu0 0.0
    %2518 = vmatpush1.msra.mxu0 0.0
    %2519 = vmatprep.subr.mxu0 0.0
    %2520 = vmatpush1.msra.mxu0 0.0
    %2521 = vmatprep.subr.mxu0 0.0
    %2522 = vmatpush1.msra.mxu0 0.0
    %2523 = vmatprep.subr.mxu0 0.0
    %2524 = vmatpush1.msra.mxu0 0.0
    %2525 = vmatprep.subr.mxu0 0.0
    %2526 = vmatpush1.msra.mxu0 0.0
    %2527 = vmatprep.subr.mxu0 0.0
    %2528 = vmatpush1.msra.mxu0 0.0
    %2529 = vmatprep.subr.mxu0 0.0
    %2530 = vmatpush1.msra.mxu0 0.0
    %2531 = vmatprep.subr.mxu0 0.0
    %2532 = vmatpush1.msra.mxu0 0.0
    %2533 = vmatprep.subr.mxu0 0.0
    %2534 = vmatpush1.msra.mxu0 0.0
    %2535 = vmatprep.subr.mxu0 0.0
    %2536 = vmatpush1.msra.mxu0 0.0
    %2537 = vmatprep.mubr.f32.mxu0 0.0
    %2538 = vmatmul.mubr.f32.gmra.mrb[0].mxu0 %v2392
    %v2539 = vpop.f32.mrb[0].mxu0
    %v2540 = vadd.f32 0.0, %v2539
    %v2541 = vpop.f32.mrb[0].mxu0
    %v2542 = vadd.f32 0.0, %v2541
    %2543 = vdwg.mxu0
    %s2544 = scalar_lea.vmem %s7, 6
    %v2545 = vld [vmem:[%s2544] ss:$8 sm:$0xf]
    %v2547 = vlaneseq
    %v2548 = vshrl.u32 %v2547, 7
    %v2549 = vsub.s32 0, %v2548
    %v2550 = vrot.slane %v2545, %v2549
    %v2551 = vlaneseq
    %v2552 = vshrl.u32 %v2551, 7
    %v2553 = vsub.s32 1, %v2552
    %v2554 = vrot.slane %v2545, %v2553
    %v2555 = vlaneseq
    %v2556 = vshrl.u32 %v2555, 7
    %v2557 = vsub.s32 2, %v2556
    %v2558 = vrot.slane %v2545, %v2557
    %v2559 = vlaneseq
    %v2560 = vshrl.u32 %v2559, 7
    %v2561 = vsub.s32 3, %v2560
    %v2562 = vrot.slane %v2545, %v2561
    %v2567 = vmul.f32 %v2469, %v2550
    %v2568 = vmul.f32 %v2471, %v2554
    %v2569 = vmul.f32 %v2540, %v2558
    %v2570 = vmul.f32 %v2542, %v2562
    %v2571 = vadd.f32 %v2352, %v2567
    %v2572 = vadd.f32 %v2353, %v2568
    %v2573 = vadd.f32 %v2354, %v2569
    %v2574 = vadd.f32 %v2355, %v2570
    %s2575 = scalar_lea.vmem %s4, 56
    %v2576 = vld [vmem:[%s2575] sm:$0xff]
    %2577 = vrot.lane.b32.xlu0 %v1030, 16
    %v2578 = vpop.permute.xlu0 %2577
    %2579 = vrot.lane.b32.xlu0 %v1026, 16
    %v2580 = vpop.permute.xlu0 %2579
    %2581 = vrot.lane.b32.xlu0 %v1027, 16
    %v2582 = vpop.permute.xlu0 %2581
    %2583 = vrot.lane.b32.xlu0 %v1028, 16
    %v2584 = vpop.permute.xlu0 %2583
    %2585 = vrot.lane.b32.xlu0 %v1029, 16
    %v2586 = vpop.permute.xlu0 %2585
    %2587 = vrot.lane.b32.xlu0 %v1031, 16
    %v2588 = vpop.permute.xlu0 %2587
    %2589 = vrot.lane.b32.xlu0 %v1032, 16
    %v2590 = vpop.permute.xlu0 %2589
    %2591 = vrot.lane.b32.xlu0 %v1033, 16
    %v2592 = vpop.permute.xlu0 %2591
    %2593 = vrot.lane.b32.xlu0 %v1034, 16
    %v2594 = vpop.permute.xlu0 %2593
    %2595 = vrot.lane.b32.xlu0 %v1035, 16
    %v2596 = vpop.permute.xlu0 %2595
    %vm2597 = vcmask 130048
    %v2598 = vsel %vm2597, %v2578, %v2580
    %v2599 = vsel %vm2597, %v2580, %v2582
    %v2600 = vsel %vm2597, %v2582, %v2584
    %v2601 = vsel %vm2597, %v2584, %v2586
    %v2602 = vsel %vm2597, %v2588, %v2590
    %v2603 = vsel %vm2597, %v2590, %v2592
    %v2604 = vsel %vm2597, %v2592, %v2594
    %v2605 = vsel %vm2597, %v2594, %v2596
    %v2611 = vsel %vm1080, %v2576, 0
    %v2613 = vsel %vm1084, %v2602, 0
    %v2615 = vsel %vm1084, %v2603, 0
    %v2617 = vsel %vm1084, %v2604, 0
    %v2619 = vsel %vm1084, %v2605, 0
    %2621 = vmatprep.subr.mxu0 %v2599
    %2622 = vmatpush1.msra.mxu0 %v2598
    %2623 = vmatprep.subr.mxu0 %v2615
    %2624 = vmatpush1.msra.mxu0 %v2613
    %2625 = vmatprep.subr.mxu0 0.0
    %2626 = vmatpush1.msra.mxu0 0.0
    %2627 = vmatprep.subr.mxu0 0.0
    %2628 = vmatpush1.msra.mxu0 0.0
    %2629 = vmatprep.subr.mxu0 0.0
    %2630 = vmatpush1.msra.mxu0 0.0
    %2631 = vmatprep.subr.mxu0 0.0
    %2632 = vmatpush1.msra.mxu0 0.0
    %2633 = vmatprep.subr.mxu0 0.0
    %2634 = vmatpush1.msra.mxu0 0.0
    %2635 = vmatprep.subr.mxu0 0.0
    %2636 = vmatpush1.msra.mxu0 0.0
    %2637 = vmatprep.subr.mxu0 0.0
    %2638 = vmatpush1.msra.mxu0 0.0
    %2639 = vmatprep.subr.mxu0 0.0
    %2640 = vmatpush1.msra.mxu0 0.0
    %2641 = vmatprep.subr.mxu0 0.0
    %2642 = vmatpush1.msra.mxu0 0.0
    %2643 = vmatprep.subr.mxu0 0.0
    %2644 = vmatpush1.msra.mxu0 0.0
    %2645 = vmatprep.subr.mxu0 0.0
    %2646 = vmatpush1.msra.mxu0 0.0
    %2647 = vmatprep.subr.mxu0 0.0
    %2648 = vmatpush1.msra.mxu0 0.0
    %2649 = vmatprep.subr.mxu0 0.0
    %2650 = vmatpush1.msra.mxu0 0.0
    %2651 = vmatprep.subr.mxu0 0.0
    %2652 = vmatpush1.msra.mxu0 0.0
    %2653 = vmatprep.subr.mxu0 0.0
    %2654 = vmatpush1.msra.mxu0 0.0
    %2655 = vmatprep.subr.mxu0 0.0
    %2656 = vmatpush1.msra.mxu0 0.0
    %2657 = vmatprep.subr.mxu0 0.0
    %2658 = vmatpush1.msra.mxu0 0.0
    %2659 = vmatprep.subr.mxu0 0.0
    %2660 = vmatpush1.msra.mxu0 0.0
    %2661 = vmatprep.subr.mxu0 0.0
    %2662 = vmatpush1.msra.mxu0 0.0
    %2663 = vmatprep.subr.mxu0 0.0
    %2664 = vmatpush1.msra.mxu0 0.0
    %2665 = vmatprep.subr.mxu0 0.0
    %2666 = vmatpush1.msra.mxu0 0.0
    %2667 = vmatprep.subr.mxu0 0.0
    %2668 = vmatpush1.msra.mxu0 0.0
    %2669 = vmatprep.subr.mxu0 0.0
    %2670 = vmatpush1.msra.mxu0 0.0
    %2671 = vmatprep.subr.mxu0 0.0
    %2672 = vmatpush1.msra.mxu0 0.0
    %2673 = vmatprep.subr.mxu0 0.0
    %2674 = vmatpush1.msra.mxu0 0.0
    %2675 = vmatprep.subr.mxu0 0.0
    %2676 = vmatpush1.msra.mxu0 0.0
    %2677 = vmatprep.subr.mxu0 0.0
    %2678 = vmatpush1.msra.mxu0 0.0
    %2679 = vmatprep.subr.mxu0 0.0
    %2680 = vmatpush1.msra.mxu0 0.0
    %2681 = vmatprep.subr.mxu0 0.0
    %2682 = vmatpush1.msra.mxu0 0.0
    %2683 = vmatprep.subr.mxu0 0.0
    %2684 = vmatpush1.msra.mxu0 0.0
    %2685 = vmatprep.mubr.f32.mxu0 0.0
    %2686 = vmatmul.mubr.f32.gmra.mrb[0].mxu0 %v2611
    %v2687 = vpop.f32.mrb[0].mxu0
    %v2688 = vadd.f32 0.0, %v2687
    %v2689 = vpop.f32.mrb[0].mxu0
    %v2690 = vadd.f32 0.0, %v2689
    %2691 = vdwg.mxu0
    %2692 = vmatprep.subr.mxu0 %v2601
    %2693 = vmatpush1.msra.mxu0 %v2600
    %2694 = vmatprep.subr.mxu0 %v2619
    %2695 = vmatpush1.msra.mxu0 %v2617
    %2696 = vmatprep.subr.mxu0 0.0
    %2697 = vmatpush1.msra.mxu0 0.0
    %2698 = vmatprep.subr.mxu0 0.0
    %2699 = vmatpush1.msra.mxu0 0.0
    %2700 = vmatprep.subr.mxu0 0.0
    %2701 = vmatpush1.msra.mxu0 0.0
    %2702 = vmatprep.subr.mxu0 0.0
    %2703 = vmatpush1.msra.mxu0 0.0
    %2704 = vmatprep.subr.mxu0 0.0
    %2705 = vmatpush1.msra.mxu0 0.0
    %2706 = vmatprep.subr.mxu0 0.0
    %2707 = vmatpush1.msra.mxu0 0.0
    %2708 = vmatprep.subr.mxu0 0.0
    %2709 = vmatpush1.msra.mxu0 0.0
    %2710 = vmatprep.subr.mxu0 0.0
    %2711 = vmatpush1.msra.mxu0 0.0
    %2712 = vmatprep.subr.mxu0 0.0
    %2713 = vmatpush1.msra.mxu0 0.0
    %2714 = vmatprep.subr.mxu0 0.0
    %2715 = vmatpush1.msra.mxu0 0.0
    %2716 = vmatprep.subr.mxu0 0.0
    %2717 = vmatpush1.msra.mxu0 0.0
    %2718 = vmatprep.subr.mxu0 0.0
    %2719 = vmatpush1.msra.mxu0 0.0
    %2720 = vmatprep.subr.mxu0 0.0
    %2721 = vmatpush1.msra.mxu0 0.0
    %2722 = vmatprep.subr.mxu0 0.0
    %2723 = vmatpush1.msra.mxu0 0.0
    %2724 = vmatprep.subr.mxu0 0.0
    %2725 = vmatpush1.msra.mxu0 0.0
    %2726 = vmatprep.subr.mxu0 0.0
    %2727 = vmatpush1.msra.mxu0 0.0
    %2728 = vmatprep.subr.mxu0 0.0
    %2729 = vmatpush1.msra.mxu0 0.0
    %2730 = vmatprep.subr.mxu0 0.0
    %2731 = vmatpush1.msra.mxu0 0.0
    %2732 = vmatprep.subr.mxu0 0.0
    %2733 = vmatpush1.msra.mxu0 0.0
    %2734 = vmatprep.subr.mxu0 0.0
    %2735 = vmatpush1.msra.mxu0 0.0
    %2736 = vmatprep.subr.mxu0 0.0
    %2737 = vmatpush1.msra.mxu0 0.0
    %2738 = vmatprep.subr.mxu0 0.0
    %2739 = vmatpush1.msra.mxu0 0.0
    %2740 = vmatprep.subr.mxu0 0.0
    %2741 = vmatpush1.msra.mxu0 0.0
    %2742 = vmatprep.subr.mxu0 0.0
    %2743 = vmatpush1.msra.mxu0 0.0
    %2744 = vmatprep.subr.mxu0 0.0
    %2745 = vmatpush1.msra.mxu0 0.0
    %2746 = vmatprep.subr.mxu0 0.0
    %2747 = vmatpush1.msra.mxu0 0.0
    %2748 = vmatprep.subr.mxu0 0.0
    %2749 = vmatpush1.msra.mxu0 0.0
    %2750 = vmatprep.subr.mxu0 0.0
    %2751 = vmatpush1.msra.mxu0 0.0
    %2752 = vmatprep.subr.mxu0 0.0
    %2753 = vmatpush1.msra.mxu0 0.0
    %2754 = vmatprep.subr.mxu0 0.0
    %2755 = vmatpush1.msra.mxu0 0.0
    %2756 = vmatprep.mubr.f32.mxu0 0.0
    %2757 = vmatmul.mubr.f32.gmra.mrb[0].mxu0 %v2611
    %v2758 = vpop.f32.mrb[0].mxu0
    %v2759 = vadd.f32 0.0, %v2758
    %v2760 = vpop.f32.mrb[0].mxu0
    %v2761 = vadd.f32 0.0, %v2760
    %2762 = vdwg.mxu0
    %s2763 = scalar_lea.vmem %s7, 7
    %v2764 = vld [vmem:[%s2763] ss:$8 sm:$0xf]
    %v2766 = vlaneseq
    %v2767 = vshrl.u32 %v2766, 7
    %v2768 = vsub.s32 0, %v2767
    %v2769 = vrot.slane %v2764, %v2768
    %v2770 = vlaneseq
    %v2771 = vshrl.u32 %v2770, 7
    %v2772 = vsub.s32 1, %v2771
    %v2773 = vrot.slane %v2764, %v2772
    %v2774 = vlaneseq
    %v2775 = vshrl.u32 %v2774, 7
    %v2776 = vsub.s32 2, %v2775
    %v2777 = vrot.slane %v2764, %v2776
    %v2778 = vlaneseq
    %v2779 = vshrl.u32 %v2778, 7
    %v2780 = vsub.s32 3, %v2779
    %v2781 = vrot.slane %v2764, %v2780
    %v2786 = vmul.f32 %v2688, %v2769
    %v2787 = vmul.f32 %v2690, %v2773
    %v2788 = vmul.f32 %v2759, %v2777
    %v2789 = vmul.f32 %v2761, %v2781
    %v2790 = vadd.f32 %v2571, %v2786
    %v2791 = vadd.f32 %v2572, %v2787
    %v2792 = vadd.f32 %v2573, %v2788
    %v2793 = vadd.f32 %v2574, %v2789
    %s2794 = scalar_lea.vmem %s4, 64
    %v2795 = vld [vmem:[%s2794] sm:$0xff]
    %2796 = vrot.lane.b32.xlu0 %v1030, 15
    %v2797 = vpop.permute.xlu0 %2796
    %2798 = vrot.lane.b32.xlu0 %v1026, 15
    %v2799 = vpop.permute.xlu0 %2798
    %2800 = vrot.lane.b32.xlu0 %v1027, 15
    %v2801 = vpop.permute.xlu0 %2800
    %2802 = vrot.lane.b32.xlu0 %v1028, 15
    %v2803 = vpop.permute.xlu0 %2802
    %2804 = vrot.lane.b32.xlu0 %v1029, 15
    %v2805 = vpop.permute.xlu0 %2804
    %2806 = vrot.lane.b32.xlu0 %v1031, 15
    %v2807 = vpop.permute.xlu0 %2806
    %2808 = vrot.lane.b32.xlu0 %v1032, 15
    %v2809 = vpop.permute.xlu0 %2808
    %2810 = vrot.lane.b32.xlu0 %v1033, 15
    %v2811 = vpop.permute.xlu0 %2810
    %2812 = vrot.lane.b32.xlu0 %v1034, 15
    %v2813 = vpop.permute.xlu0 %2812
    %2814 = vrot.lane.b32.xlu0 %v1035, 15
    %v2815 = vpop.permute.xlu0 %2814
    %vm2816 = vcmask 121856
    %v2817 = vsel %vm2816, %v2797, %v2799
    %v2818 = vsel %vm2816, %v2799, %v2801
    %v2819 = vsel %vm2816, %v2801, %v2803
    %v2820 = vsel %vm2816, %v2803, %v2805
    %v2821 = vsel %vm2816, %v2807, %v2809
    %v2822 = vsel %vm2816, %v2809, %v2811
    %v2823 = vsel %vm2816, %v2811, %v2813
    %v2824 = vsel %vm2816, %v2813, %v2815
    %v2830 = vsel %vm1080, %v2795, 0
    %v2832 = vsel %vm1084, %v2821, 0
    %v2834 = vsel %vm1084, %v2822, 0
    %v2836 = vsel %vm1084, %v2823, 0
    %v2838 = vsel %vm1084, %v2824, 0
    %2840 = vmatprep.subr.mxu0 %v2818
    %2841 = vmatpush1.msra.mxu0 %v2817
    %2842 = vmatprep.subr.mxu0 %v2834
    %2843 = vmatpush1.msra.mxu0 %v2832
    %2844 = vmatprep.subr.mxu0 0.0
    %2845 = vmatpush1.msra.mxu0 0.0
    %2846 = vmatprep.subr.mxu0 0.0
    %2847 = vmatpush1.msra.mxu0 0.0
    %2848 = vmatprep.subr.mxu0 0.0
    %2849 = vmatpush1.msra.mxu0 0.0
    %2850 = vmatprep.subr.mxu0 0.0
    %2851 = vmatpush1.msra.mxu0 0.0
    %2852 = vmatprep.subr.mxu0 0.0
    %2853 = vmatpush1.msra.mxu0 0.0
    %2854 = vmatprep.subr.mxu0 0.0
    %2855 = vmatpush1.msra.mxu0 0.0
    %2856 = vmatprep.subr.mxu0 0.0
    %2857 = vmatpush1.msra.mxu0 0.0
    %2858 = vmatprep.subr.mxu0 0.0
    %2859 = vmatpush1.msra.mxu0 0.0
    %2860 = vmatprep.subr.mxu0 0.0
    %2861 = vmatpush1.msra.mxu0 0.0
    %2862 = vmatprep.subr.mxu0 0.0
    %2863 = vmatpush1.msra.mxu0 0.0
    %2864 = vmatprep.subr.mxu0 0.0
    %2865 = vmatpush1.msra.mxu0 0.0
    %2866 = vmatprep.subr.mxu0 0.0
    %2867 = vmatpush1.msra.mxu0 0.0
    %2868 = vmatprep.subr.mxu0 0.0
    %2869 = vmatpush1.msra.mxu0 0.0
    %2870 = vmatprep.subr.mxu0 0.0
    %2871 = vmatpush1.msra.mxu0 0.0
    %2872 = vmatprep.subr.mxu0 0.0
    %2873 = vmatpush1.msra.mxu0 0.0
    %2874 = vmatprep.subr.mxu0 0.0
    %2875 = vmatpush1.msra.mxu0 0.0
    %2876 = vmatprep.subr.mxu0 0.0
    %2877 = vmatpush1.msra.mxu0 0.0
    %2878 = vmatprep.subr.mxu0 0.0
    %2879 = vmatpush1.msra.mxu0 0.0
    %2880 = vmatprep.subr.mxu0 0.0
    %2881 = vmatpush1.msra.mxu0 0.0
    %2882 = vmatprep.subr.mxu0 0.0
    %2883 = vmatpush1.msra.mxu0 0.0
    %2884 = vmatprep.subr.mxu0 0.0
    %2885 = vmatpush1.msra.mxu0 0.0
    %2886 = vmatprep.subr.mxu0 0.0
    %2887 = vmatpush1.msra.mxu0 0.0
    %2888 = vmatprep.subr.mxu0 0.0
    %2889 = vmatpush1.msra.mxu0 0.0
    %2890 = vmatprep.subr.mxu0 0.0
    %2891 = vmatpush1.msra.mxu0 0.0
    %2892 = vmatprep.subr.mxu0 0.0
    %2893 = vmatpush1.msra.mxu0 0.0
    %2894 = vmatprep.subr.mxu0 0.0
    %2895 = vmatpush1.msra.mxu0 0.0
    %2896 = vmatprep.subr.mxu0 0.0
    %2897 = vmatpush1.msra.mxu0 0.0
    %2898 = vmatprep.subr.mxu0 0.0
    %2899 = vmatpush1.msra.mxu0 0.0
    %2900 = vmatprep.subr.mxu0 0.0
    %2901 = vmatpush1.msra.mxu0 0.0
    %2902 = vmatprep.subr.mxu0 0.0
    %2903 = vmatpush1.msra.mxu0 0.0
    %2904 = vmatprep.mubr.f32.mxu0 0.0
    %2905 = vmatmul.mubr.f32.gmra.mrb[0].mxu0 %v2830
    %v2906 = vpop.f32.mrb[0].mxu0
    %v2907 = vadd.f32 0.0, %v2906
    %v2908 = vpop.f32.mrb[0].mxu0
    %v2909 = vadd.f32 0.0, %v2908
    %2910 = vdwg.mxu0
    %2911 = vmatprep.subr.mxu0 %v2820
    %2912 = vmatpush1.msra.mxu0 %v2819
    %2913 = vmatprep.subr.mxu0 %v2838
    %2914 = vmatpush1.msra.mxu0 %v2836
    %2915 = vmatprep.subr.mxu0 0.0
    %2916 = vmatpush1.msra.mxu0 0.0
    %2917 = vmatprep.subr.mxu0 0.0
    %2918 = vmatpush1.msra.mxu0 0.0
    %2919 = vmatprep.subr.mxu0 0.0
    %2920 = vmatpush1.msra.mxu0 0.0
    %2921 = vmatprep.subr.mxu0 0.0
    %2922 = vmatpush1.msra.mxu0 0.0
    %2923 = vmatprep.subr.mxu0 0.0
    %2924 = vmatpush1.msra.mxu0 0.0
    %2925 = vmatprep.subr.mxu0 0.0
    %2926 = vmatpush1.msra.mxu0 0.0
    %2927 = vmatprep.subr.mxu0 0.0
    %2928 = vmatpush1.msra.mxu0 0.0
    %2929 = vmatprep.subr.mxu0 0.0
    %2930 = vmatpush1.msra.mxu0 0.0
    %2931 = vmatprep.subr.mxu0 0.0
    %2932 = vmatpush1.msra.mxu0 0.0
    %2933 = vmatprep.subr.mxu0 0.0
    %2934 = vmatpush1.msra.mxu0 0.0
    %2935 = vmatprep.subr.mxu0 0.0
    %2936 = vmatpush1.msra.mxu0 0.0
    %2937 = vmatprep.subr.mxu0 0.0
    %2938 = vmatpush1.msra.mxu0 0.0
    %2939 = vmatprep.subr.mxu0 0.0
    %2940 = vmatpush1.msra.mxu0 0.0
    %2941 = vmatprep.subr.mxu0 0.0
    %2942 = vmatpush1.msra.mxu0 0.0
    %2943 = vmatprep.subr.mxu0 0.0
    %2944 = vmatpush1.msra.mxu0 0.0
    %2945 = vmatprep.subr.mxu0 0.0
    %2946 = vmatpush1.msra.mxu0 0.0
    %2947 = vmatprep.subr.mxu0 0.0
    %2948 = vmatpush1.msra.mxu0 0.0
    %2949 = vmatprep.subr.mxu0 0.0
    %2950 = vmatpush1.msra.mxu0 0.0
    %2951 = vmatprep.subr.mxu0 0.0
    %2952 = vmatpush1.msra.mxu0 0.0
    %2953 = vmatprep.subr.mxu0 0.0
    %2954 = vmatpush1.msra.mxu0 0.0
    %2955 = vmatprep.subr.mxu0 0.0
    %2956 = vmatpush1.msra.mxu0 0.0
    %2957 = vmatprep.subr.mxu0 0.0
    %2958 = vmatpush1.msra.mxu0 0.0
    %2959 = vmatprep.subr.mxu0 0.0
    %2960 = vmatpush1.msra.mxu0 0.0
    %2961 = vmatprep.subr.mxu0 0.0
    %2962 = vmatpush1.msra.mxu0 0.0
    %2963 = vmatprep.subr.mxu0 0.0
    %2964 = vmatpush1.msra.mxu0 0.0
    %2965 = vmatprep.subr.mxu0 0.0
    %2966 = vmatpush1.msra.mxu0 0.0
    %2967 = vmatprep.subr.mxu0 0.0
    %2968 = vmatpush1.msra.mxu0 0.0
    %2969 = vmatprep.subr.mxu0 0.0
    %2970 = vmatpush1.msra.mxu0 0.0
    %2971 = vmatprep.subr.mxu0 0.0
    %2972 = vmatpush1.msra.mxu0 0.0
    %2973 = vmatprep.subr.mxu0 0.0
    %2974 = vmatpush1.msra.mxu0 0.0
    %2975 = vmatprep.mubr.f32.mxu0 0.0
    %2976 = vmatmul.mubr.f32.gmra.mrb[0].mxu0 %v2830
    %v2977 = vpop.f32.mrb[0].mxu0
    %v2978 = vadd.f32 0.0, %v2977
    %v2979 = vpop.f32.mrb[0].mxu0
    %v2980 = vadd.f32 0.0, %v2979
    %2981 = vdwg.mxu0
    %s2982 = scalar_lea.vmem %s7, 32
    %v2983 = vld [vmem:[%s2982] ss:$8 sm:$0xf]
    %v2985 = vlaneseq
    %v2986 = vshrl.u32 %v2985, 7
    %v2987 = vsub.s32 0, %v2986
    %v2988 = vrot.slane %v2983, %v2987
    %v2989 = vlaneseq
    %v2990 = vshrl.u32 %v2989, 7
    %v2991 = vsub.s32 1, %v2990
    %v2992 = vrot.slane %v2983, %v2991
    %v2993 = vlaneseq
    %v2994 = vshrl.u32 %v2993, 7
    %v2995 = vsub.s32 2, %v2994
    %v2996 = vrot.slane %v2983, %v2995
    %v2997 = vlaneseq
    %v2998 = vshrl.u32 %v2997, 7
    %v2999 = vsub.s32 3, %v2998
    %v3000 = vrot.slane %v2983, %v2999
    %v3005 = vmul.f32 %v2907, %v2988
    %v3006 = vmul.f32 %v2909, %v2992
    %v3007 = vmul.f32 %v2978, %v2996
    %v3008 = vmul.f32 %v2980, %v3000
    %v3009 = vadd.f32 %v2790, %v3005
    %v3010 = vadd.f32 %v2791, %v3006
    %v3011 = vadd.f32 %v2792, %v3007
    %v3012 = vadd.f32 %v2793, %v3008
    %s3013 = scalar_lea.vmem %s4, 72
    %v3014 = vld [vmem:[%s3013] sm:$0xff]
    %3015 = vrot.lane.b32.xlu0 %v1030, 14
    %v3016 = vpop.permute.xlu0 %3015
    %3017 = vrot.lane.b32.xlu0 %v1026, 14
    %v3018 = vpop.permute.xlu0 %3017
    %3019 = vrot.lane.b32.xlu0 %v1027, 14
    %v3020 = vpop.permute.xlu0 %3019
    %3021 = vrot.lane.b32.xlu0 %v1028, 14
    %v3022 = vpop.permute.xlu0 %3021
    %3023 = vrot.lane.b32.xlu0 %v1029, 14
    %v3024 = vpop.permute.xlu0 %3023
    %3025 = vrot.lane.b32.xlu0 %v1031, 14
    %v3026 = vpop.permute.xlu0 %3025
    %3027 = vrot.lane.b32.xlu0 %v1032, 14
    %v3028 = vpop.permute.xlu0 %3027
    %3029 = vrot.lane.b32.xlu0 %v1033, 14
    %v3030 = vpop.permute.xlu0 %3029
    %3031 = vrot.lane.b32.xlu0 %v1034, 14
    %v3032 = vpop.permute.xlu0 %3031
    %3033 = vrot.lane.b32.xlu0 %v1035, 14
    %v3034 = vpop.permute.xlu0 %3033
    %v3035 = vsel %vm1080, %v3016, %v3018
    %v3036 = vsel %vm1080, %v3018, %v3020
    %v3037 = vsel %vm1080, %v3020, %v3022
    %v3038 = vsel %vm1080, %v3022, %v3024
    %v3039 = vsel %vm1080, %v3026, %v3028
    %v3040 = vsel %vm1080, %v3028, %v3030
    %v3041 = vsel %vm1080, %v3030, %v3032
    %v3042 = vsel %vm1080, %v3032, %v3034
    %v3048 = vsel %vm1080, %v3014, 0
    %v3050 = vsel %vm1084, %v3039, 0
    %v3052 = vsel %vm1084, %v3040, 0
    %v3054 = vsel %vm1084, %v3041, 0
    %v3056 = vsel %vm1084, %v3042, 0
    %3058 = vmatprep.subr.mxu0 %v3036
    %3059 = vmatpush1.msra.mxu0 %v3035
    %3060 = vmatprep.subr.mxu0 %v3052
    %3061 = vmatpush1.msra.mxu0 %v3050
    %3062 = vmatprep.subr.mxu0 0.0
    %3063 = vmatpush1.msra.mxu0 0.0
    %3064 = vmatprep.subr.mxu0 0.0
    %3065 = vmatpush1.msra.mxu0 0.0
    %3066 = vmatprep.subr.mxu0 0.0
    %3067 = vmatpush1.msra.mxu0 0.0
    %3068 = vmatprep.subr.mxu0 0.0
    %3069 = vmatpush1.msra.mxu0 0.0
    %3070 = vmatprep.subr.mxu0 0.0
    %3071 = vmatpush1.msra.mxu0 0.0
    %3072 = vmatprep.subr.mxu0 0.0
    %3073 = vmatpush1.msra.mxu0 0.0
    %3074 = vmatprep.subr.mxu0 0.0
    %3075 = vmatpush1.msra.mxu0 0.0
    %3076 = vmatprep.subr.mxu0 0.0
    %3077 = vmatpush1.msra.mxu0 0.0
    %3078 = vmatprep.subr.mxu0 0.0
    %3079 = vmatpush1.msra.mxu0 0.0
    %3080 = vmatprep.subr.mxu0 0.0
    %3081 = vmatpush1.msra.mxu0 0.0
    %3082 = vmatprep.subr.mxu0 0.0
    %3083 = vmatpush1.msra.mxu0 0.0
    %3084 = vmatprep.subr.mxu0 0.0
    %3085 = vmatpush1.msra.mxu0 0.0
    %3086 = vmatprep.subr.mxu0 0.0
    %3087 = vmatpush1.msra.mxu0 0.0
    %3088 = vmatprep.subr.mxu0 0.0
    %3089 = vmatpush1.msra.mxu0 0.0
    %3090 = vmatprep.subr.mxu0 0.0
    %3091 = vmatpush1.msra.mxu0 0.0
    %3092 = vmatprep.subr.mxu0 0.0
    %3093 = vmatpush1.msra.mxu0 0.0
    %3094 = vmatprep.subr.mxu0 0.0
    %3095 = vmatpush1.msra.mxu0 0.0
    %3096 = vmatprep.subr.mxu0 0.0
    %3097 = vmatpush1.msra.mxu0 0.0
    %3098 = vmatprep.subr.mxu0 0.0
    %3099 = vmatpush1.msra.mxu0 0.0
    %3100 = vmatprep.subr.mxu0 0.0
    %3101 = vmatpush1.msra.mxu0 0.0
    %3102 = vmatprep.subr.mxu0 0.0
    %3103 = vmatpush1.msra.mxu0 0.0
    %3104 = vmatprep.subr.mxu0 0.0
    %3105 = vmatpush1.msra.mxu0 0.0
    %3106 = vmatprep.subr.mxu0 0.0
    %3107 = vmatpush1.msra.mxu0 0.0
    %3108 = vmatprep.subr.mxu0 0.0
    %3109 = vmatpush1.msra.mxu0 0.0
    %3110 = vmatprep.subr.mxu0 0.0
    %3111 = vmatpush1.msra.mxu0 0.0
    %3112 = vmatprep.subr.mxu0 0.0
    %3113 = vmatpush1.msra.mxu0 0.0
    %3114 = vmatprep.subr.mxu0 0.0
    %3115 = vmatpush1.msra.mxu0 0.0
    %3116 = vmatprep.subr.mxu0 0.0
    %3117 = vmatpush1.msra.mxu0 0.0
    %3118 = vmatprep.subr.mxu0 0.0
    %3119 = vmatpush1.msra.mxu0 0.0
    %3120 = vmatprep.subr.mxu0 0.0
    %3121 = vmatpush1.msra.mxu0 0.0
    %3122 = vmatprep.mubr.f32.mxu0 0.0
    %3123 = vmatmul.mubr.f32.gmra.mrb[0].mxu0 %v3048
    %v3124 = vpop.f32.mrb[0].mxu0
    %v3125 = vadd.f32 0.0, %v3124
    %v3126 = vpop.f32.mrb[0].mxu0
    %v3127 = vadd.f32 0.0, %v3126
    %3128 = vdwg.mxu0
    %3129 = vmatprep.subr.mxu0 %v3038
    %3130 = vmatpush1.msra.mxu0 %v3037
    %3131 = vmatprep.subr.mxu0 %v3056
    %3132 = vmatpush1.msra.mxu0 %v3054
    %3133 = vmatprep.subr.mxu0 0.0
    %3134 = vmatpush1.msra.mxu0 0.0
    %3135 = vmatprep.subr.mxu0 0.0
    %3136 = vmatpush1.msra.mxu0 0.0
    %3137 = vmatprep.subr.mxu0 0.0
    %3138 = vmatpush1.msra.mxu0 0.0
    %3139 = vmatprep.subr.mxu0 0.0
    %3140 = vmatpush1.msra.mxu0 0.0
    %3141 = vmatprep.subr.mxu0 0.0
    %3142 = vmatpush1.msra.mxu0 0.0
    %3143 = vmatprep.subr.mxu0 0.0
    %3144 = vmatpush1.msra.mxu0 0.0
    %3145 = vmatprep.subr.mxu0 0.0
    %3146 = vmatpush1.msra.mxu0 0.0
    %3147 = vmatprep.subr.mxu0 0.0
    %3148 = vmatpush1.msra.mxu0 0.0
    %3149 = vmatprep.subr.mxu0 0.0
    %3150 = vmatpush1.msra.mxu0 0.0
    %3151 = vmatprep.subr.mxu0 0.0
    %3152 = vmatpush1.msra.mxu0 0.0
    %3153 = vmatprep.subr.mxu0 0.0
    %3154 = vmatpush1.msra.mxu0 0.0
    %3155 = vmatprep.subr.mxu0 0.0
    %3156 = vmatpush1.msra.mxu0 0.0
    %3157 = vmatprep.subr.mxu0 0.0
    %3158 = vmatpush1.msra.mxu0 0.0
    %3159 = vmatprep.subr.mxu0 0.0
    %3160 = vmatpush1.msra.mxu0 0.0
    %3161 = vmatprep.subr.mxu0 0.0
    %3162 = vmatpush1.msra.mxu0 0.0
    %3163 = vmatprep.subr.mxu0 0.0
    %3164 = vmatpush1.msra.mxu0 0.0
    %3165 = vmatprep.subr.mxu0 0.0
    %3166 = vmatpush1.msra.mxu0 0.0
    %3167 = vmatprep.subr.mxu0 0.0
    %3168 = vmatpush1.msra.mxu0 0.0
    %3169 = vmatprep.subr.mxu0 0.0
    %3170 = vmatpush1.msra.mxu0 0.0
    %3171 = vmatprep.subr.mxu0 0.0
    %3172 = vmatpush1.msra.mxu0 0.0
    %3173 = vmatprep.subr.mxu0 0.0
    %3174 = vmatpush1.msra.mxu0 0.0
    %3175 = vmatprep.subr.mxu0 0.0
    %3176 = vmatpush1.msra.mxu0 0.0
    %3177 = vmatprep.subr.mxu0 0.0
    %3178 = vmatpush1.msra.mxu0 0.0
    %3179 = vmatprep.subr.mxu0 0.0
    %3180 = vmatpush1.msra.mxu0 0.0
    %3181 = vmatprep.subr.mxu0 0.0
    %3182 = vmatpush1.msra.mxu0 0.0
    %3183 = vmatprep.subr.mxu0 0.0
    %3184 = vmatpush1.msra.mxu0 0.0
    %3185 = vmatprep.subr.mxu0 0.0
    %3186 = vmatpush1.msra.mxu0 0.0
    %3187 = vmatprep.subr.mxu0 0.0
    %3188 = vmatpush1.msra.mxu0 0.0
    %3189 = vmatprep.subr.mxu0 0.0
    %3190 = vmatpush1.msra.mxu0 0.0
    %3191 = vmatprep.subr.mxu0 0.0
    %3192 = vmatpush1.msra.mxu0 0.0
    %3193 = vmatprep.mubr.f32.mxu0 0.0
    %3194 = vmatmul.mubr.f32.gmra.mrb[0].mxu0 %v3048
    %v3195 = vpop.f32.mrb[0].mxu0
    %v3196 = vadd.f32 0.0, %v3195
    %v3197 = vpop.f32.mrb[0].mxu0
    %v3198 = vadd.f32 0.0, %v3197
    %3199 = vdwg.mxu0
    %s3200 = scalar_lea.vmem %s7, 33
    %v3201 = vld [vmem:[%s3200] ss:$8 sm:$0xf]
    %v3203 = vlaneseq
    %v3204 = vshrl.u32 %v3203, 7
    %v3205 = vsub.s32 0, %v3204
    %v3206 = vrot.slane %v3201, %v3205
    %v3207 = vlaneseq
    %v3208 = vshrl.u32 %v3207, 7
    %v3209 = vsub.s32 1, %v3208
    %v3210 = vrot.slane %v3201, %v3209
    %v3211 = vlaneseq
    %v3212 = vshrl.u32 %v3211, 7
    %v3213 = vsub.s32 2, %v3212
    %v3214 = vrot.slane %v3201, %v3213
    %v3215 = vlaneseq
    %v3216 = vshrl.u32 %v3215, 7
    %v3217 = vsub.s32 3, %v3216
    %v3218 = vrot.slane %v3201, %v3217
    %v3223 = vmul.f32 %v3125, %v3206
    %v3224 = vmul.f32 %v3127, %v3210
    %v3225 = vmul.f32 %v3196, %v3214
    %v3226 = vmul.f32 %v3198, %v3218
    %v3227 = vadd.f32 %v3009, %v3223
    %v3228 = vadd.f32 %v3010, %v3224
    %v3229 = vadd.f32 %v3011, %v3225
    %v3230 = vadd.f32 %v3012, %v3226
    %s3231 = scalar_lea.vmem %s4, 80
    %v3232 = vld [vmem:[%s3231] sm:$0xff]
    %3233 = vrot.lane.b32.xlu0 %v1030, 2
    %v3234 = vpop.permute.xlu0 %3233
    %3235 = vrot.lane.b32.xlu0 %v1026, 2
    %v3236 = vpop.permute.xlu0 %3235
    %3237 = vrot.lane.b32.xlu0 %v1027, 2
    %v3238 = vpop.permute.xlu0 %3237
    %3239 = vrot.lane.b32.xlu0 %v1028, 2
    %v3240 = vpop.permute.xlu0 %3239
    %3241 = vrot.lane.b32.xlu0 %v1029, 2
    %v3242 = vpop.permute.xlu0 %3241
    %3243 = vrot.lane.b32.xlu0 %v1031, 2
    %v3244 = vpop.permute.xlu0 %3243
    %3245 = vrot.lane.b32.xlu0 %v1032, 2
    %v3246 = vpop.permute.xlu0 %3245
    %3247 = vrot.lane.b32.xlu0 %v1033, 2
    %v3248 = vpop.permute.xlu0 %3247
    %3249 = vrot.lane.b32.xlu0 %v1034, 2
    %v3250 = vpop.permute.xlu0 %3249
    %3251 = vrot.lane.b32.xlu0 %v1035, 2
    %v3252 = vpop.permute.xlu0 %3251
    %vm3253 = vcmask 15360
    %v3254 = vsel %vm3253, %v3234, %v3236
    %v3255 = vsel %vm3253, %v3236, %v3238
    %v3256 = vsel %vm3253, %v3238, %v3240
    %v3257 = vsel %vm3253, %v3240, %v3242
    %v3258 = vsel %vm3253, %v3244, %v3246
    %v3259 = vsel %vm3253, %v3246, %v3248
    %v3260 = vsel %vm3253, %v3248, %v3250
    %v3261 = vsel %vm3253, %v3250, %v3252
    %v3267 = vsel %vm1080, %v3232, 0
    %v3269 = vsel %vm1084, %v3258, 0
    %v3271 = vsel %vm1084, %v3259, 0
    %v3273 = vsel %vm1084, %v3260, 0
    %v3275 = vsel %vm1084, %v3261, 0
    %3277 = vmatprep.subr.mxu0 %v3255
    %3278 = vmatpush1.msra.mxu0 %v3254
    %3279 = vmatprep.subr.mxu0 %v3271
    %3280 = vmatpush1.msra.mxu0 %v3269
    %3281 = vmatprep.subr.mxu0 0.0
    %3282 = vmatpush1.msra.mxu0 0.0
    %3283 = vmatprep.subr.mxu0 0.0
    %3284 = vmatpush1.msra.mxu0 0.0
    %3285 = vmatprep.subr.mxu0 0.0
    %3286 = vmatpush1.msra.mxu0 0.0
    %3287 = vmatprep.subr.mxu0 0.0
    %3288 = vmatpush1.msra.mxu0 0.0
    %3289 = vmatprep.subr.mxu0 0.0
    %3290 = vmatpush1.msra.mxu0 0.0
    %3291 = vmatprep.subr.mxu0 0.0
    %3292 = vmatpush1.msra.mxu0 0.0
    %3293 = vmatprep.subr.mxu0 0.0
    %3294 = vmatpush1.msra.mxu0 0.0
    %3295 = vmatprep.subr.mxu0 0.0
    %3296 = vmatpush1.msra.mxu0 0.0
    %3297 = vmatprep.subr.mxu0 0.0
    %3298 = vmatpush1.msra.mxu0 0.0
    %3299 = vmatprep.subr.mxu0 0.0
    %3300 = vmatpush1.msra.mxu0 0.0
    %3301 = vmatprep.subr.mxu0 0.0
    %3302 = vmatpush1.msra.mxu0 0.0
    %3303 = vmatprep.subr.mxu0 0.0
    %3304 = vmatpush1.msra.mxu0 0.0
    %3305 = vmatprep.subr.mxu0 0.0
    %3306 = vmatpush1.msra.mxu0 0.0
    %3307 = vmatprep.subr.mxu0 0.0
    %3308 = vmatpush1.msra.mxu0 0.0
    %3309 = vmatprep.subr.mxu0 0.0
    %3310 = vmatpush1.msra.mxu0 0.0
    %3311 = vmatprep.subr.mxu0 0.0
    %3312 = vmatpush1.msra.mxu0 0.0
    %3313 = vmatprep.subr.mxu0 0.0
    %3314 = vmatpush1.msra.mxu0 0.0
    %3315 = vmatprep.subr.mxu0 0.0
    %3316 = vmatpush1.msra.mxu0 0.0
    %3317 = vmatprep.subr.mxu0 0.0
    %3318 = vmatpush1.msra.mxu0 0.0
    %3319 = vmatprep.subr.mxu0 0.0
    %3320 = vmatpush1.msra.mxu0 0.0
    %3321 = vmatprep.subr.mxu0 0.0
    %3322 = vmatpush1.msra.mxu0 0.0
    %3323 = vmatprep.subr.mxu0 0.0
    %3324 = vmatpush1.msra.mxu0 0.0
    %3325 = vmatprep.subr.mxu0 0.0
    %3326 = vmatpush1.msra.mxu0 0.0
    %3327 = vmatprep.subr.mxu0 0.0
    %3328 = vmatpush1.msra.mxu0 0.0
    %3329 = vmatprep.subr.mxu0 0.0
    %3330 = vmatpush1.msra.mxu0 0.0
    %3331 = vmatprep.subr.mxu0 0.0
    %3332 = vmatpush1.msra.mxu0 0.0
    %3333 = vmatprep.subr.mxu0 0.0
    %3334 = vmatpush1.msra.mxu0 0.0
    %3335 = vmatprep.subr.mxu0 0.0
    %3336 = vmatpush1.msra.mxu0 0.0
    %3337 = vmatprep.subr.mxu0 0.0
    %3338 = vmatpush1.msra.mxu0 0.0
    %3339 = vmatprep.subr.mxu0 0.0
    %3340 = vmatpush1.msra.mxu0 0.0
    %3341 = vmatprep.mubr.f32.mxu0 0.0
    %3342 = vmatmul.mubr.f32.gmra.mrb[0].mxu0 %v3267
    %v3343 = vpop.f32.mrb[0].mxu0
    %v3344 = vadd.f32 0.0, %v3343
    %v3345 = vpop.f32.mrb[0].mxu0
    %v3346 = vadd.f32 0.0, %v3345
    %3347 = vdwg.mxu0
    %3348 = vmatprep.subr.mxu0 %v3257
    %3349 = vmatpush1.msra.mxu0 %v3256
    %3350 = vmatprep.subr.mxu0 %v3275
    %3351 = vmatpush1.msra.mxu0 %v3273
    %3352 = vmatprep.subr.mxu0 0.0
    %3353 = vmatpush1.msra.mxu0 0.0
    %3354 = vmatprep.subr.mxu0 0.0
    %3355 = vmatpush1.msra.mxu0 0.0
    %3356 = vmatprep.subr.mxu0 0.0
    %3357 = vmatpush1.msra.mxu0 0.0
    %3358 = vmatprep.subr.mxu0 0.0
    %3359 = vmatpush1.msra.mxu0 0.0
    %3360 = vmatprep.subr.mxu0 0.0
    %3361 = vmatpush1.msra.mxu0 0.0
    %3362 = vmatprep.subr.mxu0 0.0
    %3363 = vmatpush1.msra.mxu0 0.0
    %3364 = vmatprep.subr.mxu0 0.0
    %3365 = vmatpush1.msra.mxu0 0.0
    %3366 = vmatprep.subr.mxu0 0.0
    %3367 = vmatpush1.msra.mxu0 0.0
    %3368 = vmatprep.subr.mxu0 0.0
    %3369 = vmatpush1.msra.mxu0 0.0
    %3370 = vmatprep.subr.mxu0 0.0
    %3371 = vmatpush1.msra.mxu0 0.0
    %3372 = vmatprep.subr.mxu0 0.0
    %3373 = vmatpush1.msra.mxu0 0.0
    %3374 = vmatprep.subr.mxu0 0.0
    %3375 = vmatpush1.msra.mxu0 0.0
    %3376 = vmatprep.subr.mxu0 0.0
    %3377 = vmatpush1.msra.mxu0 0.0
    %3378 = vmatprep.subr.mxu0 0.0
    %3379 = vmatpush1.msra.mxu0 0.0
    %3380 = vmatprep.subr.mxu0 0.0
    %3381 = vmatpush1.msra.mxu0 0.0
    %3382 = vmatprep.subr.mxu0 0.0
    %3383 = vmatpush1.msra.mxu0 0.0
    %3384 = vmatprep.subr.mxu0 0.0
    %3385 = vmatpush1.msra.mxu0 0.0
    %3386 = vmatprep.subr.mxu0 0.0
    %3387 = vmatpush1.msra.mxu0 0.0
    %3388 = vmatprep.subr.mxu0 0.0
    %3389 = vmatpush1.msra.mxu0 0.0
    %3390 = vmatprep.subr.mxu0 0.0
    %3391 = vmatpush1.msra.mxu0 0.0
    %3392 = vmatprep.subr.mxu0 0.0
    %3393 = vmatpush1.msra.mxu0 0.0
    %3394 = vmatprep.subr.mxu0 0.0
    %3395 = vmatpush1.msra.mxu0 0.0
    %3396 = vmatprep.subr.mxu0 0.0
    %3397 = vmatpush1.msra.mxu0 0.0
    %3398 = vmatprep.subr.mxu0 0.0
    %3399 = vmatpush1.msra.mxu0 0.0
    %3400 = vmatprep.subr.mxu0 0.0
    %3401 = vmatpush1.msra.mxu0 0.0
    %3402 = vmatprep.subr.mxu0 0.0
    %3403 = vmatpush1.msra.mxu0 0.0
    %3404 = vmatprep.subr.mxu0 0.0
    %3405 = vmatpush1.msra.mxu0 0.0
    %3406 = vmatprep.subr.mxu0 0.0
    %3407 = vmatpush1.msra.mxu0 0.0
    %3408 = vmatprep.subr.mxu0 0.0
    %3409 = vmatpush1.msra.mxu0 0.0
    %3410 = vmatprep.subr.mxu0 0.0
    %3411 = vmatpush1.msra.mxu0 0.0
    %3412 = vmatprep.mubr.f32.mxu0 0.0
    %3413 = vmatmul.mubr.f32.gmra.mrb[0].mxu0 %v3267
    %v3414 = vpop.f32.mrb[0].mxu0
    %v3415 = vadd.f32 0.0, %v3414
    %v3416 = vpop.f32.mrb[0].mxu0
    %v3417 = vadd.f32 0.0, %v3416
    %3418 = vdwg.mxu0
    %s3419 = scalar_lea.vmem %s7, 34
    %v3420 = vld [vmem:[%s3419] ss:$8 sm:$0xf]
    %v3422 = vlaneseq
    %v3423 = vshrl.u32 %v3422, 7
    %v3424 = vsub.s32 0, %v3423
    %v3425 = vrot.slane %v3420, %v3424
    %v3426 = vlaneseq
    %v3427 = vshrl.u32 %v3426, 7
    %v3428 = vsub.s32 1, %v3427
    %v3429 = vrot.slane %v3420, %v3428
    %v3430 = vlaneseq
    %v3431 = vshrl.u32 %v3430, 7
    %v3432 = vsub.s32 2, %v3431
    %v3433 = vrot.slane %v3420, %v3432
    %v3434 = vlaneseq
    %v3435 = vshrl.u32 %v3434, 7
    %v3436 = vsub.s32 3, %v3435
    %v3437 = vrot.slane %v3420, %v3436
    %v3442 = vmul.f32 %v3344, %v3425
    %v3443 = vmul.f32 %v3346, %v3429
    %v3444 = vmul.f32 %v3415, %v3433
    %v3445 = vmul.f32 %v3417, %v3437
    %v3446 = vadd.f32 %v3227, %v3442
    %v3447 = vadd.f32 %v3228, %v3443
    %v3448 = vadd.f32 %v3229, %v3444
    %v3449 = vadd.f32 %v3230, %v3445
    %s3450 = scalar_lea.vmem %s4, 88
    %v3451 = vld [vmem:[%s3450] sm:$0xff]
    %3452 = vrot.lane.b32.xlu0 %v1030, 1
    %v3453 = vpop.permute.xlu0 %3452
    %3454 = vrot.lane.b32.xlu0 %v1026, 1
    %v3455 = vpop.permute.xlu0 %3454
    %3456 = vrot.lane.b32.xlu0 %v1027, 1
    %v3457 = vpop.permute.xlu0 %3456
    %3458 = vrot.lane.b32.xlu0 %v1028, 1
    %v3459 = vpop.permute.xlu0 %3458
    %3460 = vrot.lane.b32.xlu0 %v1029, 1
    %v3461 = vpop.permute.xlu0 %3460
    %3462 = vrot.lane.b32.xlu0 %v1031, 1
    %v3463 = vpop.permute.xlu0 %3462
    %3464 = vrot.lane.b32.xlu0 %v1032, 1
    %v3465 = vpop.permute.xlu0 %3464
    %3466 = vrot.lane.b32.xlu0 %v1033, 1
    %v3467 = vpop.permute.xlu0 %3466
    %3468 = vrot.lane.b32.xlu0 %v1034, 1
    %v3469 = vpop.permute.xlu0 %3468
    %3470 = vrot.lane.b32.xlu0 %v1035, 1
    %v3471 = vpop.permute.xlu0 %3470
    %vm3472 = vcmask 7168
    %v3473 = vsel %vm3472, %v3453, %v3455
    %v3474 = vsel %vm3472, %v3455, %v3457
    %v3475 = vsel %vm3472, %v3457, %v3459
    %v3476 = vsel %vm3472, %v3459, %v3461
    %v3477 = vsel %vm3472, %v3463, %v3465
    %v3478 = vsel %vm3472, %v3465, %v3467
    %v3479 = vsel %vm3472, %v3467, %v3469
    %v3480 = vsel %vm3472, %v3469, %v3471
    %v3486 = vsel %vm1080, %v3451, 0
    %v3488 = vsel %vm1084, %v3477, 0
    %v3490 = vsel %vm1084, %v3478, 0
    %v3492 = vsel %vm1084, %v3479, 0
    %v3494 = vsel %vm1084, %v3480, 0
    %3496 = vmatprep.subr.mxu0 %v3474
    %3497 = vmatpush1.msra.mxu0 %v3473
    %3498 = vmatprep.subr.mxu0 %v3490
    %3499 = vmatpush1.msra.mxu0 %v3488
    %3500 = vmatprep.subr.mxu0 0.0
    %3501 = vmatpush1.msra.mxu0 0.0
    %3502 = vmatprep.subr.mxu0 0.0
    %3503 = vmatpush1.msra.mxu0 0.0
    %3504 = vmatprep.subr.mxu0 0.0
    %3505 = vmatpush1.msra.mxu0 0.0
    %3506 = vmatprep.subr.mxu0 0.0
    %3507 = vmatpush1.msra.mxu0 0.0
    %3508 = vmatprep.subr.mxu0 0.0
    %3509 = vmatpush1.msra.mxu0 0.0
    %3510 = vmatprep.subr.mxu0 0.0
    %3511 = vmatpush1.msra.mxu0 0.0
    %3512 = vmatprep.subr.mxu0 0.0
    %3513 = vmatpush1.msra.mxu0 0.0
    %3514 = vmatprep.subr.mxu0 0.0
    %3515 = vmatpush1.msra.mxu0 0.0
    %3516 = vmatprep.subr.mxu0 0.0
    %3517 = vmatpush1.msra.mxu0 0.0
    %3518 = vmatprep.subr.mxu0 0.0
    %3519 = vmatpush1.msra.mxu0 0.0
    %3520 = vmatprep.subr.mxu0 0.0
    %3521 = vmatpush1.msra.mxu0 0.0
    %3522 = vmatprep.subr.mxu0 0.0
    %3523 = vmatpush1.msra.mxu0 0.0
    %3524 = vmatprep.subr.mxu0 0.0
    %3525 = vmatpush1.msra.mxu0 0.0
    %3526 = vmatprep.subr.mxu0 0.0
    %3527 = vmatpush1.msra.mxu0 0.0
    %3528 = vmatprep.subr.mxu0 0.0
    %3529 = vmatpush1.msra.mxu0 0.0
    %3530 = vmatprep.subr.mxu0 0.0
    %3531 = vmatpush1.msra.mxu0 0.0
    %3532 = vmatprep.subr.mxu0 0.0
    %3533 = vmatpush1.msra.mxu0 0.0
    %3534 = vmatprep.subr.mxu0 0.0
    %3535 = vmatpush1.msra.mxu0 0.0
    %3536 = vmatprep.subr.mxu0 0.0
    %3537 = vmatpush1.msra.mxu0 0.0
    %3538 = vmatprep.subr.mxu0 0.0
    %3539 = vmatpush1.msra.mxu0 0.0
    %3540 = vmatprep.subr.mxu0 0.0
    %3541 = vmatpush1.msra.mxu0 0.0
    %3542 = vmatprep.subr.mxu0 0.0
    %3543 = vmatpush1.msra.mxu0 0.0
    %3544 = vmatprep.subr.mxu0 0.0
    %3545 = vmatpush1.msra.mxu0 0.0
    %3546 = vmatprep.subr.mxu0 0.0
    %3547 = vmatpush1.msra.mxu0 0.0
    %3548 = vmatprep.subr.mxu0 0.0
    %3549 = vmatpush1.msra.mxu0 0.0
    %3550 = vmatprep.subr.mxu0 0.0
    %3551 = vmatpush1.msra.mxu0 0.0
    %3552 = vmatprep.subr.mxu0 0.0
    %3553 = vmatpush1.msra.mxu0 0.0
    %3554 = vmatprep.subr.mxu0 0.0
    %3555 = vmatpush1.msra.mxu0 0.0
    %3556 = vmatprep.subr.mxu0 0.0
    %3557 = vmatpush1.msra.mxu0 0.0
    %3558 = vmatprep.subr.mxu0 0.0
    %3559 = vmatpush1.msra.mxu0 0.0
    %3560 = vmatprep.mubr.f32.mxu0 0.0
    %3561 = vmatmul.mubr.f32.gmra.mrb[0].mxu0 %v3486
    %v3562 = vpop.f32.mrb[0].mxu0
    %v3563 = vadd.f32 0.0, %v3562
    %v3564 = vpop.f32.mrb[0].mxu0
    %v3565 = vadd.f32 0.0, %v3564
    %3566 = vdwg.mxu0
    %3567 = vmatprep.subr.mxu0 %v3476
    %3568 = vmatpush1.msra.mxu0 %v3475
    %3569 = vmatprep.subr.mxu0 %v3494
    %3570 = vmatpush1.msra.mxu0 %v3492
    %3571 = vmatprep.subr.mxu0 0.0
    %3572 = vmatpush1.msra.mxu0 0.0
    %3573 = vmatprep.subr.mxu0 0.0
    %3574 = vmatpush1.msra.mxu0 0.0
    %3575 = vmatprep.subr.mxu0 0.0
    %3576 = vmatpush1.msra.mxu0 0.0
    %3577 = vmatprep.subr.mxu0 0.0
    %3578 = vmatpush1.msra.mxu0 0.0
    %3579 = vmatprep.subr.mxu0 0.0
    %3580 = vmatpush1.msra.mxu0 0.0
    %3581 = vmatprep.subr.mxu0 0.0
    %3582 = vmatpush1.msra.mxu0 0.0
    %3583 = vmatprep.subr.mxu0 0.0
    %3584 = vmatpush1.msra.mxu0 0.0
    %3585 = vmatprep.subr.mxu0 0.0
    %3586 = vmatpush1.msra.mxu0 0.0
    %3587 = vmatprep.subr.mxu0 0.0
    %3588 = vmatpush1.msra.mxu0 0.0
    %3589 = vmatprep.subr.mxu0 0.0
    %3590 = vmatpush1.msra.mxu0 0.0
    %3591 = vmatprep.subr.mxu0 0.0
    %3592 = vmatpush1.msra.mxu0 0.0
    %3593 = vmatprep.subr.mxu0 0.0
    %3594 = vmatpush1.msra.mxu0 0.0
    %3595 = vmatprep.subr.mxu0 0.0
    %3596 = vmatpush1.msra.mxu0 0.0
    %3597 = vmatprep.subr.mxu0 0.0
    %3598 = vmatpush1.msra.mxu0 0.0
    %3599 = vmatprep.subr.mxu0 0.0
    %3600 = vmatpush1.msra.mxu0 0.0
    %3601 = vmatprep.subr.mxu0 0.0
    %3602 = vmatpush1.msra.mxu0 0.0
    %3603 = vmatprep.subr.mxu0 0.0
    %3604 = vmatpush1.msra.mxu0 0.0
    %3605 = vmatprep.subr.mxu0 0.0
    %3606 = vmatpush1.msra.mxu0 0.0
    %3607 = vmatprep.subr.mxu0 0.0
    %3608 = vmatpush1.msra.mxu0 0.0
    %3609 = vmatprep.subr.mxu0 0.0
    %3610 = vmatpush1.msra.mxu0 0.0
    %3611 = vmatprep.subr.mxu0 0.0
    %3612 = vmatpush1.msra.mxu0 0.0
    %3613 = vmatprep.subr.mxu0 0.0
    %3614 = vmatpush1.msra.mxu0 0.0
    %3615 = vmatprep.subr.mxu0 0.0
    %3616 = vmatpush1.msra.mxu0 0.0
    %3617 = vmatprep.subr.mxu0 0.0
    %3618 = vmatpush1.msra.mxu0 0.0
    %3619 = vmatprep.subr.mxu0 0.0
    %3620 = vmatpush1.msra.mxu0 0.0
    %3621 = vmatprep.subr.mxu0 0.0
    %3622 = vmatpush1.msra.mxu0 0.0
    %3623 = vmatprep.subr.mxu0 0.0
    %3624 = vmatpush1.msra.mxu0 0.0
    %3625 = vmatprep.subr.mxu0 0.0
    %3626 = vmatpush1.msra.mxu0 0.0
    %3627 = vmatprep.subr.mxu0 0.0
    %3628 = vmatpush1.msra.mxu0 0.0
    %3629 = vmatprep.subr.mxu0 0.0
    %3630 = vmatpush1.msra.mxu0 0.0
    %3631 = vmatprep.mubr.f32.mxu0 0.0
    %3632 = vmatmul.mubr.f32.gmra.mrb[0].mxu0 %v3486
    %v3633 = vpop.f32.mrb[0].mxu0
    %v3634 = vadd.f32 0.0, %v3633
    %v3635 = vpop.f32.mrb[0].mxu0
    %v3636 = vadd.f32 0.0, %v3635
    %3637 = vdwg.mxu0
    %s3638 = scalar_lea.vmem %s7, 35
    %v3639 = vld [vmem:[%s3638] ss:$8 sm:$0xf]
    %v3641 = vlaneseq
    %v3642 = vshrl.u32 %v3641, 7
    %v3643 = vsub.s32 0, %v3642
    %v3644 = vrot.slane %v3639, %v3643
    %v3645 = vlaneseq
    %v3646 = vshrl.u32 %v3645, 7
    %v3647 = vsub.s32 1, %v3646
    %v3648 = vrot.slane %v3639, %v3647
    %v3649 = vlaneseq
    %v3650 = vshrl.u32 %v3649, 7
    %v3651 = vsub.s32 2, %v3650
    %v3652 = vrot.slane %v3639, %v3651
    %v3653 = vlaneseq
    %v3654 = vshrl.u32 %v3653, 7
    %v3655 = vsub.s32 3, %v3654
    %v3656 = vrot.slane %v3639, %v3655
    %v3661 = vmul.f32 %v3563, %v3644
    %v3662 = vmul.f32 %v3565, %v3648
    %v3663 = vmul.f32 %v3634, %v3652
    %v3664 = vmul.f32 %v3636, %v3656
    %v3665 = vadd.f32 %v3446, %v3661
    %v3666 = vadd.f32 %v3447, %v3662
    %v3667 = vadd.f32 %v3448, %v3663
    %v3668 = vadd.f32 %v3449, %v3664
    %s3669 = scalar_lea.vmem %s4, 96
    %v3670 = vld [vmem:[%s3669] sm:$0xff]
    %v3672 = vsel %vm1080, %v3670, 0
    %v3674 = vsel %vm1084, %v1032, 0
    %v3676 = vsel %vm1084, %v1033, 0
    %v3678 = vsel %vm1084, %v1034, 0
    %v3680 = vsel %vm1084, %v1035, 0
    %3682 = vmatprep.subr.mxu0 %v1027
    %3683 = vmatpush1.msra.mxu0 %v1026
    %3684 = vmatprep.subr.mxu0 %v3676
    %3685 = vmatpush1.msra.mxu0 %v3674
    %3686 = vmatprep.subr.mxu0 0.0
    %3687 = vmatpush1.msra.mxu0 0.0
    %3688 = vmatprep.subr.mxu0 0.0
    %3689 = vmatpush1.msra.mxu0 0.0
    %3690 = vmatprep.subr.mxu0 0.0
    %3691 = vmatpush1.msra.mxu0 0.0
    %3692 = vmatprep.subr.mxu0 0.0
    %3693 = vmatpush1.msra.mxu0 0.0
    %3694 = vmatprep.subr.mxu0 0.0
    %3695 = vmatpush1.msra.mxu0 0.0
    %3696 = vmatprep.subr.mxu0 0.0
    %3697 = vmatpush1.msra.mxu0 0.0
    %3698 = vmatprep.subr.mxu0 0.0
    %3699 = vmatpush1.msra.mxu0 0.0
    %3700 = vmatprep.subr.mxu0 0.0
    %3701 = vmatpush1.msra.mxu0 0.0
    %3702 = vmatprep.subr.mxu0 0.0
    %3703 = vmatpush1.msra.mxu0 0.0
    %3704 = vmatprep.subr.mxu0 0.0
    %3705 = vmatpush1.msra.mxu0 0.0
    %3706 = vmatprep.subr.mxu0 0.0
    %3707 = vmatpush1.msra.mxu0 0.0
    %3708 = vmatprep.subr.mxu0 0.0
    %3709 = vmatpush1.msra.mxu0 0.0
    %3710 = vmatprep.subr.mxu0 0.0
    %3711 = vmatpush1.msra.mxu0 0.0
    %3712 = vmatprep.subr.mxu0 0.0
    %3713 = vmatpush1.msra.mxu0 0.0
    %3714 = vmatprep.subr.mxu0 0.0
    %3715 = vmatpush1.msra.mxu0 0.0
    %3716 = vmatprep.subr.mxu0 0.0
    %3717 = vmatpush1.msra.mxu0 0.0
    %3718 = vmatprep.subr.mxu0 0.0
    %3719 = vmatpush1.msra.mxu0 0.0
    %3720 = vmatprep.subr.mxu0 0.0
    %3721 = vmatpush1.msra.mxu0 0.0
    %3722 = vmatprep.subr.mxu0 0.0
    %3723 = vmatpush1.msra.mxu0 0.0
    %3724 = vmatprep.subr.mxu0 0.0
    %3725 = vmatpush1.msra.mxu0 0.0
    %3726 = vmatprep.subr.mxu0 0.0
    %3727 = vmatpush1.msra.mxu0 0.0
    %3728 = vmatprep.subr.mxu0 0.0
    %3729 = vmatpush1.msra.mxu0 0.0
    %3730 = vmatprep.subr.mxu0 0.0
    %3731 = vmatpush1.msra.mxu0 0.0
    %3732 = vmatprep.subr.mxu0 0.0
    %3733 = vmatpush1.msra.mxu0 0.0
    %3734 = vmatprep.subr.mxu0 0.0
    %3735 = vmatpush1.msra.mxu0 0.0
    %3736 = vmatprep.subr.mxu0 0.0
    %3737 = vmatpush1.msra.mxu0 0.0
    %3738 = vmatprep.subr.mxu0 0.0
    %3739 = vmatpush1.msra.mxu0 0.0
    %3740 = vmatprep.subr.mxu0 0.0
    %3741 = vmatpush1.msra.mxu0 0.0
    %3742 = vmatprep.subr.mxu0 0.0
    %3743 = vmatpush1.msra.mxu0 0.0
    %3744 = vmatprep.subr.mxu0 0.0
    %3745 = vmatpush1.msra.mxu0 0.0
    %3746 = vmatprep.mubr.f32.mxu0 0.0
    %3747 = vmatmul.mubr.f32.gmra.mrb[0].mxu0 %v3672
    %v3748 = vpop.f32.mrb[0].mxu0
    %v3749 = vadd.f32 0.0, %v3748
    %v3750 = vpop.f32.mrb[0].mxu0
    %v3751 = vadd.f32 0.0, %v3750
    %3752 = vdwg.mxu0
    %3753 = vmatprep.subr.mxu0 %v1029
    %3754 = vmatpush1.msra.mxu0 %v1028
    %3755 = vmatprep.subr.mxu0 %v3680
    %3756 = vmatpush1.msra.mxu0 %v3678
    %3757 = vmatprep.subr.mxu0 0.0
    %3758 = vmatpush1.msra.mxu0 0.0
    %3759 = vmatprep.subr.mxu0 0.0
    %3760 = vmatpush1.msra.mxu0 0.0
    %3761 = vmatprep.subr.mxu0 0.0
    %3762 = vmatpush1.msra.mxu0 0.0
    %3763 = vmatprep.subr.mxu0 0.0
    %3764 = vmatpush1.msra.mxu0 0.0
    %3765 = vmatprep.subr.mxu0 0.0
    %3766 = vmatpush1.msra.mxu0 0.0
    %3767 = vmatprep.subr.mxu0 0.0
    %3768 = vmatpush1.msra.mxu0 0.0
    %3769 = vmatprep.subr.mxu0 0.0
    %3770 = vmatpush1.msra.mxu0 0.0
    %3771 = vmatprep.subr.mxu0 0.0
    %3772 = vmatpush1.msra.mxu0 0.0
    %3773 = vmatprep.subr.mxu0 0.0
    %3774 = vmatpush1.msra.mxu0 0.0
    %3775 = vmatprep.subr.mxu0 0.0
    %3776 = vmatpush1.msra.mxu0 0.0
    %3777 = vmatprep.subr.mxu0 0.0
    %3778 = vmatpush1.msra.mxu0 0.0
    %3779 = vmatprep.subr.mxu0 0.0
    %3780 = vmatpush1.msra.mxu0 0.0
    %3781 = vmatprep.subr.mxu0 0.0
    %3782 = vmatpush1.msra.mxu0 0.0
    %3783 = vmatprep.subr.mxu0 0.0
    %3784 = vmatpush1.msra.mxu0 0.0
    %3785 = vmatprep.subr.mxu0 0.0
    %3786 = vmatpush1.msra.mxu0 0.0
    %3787 = vmatprep.subr.mxu0 0.0
    %3788 = vmatpush1.msra.mxu0 0.0
    %3789 = vmatprep.subr.mxu0 0.0
    %3790 = vmatpush1.msra.mxu0 0.0
    %3791 = vmatprep.subr.mxu0 0.0
    %3792 = vmatpush1.msra.mxu0 0.0
    %3793 = vmatprep.subr.mxu0 0.0
    %3794 = vmatpush1.msra.mxu0 0.0
    %3795 = vmatprep.subr.mxu0 0.0
    %3796 = vmatpush1.msra.mxu0 0.0
    %3797 = vmatprep.subr.mxu0 0.0
    %3798 = vmatpush1.msra.mxu0 0.0
    %3799 = vmatprep.subr.mxu0 0.0
    %3800 = vmatpush1.msra.mxu0 0.0
    %3801 = vmatprep.subr.mxu0 0.0
    %3802 = vmatpush1.msra.mxu0 0.0
    %3803 = vmatprep.subr.mxu0 0.0
    %3804 = vmatpush1.msra.mxu0 0.0
    %3805 = vmatprep.subr.mxu0 0.0
    %3806 = vmatpush1.msra.mxu0 0.0
    %3807 = vmatprep.subr.mxu0 0.0
    %3808 = vmatpush1.msra.mxu0 0.0
    %3809 = vmatprep.subr.mxu0 0.0
    %3810 = vmatpush1.msra.mxu0 0.0
    %3811 = vmatprep.subr.mxu0 0.0
    %3812 = vmatpush1.msra.mxu0 0.0
    %3813 = vmatprep.subr.mxu0 0.0
    %3814 = vmatpush1.msra.mxu0 0.0
    %3815 = vmatprep.subr.mxu0 0.0
    %3816 = vmatpush1.msra.mxu0 0.0
    %3817 = vmatprep.mubr.f32.mxu0 0.0
    %3818 = vmatmul.mubr.f32.gmra.mrb[0].mxu0 %v3672
    %v3819 = vpop.f32.mrb[0].mxu0
    %v3820 = vadd.f32 0.0, %v3819
    %v3821 = vpop.f32.mrb[0].mxu0
    %v3822 = vadd.f32 0.0, %v3821
    %3823 = vdwg.mxu0
    %v3824 = vadd.f32 %v3665, %v3749
    %v3825 = vadd.f32 %v3666, %v3751
    %v3826 = vadd.f32 %v3667, %v3820
    %v3827 = vadd.f32 %v3668, %v3822
    %v3828 = vld [vmem:[#allocation2 + $0x8] sm:$0xff]
    %v3829 = vld [vmem:[#allocation2 + $0x10] sm:$0xff]
    %v3830 = vld [vmem:[#allocation2 + $0x18] sm:$0xff]
    %v3831 = vld [vmem:[#allocation2 + $0x20] sm:$0xff]
    %v3832 = vld [vmem:[#allocation2 + $0x28] sm:$0xff]
    %v3833 = vld [vmem:[#allocation2 + $0x38] sm:$0x3f]
    %v3834 = vld [vmem:[#allocation2 + $0x40] sm:$0x3f]
    %v3835 = vld [vmem:[#allocation2 + $0x48] sm:$0x3f]
    %v3836 = vld [vmem:[#allocation2 + $0x50] sm:$0x3f]
    %v3837 = vld [vmem:[#allocation2 + $0x58] sm:$0x3f]
    %s3838 = scalar_lea.vmem %s4, 104
    %v3839 = vld [vmem:[%s3838] sm:$0xff]
    %3850 = vrot.lane.b32.xlu0 %v3828, 127
    %v3851 = vpop.permute.xlu0 %3850
    %3852 = vrot.lane.b32.xlu0 %v3829, 127
    %v3853 = vpop.permute.xlu0 %3852
    %3854 = vrot.lane.b32.xlu0 %v3830, 127
    %v3855 = vpop.permute.xlu0 %3854
    %3856 = vrot.lane.b32.xlu0 %v3831, 127
    %v3857 = vpop.permute.xlu0 %3856
    %3858 = vrot.lane.b32.xlu0 %v3832, 127
    %v3859 = vpop.permute.xlu0 %3858
    %3860 = vrot.lane.b32.xlu0 %v3833, 127
    %v3861 = vpop.permute.xlu0 %3860
    %3862 = vrot.lane.b32.xlu0 %v3834, 127
    %v3863 = vpop.permute.xlu0 %3862
    %3864 = vrot.lane.b32.xlu0 %v3835, 127
    %v3865 = vpop.permute.xlu0 %3864
    %3866 = vrot.lane.b32.xlu0 %v3836, 127
    %v3867 = vpop.permute.xlu0 %3866
    %3868 = vrot.lane.b32.xlu0 %v3837, 127
    %v3869 = vpop.permute.xlu0 %3868
    %vm3870 = vcmask 1039360
    %v3871 = vsel %vm3870, %v3851, %v3853
    %v3872 = vsel %vm3870, %v3853, %v3855
    %v3873 = vsel %vm3870, %v3855, %v3857
    %v3874 = vsel %vm3870, %v3857, %v3859
    %v3875 = vsel %vm3870, %v3861, %v3863
    %v3876 = vsel %vm3870, %v3863, %v3865
    %v3877 = vsel %vm3870, %v3865, %v3867
    %v3878 = vsel %vm3870, %v3867, %v3869
    %v3884 = vsel %vm1080, %v3839, 0
    %v3886 = vsel %vm1084, %v3875, 0
    %v3888 = vsel %vm1084, %v3876, 0
    %v3890 = vsel %vm1084, %v3877, 0
    %v3892 = vsel %vm1084, %v3878, 0
    %3894 = vmatprep.subr.mxu0 %v3872
    %3895 = vmatpush1.msra.mxu0 %v3871
    %3896 = vmatprep.subr.mxu0 %v3888
    %3897 = vmatpush1.msra.mxu0 %v3886
    %3898 = vmatprep.subr.mxu0 0.0
    %3899 = vmatpush1.msra.mxu0 0.0
    %3900 = vmatprep.subr.mxu0 0.0
    %3901 = vmatpush1.msra.mxu0 0.0
    %3902 = vmatprep.subr.mxu0 0.0
    %3903 = vmatpush1.msra.mxu0 0.0
    %3904 = vmatprep.subr.mxu0 0.0
    %3905 = vmatpush1.msra.mxu0 0.0
    %3906 = vmatprep.subr.mxu0 0.0
    %3907 = vmatpush1.msra.mxu0 0.0
    %3908 = vmatprep.subr.mxu0 0.0
    %3909 = vmatpush1.msra.mxu0 0.0
    %3910 = vmatprep.subr.mxu0 0.0
    %3911 = vmatpush1.msra.mxu0 0.0
    %3912 = vmatprep.subr.mxu0 0.0
    %3913 = vmatpush1.msra.mxu0 0.0
    %3914 = vmatprep.subr.mxu0 0.0
    %3915 = vmatpush1.msra.mxu0 0.0
    %3916 = vmatprep.subr.mxu0 0.0
    %3917 = vmatpush1.msra.mxu0 0.0
    %3918 = vmatprep.subr.mxu0 0.0
    %3919 = vmatpush1.msra.mxu0 0.0
    %3920 = vmatprep.subr.mxu0 0.0
    %3921 = vmatpush1.msra.mxu0 0.0
    %3922 = vmatprep.subr.mxu0 0.0
    %3923 = vmatpush1.msra.mxu0 0.0
    %3924 = vmatprep.subr.mxu0 0.0
    %3925 = vmatpush1.msra.mxu0 0.0
    %3926 = vmatprep.subr.mxu0 0.0
    %3927 = vmatpush1.msra.mxu0 0.0
    %3928 = vmatprep.subr.mxu0 0.0
    %3929 = vmatpush1.msra.mxu0 0.0
    %3930 = vmatprep.subr.mxu0 0.0
    %3931 = vmatpush1.msra.mxu0 0.0
    %3932 = vmatprep.subr.mxu0 0.0
    %3933 = vmatpush1.msra.mxu0 0.0
    %3934 = vmatprep.subr.mxu0 0.0
    %3935 = vmatpush1.msra.mxu0 0.0
    %3936 = vmatprep.subr.mxu0 0.0
    %3937 = vmatpush1.msra.mxu0 0.0
    %3938 = vmatprep.subr.mxu0 0.0
    %3939 = vmatpush1.msra.mxu0 0.0
    %3940 = vmatprep.subr.mxu0 0.0
    %3941 = vmatpush1.msra.mxu0 0.0
    %3942 = vmatprep.subr.mxu0 0.0
    %3943 = vmatpush1.msra.mxu0 0.0
    %3944 = vmatprep.subr.mxu0 0.0
    %3945 = vmatpush1.msra.mxu0 0.0
    %3946 = vmatprep.subr.mxu0 0.0
    %3947 = vmatpush1.msra.mxu0 0.0
    %3948 = vmatprep.subr.mxu0 0.0
    %3949 = vmatpush1.msra.mxu0 0.0
    %3950 = vmatprep.subr.mxu0 0.0
    %3951 = vmatpush1.msra.mxu0 0.0
    %3952 = vmatprep.subr.mxu0 0.0
    %3953 = vmatpush1.msra.mxu0 0.0
    %3954 = vmatprep.subr.mxu0 0.0
    %3955 = vmatpush1.msra.mxu0 0.0
    %3956 = vmatprep.subr.mxu0 0.0
    %3957 = vmatpush1.msra.mxu0 0.0
    %3958 = vmatprep.mubr.f32.mxu0 0.0
    %3959 = vmatmul.mubr.f32.gmra.mrb[0].mxu0 %v3884
    %v3960 = vpop.f32.mrb[0].mxu0
    %v3961 = vadd.f32 0.0, %v3960
    %v3962 = vpop.f32.mrb[0].mxu0
    %v3963 = vadd.f32 0.0, %v3962
    %3964 = vdwg.mxu0
    %3965 = vmatprep.subr.mxu0 %v3874
    %3966 = vmatpush1.msra.mxu0 %v3873
    %3967 = vmatprep.subr.mxu0 %v3892
    %3968 = vmatpush1.msra.mxu0 %v3890
    %3969 = vmatprep.subr.mxu0 0.0
    %3970 = vmatpush1.msra.mxu0 0.0
    %3971 = vmatprep.subr.mxu0 0.0
    %3972 = vmatpush1.msra.mxu0 0.0
    %3973 = vmatprep.subr.mxu0 0.0
    %3974 = vmatpush1.msra.mxu0 0.0
    %3975 = vmatprep.subr.mxu0 0.0
    %3976 = vmatpush1.msra.mxu0 0.0
    %3977 = vmatprep.subr.mxu0 0.0
    %3978 = vmatpush1.msra.mxu0 0.0
    %3979 = vmatprep.subr.mxu0 0.0
    %3980 = vmatpush1.msra.mxu0 0.0
    %3981 = vmatprep.subr.mxu0 0.0
    %3982 = vmatpush1.msra.mxu0 0.0
    %3983 = vmatprep.subr.mxu0 0.0
    %3984 = vmatpush1.msra.mxu0 0.0
    %3985 = vmatprep.subr.mxu0 0.0
    %3986 = vmatpush1.msra.mxu0 0.0
    %3987 = vmatprep.subr.mxu0 0.0
    %3988 = vmatpush1.msra.mxu0 0.0
    %3989 = vmatprep.subr.mxu0 0.0
    %3990 = vmatpush1.msra.mxu0 0.0
    %3991 = vmatprep.subr.mxu0 0.0
    %3992 = vmatpush1.msra.mxu0 0.0
    %3993 = vmatprep.subr.mxu0 0.0
    %3994 = vmatpush1.msra.mxu0 0.0
    %3995 = vmatprep.subr.mxu0 0.0
    %3996 = vmatpush1.msra.mxu0 0.0
    %3997 = vmatprep.subr.mxu0 0.0
    %3998 = vmatpush1.msra.mxu0 0.0
    %3999 = vmatprep.subr.mxu0 0.0
    %4000 = vmatpush1.msra.mxu0 0.0
    %4001 = vmatprep.subr.mxu0 0.0
    %4002 = vmatpush1.msra.mxu0 0.0
    %4003 = vmatprep.subr.mxu0 0.0
    %4004 = vmatpush1.msra.mxu0 0.0
    %4005 = vmatprep.subr.mxu0 0.0
    %4006 = vmatpush1.msra.mxu0 0.0
    %4007 = vmatprep.subr.mxu0 0.0
    %4008 = vmatpush1.msra.mxu0 0.0
    %4009 = vmatprep.subr.mxu0 0.0
    %4010 = vmatpush1.msra.mxu0 0.0
    %4011 = vmatprep.subr.mxu0 0.0
    %4012 = vmatpush1.msra.mxu0 0.0
    %4013 = vmatprep.subr.mxu0 0.0
    %4014 = vmatpush1.msra.mxu0 0.0
    %4015 = vmatprep.subr.mxu0 0.0
    %4016 = vmatpush1.msra.mxu0 0.0
    %4017 = vmatprep.subr.mxu0 0.0
    %4018 = vmatpush1.msra.mxu0 0.0
    %4019 = vmatprep.subr.mxu0 0.0
    %4020 = vmatpush1.msra.mxu0 0.0
    %4021 = vmatprep.subr.mxu0 0.0
    %4022 = vmatpush1.msra.mxu0 0.0
    %4023 = vmatprep.subr.mxu0 0.0
    %4024 = vmatpush1.msra.mxu0 0.0
    %4025 = vmatprep.subr.mxu0 0.0
    %4026 = vmatpush1.msra.mxu0 0.0
    %4027 = vmatprep.subr.mxu0 0.0
    %4028 = vmatpush1.msra.mxu0 0.0
    %4029 = vmatprep.mubr.f32.mxu0 0.0
    %4030 = vmatmul.mubr.f32.gmra.mrb[0].mxu0 %v3884
    %v4031 = vpop.f32.mrb[0].mxu0
    %v4032 = vadd.f32 0.0, %v4031
    %v4033 = vpop.f32.mrb[0].mxu0
    %v4034 = vadd.f32 0.0, %v4033
    %4035 = vdwg.mxu0
    %s4036 = scalar_lea.vmem %s7, 37
    %v4037 = vld [vmem:[%s4036] ss:$8 sm:$0xf]
    %v4039 = vlaneseq
    %v4040 = vshrl.u32 %v4039, 7
    %v4041 = vsub.s32 0, %v4040
    %v4042 = vrot.slane %v4037, %v4041
    %v4043 = vlaneseq
    %v4044 = vshrl.u32 %v4043, 7
    %v4045 = vsub.s32 1, %v4044
    %v4046 = vrot.slane %v4037, %v4045
    %v4047 = vlaneseq
    %v4048 = vshrl.u32 %v4047, 7
    %v4049 = vsub.s32 2, %v4048
    %v4050 = vrot.slane %v4037, %v4049
    %v4051 = vlaneseq
    %v4052 = vshrl.u32 %v4051, 7
    %v4053 = vsub.s32 3, %v4052
    %v4054 = vrot.slane %v4037, %v4053
    %v4059 = vmul.f32 %v3961, %v4042
    %v4060 = vmul.f32 %v3963, %v4046
    %v4061 = vmul.f32 %v4032, %v4050
    %v4062 = vmul.f32 %v4034, %v4054
    %v4063 = vadd.f32 %v3824, %v4059
    %v4064 = vadd.f32 %v3825, %v4060
    %v4065 = vadd.f32 %v3826, %v4061
    %v4066 = vadd.f32 %v3827, %v4062
    %s4067 = scalar_lea.vmem %s4, 112
    %v4068 = vld [vmem:[%s4067] sm:$0xff]
    %4069 = vrot.lane.b32.xlu0 %v3828, 126
    %v4070 = vpop.permute.xlu0 %4069
    %4071 = vrot.lane.b32.xlu0 %v3829, 126
    %v4072 = vpop.permute.xlu0 %4071
    %4073 = vrot.lane.b32.xlu0 %v3830, 126
    %v4074 = vpop.permute.xlu0 %4073
    %4075 = vrot.lane.b32.xlu0 %v3831, 126
    %v4076 = vpop.permute.xlu0 %4075
    %4077 = vrot.lane.b32.xlu0 %v3832, 126
    %v4078 = vpop.permute.xlu0 %4077
    %4079 = vrot.lane.b32.xlu0 %v3833, 126
    %v4080 = vpop.permute.xlu0 %4079
    %4081 = vrot.lane.b32.xlu0 %v3834, 126
    %v4082 = vpop.permute.xlu0 %4081
    %4083 = vrot.lane.b32.xlu0 %v3835, 126
    %v4084 = vpop.permute.xlu0 %4083
    %4085 = vrot.lane.b32.xlu0 %v3836, 126
    %v4086 = vpop.permute.xlu0 %4085
    %4087 = vrot.lane.b32.xlu0 %v3837, 126
    %v4088 = vpop.permute.xlu0 %4087
    %vm4089 = vcmask 1031168
    %v4090 = vsel %vm4089, %v4070, %v4072
    %v4091 = vsel %vm4089, %v4072, %v4074
    %v4092 = vsel %vm4089, %v4074, %v4076
    %v4093 = vsel %vm4089, %v4076, %v4078
    %v4094 = vsel %vm4089, %v4080, %v4082
    %v4095 = vsel %vm4089, %v4082, %v4084
    %v4096 = vsel %vm4089, %v4084, %v4086
    %v4097 = vsel %vm4089, %v4086, %v4088
    %v4103 = vsel %vm1080, %v4068, 0
    %v4105 = vsel %vm1084, %v4094, 0
    %v4107 = vsel %vm1084, %v4095, 0
    %v4109 = vsel %vm1084, %v4096, 0
    %v4111 = vsel %vm1084, %v4097, 0
    %4113 = vmatprep.subr.mxu0 %v4091
    %4114 = vmatpush1.msra.mxu0 %v4090
    %4115 = vmatprep.subr.mxu0 %v4107
    %4116 = vmatpush1.msra.mxu0 %v4105
    %4117 = vmatprep.subr.mxu0 0.0
    %4118 = vmatpush1.msra.mxu0 0.0
    %4119 = vmatprep.subr.mxu0 0.0
    %4120 = vmatpush1.msra.mxu0 0.0
    %4121 = vmatprep.subr.mxu0 0.0
    %4122 = vmatpush1.msra.mxu0 0.0
    %4123 = vmatprep.subr.mxu0 0.0
    %4124 = vmatpush1.msra.mxu0 0.0
    %4125 = vmatprep.subr.mxu0 0.0
    %4126 = vmatpush1.msra.mxu0 0.0
    %4127 = vmatprep.subr.mxu0 0.0
    %4128 = vmatpush1.msra.mxu0 0.0
    %4129 = vmatprep.subr.mxu0 0.0
    %4130 = vmatpush1.msra.mxu0 0.0
    %4131 = vmatprep.subr.mxu0 0.0
    %4132 = vmatpush1.msra.mxu0 0.0
    %4133 = vmatprep.subr.mxu0 0.0
    %4134 = vmatpush1.msra.mxu0 0.0
    %4135 = vmatprep.subr.mxu0 0.0
    %4136 = vmatpush1.msra.mxu0 0.0
    %4137 = vmatprep.subr.mxu0 0.0
    %4138 = vmatpush1.msra.mxu0 0.0
    %4139 = vmatprep.subr.mxu0 0.0
    %4140 = vmatpush1.msra.mxu0 0.0
    %4141 = vmatprep.subr.mxu0 0.0
    %4142 = vmatpush1.msra.mxu0 0.0
    %4143 = vmatprep.subr.mxu0 0.0
    %4144 = vmatpush1.msra.mxu0 0.0
    %4145 = vmatprep.subr.mxu0 0.0
    %4146 = vmatpush1.msra.mxu0 0.0
    %4147 = vmatprep.subr.mxu0 0.0
    %4148 = vmatpush1.msra.mxu0 0.0
    %4149 = vmatprep.subr.mxu0 0.0
    %4150 = vmatpush1.msra.mxu0 0.0
    %4151 = vmatprep.subr.mxu0 0.0
    %4152 = vmatpush1.msra.mxu0 0.0
    %4153 = vmatprep.subr.mxu0 0.0
    %4154 = vmatpush1.msra.mxu0 0.0
    %4155 = vmatprep.subr.mxu0 0.0
    %4156 = vmatpush1.msra.mxu0 0.0
    %4157 = vmatprep.subr.mxu0 0.0
    %4158 = vmatpush1.msra.mxu0 0.0
    %4159 = vmatprep.subr.mxu0 0.0
    %4160 = vmatpush1.msra.mxu0 0.0
    %4161 = vmatprep.subr.mxu0 0.0
    %4162 = vmatpush1.msra.mxu0 0.0
    %4163 = vmatprep.subr.mxu0 0.0
    %4164 = vmatpush1.msra.mxu0 0.0
    %4165 = vmatprep.subr.mxu0 0.0
    %4166 = vmatpush1.msra.mxu0 0.0
    %4167 = vmatprep.subr.mxu0 0.0
    %4168 = vmatpush1.msra.mxu0 0.0
    %4169 = vmatprep.subr.mxu0 0.0
    %4170 = vmatpush1.msra.mxu0 0.0
    %4171 = vmatprep.subr.mxu0 0.0
    %4172 = vmatpush1.msra.mxu0 0.0
    %4173 = vmatprep.subr.mxu0 0.0
    %4174 = vmatpush1.msra.mxu0 0.0
    %4175 = vmatprep.subr.mxu0 0.0
    %4176 = vmatpush1.msra.mxu0 0.0
    %4177 = vmatprep.mubr.f32.mxu0 0.0
    %4178 = vmatmul.mubr.f32.gmra.mrb[0].mxu0 %v4103
    %v4179 = vpop.f32.mrb[0].mxu0
    %v4180 = vadd.f32 0.0, %v4179
    %v4181 = vpop.f32.mrb[0].mxu0
    %v4182 = vadd.f32 0.0, %v4181
    %4183 = vdwg.mxu0
    %4184 = vmatprep.subr.mxu0 %v4093
    %4185 = vmatpush1.msra.mxu0 %v4092
    %4186 = vmatprep.subr.mxu0 %v4111
    %4187 = vmatpush1.msra.mxu0 %v4109
    %4188 = vmatprep.subr.mxu0 0.0
    %4189 = vmatpush1.msra.mxu0 0.0
    %4190 = vmatprep.subr.mxu0 0.0
    %4191 = vmatpush1.msra.mxu0 0.0
    %4192 = vmatprep.subr.mxu0 0.0
    %4193 = vmatpush1.msra.mxu0 0.0
    %4194 = vmatprep.subr.mxu0 0.0
    %4195 = vmatpush1.msra.mxu0 0.0
    %4196 = vmatprep.subr.mxu0 0.0
    %4197 = vmatpush1.msra.mxu0 0.0
    %4198 = vmatprep.subr.mxu0 0.0
    %4199 = vmatpush1.msra.mxu0 0.0
    %4200 = vmatprep.subr.mxu0 0.0
    %4201 = vmatpush1.msra.mxu0 0.0
    %4202 = vmatprep.subr.mxu0 0.0
    %4203 = vmatpush1.msra.mxu0 0.0
    %4204 = vmatprep.subr.mxu0 0.0
    %4205 = vmatpush1.msra.mxu0 0.0
    %4206 = vmatprep.subr.mxu0 0.0
    %4207 = vmatpush1.msra.mxu0 0.0
    %4208 = vmatprep.subr.mxu0 0.0
    %4209 = vmatpush1.msra.mxu0 0.0
    %4210 = vmatprep.subr.mxu0 0.0
    %4211 = vmatpush1.msra.mxu0 0.0
    %4212 = vmatprep.subr.mxu0 0.0
    %4213 = vmatpush1.msra.mxu0 0.0
    %4214 = vmatprep.subr.mxu0 0.0
    %4215 = vmatpush1.msra.mxu0 0.0
    %4216 = vmatprep.subr.mxu0 0.0
    %4217 = vmatpush1.msra.mxu0 0.0
    %4218 = vmatprep.subr.mxu0 0.0
    %4219 = vmatpush1.msra.mxu0 0.0
    %4220 = vmatprep.subr.mxu0 0.0
    %4221 = vmatpush1.msra.mxu0 0.0
    %4222 = vmatprep.subr.mxu0 0.0
    %4223 = vmatpush1.msra.mxu0 0.0
    %4224 = vmatprep.subr.mxu0 0.0
    %4225 = vmatpush1.msra.mxu0 0.0
    %4226 = vmatprep.subr.mxu0 0.0
    %4227 = vmatpush1.msra.mxu0 0.0
    %4228 = vmatprep.subr.mxu0 0.0
    %4229 = vmatpush1.msra.mxu0 0.0
    %4230 = vmatprep.subr.mxu0 0.0
    %4231 = vmatpush1.msra.mxu0 0.0
    %4232 = vmatprep.subr.mxu0 0.0
    %4233 = vmatpush1.msra.mxu0 0.0
    %4234 = vmatprep.subr.mxu0 0.0
    %4235 = vmatpush1.msra.mxu0 0.0
    %4236 = vmatprep.subr.mxu0 0.0
    %4237 = vmatpush1.msra.mxu0 0.0
    %4238 = vmatprep.subr.mxu0 0.0
    %4239 = vmatpush1.msra.mxu0 0.0
    %4240 = vmatprep.subr.mxu0 0.0
    %4241 = vmatpush1.msra.mxu0 0.0
    %4242 = vmatprep.subr.mxu0 0.0
    %4243 = vmatpush1.msra.mxu0 0.0
    %4244 = vmatprep.subr.mxu0 0.0
    %4245 = vmatpush1.msra.mxu0 0.0
    %4246 = vmatprep.subr.mxu0 0.0
    %4247 = vmatpush1.msra.mxu0 0.0
    %4248 = vmatprep.mubr.f32.mxu0 0.0
    %4249 = vmatmul.mubr.f32.gmra.mrb[0].mxu0 %v4103
    %v4250 = vpop.f32.mrb[0].mxu0
    %v4251 = vadd.f32 0.0, %v4250
    %v4252 = vpop.f32.mrb[0].mxu0
    %v4253 = vadd.f32 0.0, %v4252
    %4254 = vdwg.mxu0
    %s4255 = scalar_lea.vmem %s7, 38
    %v4256 = vld [vmem:[%s4255] ss:$8 sm:$0xf]
    %v4258 = vlaneseq
    %v4259 = vshrl.u32 %v4258, 7
    %v4260 = vsub.s32 0, %v4259
    %v4261 = vrot.slane %v4256, %v4260
    %v4262 = vlaneseq
    %v4263 = vshrl.u32 %v4262, 7
    %v4264 = vsub.s32 1, %v4263
    %v4265 = vrot.slane %v4256, %v4264
    %v4266 = vlaneseq
    %v4267 = vshrl.u32 %v4266, 7
    %v4268 = vsub.s32 2, %v4267
    %v4269 = vrot.slane %v4256, %v4268
    %v4270 = vlaneseq
    %v4271 = vshrl.u32 %v4270, 7
    %v4272 = vsub.s32 3, %v4271
    %v4273 = vrot.slane %v4256, %v4272
    %v4278 = vmul.f32 %v4180, %v4261
    %v4279 = vmul.f32 %v4182, %v4265
    %v4280 = vmul.f32 %v4251, %v4269
    %v4281 = vmul.f32 %v4253, %v4273
    %v4282 = vadd.f32 %v4063, %v4278
    %v4283 = vadd.f32 %v4064, %v4279
    %v4284 = vadd.f32 %v4065, %v4280
    %v4285 = vadd.f32 %v4066, %v4281
    %s4286 = scalar_lea.vmem %s4, 120
    %v4287 = vld [vmem:[%s4286] sm:$0xff]
    %4288 = vrot.lane.b32.xlu0 %v3828, 114
    %v4289 = vpop.permute.xlu0 %4288
    %4290 = vrot.lane.b32.xlu0 %v3829, 114
    %v4291 = vpop.permute.xlu0 %4290
    %4292 = vrot.lane.b32.xlu0 %v3830, 114
    %v4293 = vpop.permute.xlu0 %4292
    %4294 = vrot.lane.b32.xlu0 %v3831, 114
    %v4295 = vpop.permute.xlu0 %4294
    %4296 = vrot.lane.b32.xlu0 %v3832, 114
    %v4297 = vpop.permute.xlu0 %4296
    %4298 = vrot.lane.b32.xlu0 %v3833, 114
    %v4299 = vpop.permute.xlu0 %4298
    %4300 = vrot.lane.b32.xlu0 %v3834, 114
    %v4301 = vpop.permute.xlu0 %4300
    %4302 = vrot.lane.b32.xlu0 %v3835, 114
    %v4303 = vpop.permute.xlu0 %4302
    %4304 = vrot.lane.b32.xlu0 %v3836, 114
    %v4305 = vpop.permute.xlu0 %4304
    %4306 = vrot.lane.b32.xlu0 %v3837, 114
    %v4307 = vpop.permute.xlu0 %4306
    %vm4308 = vcmask 932864
    %v4309 = vsel %vm4308, %v4289, %v4291
    %v4310 = vsel %vm4308, %v4291, %v4293
    %v4311 = vsel %vm4308, %v4293, %v4295
    %v4312 = vsel %vm4308, %v4295, %v4297
    %v4313 = vsel %vm4308, %v4299, %v4301
    %v4314 = vsel %vm4308, %v4301, %v4303
    %v4315 = vsel %vm4308, %v4303, %v4305
    %v4316 = vsel %vm4308, %v4305, %v4307
    %v4322 = vsel %vm1080, %v4287, 0
    %v4324 = vsel %vm1084, %v4313, 0
    %v4326 = vsel %vm1084, %v4314, 0
    %v4328 = vsel %vm1084, %v4315, 0
    %v4330 = vsel %vm1084, %v4316, 0
    %4332 = vmatprep.subr.mxu0 %v4310
    %4333 = vmatpush1.msra.mxu0 %v4309
    %4334 = vmatprep.subr.mxu0 %v4326
    %4335 = vmatpush1.msra.mxu0 %v4324
    %4336 = vmatprep.subr.mxu0 0.0
    %4337 = vmatpush1.msra.mxu0 0.0
    %4338 = vmatprep.subr.mxu0 0.0
    %4339 = vmatpush1.msra.mxu0 0.0
    %4340 = vmatprep.subr.mxu0 0.0
    %4341 = vmatpush1.msra.mxu0 0.0
    %4342 = vmatprep.subr.mxu0 0.0
    %4343 = vmatpush1.msra.mxu0 0.0
    %4344 = vmatprep.subr.mxu0 0.0
    %4345 = vmatpush1.msra.mxu0 0.0
    %4346 = vmatprep.subr.mxu0 0.0
    %4347 = vmatpush1.msra.mxu0 0.0
    %4348 = vmatprep.subr.mxu0 0.0
    %4349 = vmatpush1.msra.mxu0 0.0
    %4350 = vmatprep.subr.mxu0 0.0
    %4351 = vmatpush1.msra.mxu0 0.0
    %4352 = vmatprep.subr.mxu0 0.0
    %4353 = vmatpush1.msra.mxu0 0.0
    %4354 = vmatprep.subr.mxu0 0.0
    %4355 = vmatpush1.msra.mxu0 0.0
    %4356 = vmatprep.subr.mxu0 0.0
    %4357 = vmatpush1.msra.mxu0 0.0
    %4358 = vmatprep.subr.mxu0 0.0
    %4359 = vmatpush1.msra.mxu0 0.0
    %4360 = vmatprep.subr.mxu0 0.0
    %4361 = vmatpush1.msra.mxu0 0.0
    %4362 = vmatprep.subr.mxu0 0.0
    %4363 = vmatpush1.msra.mxu0 0.0
    %4364 = vmatprep.subr.mxu0 0.0
    %4365 = vmatpush1.msra.mxu0 0.0
    %4366 = vmatprep.subr.mxu0 0.0
    %4367 = vmatpush1.msra.mxu0 0.0
    %4368 = vmatprep.subr.mxu0 0.0
    %4369 = vmatpush1.msra.mxu0 0.0
    %4370 = vmatprep.subr.mxu0 0.0
    %4371 = vmatpush1.msra.mxu0 0.0
    %4372 = vmatprep.subr.mxu0 0.0
    %4373 = vmatpush1.msra.mxu0 0.0
    %4374 = vmatprep.subr.mxu0 0.0
    %4375 = vmatpush1.msra.mxu0 0.0
    %4376 = vmatprep.subr.mxu0 0.0
    %4377 = vmatpush1.msra.mxu0 0.0
    %4378 = vmatprep.subr.mxu0 0.0
    %4379 = vmatpush1.msra.mxu0 0.0
    %4380 = vmatprep.subr.mxu0 0.0
    %4381 = vmatpush1.msra.mxu0 0.0
    %4382 = vmatprep.subr.mxu0 0.0
    %4383 = vmatpush1.msra.mxu0 0.0
    %4384 = vmatprep.subr.mxu0 0.0
    %4385 = vmatpush1.msra.mxu0 0.0
    %4386 = vmatprep.subr.mxu0 0.0
    %4387 = vmatpush1.msra.mxu0 0.0
    %4388 = vmatprep.subr.mxu0 0.0
    %4389 = vmatpush1.msra.mxu0 0.0
    %4390 = vmatprep.subr.mxu0 0.0
    %4391 = vmatpush1.msra.mxu0 0.0
    %4392 = vmatprep.subr.mxu0 0.0
    %4393 = vmatpush1.msra.mxu0 0.0
    %4394 = vmatprep.subr.mxu0 0.0
    %4395 = vmatpush1.msra.mxu0 0.0
    %4396 = vmatprep.mubr.f32.mxu0 0.0
    %4397 = vmatmul.mubr.f32.gmra.mrb[0].mxu0 %v4322
    %v4398 = vpop.f32.mrb[0].mxu0
    %v4399 = vadd.f32 0.0, %v4398
    %v4400 = vpop.f32.mrb[0].mxu0
    %v4401 = vadd.f32 0.0, %v4400
    %4402 = vdwg.mxu0
    %4403 = vmatprep.subr.mxu0 %v4312
    %4404 = vmatpush1.msra.mxu0 %v4311
    %4405 = vmatprep.subr.mxu0 %v4330
    %4406 = vmatpush1.msra.mxu0 %v4328
    %4407 = vmatprep.subr.mxu0 0.0
    %4408 = vmatpush1.msra.mxu0 0.0
    %4409 = vmatprep.subr.mxu0 0.0
    %4410 = vmatpush1.msra.mxu0 0.0
    %4411 = vmatprep.subr.mxu0 0.0
    %4412 = vmatpush1.msra.mxu0 0.0
    %4413 = vmatprep.subr.mxu0 0.0
    %4414 = vmatpush1.msra.mxu0 0.0
    %4415 = vmatprep.subr.mxu0 0.0
    %4416 = vmatpush1.msra.mxu0 0.0
    %4417 = vmatprep.subr.mxu0 0.0
    %4418 = vmatpush1.msra.mxu0 0.0
    %4419 = vmatprep.subr.mxu0 0.0
    %4420 = vmatpush1.msra.mxu0 0.0
    %4421 = vmatprep.subr.mxu0 0.0
    %4422 = vmatpush1.msra.mxu0 0.0
    %4423 = vmatprep.subr.mxu0 0.0
    %4424 = vmatpush1.msra.mxu0 0.0
    %4425 = vmatprep.subr.mxu0 0.0
    %4426 = vmatpush1.msra.mxu0 0.0
    %4427 = vmatprep.subr.mxu0 0.0
    %4428 = vmatpush1.msra.mxu0 0.0
    %4429 = vmatprep.subr.mxu0 0.0
    %4430 = vmatpush1.msra.mxu0 0.0
    %4431 = vmatprep.subr.mxu0 0.0
    %4432 = vmatpush1.msra.mxu0 0.0
    %4433 = vmatprep.subr.mxu0 0.0
    %4434 = vmatpush1.msra.mxu0 0.0
    %4435 = vmatprep.subr.mxu0 0.0
    %4436 = vmatpush1.msra.mxu0 0.0
    %4437 = vmatprep.subr.mxu0 0.0
    %4438 = vmatpush1.msra.mxu0 0.0
    %4439 = vmatprep.subr.mxu0 0.0
    %4440 = vmatpush1.msra.mxu0 0.0
    %4441 = vmatprep.subr.mxu0 0.0
    %4442 = vmatpush1.msra.mxu0 0.0
    %4443 = vmatprep.subr.mxu0 0.0
    %4444 = vmatpush1.msra.mxu0 0.0
    %4445 = vmatprep.subr.mxu0 0.0
    %4446 = vmatpush1.msra.mxu0 0.0
    %4447 = vmatprep.subr.mxu0 0.0
    %4448 = vmatpush1.msra.mxu0 0.0
    %4449 = vmatprep.subr.mxu0 0.0
    %4450 = vmatpush1.msra.mxu0 0.0
    %4451 = vmatprep.subr.mxu0 0.0
    %4452 = vmatpush1.msra.mxu0 0.0
    %4453 = vmatprep.subr.mxu0 0.0
    %4454 = vmatpush1.msra.mxu0 0.0
    %4455 = vmatprep.subr.mxu0 0.0
    %4456 = vmatpush1.msra.mxu0 0.0
    %4457 = vmatprep.subr.mxu0 0.0
    %4458 = vmatpush1.msra.mxu0 0.0
    %4459 = vmatprep.subr.mxu0 0.0
    %4460 = vmatpush1.msra.mxu0 0.0
    %4461 = vmatprep.subr.mxu0 0.0
    %4462 = vmatpush1.msra.mxu0 0.0
    %4463 = vmatprep.subr.mxu0 0.0
    %4464 = vmatpush1.msra.mxu0 0.0
    %4465 = vmatprep.subr.mxu0 0.0
    %4466 = vmatpush1.msra.mxu0 0.0
    %4467 = vmatprep.mubr.f32.mxu0 0.0
    %4468 = vmatmul.mubr.f32.gmra.mrb[0].mxu0 %v4322
    %v4469 = vpop.f32.mrb[0].mxu0
    %v4470 = vadd.f32 0.0, %v4469
    %v4471 = vpop.f32.mrb[0].mxu0
    %v4472 = vadd.f32 0.0, %v4471
    %4473 = vdwg.mxu0
    %s4474 = scalar_lea.vmem %s7, 39
    %v4475 = vld [vmem:[%s4474] ss:$8 sm:$0xf]
    %v4477 = vlaneseq
    %v4478 = vshrl.u32 %v4477, 7
    %v4479 = vsub.s32 0, %v4478
    %v4480 = vrot.slane %v4475, %v4479
    %v4481 = vlaneseq
    %v4482 = vshrl.u32 %v4481, 7
    %v4483 = vsub.s32 1, %v4482
    %v4484 = vrot.slane %v4475, %v4483
    %v4485 = vlaneseq
    %v4486 = vshrl.u32 %v4485, 7
    %v4487 = vsub.s32 2, %v4486
    %v4488 = vrot.slane %v4475, %v4487
    %v4489 = vlaneseq
    %v4490 = vshrl.u32 %v4489, 7
    %v4491 = vsub.s32 3, %v4490
    %v4492 = vrot.slane %v4475, %v4491
    %v4497 = vmul.f32 %v4399, %v4480
    %v4498 = vmul.f32 %v4401, %v4484
    %v4499 = vmul.f32 %v4470, %v4488
    %v4500 = vmul.f32 %v4472, %v4492
    %v4501 = vadd.f32 %v4282, %v4497
    %v4502 = vadd.f32 %v4283, %v4498
    %v4503 = vadd.f32 %v4284, %v4499
    %v4504 = vadd.f32 %v4285, %v4500
    %s4505 = scalar_lea.vmem %s4, 128
    %v4506 = vld [vmem:[%s4505] sm:$0xff]
    %4507 = vrot.lane.b32.xlu0 %v3828, 113
    %v4508 = vpop.permute.xlu0 %4507
    %4509 = vrot.lane.b32.xlu0 %v3829, 113
    %v4510 = vpop.permute.xlu0 %4509
    %4511 = vrot.lane.b32.xlu0 %v3830, 113
    %v4512 = vpop.permute.xlu0 %4511
    %4513 = vrot.lane.b32.xlu0 %v3831, 113
    %v4514 = vpop.permute.xlu0 %4513
    %4515 = vrot.lane.b32.xlu0 %v3832, 113
    %v4516 = vpop.permute.xlu0 %4515
    %4517 = vrot.lane.b32.xlu0 %v3833, 113
    %v4518 = vpop.permute.xlu0 %4517
    %4519 = vrot.lane.b32.xlu0 %v3834, 113
    %v4520 = vpop.permute.xlu0 %4519
    %4521 = vrot.lane.b32.xlu0 %v3835, 113
    %v4522 = vpop.permute.xlu0 %4521
    %4523 = vrot.lane.b32.xlu0 %v3836, 113
    %v4524 = vpop.permute.xlu0 %4523
    %4525 = vrot.lane.b32.xlu0 %v3837, 113
    %v4526 = vpop.permute.xlu0 %4525
    %vm4527 = vcmask 924672
    %v4528 = vsel %vm4527, %v4508, %v4510
    %v4529 = vsel %vm4527, %v4510, %v4512
    %v4530 = vsel %vm4527, %v4512, %v4514
    %v4531 = vsel %vm4527, %v4514, %v4516
    %v4532 = vsel %vm4527, %v4518, %v4520
    %v4533 = vsel %vm4527, %v4520, %v4522
    %v4534 = vsel %vm4527, %v4522, %v4524
    %v4535 = vsel %vm4527, %v4524, %v4526
    %v4541 = vsel %vm1080, %v4506, 0
    %v4543 = vsel %vm1084, %v4532, 0
    %v4545 = vsel %vm1084, %v4533, 0
    %v4547 = vsel %vm1084, %v4534, 0
    %v4549 = vsel %vm1084, %v4535, 0
    %4551 = vmatprep.subr.mxu0 %v4529
    %4552 = vmatpush1.msra.mxu0 %v4528
    %4553 = vmatprep.subr.mxu0 %v4545
    %4554 = vmatpush1.msra.mxu0 %v4543
    %4555 = vmatprep.subr.mxu0 0.0
    %4556 = vmatpush1.msra.mxu0 0.0
    %4557 = vmatprep.subr.mxu0 0.0
    %4558 = vmatpush1.msra.mxu0 0.0
    %4559 = vmatprep.subr.mxu0 0.0
    %4560 = vmatpush1.msra.mxu0 0.0
    %4561 = vmatprep.subr.mxu0 0.0
    %4562 = vmatpush1.msra.mxu0 0.0
    %4563 = vmatprep.subr.mxu0 0.0
    %4564 = vmatpush1.msra.mxu0 0.0
    %4565 = vmatprep.subr.mxu0 0.0
    %4566 = vmatpush1.msra.mxu0 0.0
    %4567 = vmatprep.subr.mxu0 0.0
    %4568 = vmatpush1.msra.mxu0 0.0
    %4569 = vmatprep.subr.mxu0 0.0
    %4570 = vmatpush1.msra.mxu0 0.0
    %4571 = vmatprep.subr.mxu0 0.0
    %4572 = vmatpush1.msra.mxu0 0.0
    %4573 = vmatprep.subr.mxu0 0.0
    %4574 = vmatpush1.msra.mxu0 0.0
    %4575 = vmatprep.subr.mxu0 0.0
    %4576 = vmatpush1.msra.mxu0 0.0
    %4577 = vmatprep.subr.mxu0 0.0
    %4578 = vmatpush1.msra.mxu0 0.0
    %4579 = vmatprep.subr.mxu0 0.0
    %4580 = vmatpush1.msra.mxu0 0.0
    %4581 = vmatprep.subr.mxu0 0.0
    %4582 = vmatpush1.msra.mxu0 0.0
    %4583 = vmatprep.subr.mxu0 0.0
    %4584 = vmatpush1.msra.mxu0 0.0
    %4585 = vmatprep.subr.mxu0 0.0
    %4586 = vmatpush1.msra.mxu0 0.0
    %4587 = vmatprep.subr.mxu0 0.0
    %4588 = vmatpush1.msra.mxu0 0.0
    %4589 = vmatprep.subr.mxu0 0.0
    %4590 = vmatpush1.msra.mxu0 0.0
    %4591 = vmatprep.subr.mxu0 0.0
    %4592 = vmatpush1.msra.mxu0 0.0
    %4593 = vmatprep.subr.mxu0 0.0
    %4594 = vmatpush1.msra.mxu0 0.0
    %4595 = vmatprep.subr.mxu0 0.0
    %4596 = vmatpush1.msra.mxu0 0.0
    %4597 = vmatprep.subr.mxu0 0.0
    %4598 = vmatpush1.msra.mxu0 0.0
    %4599 = vmatprep.subr.mxu0 0.0
    %4600 = vmatpush1.msra.mxu0 0.0
    %4601 = vmatprep.subr.mxu0 0.0
    %4602 = vmatpush1.msra.mxu0 0.0
    %4603 = vmatprep.subr.mxu0 0.0
    %4604 = vmatpush1.msra.mxu0 0.0
    %4605 = vmatprep.subr.mxu0 0.0
    %4606 = vmatpush1.msra.mxu0 0.0
    %4607 = vmatprep.subr.mxu0 0.0
    %4608 = vmatpush1.msra.mxu0 0.0
    %4609 = vmatprep.subr.mxu0 0.0
    %4610 = vmatpush1.msra.mxu0 0.0
    %4611 = vmatprep.subr.mxu0 0.0
    %4612 = vmatpush1.msra.mxu0 0.0
    %4613 = vmatprep.subr.mxu0 0.0
    %4614 = vmatpush1.msra.mxu0 0.0
    %4615 = vmatprep.mubr.f32.mxu0 0.0
    %4616 = vmatmul.mubr.f32.gmra.mrb[0].mxu0 %v4541
    %v4617 = vpop.f32.mrb[0].mxu0
    %v4618 = vadd.f32 0.0, %v4617
    %v4619 = vpop.f32.mrb[0].mxu0
    %v4620 = vadd.f32 0.0, %v4619
    %4621 = vdwg.mxu0
    %4622 = vmatprep.subr.mxu0 %v4531
    %4623 = vmatpush1.msra.mxu0 %v4530
    %4624 = vmatprep.subr.mxu0 %v4549
    %4625 = vmatpush1.msra.mxu0 %v4547
    %4626 = vmatprep.subr.mxu0 0.0
    %4627 = vmatpush1.msra.mxu0 0.0
    %4628 = vmatprep.subr.mxu0 0.0
    %4629 = vmatpush1.msra.mxu0 0.0
    %4630 = vmatprep.subr.mxu0 0.0
    %4631 = vmatpush1.msra.mxu0 0.0
    %4632 = vmatprep.subr.mxu0 0.0
    %4633 = vmatpush1.msra.mxu0 0.0
    %4634 = vmatprep.subr.mxu0 0.0
    %4635 = vmatpush1.msra.mxu0 0.0
    %4636 = vmatprep.subr.mxu0 0.0
    %4637 = vmatpush1.msra.mxu0 0.0
    %4638 = vmatprep.subr.mxu0 0.0
    %4639 = vmatpush1.msra.mxu0 0.0
    %4640 = vmatprep.subr.mxu0 0.0
    %4641 = vmatpush1.msra.mxu0 0.0
    %4642 = vmatprep.subr.mxu0 0.0
    %4643 = vmatpush1.msra.mxu0 0.0
    %4644 = vmatprep.subr.mxu0 0.0
    %4645 = vmatpush1.msra.mxu0 0.0
    %4646 = vmatprep.subr.mxu0 0.0
    %4647 = vmatpush1.msra.mxu0 0.0
    %4648 = vmatprep.subr.mxu0 0.0
    %4649 = vmatpush1.msra.mxu0 0.0
    %4650 = vmatprep.subr.mxu0 0.0
    %4651 = vmatpush1.msra.mxu0 0.0
    %4652 = vmatprep.subr.mxu0 0.0
    %4653 = vmatpush1.msra.mxu0 0.0
    %4654 = vmatprep.subr.mxu0 0.0
    %4655 = vmatpush1.msra.mxu0 0.0
    %4656 = vmatprep.subr.mxu0 0.0
    %4657 = vmatpush1.msra.mxu0 0.0
    %4658 = vmatprep.subr.mxu0 0.0
    %4659 = vmatpush1.msra.mxu0 0.0
    %4660 = vmatprep.subr.mxu0 0.0
    %4661 = vmatpush1.msra.mxu0 0.0
    %4662 = vmatprep.subr.mxu0 0.0
    %4663 = vmatpush1.msra.mxu0 0.0
    %4664 = vmatprep.subr.mxu0 0.0
    %4665 = vmatpush1.msra.mxu0 0.0
    %4666 = vmatprep.subr.mxu0 0.0
    %4667 = vmatpush1.msra.mxu0 0.0
    %4668 = vmatprep.subr.mxu0 0.0
    %4669 = vmatpush1.msra.mxu0 0.0
    %4670 = vmatprep.subr.mxu0 0.0
    %4671 = vmatpush1.msra.mxu0 0.0
    %4672 = vmatprep.subr.mxu0 0.0
    %4673 = vmatpush1.msra.mxu0 0.0
    %4674 = vmatprep.subr.mxu0 0.0
    %4675 = vmatpush1.msra.mxu0 0.0
    %4676 = vmatprep.subr.mxu0 0.0
    %4677 = vmatpush1.msra.mxu0 0.0
    %4678 = vmatprep.subr.mxu0 0.0
    %4679 = vmatpush1.msra.mxu0 0.0
    %4680 = vmatprep.subr.mxu0 0.0
    %4681 = vmatpush1.msra.mxu0 0.0
    %4682 = vmatprep.subr.mxu0 0.0
    %4683 = vmatpush1.msra.mxu0 0.0
    %4684 = vmatprep.subr.mxu0 0.0
    %4685 = vmatpush1.msra.mxu0 0.0
    %4686 = vmatprep.mubr.f32.mxu0 0.0
    %4687 = vmatmul.mubr.f32.gmra.mrb[0].mxu0 %v4541
    %v4688 = vpop.f32.mrb[0].mxu0
    %v4689 = vadd.f32 0.0, %v4688
    %v4690 = vpop.f32.mrb[0].mxu0
    %v4691 = vadd.f32 0.0, %v4690
    %4692 = vdwg.mxu0
    %s4693 = scalar_lea.vmem %s7, 64
    %v4694 = vld [vmem:[%s4693] ss:$8 sm:$0xf]
    %v4696 = vlaneseq
    %v4697 = vshrl.u32 %v4696, 7
    %v4698 = vsub.s32 0, %v4697
    %v4699 = vrot.slane %v4694, %v4698
    %v4700 = vlaneseq
    %v4701 = vshrl.u32 %v4700, 7
    %v4702 = vsub.s32 1, %v4701
    %v4703 = vrot.slane %v4694, %v4702
    %v4704 = vlaneseq
    %v4705 = vshrl.u32 %v4704, 7
    %v4706 = vsub.s32 2, %v4705
    %v4707 = vrot.slane %v4694, %v4706
    %v4708 = vlaneseq
    %v4709 = vshrl.u32 %v4708, 7
    %v4710 = vsub.s32 3, %v4709
    %v4711 = vrot.slane %v4694, %v4710
    %v4716 = vmul.f32 %v4618, %v4699
    %v4717 = vmul.f32 %v4620, %v4703
    %v4718 = vmul.f32 %v4689, %v4707
    %v4719 = vmul.f32 %v4691, %v4711
    %v4720 = vadd.f32 %v4501, %v4716
    %v4721 = vadd.f32 %v4502, %v4717
    %v4722 = vadd.f32 %v4503, %v4718
    %v4723 = vadd.f32 %v4504, %v4719
    %s4724 = scalar_lea.vmem %s4, 136
    %v4725 = vld [vmem:[%s4724] sm:$0xff]
    %4726 = vrot.lane.b32.xlu0 %v3828, 112
    %v4727 = vpop.permute.xlu0 %4726
    %4728 = vrot.lane.b32.xlu0 %v3829, 112
    %v4729 = vpop.permute.xlu0 %4728
    %4730 = vrot.lane.b32.xlu0 %v3830, 112
    %v4731 = vpop.permute.xlu0 %4730
    %4732 = vrot.lane.b32.xlu0 %v3831, 112
    %v4733 = vpop.permute.xlu0 %4732
    %4734 = vrot.lane.b32.xlu0 %v3832, 112
    %v4735 = vpop.permute.xlu0 %4734
    %4736 = vrot.lane.b32.xlu0 %v3833, 112
    %v4737 = vpop.permute.xlu0 %4736
    %4738 = vrot.lane.b32.xlu0 %v3834, 112
    %v4739 = vpop.permute.xlu0 %4738
    %4740 = vrot.lane.b32.xlu0 %v3835, 112
    %v4741 = vpop.permute.xlu0 %4740
    %4742 = vrot.lane.b32.xlu0 %v3836, 112
    %v4743 = vpop.permute.xlu0 %4742
    %4744 = vrot.lane.b32.xlu0 %v3837, 112
    %v4745 = vpop.permute.xlu0 %4744
    %vm4746 = vcmask 916480
    %v4747 = vsel %vm4746, %v4727, %v4729
    %v4748 = vsel %vm4746, %v4729, %v4731
    %v4749 = vsel %vm4746, %v4731, %v4733
    %v4750 = vsel %vm4746, %v4733, %v4735
    %v4751 = vsel %vm4746, %v4737, %v4739
    %v4752 = vsel %vm4746, %v4739, %v4741
    %v4753 = vsel %vm4746, %v4741, %v4743
    %v4754 = vsel %vm4746, %v4743, %v4745
    %v4760 = vsel %vm1080, %v4725, 0
    %v4762 = vsel %vm1084, %v4751, 0
    %v4764 = vsel %vm1084, %v4752, 0
    %v4766 = vsel %vm1084, %v4753, 0
    %v4768 = vsel %vm1084, %v4754, 0
    %4770 = vmatprep.subr.mxu0 %v4748
    %4771 = vmatpush1.msra.mxu0 %v4747
    %4772 = vmatprep.subr.mxu0 %v4764
    %4773 = vmatpush1.msra.mxu0 %v4762
    %4774 = vmatprep.subr.mxu0 0.0
    %4775 = vmatpush1.msra.mxu0 0.0
    %4776 = vmatprep.subr.mxu0 0.0
    %4777 = vmatpush1.msra.mxu0 0.0
    %4778 = vmatprep.subr.mxu0 0.0
    %4779 = vmatpush1.msra.mxu0 0.0
    %4780 = vmatprep.subr.mxu0 0.0
    %4781 = vmatpush1.msra.mxu0 0.0
    %4782 = vmatprep.subr.mxu0 0.0
    %4783 = vmatpush1.msra.mxu0 0.0
    %4784 = vmatprep.subr.mxu0 0.0
    %4785 = vmatpush1.msra.mxu0 0.0
    %4786 = vmatprep.subr.mxu0 0.0
    %4787 = vmatpush1.msra.mxu0 0.0
    %4788 = vmatprep.subr.mxu0 0.0
    %4789 = vmatpush1.msra.mxu0 0.0
    %4790 = vmatprep.subr.mxu0 0.0
    %4791 = vmatpush1.msra.mxu0 0.0
    %4792 = vmatprep.subr.mxu0 0.0
    %4793 = vmatpush1.msra.mxu0 0.0
    %4794 = vmatprep.subr.mxu0 0.0
    %4795 = vmatpush1.msra.mxu0 0.0
    %4796 = vmatprep.subr.mxu0 0.0
    %4797 = vmatpush1.msra.mxu0 0.0
    %4798 = vmatprep.subr.mxu0 0.0
    %4799 = vmatpush1.msra.mxu0 0.0
    %4800 = vmatprep.subr.mxu0 0.0
    %4801 = vmatpush1.msra.mxu0 0.0
    %4802 = vmatprep.subr.mxu0 0.0
    %4803 = vmatpush1.msra.mxu0 0.0
    %4804 = vmatprep.subr.mxu0 0.0
    %4805 = vmatpush1.msra.mxu0 0.0
    %4806 = vmatprep.subr.mxu0 0.0
    %4807 = vmatpush1.msra.mxu0 0.0
    %4808 = vmatprep.subr.mxu0 0.0
    %4809 = vmatpush1.msra.mxu0 0.0
    %4810 = vmatprep.subr.mxu0 0.0
    %4811 = vmatpush1.msra.mxu0 0.0
    %4812 = vmatprep.subr.mxu0 0.0
    %4813 = vmatpush1.msra.mxu0 0.0
    %4814 = vmatprep.subr.mxu0 0.0
    %4815 = vmatpush1.msra.mxu0 0.0
    %4816 = vmatprep.subr.mxu0 0.0
    %4817 = vmatpush1.msra.mxu0 0.0
    %4818 = vmatprep.subr.mxu0 0.0
    %4819 = vmatpush1.msra.mxu0 0.0
    %4820 = vmatprep.subr.mxu0 0.0
    %4821 = vmatpush1.msra.mxu0 0.0
    %4822 = vmatprep.subr.mxu0 0.0
    %4823 = vmatpush1.msra.mxu0 0.0
    %4824 = vmatprep.subr.mxu0 0.0
    %4825 = vmatpush1.msra.mxu0 0.0
    %4826 = vmatprep.subr.mxu0 0.0
    %4827 = vmatpush1.msra.mxu0 0.0
    %4828 = vmatprep.subr.mxu0 0.0
    %4829 = vmatpush1.msra.mxu0 0.0
    %4830 = vmatprep.subr.mxu0 0.0
    %4831 = vmatpush1.msra.mxu0 0.0
    %4832 = vmatprep.subr.mxu0 0.0
    %4833 = vmatpush1.msra.mxu0 0.0
    %4834 = vmatprep.mubr.f32.mxu0 0.0
    %4835 = vmatmul.mubr.f32.gmra.mrb[0].mxu0 %v4760
    %v4836 = vpop.f32.mrb[0].mxu0
    %v4837 = vadd.f32 0.0, %v4836
    %v4838 = vpop.f32.mrb[0].mxu0
    %v4839 = vadd.f32 0.0, %v4838
    %4840 = vdwg.mxu0
    %4841 = vmatprep.subr.mxu0 %v4750
    %4842 = vmatpush1.msra.mxu0 %v4749
    %4843 = vmatprep.subr.mxu0 %v4768
    %4844 = vmatpush1.msra.mxu0 %v4766
    %4845 = vmatprep.subr.mxu0 0.0
    %4846 = vmatpush1.msra.mxu0 0.0
    %4847 = vmatprep.subr.mxu0 0.0
    %4848 = vmatpush1.msra.mxu0 0.0
    %4849 = vmatprep.subr.mxu0 0.0
    %4850 = vmatpush1.msra.mxu0 0.0
    %4851 = vmatprep.subr.mxu0 0.0
    %4852 = vmatpush1.msra.mxu0 0.0
    %4853 = vmatprep.subr.mxu0 0.0
    %4854 = vmatpush1.msra.mxu0 0.0
    %4855 = vmatprep.subr.mxu0 0.0
    %4856 = vmatpush1.msra.mxu0 0.0
    %4857 = vmatprep.subr.mxu0 0.0
    %4858 = vmatpush1.msra.mxu0 0.0
    %4859 = vmatprep.subr.mxu0 0.0
    %4860 = vmatpush1.msra.mxu0 0.0
    %4861 = vmatprep.subr.mxu0 0.0
    %4862 = vmatpush1.msra.mxu0 0.0
    %4863 = vmatprep.subr.mxu0 0.0
    %4864 = vmatpush1.msra.mxu0 0.0
    %4865 = vmatprep.subr.mxu0 0.0
    %4866 = vmatpush1.msra.mxu0 0.0
    %4867 = vmatprep.subr.mxu0 0.0
    %4868 = vmatpush1.msra.mxu0 0.0
    %4869 = vmatprep.subr.mxu0 0.0
    %4870 = vmatpush1.msra.mxu0 0.0
    %4871 = vmatprep.subr.mxu0 0.0
    %4872 = vmatpush1.msra.mxu0 0.0
    %4873 = vmatprep.subr.mxu0 0.0
    %4874 = vmatpush1.msra.mxu0 0.0
    %4875 = vmatprep.subr.mxu0 0.0
    %4876 = vmatpush1.msra.mxu0 0.0
    %4877 = vmatprep.subr.mxu0 0.0
    %4878 = vmatpush1.msra.mxu0 0.0
    %4879 = vmatprep.subr.mxu0 0.0
    %4880 = vmatpush1.msra.mxu0 0.0
    %4881 = vmatprep.subr.mxu0 0.0
    %4882 = vmatpush1.msra.mxu0 0.0
    %4883 = vmatprep.subr.mxu0 0.0
    %4884 = vmatpush1.msra.mxu0 0.0
    %4885 = vmatprep.subr.mxu0 0.0
    %4886 = vmatpush1.msra.mxu0 0.0
    %4887 = vmatprep.subr.mxu0 0.0
    %4888 = vmatpush1.msra.mxu0 0.0
    %4889 = vmatprep.subr.mxu0 0.0
    %4890 = vmatpush1.msra.mxu0 0.0
    %4891 = vmatprep.subr.mxu0 0.0
    %4892 = vmatpush1.msra.mxu0 0.0
    %4893 = vmatprep.subr.mxu0 0.0
    %4894 = vmatpush1.msra.mxu0 0.0
    %4895 = vmatprep.subr.mxu0 0.0
    %4896 = vmatpush1.msra.mxu0 0.0
    %4897 = vmatprep.subr.mxu0 0.0
    %4898 = vmatpush1.msra.mxu0 0.0
    %4899 = vmatprep.subr.mxu0 0.0
    %4900 = vmatpush1.msra.mxu0 0.0
    %4901 = vmatprep.subr.mxu0 0.0
    %4902 = vmatpush1.msra.mxu0 0.0
    %4903 = vmatprep.subr.mxu0 0.0
    %4904 = vmatpush1.msra.mxu0 0.0
    %4905 = vmatprep.mubr.f32.mxu0 0.0
    %4906 = vmatmul.mubr.f32.gmra.mrb[0].mxu0 %v4760
    %v4907 = vpop.f32.mrb[0].mxu0
    %v4908 = vadd.f32 0.0, %v4907
    %v4909 = vpop.f32.mrb[0].mxu0
    %v4910 = vadd.f32 0.0, %v4909
    %4911 = vdwg.mxu0
    %s4912 = scalar_lea.vmem %s7, 65
    %v4913 = vld [vmem:[%s4912] ss:$8 sm:$0xf]
    %v4915 = vlaneseq
    %v4916 = vshrl.u32 %v4915, 7
    %v4917 = vsub.s32 0, %v4916
    %v4918 = vrot.slane %v4913, %v4917
    %v4919 = vlaneseq
    %v4920 = vshrl.u32 %v4919, 7
    %v4921 = vsub.s32 1, %v4920
    %v4922 = vrot.slane %v4913, %v4921
    %v4923 = vlaneseq
    %v4924 = vshrl.u32 %v4923, 7
    %v4925 = vsub.s32 2, %v4924
    %v4926 = vrot.slane %v4913, %v4925
    %v4927 = vlaneseq
    %v4928 = vshrl.u32 %v4927, 7
    %v4929 = vsub.s32 3, %v4928
    %v4930 = vrot.slane %v4913, %v4929
    %v4935 = vmul.f32 %v4837, %v4918
    %v4936 = vmul.f32 %v4839, %v4922
    %v4937 = vmul.f32 %v4908, %v4926
    %v4938 = vmul.f32 %v4910, %v4930
    %v4939 = vadd.f32 %v4720, %v4935
    %v4940 = vadd.f32 %v4721, %v4936
    %v4941 = vadd.f32 %v4722, %v4937
    %v4942 = vadd.f32 %v4723, %v4938
    %s4943 = scalar_lea.vmem %s4, 144
    %v4944 = vld [vmem:[%s4943] sm:$0xff]
    %4945 = vrot.lane.b32.xlu0 %v3828, 111
    %v4946 = vpop.permute.xlu0 %4945
    %4947 = vrot.lane.b32.xlu0 %v3829, 111
    %v4948 = vpop.permute.xlu0 %4947
    %4949 = vrot.lane.b32.xlu0 %v3830, 111
    %v4950 = vpop.permute.xlu0 %4949
    %4951 = vrot.lane.b32.xlu0 %v3831, 111
    %v4952 = vpop.permute.xlu0 %4951
    %4953 = vrot.lane.b32.xlu0 %v3832, 111
    %v4954 = vpop.permute.xlu0 %4953
    %4955 = vrot.lane.b32.xlu0 %v3833, 111
    %v4956 = vpop.permute.xlu0 %4955
    %4957 = vrot.lane.b32.xlu0 %v3834, 111
    %v4958 = vpop.permute.xlu0 %4957
    %4959 = vrot.lane.b32.xlu0 %v3835, 111
    %v4960 = vpop.permute.xlu0 %4959
    %4961 = vrot.lane.b32.xlu0 %v3836, 111
    %v4962 = vpop.permute.xlu0 %4961
    %4963 = vrot.lane.b32.xlu0 %v3837, 111
    %v4964 = vpop.permute.xlu0 %4963
    %vm4965 = vcmask 908288
    %v4966 = vsel %vm4965, %v4946, %v4948
    %v4967 = vsel %vm4965, %v4948, %v4950
    %v4968 = vsel %vm4965, %v4950, %v4952
    %v4969 = vsel %vm4965, %v4952, %v4954
    %v4970 = vsel %vm4965, %v4956, %v4958
    %v4971 = vsel %vm4965, %v4958, %v4960
    %v4972 = vsel %vm4965, %v4960, %v4962
    %v4973 = vsel %vm4965, %v4962, %v4964
    %v4979 = vsel %vm1080, %v4944, 0
    %v4981 = vsel %vm1084, %v4970, 0
    %v4983 = vsel %vm1084, %v4971, 0
    %v4985 = vsel %vm1084, %v4972, 0
    %v4987 = vsel %vm1084, %v4973, 0
    %4989 = vmatprep.subr.mxu0 %v4967
    %4990 = vmatpush1.msra.mxu0 %v4966
    %4991 = vmatprep.subr.mxu0 %v4983
    %4992 = vmatpush1.msra.mxu0 %v4981
    %4993 = vmatprep.subr.mxu0 0.0
    %4994 = vmatpush1.msra.mxu0 0.0
    %4995 = vmatprep.subr.mxu0 0.0
    %4996 = vmatpush1.msra.mxu0 0.0
    %4997 = vmatprep.subr.mxu0 0.0
    %4998 = vmatpush1.msra.mxu0 0.0
    %4999 = vmatprep.subr.mxu0 0.0
    %5000 = vmatpush1.msra.mxu0 0.0
    %5001 = vmatprep.subr.mxu0 0.0
    %5002 = vmatpush1.msra.mxu0 0.0
    %5003 = vmatprep.subr.mxu0 0.0
    %5004 = vmatpush1.msra.mxu0 0.0
    %5005 = vmatprep.subr.mxu0 0.0
    %5006 = vmatpush1.msra.mxu0 0.0
    %5007 = vmatprep.subr.mxu0 0.0
    %5008 = vmatpush1.msra.mxu0 0.0
    %5009 = vmatprep.subr.mxu0 0.0
    %5010 = vmatpush1.msra.mxu0 0.0
    %5011 = vmatprep.subr.mxu0 0.0
    %5012 = vmatpush1.msra.mxu0 0.0
    %5013 = vmatprep.subr.mxu0 0.0
    %5014 = vmatpush1.msra.mxu0 0.0
    %5015 = vmatprep.subr.mxu0 0.0
    %5016 = vmatpush1.msra.mxu0 0.0
    %5017 = vmatprep.subr.mxu0 0.0
    %5018 = vmatpush1.msra.mxu0 0.0
    %5019 = vmatprep.subr.mxu0 0.0
    %5020 = vmatpush1.msra.mxu0 0.0
    %5021 = vmatprep.subr.mxu0 0.0
    %5022 = vmatpush1.msra.mxu0 0.0
    %5023 = vmatprep.subr.mxu0 0.0
    %5024 = vmatpush1.msra.mxu0 0.0
    %5025 = vmatprep.subr.mxu0 0.0
    %5026 = vmatpush1.msra.mxu0 0.0
    %5027 = vmatprep.subr.mxu0 0.0
    %5028 = vmatpush1.msra.mxu0 0.0
    %5029 = vmatprep.subr.mxu0 0.0
    %5030 = vmatpush1.msra.mxu0 0.0
    %5031 = vmatprep.subr.mxu0 0.0
    %5032 = vmatpush1.msra.mxu0 0.0
    %5033 = vmatprep.subr.mxu0 0.0
    %5034 = vmatpush1.msra.mxu0 0.0
    %5035 = vmatprep.subr.mxu0 0.0
    %5036 = vmatpush1.msra.mxu0 0.0
    %5037 = vmatprep.subr.mxu0 0.0
    %5038 = vmatpush1.msra.mxu0 0.0
    %5039 = vmatprep.subr.mxu0 0.0
    %5040 = vmatpush1.msra.mxu0 0.0
    %5041 = vmatprep.subr.mxu0 0.0
    %5042 = vmatpush1.msra.mxu0 0.0
    %5043 = vmatprep.subr.mxu0 0.0
    %5044 = vmatpush1.msra.mxu0 0.0
    %5045 = vmatprep.subr.mxu0 0.0
    %5046 = vmatpush1.msra.mxu0 0.0
    %5047 = vmatprep.subr.mxu0 0.0
    %5048 = vmatpush1.msra.mxu0 0.0
    %5049 = vmatprep.subr.mxu0 0.0
    %5050 = vmatpush1.msra.mxu0 0.0
    %5051 = vmatprep.subr.mxu0 0.0
    %5052 = vmatpush1.msra.mxu0 0.0
    %5053 = vmatprep.mubr.f32.mxu0 0.0
    %5054 = vmatmul.mubr.f32.gmra.mrb[0].mxu0 %v4979
    %v5055 = vpop.f32.mrb[0].mxu0
    %v5056 = vadd.f32 0.0, %v5055
    %v5057 = vpop.f32.mrb[0].mxu0
    %v5058 = vadd.f32 0.0, %v5057
    %5059 = vdwg.mxu0
    %5060 = vmatprep.subr.mxu0 %v4969
    %5061 = vmatpush1.msra.mxu0 %v4968
    %5062 = vmatprep.subr.mxu0 %v4987
    %5063 = vmatpush1.msra.mxu0 %v4985
    %5064 = vmatprep.subr.mxu0 0.0
    %5065 = vmatpush1.msra.mxu0 0.0
    %5066 = vmatprep.subr.mxu0 0.0
    %5067 = vmatpush1.msra.mxu0 0.0
    %5068 = vmatprep.subr.mxu0 0.0
    %5069 = vmatpush1.msra.mxu0 0.0
    %5070 = vmatprep.subr.mxu0 0.0
    %5071 = vmatpush1.msra.mxu0 0.0
    %5072 = vmatprep.subr.mxu0 0.0
    %5073 = vmatpush1.msra.mxu0 0.0
    %5074 = vmatprep.subr.mxu0 0.0
    %5075 = vmatpush1.msra.mxu0 0.0
    %5076 = vmatprep.subr.mxu0 0.0
    %5077 = vmatpush1.msra.mxu0 0.0
    %5078 = vmatprep.subr.mxu0 0.0
    %5079 = vmatpush1.msra.mxu0 0.0
    %5080 = vmatprep.subr.mxu0 0.0
    %5081 = vmatpush1.msra.mxu0 0.0
    %5082 = vmatprep.subr.mxu0 0.0
    %5083 = vmatpush1.msra.mxu0 0.0
    %5084 = vmatprep.subr.mxu0 0.0
    %5085 = vmatpush1.msra.mxu0 0.0
    %5086 = vmatprep.subr.mxu0 0.0
    %5087 = vmatpush1.msra.mxu0 0.0
    %5088 = vmatprep.subr.mxu0 0.0
    %5089 = vmatpush1.msra.mxu0 0.0
    %5090 = vmatprep.subr.mxu0 0.0
    %5091 = vmatpush1.msra.mxu0 0.0
    %5092 = vmatprep.subr.mxu0 0.0
    %5093 = vmatpush1.msra.mxu0 0.0
    %5094 = vmatprep.subr.mxu0 0.0
    %5095 = vmatpush1.msra.mxu0 0.0
    %5096 = vmatprep.subr.mxu0 0.0
    %5097 = vmatpush1.msra.mxu0 0.0
    %5098 = vmatprep.subr.mxu0 0.0
    %5099 = vmatpush1.msra.mxu0 0.0
    %5100 = vmatprep.subr.mxu0 0.0
    %5101 = vmatpush1.msra.mxu0 0.0
    %5102 = vmatprep.subr.mxu0 0.0
    %5103 = vmatpush1.msra.mxu0 0.0
    %5104 = vmatprep.subr.mxu0 0.0
    %5105 = vmatpush1.msra.mxu0 0.0
    %5106 = vmatprep.subr.mxu0 0.0
    %5107 = vmatpush1.msra.mxu0 0.0
    %5108 = vmatprep.subr.mxu0 0.0
    %5109 = vmatpush1.msra.mxu0 0.0
    %5110 = vmatprep.subr.mxu0 0.0
    %5111 = vmatpush1.msra.mxu0 0.0
    %5112 = vmatprep.subr.mxu0 0.0
    %5113 = vmatpush1.msra.mxu0 0.0
    %5114 = vmatprep.subr.mxu0 0.0
    %5115 = vmatpush1.msra.mxu0 0.0
    %5116 = vmatprep.subr.mxu0 0.0
    %5117 = vmatpush1.msra.mxu0 0.0
    %5118 = vmatprep.subr.mxu0 0.0
    %5119 = vmatpush1.msra.mxu0 0.0
    %5120 = vmatprep.subr.mxu0 0.0
    %5121 = vmatpush1.msra.mxu0 0.0
    %5122 = vmatprep.subr.mxu0 0.0
    %5123 = vmatpush1.msra.mxu0 0.0
    %5124 = vmatprep.mubr.f32.mxu0 0.0
    %5125 = vmatmul.mubr.f32.gmra.mrb[0].mxu0 %v4979
    %v5126 = vpop.f32.mrb[0].mxu0
    %v5127 = vadd.f32 0.0, %v5126
    %v5128 = vpop.f32.mrb[0].mxu0
    %v5129 = vadd.f32 0.0, %v5128
    %5130 = vdwg.mxu0
    %s5131 = scalar_lea.vmem %s7, 66
    %v5132 = vld [vmem:[%s5131] ss:$8 sm:$0xf]
    %v5134 = vlaneseq
    %v5135 = vshrl.u32 %v5134, 7
    %v5136 = vsub.s32 0, %v5135
    %v5137 = vrot.slane %v5132, %v5136
    %v5138 = vlaneseq
    %v5139 = vshrl.u32 %v5138, 7
    %v5140 = vsub.s32 1, %v5139
    %v5141 = vrot.slane %v5132, %v5140
    %v5142 = vlaneseq
    %v5143 = vshrl.u32 %v5142, 7
    %v5144 = vsub.s32 2, %v5143
    %v5145 = vrot.slane %v5132, %v5144
    %v5146 = vlaneseq
    %v5147 = vshrl.u32 %v5146, 7
    %v5148 = vsub.s32 3, %v5147
    %v5149 = vrot.slane %v5132, %v5148
    %v5154 = vmul.f32 %v5056, %v5137
    %v5155 = vmul.f32 %v5058, %v5141
    %v5156 = vmul.f32 %v5127, %v5145
    %v5157 = vmul.f32 %v5129, %v5149
    %v5158 = vadd.f32 %v4939, %v5154
    %v5159 = vadd.f32 %v4940, %v5155
    %v5160 = vadd.f32 %v4941, %v5156
    %v5161 = vadd.f32 %v4942, %v5157
    %s5162 = scalar_lea.vmem %s4, 152
    %v5163 = vld [vmem:[%s5162] sm:$0xff]
    %5164 = vrot.lane.b32.xlu0 %v3828, 110
    %v5165 = vpop.permute.xlu0 %5164
    %5166 = vrot.lane.b32.xlu0 %v3829, 110
    %v5167 = vpop.permute.xlu0 %5166
    %5168 = vrot.lane.b32.xlu0 %v3830, 110
    %v5169 = vpop.permute.xlu0 %5168
    %5170 = vrot.lane.b32.xlu0 %v3831, 110
    %v5171 = vpop.permute.xlu0 %5170
    %5172 = vrot.lane.b32.xlu0 %v3832, 110
    %v5173 = vpop.permute.xlu0 %5172
    %5174 = vrot.lane.b32.xlu0 %v3833, 110
    %v5175 = vpop.permute.xlu0 %5174
    %5176 = vrot.lane.b32.xlu0 %v3834, 110
    %v5177 = vpop.permute.xlu0 %5176
    %5178 = vrot.lane.b32.xlu0 %v3835, 110
    %v5179 = vpop.permute.xlu0 %5178
    %5180 = vrot.lane.b32.xlu0 %v3836, 110
    %v5181 = vpop.permute.xlu0 %5180
    %5182 = vrot.lane.b32.xlu0 %v3837, 110
    %v5183 = vpop.permute.xlu0 %5182
    %vm5184 = vcmask 900096
    %v5185 = vsel %vm5184, %v5165, %v5167
    %v5186 = vsel %vm5184, %v5167, %v5169
    %v5187 = vsel %vm5184, %v5169, %v5171
    %v5188 = vsel %vm5184, %v5171, %v5173
    %v5189 = vsel %vm5184, %v5175, %v5177
    %v5190 = vsel %vm5184, %v5177, %v5179
    %v5191 = vsel %vm5184, %v5179, %v5181
    %v5192 = vsel %vm5184, %v5181, %v5183
    %v5198 = vsel %vm1080, %v5163, 0
    %v5200 = vsel %vm1084, %v5189, 0
    %v5202 = vsel %vm1084, %v5190, 0
    %v5204 = vsel %vm1084, %v5191, 0
    %v5206 = vsel %vm1084, %v5192, 0
    %5208 = vmatprep.subr.mxu0 %v5186
    %5209 = vmatpush1.msra.mxu0 %v5185
    %5210 = vmatprep.subr.mxu0 %v5202
    %5211 = vmatpush1.msra.mxu0 %v5200
    %5212 = vmatprep.subr.mxu0 0.0
    %5213 = vmatpush1.msra.mxu0 0.0
    %5214 = vmatprep.subr.mxu0 0.0
    %5215 = vmatpush1.msra.mxu0 0.0
    %5216 = vmatprep.subr.mxu0 0.0
    %5217 = vmatpush1.msra.mxu0 0.0
    %5218 = vmatprep.subr.mxu0 0.0
    %5219 = vmatpush1.msra.mxu0 0.0
    %5220 = vmatprep.subr.mxu0 0.0
    %5221 = vmatpush1.msra.mxu0 0.0
    %5222 = vmatprep.subr.mxu0 0.0
    %5223 = vmatpush1.msra.mxu0 0.0
    %5224 = vmatprep.subr.mxu0 0.0
    %5225 = vmatpush1.msra.mxu0 0.0
    %5226 = vmatprep.subr.mxu0 0.0
    %5227 = vmatpush1.msra.mxu0 0.0
    %5228 = vmatprep.subr.mxu0 0.0
    %5229 = vmatpush1.msra.mxu0 0.0
    %5230 = vmatprep.subr.mxu0 0.0
    %5231 = vmatpush1.msra.mxu0 0.0
    %5232 = vmatprep.subr.mxu0 0.0
    %5233 = vmatpush1.msra.mxu0 0.0
    %5234 = vmatprep.subr.mxu0 0.0
    %5235 = vmatpush1.msra.mxu0 0.0
    %5236 = vmatprep.subr.mxu0 0.0
    %5237 = vmatpush1.msra.mxu0 0.0
    %5238 = vmatprep.subr.mxu0 0.0
    %5239 = vmatpush1.msra.mxu0 0.0
    %5240 = vmatprep.subr.mxu0 0.0
    %5241 = vmatpush1.msra.mxu0 0.0
    %5242 = vmatprep.subr.mxu0 0.0
    %5243 = vmatpush1.msra.mxu0 0.0
    %5244 = vmatprep.subr.mxu0 0.0
    %5245 = vmatpush1.msra.mxu0 0.0
    %5246 = vmatprep.subr.mxu0 0.0
    %5247 = vmatpush1.msra.mxu0 0.0
    %5248 = vmatprep.subr.mxu0 0.0
    %5249 = vmatpush1.msra.mxu0 0.0
    %5250 = vmatprep.subr.mxu0 0.0
    %5251 = vmatpush1.msra.mxu0 0.0
    %5252 = vmatprep.subr.mxu0 0.0
    %5253 = vmatpush1.msra.mxu0 0.0
    %5254 = vmatprep.subr.mxu0 0.0
    %5255 = vmatpush1.msra.mxu0 0.0
    %5256 = vmatprep.subr.mxu0 0.0
    %5257 = vmatpush1.msra.mxu0 0.0
    %5258 = vmatprep.subr.mxu0 0.0
    %5259 = vmatpush1.msra.mxu0 0.0
    %5260 = vmatprep.subr.mxu0 0.0
    %5261 = vmatpush1.msra.mxu0 0.0
    %5262 = vmatprep.subr.mxu0 0.0
    %5263 = vmatpush1.msra.mxu0 0.0
    %5264 = vmatprep.subr.mxu0 0.0
    %5265 = vmatpush1.msra.mxu0 0.0
    %5266 = vmatprep.subr.mxu0 0.0
    %5267 = vmatpush1.msra.mxu0 0.0
    %5268 = vmatprep.subr.mxu0 0.0
    %5269 = vmatpush1.msra.mxu0 0.0
    %5270 = vmatprep.subr.mxu0 0.0
    %5271 = vmatpush1.msra.mxu0 0.0
    %5272 = vmatprep.mubr.f32.mxu0 0.0
    %5273 = vmatmul.mubr.f32.gmra.mrb[0].mxu0 %v5198
    %v5274 = vpop.f32.mrb[0].mxu0
    %v5275 = vadd.f32 0.0, %v5274
    %v5276 = vpop.f32.mrb[0].mxu0
    %v5277 = vadd.f32 0.0, %v5276
    %5278 = vdwg.mxu0
    %5279 = vmatprep.subr.mxu0 %v5188
    %5280 = vmatpush1.msra.mxu0 %v5187
    %5281 = vmatprep.subr.mxu0 %v5206
    %5282 = vmatpush1.msra.mxu0 %v5204
    %5283 = vmatprep.subr.mxu0 0.0
    %5284 = vmatpush1.msra.mxu0 0.0
    %5285 = vmatprep.subr.mxu0 0.0
    %5286 = vmatpush1.msra.mxu0 0.0
    %5287 = vmatprep.subr.mxu0 0.0
    %5288 = vmatpush1.msra.mxu0 0.0
    %5289 = vmatprep.subr.mxu0 0.0
    %5290 = vmatpush1.msra.mxu0 0.0
    %5291 = vmatprep.subr.mxu0 0.0
    %5292 = vmatpush1.msra.mxu0 0.0
    %5293 = vmatprep.subr.mxu0 0.0
    %5294 = vmatpush1.msra.mxu0 0.0
    %5295 = vmatprep.subr.mxu0 0.0
    %5296 = vmatpush1.msra.mxu0 0.0
    %5297 = vmatprep.subr.mxu0 0.0
    %5298 = vmatpush1.msra.mxu0 0.0
    %5299 = vmatprep.subr.mxu0 0.0
    %5300 = vmatpush1.msra.mxu0 0.0
    %5301 = vmatprep.subr.mxu0 0.0
    %5302 = vmatpush1.msra.mxu0 0.0
    %5303 = vmatprep.subr.mxu0 0.0
    %5304 = vmatpush1.msra.mxu0 0.0
    %5305 = vmatprep.subr.mxu0 0.0
    %5306 = vmatpush1.msra.mxu0 0.0
    %5307 = vmatprep.subr.mxu0 0.0
    %5308 = vmatpush1.msra.mxu0 0.0
    %5309 = vmatprep.subr.mxu0 0.0
    %5310 = vmatpush1.msra.mxu0 0.0
    %5311 = vmatprep.subr.mxu0 0.0
    %5312 = vmatpush1.msra.mxu0 0.0
    %5313 = vmatprep.subr.mxu0 0.0
    %5314 = vmatpush1.msra.mxu0 0.0
    %5315 = vmatprep.subr.mxu0 0.0
    %5316 = vmatpush1.msra.mxu0 0.0
    %5317 = vmatprep.subr.mxu0 0.0
    %5318 = vmatpush1.msra.mxu0 0.0
    %5319 = vmatprep.subr.mxu0 0.0
    %5320 = vmatpush1.msra.mxu0 0.0
    %5321 = vmatprep.subr.mxu0 0.0
    %5322 = vmatpush1.msra.mxu0 0.0
    %5323 = vmatprep.subr.mxu0 0.0
    %5324 = vmatpush1.msra.mxu0 0.0
    %5325 = vmatprep.subr.mxu0 0.0
    %5326 = vmatpush1.msra.mxu0 0.0
    %5327 = vmatprep.subr.mxu0 0.0
    %5328 = vmatpush1.msra.mxu0 0.0
    %5329 = vmatprep.subr.mxu0 0.0
    %5330 = vmatpush1.msra.mxu0 0.0
    %5331 = vmatprep.subr.mxu0 0.0
    %5332 = vmatpush1.msra.mxu0 0.0
    %5333 = vmatprep.subr.mxu0 0.0
    %5334 = vmatpush1.msra.mxu0 0.0
    %5335 = vmatprep.subr.mxu0 0.0
    %5336 = vmatpush1.msra.mxu0 0.0
    %5337 = vmatprep.subr.mxu0 0.0
    %5338 = vmatpush1.msra.mxu0 0.0
    %5339 = vmatprep.subr.mxu0 0.0
    %5340 = vmatpush1.msra.mxu0 0.0
    %5341 = vmatprep.subr.mxu0 0.0
    %5342 = vmatpush1.msra.mxu0 0.0
    %5343 = vmatprep.mubr.f32.mxu0 0.0
    %5344 = vmatmul.mubr.f32.gmra.mrb[0].mxu0 %v5198
    %v5345 = vpop.f32.mrb[0].mxu0
    %v5346 = vadd.f32 0.0, %v5345
    %v5347 = vpop.f32.mrb[0].mxu0
    %v5348 = vadd.f32 0.0, %v5347
    %5349 = vdwg.mxu0
    %s5350 = scalar_lea.vmem %s7, 67
    %v5351 = vld [vmem:[%s5350] ss:$8 sm:$0xf]
    %v5353 = vlaneseq
    %v5354 = vshrl.u32 %v5353, 7
    %v5355 = vsub.s32 0, %v5354
    %v5356 = vrot.slane %v5351, %v5355
    %v5357 = vlaneseq
    %v5358 = vshrl.u32 %v5357, 7
    %v5359 = vsub.s32 1, %v5358
    %v5360 = vrot.slane %v5351, %v5359
    %v5361 = vlaneseq
    %v5362 = vshrl.u32 %v5361, 7
    %v5363 = vsub.s32 2, %v5362
    %v5364 = vrot.slane %v5351, %v5363
    %v5365 = vlaneseq
    %v5366 = vshrl.u32 %v5365, 7
    %v5367 = vsub.s32 3, %v5366
    %v5368 = vrot.slane %v5351, %v5367
    %v5373 = vmul.f32 %v5275, %v5356
    %v5374 = vmul.f32 %v5277, %v5360
    %v5375 = vmul.f32 %v5346, %v5364
    %v5376 = vmul.f32 %v5348, %v5368
    %v5377 = vadd.f32 %v5158, %v5373
    %v5378 = vadd.f32 %v5159, %v5374
    %v5379 = vadd.f32 %v5160, %v5375
    %v5380 = vadd.f32 %v5161, %v5376
    %s5381 = scalar_lea.vmem %s4, 160
    %v5382 = vld [vmem:[%s5381] sm:$0xff]
    %5383 = vrot.lane.b32.xlu0 %v3828, 98
    %v5384 = vpop.permute.xlu0 %5383
    %5385 = vrot.lane.b32.xlu0 %v3829, 98
    %v5386 = vpop.permute.xlu0 %5385
    %5387 = vrot.lane.b32.xlu0 %v3830, 98
    %v5388 = vpop.permute.xlu0 %5387
    %5389 = vrot.lane.b32.xlu0 %v3831, 98
    %v5390 = vpop.permute.xlu0 %5389
    %5391 = vrot.lane.b32.xlu0 %v3832, 98
    %v5392 = vpop.permute.xlu0 %5391
    %5393 = vrot.lane.b32.xlu0 %v3833, 98
    %v5394 = vpop.permute.xlu0 %5393
    %5395 = vrot.lane.b32.xlu0 %v3834, 98
    %v5396 = vpop.permute.xlu0 %5395
    %5397 = vrot.lane.b32.xlu0 %v3835, 98
    %v5398 = vpop.permute.xlu0 %5397
    %5399 = vrot.lane.b32.xlu0 %v3836, 98
    %v5400 = vpop.permute.xlu0 %5399
    %5401 = vrot.lane.b32.xlu0 %v3837, 98
    %v5402 = vpop.permute.xlu0 %5401
    %vm5403 = vcmask 801792
    %v5404 = vsel %vm5403, %v5384, %v5386
    %v5405 = vsel %vm5403, %v5386, %v5388
    %v5406 = vsel %vm5403, %v5388, %v5390
    %v5407 = vsel %vm5403, %v5390, %v5392
    %v5408 = vsel %vm5403, %v5394, %v5396
    %v5409 = vsel %vm5403, %v5396, %v5398
    %v5410 = vsel %vm5403, %v5398, %v5400
    %v5411 = vsel %vm5403, %v5400, %v5402
    %v5417 = vsel %vm1080, %v5382, 0
    %v5419 = vsel %vm1084, %v5408, 0
    %v5421 = vsel %vm1084, %v5409, 0
    %v5423 = vsel %vm1084, %v5410, 0
    %v5425 = vsel %vm1084, %v5411, 0
    %5427 = vmatprep.subr.mxu0 %v5405
    %5428 = vmatpush1.msra.mxu0 %v5404
    %5429 = vmatprep.subr.mxu0 %v5421
    %5430 = vmatpush1.msra.mxu0 %v5419
    %5431 = vmatprep.subr.mxu0 0.0
    %5432 = vmatpush1.msra.mxu0 0.0
    %5433 = vmatprep.subr.mxu0 0.0
    %5434 = vmatpush1.msra.mxu0 0.0
    %5435 = vmatprep.subr.mxu0 0.0
    %5436 = vmatpush1.msra.mxu0 0.0
    %5437 = vmatprep.subr.mxu0 0.0
    %5438 = vmatpush1.msra.mxu0 0.0
    %5439 = vmatprep.subr.mxu0 0.0
    %5440 = vmatpush1.msra.mxu0 0.0
    %5441 = vmatprep.subr.mxu0 0.0
    %5442 = vmatpush1.msra.mxu0 0.0
    %5443 = vmatprep.subr.mxu0 0.0
    %5444 = vmatpush1.msra.mxu0 0.0
    %5445 = vmatprep.subr.mxu0 0.0
    %5446 = vmatpush1.msra.mxu0 0.0
    %5447 = vmatprep.subr.mxu0 0.0
    %5448 = vmatpush1.msra.mxu0 0.0
    %5449 = vmatprep.subr.mxu0 0.0
    %5450 = vmatpush1.msra.mxu0 0.0
    %5451 = vmatprep.subr.mxu0 0.0
    %5452 = vmatpush1.msra.mxu0 0.0
    %5453 = vmatprep.subr.mxu0 0.0
    %5454 = vmatpush1.msra.mxu0 0.0
    %5455 = vmatprep.subr.mxu0 0.0
    %5456 = vmatpush1.msra.mxu0 0.0
    %5457 = vmatprep.subr.mxu0 0.0
    %5458 = vmatpush1.msra.mxu0 0.0
    %5459 = vmatprep.subr.mxu0 0.0
    %5460 = vmatpush1.msra.mxu0 0.0
    %5461 = vmatprep.subr.mxu0 0.0
    %5462 = vmatpush1.msra.mxu0 0.0
    %5463 = vmatprep.subr.mxu0 0.0
    %5464 = vmatpush1.msra.mxu0 0.0
    %5465 = vmatprep.subr.mxu0 0.0
    %5466 = vmatpush1.msra.mxu0 0.0
    %5467 = vmatprep.subr.mxu0 0.0
    %5468 = vmatpush1.msra.mxu0 0.0
    %5469 = vmatprep.subr.mxu0 0.0
    %5470 = vmatpush1.msra.mxu0 0.0
    %5471 = vmatprep.subr.mxu0 0.0
    %5472 = vmatpush1.msra.mxu0 0.0
    %5473 = vmatprep.subr.mxu0 0.0
    %5474 = vmatpush1.msra.mxu0 0.0
    %5475 = vmatprep.subr.mxu0 0.0
    %5476 = vmatpush1.msra.mxu0 0.0
    %5477 = vmatprep.subr.mxu0 0.0
    %5478 = vmatpush1.msra.mxu0 0.0
    %5479 = vmatprep.subr.mxu0 0.0
    %5480 = vmatpush1.msra.mxu0 0.0
    %5481 = vmatprep.subr.mxu0 0.0
    %5482 = vmatpush1.msra.mxu0 0.0
    %5483 = vmatprep.subr.mxu0 0.0
    %5484 = vmatpush1.msra.mxu0 0.0
    %5485 = vmatprep.subr.mxu0 0.0
    %5486 = vmatpush1.msra.mxu0 0.0
    %5487 = vmatprep.subr.mxu0 0.0
    %5488 = vmatpush1.msra.mxu0 0.0
    %5489 = vmatprep.subr.mxu0 0.0
    %5490 = vmatpush1.msra.mxu0 0.0
    %5491 = vmatprep.mubr.f32.mxu0 0.0
    %5492 = vmatmul.mubr.f32.gmra.mrb[0].mxu0 %v5417
    %v5493 = vpop.f32.mrb[0].mxu0
    %v5494 = vadd.f32 0.0, %v5493
    %v5495 = vpop.f32.mrb[0].mxu0
    %v5496 = vadd.f32 0.0, %v5495
    %5497 = vdwg.mxu0
    %5498 = vmatprep.subr.mxu0 %v5407
    %5499 = vmatpush1.msra.mxu0 %v5406
    %5500 = vmatprep.subr.mxu0 %v5425
    %5501 = vmatpush1.msra.mxu0 %v5423
    %5502 = vmatprep.subr.mxu0 0.0
    %5503 = vmatpush1.msra.mxu0 0.0
    %5504 = vmatprep.subr.mxu0 0.0
    %5505 = vmatpush1.msra.mxu0 0.0
    %5506 = vmatprep.subr.mxu0 0.0
    %5507 = vmatpush1.msra.mxu0 0.0
    %5508 = vmatprep.subr.mxu0 0.0
    %5509 = vmatpush1.msra.mxu0 0.0
    %5510 = vmatprep.subr.mxu0 0.0
    %5511 = vmatpush1.msra.mxu0 0.0
    %5512 = vmatprep.subr.mxu0 0.0
    %5513 = vmatpush1.msra.mxu0 0.0
    %5514 = vmatprep.subr.mxu0 0.0
    %5515 = vmatpush1.msra.mxu0 0.0
    %5516 = vmatprep.subr.mxu0 0.0
    %5517 = vmatpush1.msra.mxu0 0.0
    %5518 = vmatprep.subr.mxu0 0.0
    %5519 = vmatpush1.msra.mxu0 0.0
    %5520 = vmatprep.subr.mxu0 0.0
    %5521 = vmatpush1.msra.mxu0 0.0
    %5522 = vmatprep.subr.mxu0 0.0
    %5523 = vmatpush1.msra.mxu0 0.0
    %5524 = vmatprep.subr.mxu0 0.0
    %5525 = vmatpush1.msra.mxu0 0.0
    %5526 = vmatprep.subr.mxu0 0.0
    %5527 = vmatpush1.msra.mxu0 0.0
    %5528 = vmatprep.subr.mxu0 0.0
    %5529 = vmatpush1.msra.mxu0 0.0
    %5530 = vmatprep.subr.mxu0 0.0
    %5531 = vmatpush1.msra.mxu0 0.0
    %5532 = vmatprep.subr.mxu0 0.0
    %5533 = vmatpush1.msra.mxu0 0.0
    %5534 = vmatprep.subr.mxu0 0.0
    %5535 = vmatpush1.msra.mxu0 0.0
    %5536 = vmatprep.subr.mxu0 0.0
    %5537 = vmatpush1.msra.mxu0 0.0
    %5538 = vmatprep.subr.mxu0 0.0
    %5539 = vmatpush1.msra.mxu0 0.0
    %5540 = vmatprep.subr.mxu0 0.0
    %5541 = vmatpush1.msra.mxu0 0.0
    %5542 = vmatprep.subr.mxu0 0.0
    %5543 = vmatpush1.msra.mxu0 0.0
    %5544 = vmatprep.subr.mxu0 0.0
    %5545 = vmatpush1.msra.mxu0 0.0
    %5546 = vmatprep.subr.mxu0 0.0
    %5547 = vmatpush1.msra.mxu0 0.0
    %5548 = vmatprep.subr.mxu0 0.0
    %5549 = vmatpush1.msra.mxu0 0.0
    %5550 = vmatprep.subr.mxu0 0.0
    %5551 = vmatpush1.msra.mxu0 0.0
    %5552 = vmatprep.subr.mxu0 0.0
    %5553 = vmatpush1.msra.mxu0 0.0
    %5554 = vmatprep.subr.mxu0 0.0
    %5555 = vmatpush1.msra.mxu0 0.0
    %5556 = vmatprep.subr.mxu0 0.0
    %5557 = vmatpush1.msra.mxu0 0.0
    %5558 = vmatprep.subr.mxu0 0.0
    %5559 = vmatpush1.msra.mxu0 0.0
    %5560 = vmatprep.subr.mxu0 0.0
    %5561 = vmatpush1.msra.mxu0 0.0
    %5562 = vmatprep.mubr.f32.mxu0 0.0
    %5563 = vmatmul.mubr.f32.gmra.mrb[0].mxu0 %v5417
    %v5564 = vpop.f32.mrb[0].mxu0
    %v5565 = vadd.f32 0.0, %v5564
    %v5566 = vpop.f32.mrb[0].mxu0
    %v5567 = vadd.f32 0.0, %v5566
    %5568 = vdwg.mxu0
    %s5569 = scalar_lea.vmem %s7, 68
    %v5570 = vld [vmem:[%s5569] ss:$8 sm:$0xf]
    %v5572 = vlaneseq
    %v5573 = vshrl.u32 %v5572, 7
    %v5574 = vsub.s32 0, %v5573
    %v5575 = vrot.slane %v5570, %v5574
    %v5576 = vlaneseq
    %v5577 = vshrl.u32 %v5576, 7
    %v5578 = vsub.s32 1, %v5577
    %v5579 = vrot.slane %v5570, %v5578
    %v5580 = vlaneseq
    %v5581 = vshrl.u32 %v5580, 7
    %v5582 = vsub.s32 2, %v5581
    %v5583 = vrot.slane %v5570, %v5582
    %v5584 = vlaneseq
    %v5585 = vshrl.u32 %v5584, 7
    %v5586 = vsub.s32 3, %v5585
    %v5587 = vrot.slane %v5570, %v5586
    %v5592 = vmul.f32 %v5494, %v5575
    %v5593 = vmul.f32 %v5496, %v5579
    %v5594 = vmul.f32 %v5565, %v5583
    %v5595 = vmul.f32 %v5567, %v5587
    %v5596 = vadd.f32 %v5377, %v5592
    %v5597 = vadd.f32 %v5378, %v5593
    %v5598 = vadd.f32 %v5379, %v5594
    %v5599 = vadd.f32 %v5380, %v5595
    %s5600 = scalar_lea.vmem %s4, 168
    %v5601 = vld [vmem:[%s5600] sm:$0xff]
    %5602 = vrot.lane.b32.xlu0 %v3828, 97
    %v5603 = vpop.permute.xlu0 %5602
    %5604 = vrot.lane.b32.xlu0 %v3829, 97
    %v5605 = vpop.permute.xlu0 %5604
    %5606 = vrot.lane.b32.xlu0 %v3830, 97
    %v5607 = vpop.permute.xlu0 %5606
    %5608 = vrot.lane.b32.xlu0 %v3831, 97
    %v5609 = vpop.permute.xlu0 %5608
    %5610 = vrot.lane.b32.xlu0 %v3832, 97
    %v5611 = vpop.permute.xlu0 %5610
    %5612 = vrot.lane.b32.xlu0 %v3833, 97
    %v5613 = vpop.permute.xlu0 %5612
    %5614 = vrot.lane.b32.xlu0 %v3834, 97
    %v5615 = vpop.permute.xlu0 %5614
    %5616 = vrot.lane.b32.xlu0 %v3835, 97
    %v5617 = vpop.permute.xlu0 %5616
    %5618 = vrot.lane.b32.xlu0 %v3836, 97
    %v5619 = vpop.permute.xlu0 %5618
    %5620 = vrot.lane.b32.xlu0 %v3837, 97
    %v5621 = vpop.permute.xlu0 %5620
    %vm5622 = vcmask 793600
    %v5623 = vsel %vm5622, %v5603, %v5605
    %v5624 = vsel %vm5622, %v5605, %v5607
    %v5625 = vsel %vm5622, %v5607, %v5609
    %v5626 = vsel %vm5622, %v5609, %v5611
    %v5627 = vsel %vm5622, %v5613, %v5615
    %v5628 = vsel %vm5622, %v5615, %v5617
    %v5629 = vsel %vm5622, %v5617, %v5619
    %v5630 = vsel %vm5622, %v5619, %v5621
    %v5636 = vsel %vm1080, %v5601, 0
    %v5638 = vsel %vm1084, %v5627, 0
    %v5640 = vsel %vm1084, %v5628, 0
    %v5642 = vsel %vm1084, %v5629, 0
    %v5644 = vsel %vm1084, %v5630, 0
    %5646 = vmatprep.subr.mxu0 %v5624
    %5647 = vmatpush1.msra.mxu0 %v5623
    %5648 = vmatprep.subr.mxu0 %v5640
    %5649 = vmatpush1.msra.mxu0 %v5638
    %5650 = vmatprep.subr.mxu0 0.0
    %5651 = vmatpush1.msra.mxu0 0.0
    %5652 = vmatprep.subr.mxu0 0.0
    %5653 = vmatpush1.msra.mxu0 0.0
    %5654 = vmatprep.subr.mxu0 0.0
    %5655 = vmatpush1.msra.mxu0 0.0
    %5656 = vmatprep.subr.mxu0 0.0
    %5657 = vmatpush1.msra.mxu0 0.0
    %5658 = vmatprep.subr.mxu0 0.0
    %5659 = vmatpush1.msra.mxu0 0.0
    %5660 = vmatprep.subr.mxu0 0.0
    %5661 = vmatpush1.msra.mxu0 0.0
    %5662 = vmatprep.subr.mxu0 0.0
    %5663 = vmatpush1.msra.mxu0 0.0
    %5664 = vmatprep.subr.mxu0 0.0
    %5665 = vmatpush1.msra.mxu0 0.0
    %5666 = vmatprep.subr.mxu0 0.0
    %5667 = vmatpush1.msra.mxu0 0.0
    %5668 = vmatprep.subr.mxu0 0.0
    %5669 = vmatpush1.msra.mxu0 0.0
    %5670 = vmatprep.subr.mxu0 0.0
    %5671 = vmatpush1.msra.mxu0 0.0
    %5672 = vmatprep.subr.mxu0 0.0
    %5673 = vmatpush1.msra.mxu0 0.0
    %5674 = vmatprep.subr.mxu0 0.0
    %5675 = vmatpush1.msra.mxu0 0.0
    %5676 = vmatprep.subr.mxu0 0.0
    %5677 = vmatpush1.msra.mxu0 0.0
    %5678 = vmatprep.subr.mxu0 0.0
    %5679 = vmatpush1.msra.mxu0 0.0
    %5680 = vmatprep.subr.mxu0 0.0
    %5681 = vmatpush1.msra.mxu0 0.0
    %5682 = vmatprep.subr.mxu0 0.0
    %5683 = vmatpush1.msra.mxu0 0.0
    %5684 = vmatprep.subr.mxu0 0.0
    %5685 = vmatpush1.msra.mxu0 0.0
    %5686 = vmatprep.subr.mxu0 0.0
    %5687 = vmatpush1.msra.mxu0 0.0
    %5688 = vmatprep.subr.mxu0 0.0
    %5689 = vmatpush1.msra.mxu0 0.0
    %5690 = vmatprep.subr.mxu0 0.0
    %5691 = vmatpush1.msra.mxu0 0.0
    %5692 = vmatprep.subr.mxu0 0.0
    %5693 = vmatpush1.msra.mxu0 0.0
    %5694 = vmatprep.subr.mxu0 0.0
    %5695 = vmatpush1.msra.mxu0 0.0
    %5696 = vmatprep.subr.mxu0 0.0
    %5697 = vmatpush1.msra.mxu0 0.0
    %5698 = vmatprep.subr.mxu0 0.0
    %5699 = vmatpush1.msra.mxu0 0.0
    %5700 = vmatprep.subr.mxu0 0.0
    %5701 = vmatpush1.msra.mxu0 0.0
    %5702 = vmatprep.subr.mxu0 0.0
    %5703 = vmatpush1.msra.mxu0 0.0
    %5704 = vmatprep.subr.mxu0 0.0
    %5705 = vmatpush1.msra.mxu0 0.0
    %5706 = vmatprep.subr.mxu0 0.0
    %5707 = vmatpush1.msra.mxu0 0.0
    %5708 = vmatprep.subr.mxu0 0.0
    %5709 = vmatpush1.msra.mxu0 0.0
    %5710 = vmatprep.mubr.f32.mxu0 0.0
    %5711 = vmatmul.mubr.f32.gmra.mrb[0].mxu0 %v5636
    %v5712 = vpop.f32.mrb[0].mxu0
    %v5713 = vadd.f32 0.0, %v5712
    %v5714 = vpop.f32.mrb[0].mxu0
    %v5715 = vadd.f32 0.0, %v5714
    %5716 = vdwg.mxu0
    %5717 = vmatprep.subr.mxu0 %v5626
    %5718 = vmatpush1.msra.mxu0 %v5625
    %5719 = vmatprep.subr.mxu0 %v5644
    %5720 = vmatpush1.msra.mxu0 %v5642
    %5721 = vmatprep.subr.mxu0 0.0
    %5722 = vmatpush1.msra.mxu0 0.0
    %5723 = vmatprep.subr.mxu0 0.0
    %5724 = vmatpush1.msra.mxu0 0.0
    %5725 = vmatprep.subr.mxu0 0.0
    %5726 = vmatpush1.msra.mxu0 0.0
    %5727 = vmatprep.subr.mxu0 0.0
    %5728 = vmatpush1.msra.mxu0 0.0
    %5729 = vmatprep.subr.mxu0 0.0
    %5730 = vmatpush1.msra.mxu0 0.0
    %5731 = vmatprep.subr.mxu0 0.0
    %5732 = vmatpush1.msra.mxu0 0.0
    %5733 = vmatprep.subr.mxu0 0.0
    %5734 = vmatpush1.msra.mxu0 0.0
    %5735 = vmatprep.subr.mxu0 0.0
    %5736 = vmatpush1.msra.mxu0 0.0
    %5737 = vmatprep.subr.mxu0 0.0
    %5738 = vmatpush1.msra.mxu0 0.0
    %5739 = vmatprep.subr.mxu0 0.0
    %5740 = vmatpush1.msra.mxu0 0.0
    %5741 = vmatprep.subr.mxu0 0.0
    %5742 = vmatpush1.msra.mxu0 0.0
    %5743 = vmatprep.subr.mxu0 0.0
    %5744 = vmatpush1.msra.mxu0 0.0
    %5745 = vmatprep.subr.mxu0 0.0
    %5746 = vmatpush1.msra.mxu0 0.0
    %5747 = vmatprep.subr.mxu0 0.0
    %5748 = vmatpush1.msra.mxu0 0.0
    %5749 = vmatprep.subr.mxu0 0.0
    %5750 = vmatpush1.msra.mxu0 0.0
    %5751 = vmatprep.subr.mxu0 0.0
    %5752 = vmatpush1.msra.mxu0 0.0
    %5753 = vmatprep.subr.mxu0 0.0
    %5754 = vmatpush1.msra.mxu0 0.0
    %5755 = vmatprep.subr.mxu0 0.0
    %5756 = vmatpush1.msra.mxu0 0.0
    %5757 = vmatprep.subr.mxu0 0.0
    %5758 = vmatpush1.msra.mxu0 0.0
    %5759 = vmatprep.subr.mxu0 0.0
    %5760 = vmatpush1.msra.mxu0 0.0
    %5761 = vmatprep.subr.mxu0 0.0
    %5762 = vmatpush1.msra.mxu0 0.0
    %5763 = vmatprep.subr.mxu0 0.0
    %5764 = vmatpush1.msra.mxu0 0.0
    %5765 = vmatprep.subr.mxu0 0.0
    %5766 = vmatpush1.msra.mxu0 0.0
    %5767 = vmatprep.subr.mxu0 0.0
    %5768 = vmatpush1.msra.mxu0 0.0
    %5769 = vmatprep.subr.mxu0 0.0
    %5770 = vmatpush1.msra.mxu0 0.0
    %5771 = vmatprep.subr.mxu0 0.0
    %5772 = vmatpush1.msra.mxu0 0.0
    %5773 = vmatprep.subr.mxu0 0.0
    %5774 = vmatpush1.msra.mxu0 0.0
    %5775 = vmatprep.subr.mxu0 0.0
    %5776 = vmatpush1.msra.mxu0 0.0
    %5777 = vmatprep.subr.mxu0 0.0
    %5778 = vmatpush1.msra.mxu0 0.0
    %5779 = vmatprep.subr.mxu0 0.0
    %5780 = vmatpush1.msra.mxu0 0.0
    %5781 = vmatprep.mubr.f32.mxu0 0.0
    %5782 = vmatmul.mubr.f32.gmra.mrb[0].mxu0 %v5636
    %v5783 = vpop.f32.mrb[0].mxu0
    %v5784 = vadd.f32 0.0, %v5783
    %v5785 = vpop.f32.mrb[0].mxu0
    %v5786 = vadd.f32 0.0, %v5785
    %5787 = vdwg.mxu0
    %s5788 = scalar_lea.vmem %s7, 69
    %v5789 = vld [vmem:[%s5788] ss:$8 sm:$0xf]
    %v5791 = vlaneseq
    %v5792 = vshrl.u32 %v5791, 7
    %v5793 = vsub.s32 0, %v5792
    %v5794 = vrot.slane %v5789, %v5793
    %v5795 = vlaneseq
    %v5796 = vshrl.u32 %v5795, 7
    %v5797 = vsub.s32 1, %v5796
    %v5798 = vrot.slane %v5789, %v5797
    %v5799 = vlaneseq
    %v5800 = vshrl.u32 %v5799, 7
    %v5801 = vsub.s32 2, %v5800
    %v5802 = vrot.slane %v5789, %v5801
    %v5803 = vlaneseq
    %v5804 = vshrl.u32 %v5803, 7
    %v5805 = vsub.s32 3, %v5804
    %v5806 = vrot.slane %v5789, %v5805
    %v5811 = vmul.f32 %v5713, %v5794
    %v5812 = vmul.f32 %v5715, %v5798
    %v5813 = vmul.f32 %v5784, %v5802
    %v5814 = vmul.f32 %v5786, %v5806
    %v5815 = vadd.f32 %v5596, %v5811
    %v5816 = vadd.f32 %v5597, %v5812
    %v5817 = vadd.f32 %v5598, %v5813
    %v5818 = vadd.f32 %v5599, %v5814
    %s5819 = scalar_lea.vmem %s4, 176
    %v5820 = vld [vmem:[%s5819] sm:$0xff]
    %5821 = vrot.lane.b32.xlu0 %v3828, 96
    %v5822 = vpop.permute.xlu0 %5821
    %5823 = vrot.lane.b32.xlu0 %v3829, 96
    %v5824 = vpop.permute.xlu0 %5823
    %5825 = vrot.lane.b32.xlu0 %v3830, 96
    %v5826 = vpop.permute.xlu0 %5825
    %5827 = vrot.lane.b32.xlu0 %v3831, 96
    %v5828 = vpop.permute.xlu0 %5827
    %5829 = vrot.lane.b32.xlu0 %v3832, 96
    %v5830 = vpop.permute.xlu0 %5829
    %5831 = vrot.lane.b32.xlu0 %v3833, 96
    %v5832 = vpop.permute.xlu0 %5831
    %5833 = vrot.lane.b32.xlu0 %v3834, 96
    %v5834 = vpop.permute.xlu0 %5833
    %5835 = vrot.lane.b32.xlu0 %v3835, 96
    %v5836 = vpop.permute.xlu0 %5835
    %5837 = vrot.lane.b32.xlu0 %v3836, 96
    %v5838 = vpop.permute.xlu0 %5837
    %5839 = vrot.lane.b32.xlu0 %v3837, 96
    %v5840 = vpop.permute.xlu0 %5839
    %vm5841 = vcmask 785408
    %v5842 = vsel %vm5841, %v5822, %v5824
    %v5843 = vsel %vm5841, %v5824, %v5826
    %v5844 = vsel %vm5841, %v5826, %v5828
    %v5845 = vsel %vm5841, %v5828, %v5830
    %v5846 = vsel %vm5841, %v5832, %v5834
    %v5847 = vsel %vm5841, %v5834, %v5836
    %v5848 = vsel %vm5841, %v5836, %v5838
    %v5849 = vsel %vm5841, %v5838, %v5840
    %v5855 = vsel %vm1080, %v5820, 0
    %v5857 = vsel %vm1084, %v5846, 0
    %v5859 = vsel %vm1084, %v5847, 0
    %v5861 = vsel %vm1084, %v5848, 0
    %v5863 = vsel %vm1084, %v5849, 0
    %5865 = vmatprep.subr.mxu0 %v5843
    %5866 = vmatpush1.msra.mxu0 %v5842
    %5867 = vmatprep.subr.mxu0 %v5859
    %5868 = vmatpush1.msra.mxu0 %v5857
    %5869 = vmatprep.subr.mxu0 0.0
    %5870 = vmatpush1.msra.mxu0 0.0
    %5871 = vmatprep.subr.mxu0 0.0
    %5872 = vmatpush1.msra.mxu0 0.0
    %5873 = vmatprep.subr.mxu0 0.0
    %5874 = vmatpush1.msra.mxu0 0.0
    %5875 = vmatprep.subr.mxu0 0.0
    %5876 = vmatpush1.msra.mxu0 0.0
    %5877 = vmatprep.subr.mxu0 0.0
    %5878 = vmatpush1.msra.mxu0 0.0
    %5879 = vmatprep.subr.mxu0 0.0
    %5880 = vmatpush1.msra.mxu0 0.0
    %5881 = vmatprep.subr.mxu0 0.0
    %5882 = vmatpush1.msra.mxu0 0.0
    %5883 = vmatprep.subr.mxu0 0.0
    %5884 = vmatpush1.msra.mxu0 0.0
    %5885 = vmatprep.subr.mxu0 0.0
    %5886 = vmatpush1.msra.mxu0 0.0
    %5887 = vmatprep.subr.mxu0 0.0
    %5888 = vmatpush1.msra.mxu0 0.0
    %5889 = vmatprep.subr.mxu0 0.0
    %5890 = vmatpush1.msra.mxu0 0.0
    %5891 = vmatprep.subr.mxu0 0.0
    %5892 = vmatpush1.msra.mxu0 0.0
    %5893 = vmatprep.subr.mxu0 0.0
    %5894 = vmatpush1.msra.mxu0 0.0
    %5895 = vmatprep.subr.mxu0 0.0
    %5896 = vmatpush1.msra.mxu0 0.0
    %5897 = vmatprep.subr.mxu0 0.0
    %5898 = vmatpush1.msra.mxu0 0.0
    %5899 = vmatprep.subr.mxu0 0.0
    %5900 = vmatpush1.msra.mxu0 0.0
    %5901 = vmatprep.subr.mxu0 0.0
    %5902 = vmatpush1.msra.mxu0 0.0
    %5903 = vmatprep.subr.mxu0 0.0
    %5904 = vmatpush1.msra.mxu0 0.0
    %5905 = vmatprep.subr.mxu0 0.0
    %5906 = vmatpush1.msra.mxu0 0.0
    %5907 = vmatprep.subr.mxu0 0.0
    %5908 = vmatpush1.msra.mxu0 0.0
    %5909 = vmatprep.subr.mxu0 0.0
    %5910 = vmatpush1.msra.mxu0 0.0
    %5911 = vmatprep.subr.mxu0 0.0
    %5912 = vmatpush1.msra.mxu0 0.0
    %5913 = vmatprep.subr.mxu0 0.0
    %5914 = vmatpush1.msra.mxu0 0.0
    %5915 = vmatprep.subr.mxu0 0.0
    %5916 = vmatpush1.msra.mxu0 0.0
    %5917 = vmatprep.subr.mxu0 0.0
    %5918 = vmatpush1.msra.mxu0 0.0
    %5919 = vmatprep.subr.mxu0 0.0
    %5920 = vmatpush1.msra.mxu0 0.0
    %5921 = vmatprep.subr.mxu0 0.0
    %5922 = vmatpush1.msra.mxu0 0.0
    %5923 = vmatprep.subr.mxu0 0.0
    %5924 = vmatpush1.msra.mxu0 0.0
    %5925 = vmatprep.subr.mxu0 0.0
    %5926 = vmatpush1.msra.mxu0 0.0
    %5927 = vmatprep.subr.mxu0 0.0
    %5928 = vmatpush1.msra.mxu0 0.0
    %5929 = vmatprep.mubr.f32.mxu0 0.0
    %5930 = vmatmul.mubr.f32.gmra.mrb[0].mxu0 %v5855
    %v5931 = vpop.f32.mrb[0].mxu0
    %v5932 = vadd.f32 0.0, %v5931
    %v5933 = vpop.f32.mrb[0].mxu0
    %v5934 = vadd.f32 0.0, %v5933
    %5935 = vdwg.mxu0
    %5936 = vmatprep.subr.mxu0 %v5845
    %5937 = vmatpush1.msra.mxu0 %v5844
    %5938 = vmatprep.subr.mxu0 %v5863
    %5939 = vmatpush1.msra.mxu0 %v5861
    %5940 = vmatprep.subr.mxu0 0.0
    %5941 = vmatpush1.msra.mxu0 0.0
    %5942 = vmatprep.subr.mxu0 0.0
    %5943 = vmatpush1.msra.mxu0 0.0
    %5944 = vmatprep.subr.mxu0 0.0
    %5945 = vmatpush1.msra.mxu0 0.0
    %5946 = vmatprep.subr.mxu0 0.0
    %5947 = vmatpush1.msra.mxu0 0.0
    %5948 = vmatprep.subr.mxu0 0.0
    %5949 = vmatpush1.msra.mxu0 0.0
    %5950 = vmatprep.subr.mxu0 0.0
    %5951 = vmatpush1.msra.mxu0 0.0
    %5952 = vmatprep.subr.mxu0 0.0
    %5953 = vmatpush1.msra.mxu0 0.0
    %5954 = vmatprep.subr.mxu0 0.0
    %5955 = vmatpush1.msra.mxu0 0.0
    %5956 = vmatprep.subr.mxu0 0.0
    %5957 = vmatpush1.msra.mxu0 0.0
    %5958 = vmatprep.subr.mxu0 0.0
    %5959 = vmatpush1.msra.mxu0 0.0
    %5960 = vmatprep.subr.mxu0 0.0
    %5961 = vmatpush1.msra.mxu0 0.0
    %5962 = vmatprep.subr.mxu0 0.0
    %5963 = vmatpush1.msra.mxu0 0.0
    %5964 = vmatprep.subr.mxu0 0.0
    %5965 = vmatpush1.msra.mxu0 0.0
    %5966 = vmatprep.subr.mxu0 0.0
    %5967 = vmatpush1.msra.mxu0 0.0
    %5968 = vmatprep.subr.mxu0 0.0
    %5969 = vmatpush1.msra.mxu0 0.0
    %5970 = vmatprep.subr.mxu0 0.0
    %5971 = vmatpush1.msra.mxu0 0.0
    %5972 = vmatprep.subr.mxu0 0.0
    %5973 = vmatpush1.msra.mxu0 0.0
    %5974 = vmatprep.subr.mxu0 0.0
    %5975 = vmatpush1.msra.mxu0 0.0
    %5976 = vmatprep.subr.mxu0 0.0
    %5977 = vmatpush1.msra.mxu0 0.0
    %5978 = vmatprep.subr.mxu0 0.0
    %5979 = vmatpush1.msra.mxu0 0.0
    %5980 = vmatprep.subr.mxu0 0.0
    %5981 = vmatpush1.msra.mxu0 0.0
    %5982 = vmatprep.subr.mxu0 0.0
    %5983 = vmatpush1.msra.mxu0 0.0
    %5984 = vmatprep.subr.mxu0 0.0
    %5985 = vmatpush1.msra.mxu0 0.0
    %5986 = vmatprep.subr.mxu0 0.0
    %5987 = vmatpush1.msra.mxu0 0.0
    %5988 = vmatprep.subr.mxu0 0.0
    %5989 = vmatpush1.msra.mxu0 0.0
    %5990 = vmatprep.subr.mxu0 0.0
    %5991 = vmatpush1.msra.mxu0 0.0
    %5992 = vmatprep.subr.mxu0 0.0
    %5993 = vmatpush1.msra.mxu0 0.0
    %5994 = vmatprep.subr.mxu0 0.0
    %5995 = vmatpush1.msra.mxu0 0.0
    %5996 = vmatprep.subr.mxu0 0.0
    %5997 = vmatpush1.msra.mxu0 0.0
    %5998 = vmatprep.subr.mxu0 0.0
    %5999 = vmatpush1.msra.mxu0 0.0
    %6000 = vmatprep.mubr.f32.mxu0 0.0
    %6001 = vmatmul.mubr.f32.gmra.mrb[0].mxu0 %v5855
    %v6002 = vpop.f32.mrb[0].mxu0
    %v6003 = vadd.f32 0.0, %v6002
    %v6004 = vpop.f32.mrb[0].mxu0
    %v6005 = vadd.f32 0.0, %v6004
    %6006 = vdwg.mxu0
    %s6007 = scalar_lea.vmem %s7, 70
    %v6008 = vld [vmem:[%s6007] ss:$8 sm:$0xf]
    %v6010 = vlaneseq
    %v6011 = vshrl.u32 %v6010, 7
    %v6012 = vsub.s32 0, %v6011
    %v6013 = vrot.slane %v6008, %v6012
    %v6014 = vlaneseq
    %v6015 = vshrl.u32 %v6014, 7
    %v6016 = vsub.s32 1, %v6015
    %v6017 = vrot.slane %v6008, %v6016
    %v6018 = vlaneseq
    %v6019 = vshrl.u32 %v6018, 7
    %v6020 = vsub.s32 2, %v6019
    %v6021 = vrot.slane %v6008, %v6020
    %v6022 = vlaneseq
    %v6023 = vshrl.u32 %v6022, 7
    %v6024 = vsub.s32 3, %v6023
    %v6025 = vrot.slane %v6008, %v6024
    %v6030 = vmul.f32 %v5932, %v6013
    %v6031 = vmul.f32 %v5934, %v6017
    %v6032 = vmul.f32 %v6003, %v6021
    %v6033 = vmul.f32 %v6005, %v6025
    %v6034 = vadd.f32 %v5815, %v6030
    %v6035 = vadd.f32 %v5816, %v6031
    %v6036 = vadd.f32 %v5817, %v6032
    %v6037 = vadd.f32 %v5818, %v6033
    %s6038 = scalar_lea.vmem %s4, 184
    %v6039 = vld [vmem:[%s6038] sm:$0xff]
    %6040 = vrot.lane.b32.xlu0 %v3828, 95
    %v6041 = vpop.permute.xlu0 %6040
    %6042 = vrot.lane.b32.xlu0 %v3829, 95
    %v6043 = vpop.permute.xlu0 %6042
    %6044 = vrot.lane.b32.xlu0 %v3830, 95
    %v6045 = vpop.permute.xlu0 %6044
    %6046 = vrot.lane.b32.xlu0 %v3831, 95
    %v6047 = vpop.permute.xlu0 %6046
    %6048 = vrot.lane.b32.xlu0 %v3832, 95
    %v6049 = vpop.permute.xlu0 %6048
    %6050 = vrot.lane.b32.xlu0 %v3833, 95
    %v6051 = vpop.permute.xlu0 %6050
    %6052 = vrot.lane.b32.xlu0 %v3834, 95
    %v6053 = vpop.permute.xlu0 %6052
    %6054 = vrot.lane.b32.xlu0 %v3835, 95
    %v6055 = vpop.permute.xlu0 %6054
    %6056 = vrot.lane.b32.xlu0 %v3836, 95
    %v6057 = vpop.permute.xlu0 %6056
    %6058 = vrot.lane.b32.xlu0 %v3837, 95
    %v6059 = vpop.permute.xlu0 %6058
    %vm6060 = vcmask 777216
    %v6061 = vsel %vm6060, %v6041, %v6043
    %v6062 = vsel %vm6060, %v6043, %v6045
    %v6063 = vsel %vm6060, %v6045, %v6047
    %v6064 = vsel %vm6060, %v6047, %v6049
    %v6065 = vsel %vm6060, %v6051, %v6053
    %v6066 = vsel %vm6060, %v6053, %v6055
    %v6067 = vsel %vm6060, %v6055, %v6057
    %v6068 = vsel %vm6060, %v6057, %v6059
    %v6074 = vsel %vm1080, %v6039, 0
    %v6076 = vsel %vm1084, %v6065, 0
    %v6078 = vsel %vm1084, %v6066, 0
    %v6080 = vsel %vm1084, %v6067, 0
    %v6082 = vsel %vm1084, %v6068, 0
    %6084 = vmatprep.subr.mxu0 %v6062
    %6085 = vmatpush1.msra.mxu0 %v6061
    %6086 = vmatprep.subr.mxu0 %v6078
    %6087 = vmatpush1.msra.mxu0 %v6076
    %6088 = vmatprep.subr.mxu0 0.0
    %6089 = vmatpush1.msra.mxu0 0.0
    %6090 = vmatprep.subr.mxu0 0.0
    %6091 = vmatpush1.msra.mxu0 0.0
    %6092 = vmatprep.subr.mxu0 0.0
    %6093 = vmatpush1.msra.mxu0 0.0
    %6094 = vmatprep.subr.mxu0 0.0
    %6095 = vmatpush1.msra.mxu0 0.0
    %6096 = vmatprep.subr.mxu0 0.0
    %6097 = vmatpush1.msra.mxu0 0.0
    %6098 = vmatprep.subr.mxu0 0.0
    %6099 = vmatpush1.msra.mxu0 0.0
    %6100 = vmatprep.subr.mxu0 0.0
    %6101 = vmatpush1.msra.mxu0 0.0
    %6102 = vmatprep.subr.mxu0 0.0
    %6103 = vmatpush1.msra.mxu0 0.0
    %6104 = vmatprep.subr.mxu0 0.0
    %6105 = vmatpush1.msra.mxu0 0.0
    %6106 = vmatprep.subr.mxu0 0.0
    %6107 = vmatpush1.msra.mxu0 0.0
    %6108 = vmatprep.subr.mxu0 0.0
    %6109 = vmatpush1.msra.mxu0 0.0
    %6110 = vmatprep.subr.mxu0 0.0
    %6111 = vmatpush1.msra.mxu0 0.0
    %6112 = vmatprep.subr.mxu0 0.0
    %6113 = vmatpush1.msra.mxu0 0.0
    %6114 = vmatprep.subr.mxu0 0.0
    %6115 = vmatpush1.msra.mxu0 0.0
    %6116 = vmatprep.subr.mxu0 0.0
    %6117 = vmatpush1.msra.mxu0 0.0
    %6118 = vmatprep.subr.mxu0 0.0
    %6119 = vmatpush1.msra.mxu0 0.0
    %6120 = vmatprep.subr.mxu0 0.0
    %6121 = vmatpush1.msra.mxu0 0.0
    %6122 = vmatprep.subr.mxu0 0.0
    %6123 = vmatpush1.msra.mxu0 0.0
    %6124 = vmatprep.subr.mxu0 0.0
    %6125 = vmatpush1.msra.mxu0 0.0
    %6126 = vmatprep.subr.mxu0 0.0
    %6127 = vmatpush1.msra.mxu0 0.0
    %6128 = vmatprep.subr.mxu0 0.0
    %6129 = vmatpush1.msra.mxu0 0.0
    %6130 = vmatprep.subr.mxu0 0.0
    %6131 = vmatpush1.msra.mxu0 0.0
    %6132 = vmatprep.subr.mxu0 0.0
    %6133 = vmatpush1.msra.mxu0 0.0
    %6134 = vmatprep.subr.mxu0 0.0
    %6135 = vmatpush1.msra.mxu0 0.0
    %6136 = vmatprep.subr.mxu0 0.0
    %6137 = vmatpush1.msra.mxu0 0.0
    %6138 = vmatprep.subr.mxu0 0.0
    %6139 = vmatpush1.msra.mxu0 0.0
    %6140 = vmatprep.subr.mxu0 0.0
    %6141 = vmatpush1.msra.mxu0 0.0
    %6142 = vmatprep.subr.mxu0 0.0
    %6143 = vmatpush1.msra.mxu0 0.0
    %6144 = vmatprep.subr.mxu0 0.0
    %6145 = vmatpush1.msra.mxu0 0.0
    %6146 = vmatprep.subr.mxu0 0.0
    %6147 = vmatpush1.msra.mxu0 0.0
    %6148 = vmatprep.mubr.f32.mxu0 0.0
    %6149 = vmatmul.mubr.f32.gmra.mrb[0].mxu0 %v6074
    %v6150 = vpop.f32.mrb[0].mxu0
    %v6151 = vadd.f32 0.0, %v6150
    %v6152 = vpop.f32.mrb[0].mxu0
    %v6153 = vadd.f32 0.0, %v6152
    %6154 = vdwg.mxu0
    %6155 = vmatprep.subr.mxu0 %v6064
    %6156 = vmatpush1.msra.mxu0 %v6063
    %6157 = vmatprep.subr.mxu0 %v6082
    %6158 = vmatpush1.msra.mxu0 %v6080
    %6159 = vmatprep.subr.mxu0 0.0
    %6160 = vmatpush1.msra.mxu0 0.0
    %6161 = vmatprep.subr.mxu0 0.0
    %6162 = vmatpush1.msra.mxu0 0.0
    %6163 = vmatprep.subr.mxu0 0.0
    %6164 = vmatpush1.msra.mxu0 0.0
    %6165 = vmatprep.subr.mxu0 0.0
    %6166 = vmatpush1.msra.mxu0 0.0
    %6167 = vmatprep.subr.mxu0 0.0
    %6168 = vmatpush1.msra.mxu0 0.0
    %6169 = vmatprep.subr.mxu0 0.0
    %6170 = vmatpush1.msra.mxu0 0.0
    %6171 = vmatprep.subr.mxu0 0.0
    %6172 = vmatpush1.msra.mxu0 0.0
    %6173 = vmatprep.subr.mxu0 0.0
    %6174 = vmatpush1.msra.mxu0 0.0
    %6175 = vmatprep.subr.mxu0 0.0
    %6176 = vmatpush1.msra.mxu0 0.0
    %6177 = vmatprep.subr.mxu0 0.0
    %6178 = vmatpush1.msra.mxu0 0.0
    %6179 = vmatprep.subr.mxu0 0.0
    %6180 = vmatpush1.msra.mxu0 0.0
    %6181 = vmatprep.subr.mxu0 0.0
    %6182 = vmatpush1.msra.mxu0 0.0
    %6183 = vmatprep.subr.mxu0 0.0
    %6184 = vmatpush1.msra.mxu0 0.0
    %6185 = vmatprep.subr.mxu0 0.0
    %6186 = vmatpush1.msra.mxu0 0.0
    %6187 = vmatprep.subr.mxu0 0.0
    %6188 = vmatpush1.msra.mxu0 0.0
    %6189 = vmatprep.subr.mxu0 0.0
    %6190 = vmatpush1.msra.mxu0 0.0
    %6191 = vmatprep.subr.mxu0 0.0
    %6192 = vmatpush1.msra.mxu0 0.0
    %6193 = vmatprep.subr.mxu0 0.0
    %6194 = vmatpush1.msra.mxu0 0.0
    %6195 = vmatprep.subr.mxu0 0.0
    %6196 = vmatpush1.msra.mxu0 0.0
    %6197 = vmatprep.subr.mxu0 0.0
    %6198 = vmatpush1.msra.mxu0 0.0
    %6199 = vmatprep.subr.mxu0 0.0
    %6200 = vmatpush1.msra.mxu0 0.0
    %6201 = vmatprep.subr.mxu0 0.0
    %6202 = vmatpush1.msra.mxu0 0.0
    %6203 = vmatprep.subr.mxu0 0.0
    %6204 = vmatpush1.msra.mxu0 0.0
    %6205 = vmatprep.subr.mxu0 0.0
    %6206 = vmatpush1.msra.mxu0 0.0
    %6207 = vmatprep.subr.mxu0 0.0
    %6208 = vmatpush1.msra.mxu0 0.0
    %6209 = vmatprep.subr.mxu0 0.0
    %6210 = vmatpush1.msra.mxu0 0.0
    %6211 = vmatprep.subr.mxu0 0.0
    %6212 = vmatpush1.msra.mxu0 0.0
    %6213 = vmatprep.subr.mxu0 0.0
    %6214 = vmatpush1.msra.mxu0 0.0
    %6215 = vmatprep.subr.mxu0 0.0
    %6216 = vmatpush1.msra.mxu0 0.0
    %6217 = vmatprep.subr.mxu0 0.0
    %6218 = vmatpush1.msra.mxu0 0.0
    %6219 = vmatprep.mubr.f32.mxu0 0.0
    %6220 = vmatmul.mubr.f32.gmra.mrb[0].mxu0 %v6074
    %v6221 = vpop.f32.mrb[0].mxu0
    %v6222 = vadd.f32 0.0, %v6221
    %v6223 = vpop.f32.mrb[0].mxu0
    %v6224 = vadd.f32 0.0, %v6223
    %6225 = vdwg.mxu0
    %s6226 = scalar_lea.vmem %s7, 71
    %v6227 = vld [vmem:[%s6226] ss:$8 sm:$0xf]
    %v6229 = vlaneseq
    %v6230 = vshrl.u32 %v6229, 7
    %v6231 = vsub.s32 0, %v6230
    %v6232 = vrot.slane %v6227, %v6231
    %v6233 = vlaneseq
    %v6234 = vshrl.u32 %v6233, 7
    %v6235 = vsub.s32 1, %v6234
    %v6236 = vrot.slane %v6227, %v6235
    %v6237 = vlaneseq
    %v6238 = vshrl.u32 %v6237, 7
    %v6239 = vsub.s32 2, %v6238
    %v6240 = vrot.slane %v6227, %v6239
    %v6241 = vlaneseq
    %v6242 = vshrl.u32 %v6241, 7
    %v6243 = vsub.s32 3, %v6242
    %v6244 = vrot.slane %v6227, %v6243
    %v6249 = vmul.f32 %v6151, %v6232
    %v6250 = vmul.f32 %v6153, %v6236
    %v6251 = vmul.f32 %v6222, %v6240
    %v6252 = vmul.f32 %v6224, %v6244
    %v6253 = vadd.f32 %v6034, %v6249
    %v6254 = vadd.f32 %v6035, %v6250
    %v6255 = vadd.f32 %v6036, %v6251
    %v6256 = vadd.f32 %v6037, %v6252
    %s6257 = scalar_lea.vmem %s4, 192
    %v6258 = vld [vmem:[%s6257] sm:$0xff]
    %6259 = vrot.lane.b32.xlu0 %v3828, 94
    %v6260 = vpop.permute.xlu0 %6259
    %6261 = vrot.lane.b32.xlu0 %v3829, 94
    %v6262 = vpop.permute.xlu0 %6261
    %6263 = vrot.lane.b32.xlu0 %v3830, 94
    %v6264 = vpop.permute.xlu0 %6263
    %6265 = vrot.lane.b32.xlu0 %v3831, 94
    %v6266 = vpop.permute.xlu0 %6265
    %6267 = vrot.lane.b32.xlu0 %v3832, 94
    %v6268 = vpop.permute.xlu0 %6267
    %6269 = vrot.lane.b32.xlu0 %v3833, 94
    %v6270 = vpop.permute.xlu0 %6269
    %6271 = vrot.lane.b32.xlu0 %v3834, 94
    %v6272 = vpop.permute.xlu0 %6271
    %6273 = vrot.lane.b32.xlu0 %v3835, 94
    %v6274 = vpop.permute.xlu0 %6273
    %6275 = vrot.lane.b32.xlu0 %v3836, 94
    %v6276 = vpop.permute.xlu0 %6275
    %6277 = vrot.lane.b32.xlu0 %v3837, 94
    %v6278 = vpop.permute.xlu0 %6277
    %vm6279 = vcmask 769024
    %v6280 = vsel %vm6279, %v6260, %v6262
    %v6281 = vsel %vm6279, %v6262, %v6264
    %v6282 = vsel %vm6279, %v6264, %v6266
    %v6283 = vsel %vm6279, %v6266, %v6268
    %v6284 = vsel %vm6279, %v6270, %v6272
    %v6285 = vsel %vm6279, %v6272, %v6274
    %v6286 = vsel %vm6279, %v6274, %v6276
    %v6287 = vsel %vm6279, %v6276, %v6278
    %v6293 = vsel %vm1080, %v6258, 0
    %v6295 = vsel %vm1084, %v6284, 0
    %v6297 = vsel %vm1084, %v6285, 0
    %v6299 = vsel %vm1084, %v6286, 0
    %v6301 = vsel %vm1084, %v6287, 0
    %6303 = vmatprep.subr.mxu0 %v6281
    %6304 = vmatpush1.msra.mxu0 %v6280
    %6305 = vmatprep.subr.mxu0 %v6297
    %6306 = vmatpush1.msra.mxu0 %v6295
    %6307 = vmatprep.subr.mxu0 0.0
    %6308 = vmatpush1.msra.mxu0 0.0
    %6309 = vmatprep.subr.mxu0 0.0
    %6310 = vmatpush1.msra.mxu0 0.0
    %6311 = vmatprep.subr.mxu0 0.0
    %6312 = vmatpush1.msra.mxu0 0.0
    %6313 = vmatprep.subr.mxu0 0.0
    %6314 = vmatpush1.msra.mxu0 0.0
    %6315 = vmatprep.subr.mxu0 0.0
    %6316 = vmatpush1.msra.mxu0 0.0
    %6317 = vmatprep.subr.mxu0 0.0
    %6318 = vmatpush1.msra.mxu0 0.0
    %6319 = vmatprep.subr.mxu0 0.0
    %6320 = vmatpush1.msra.mxu0 0.0
    %6321 = vmatprep.subr.mxu0 0.0
    %6322 = vmatpush1.msra.mxu0 0.0
    %6323 = vmatprep.subr.mxu0 0.0
    %6324 = vmatpush1.msra.mxu0 0.0
    %6325 = vmatprep.subr.mxu0 0.0
    %6326 = vmatpush1.msra.mxu0 0.0
    %6327 = vmatprep.subr.mxu0 0.0
    %6328 = vmatpush1.msra.mxu0 0.0
    %6329 = vmatprep.subr.mxu0 0.0
    %6330 = vmatpush1.msra.mxu0 0.0
    %6331 = vmatprep.subr.mxu0 0.0
    %6332 = vmatpush1.msra.mxu0 0.0
    %6333 = vmatprep.subr.mxu0 0.0
    %6334 = vmatpush1.msra.mxu0 0.0
    %6335 = vmatprep.subr.mxu0 0.0
    %6336 = vmatpush1.msra.mxu0 0.0
    %6337 = vmatprep.subr.mxu0 0.0
    %6338 = vmatpush1.msra.mxu0 0.0
    %6339 = vmatprep.subr.mxu0 0.0
    %6340 = vmatpush1.msra.mxu0 0.0
    %6341 = vmatprep.subr.mxu0 0.0
    %6342 = vmatpush1.msra.mxu0 0.0
    %6343 = vmatprep.subr.mxu0 0.0
    %6344 = vmatpush1.msra.mxu0 0.0
    %6345 = vmatprep.subr.mxu0 0.0
    %6346 = vmatpush1.msra.mxu0 0.0
    %6347 = vmatprep.subr.mxu0 0.0
    %6348 = vmatpush1.msra.mxu0 0.0
    %6349 = vmatprep.subr.mxu0 0.0
    %6350 = vmatpush1.msra.mxu0 0.0
    %6351 = vmatprep.subr.mxu0 0.0
    %6352 = vmatpush1.msra.mxu0 0.0
    %6353 = vmatprep.subr.mxu0 0.0
    %6354 = vmatpush1.msra.mxu0 0.0
    %6355 = vmatprep.subr.mxu0 0.0
    %6356 = vmatpush1.msra.mxu0 0.0
    %6357 = vmatprep.subr.mxu0 0.0
    %6358 = vmatpush1.msra.mxu0 0.0
    %6359 = vmatprep.subr.mxu0 0.0
    %6360 = vmatpush1.msra.mxu0 0.0
    %6361 = vmatprep.subr.mxu0 0.0
    %6362 = vmatpush1.msra.mxu0 0.0
    %6363 = vmatprep.subr.mxu0 0.0
    %6364 = vmatpush1.msra.mxu0 0.0
    %6365 = vmatprep.subr.mxu0 0.0
    %6366 = vmatpush1.msra.mxu0 0.0
    %6367 = vmatprep.mubr.f32.mxu0 0.0
    %6368 = vmatmul.mubr.f32.gmra.mrb[0].mxu0 %v6293
    %v6369 = vpop.f32.mrb[0].mxu0
    %v6370 = vadd.f32 0.0, %v6369
    %v6371 = vpop.f32.mrb[0].mxu0
    %v6372 = vadd.f32 0.0, %v6371
    %6373 = vdwg.mxu0
    %6374 = vmatprep.subr.mxu0 %v6283
    %6375 = vmatpush1.msra.mxu0 %v6282
    %6376 = vmatprep.subr.mxu0 %v6301
    %6377 = vmatpush1.msra.mxu0 %v6299
    %6378 = vmatprep.subr.mxu0 0.0
    %6379 = vmatpush1.msra.mxu0 0.0
    %6380 = vmatprep.subr.mxu0 0.0
    %6381 = vmatpush1.msra.mxu0 0.0
    %6382 = vmatprep.subr.mxu0 0.0
    %6383 = vmatpush1.msra.mxu0 0.0
    %6384 = vmatprep.subr.mxu0 0.0
    %6385 = vmatpush1.msra.mxu0 0.0
    %6386 = vmatprep.subr.mxu0 0.0
    %6387 = vmatpush1.msra.mxu0 0.0
    %6388 = vmatprep.subr.mxu0 0.0
    %6389 = vmatpush1.msra.mxu0 0.0
    %6390 = vmatprep.subr.mxu0 0.0
    %6391 = vmatpush1.msra.mxu0 0.0
    %6392 = vmatprep.subr.mxu0 0.0
    %6393 = vmatpush1.msra.mxu0 0.0
    %6394 = vmatprep.subr.mxu0 0.0
    %6395 = vmatpush1.msra.mxu0 0.0
    %6396 = vmatprep.subr.mxu0 0.0
    %6397 = vmatpush1.msra.mxu0 0.0
    %6398 = vmatprep.subr.mxu0 0.0
    %6399 = vmatpush1.msra.mxu0 0.0
    %6400 = vmatprep.subr.mxu0 0.0
    %6401 = vmatpush1.msra.mxu0 0.0
    %6402 = vmatprep.subr.mxu0 0.0
    %6403 = vmatpush1.msra.mxu0 0.0
    %6404 = vmatprep.subr.mxu0 0.0
    %6405 = vmatpush1.msra.mxu0 0.0
    %6406 = vmatprep.subr.mxu0 0.0
    %6407 = vmatpush1.msra.mxu0 0.0
    %6408 = vmatprep.subr.mxu0 0.0
    %6409 = vmatpush1.msra.mxu0 0.0
    %6410 = vmatprep.subr.mxu0 0.0
    %6411 = vmatpush1.msra.mxu0 0.0
    %6412 = vmatprep.subr.mxu0 0.0
    %6413 = vmatpush1.msra.mxu0 0.0
    %6414 = vmatprep.subr.mxu0 0.0
    %6415 = vmatpush1.msra.mxu0 0.0
    %6416 = vmatprep.subr.mxu0 0.0
    %6417 = vmatpush1.msra.mxu0 0.0
    %6418 = vmatprep.subr.mxu0 0.0
    %6419 = vmatpush1.msra.mxu0 0.0
    %6420 = vmatprep.subr.mxu0 0.0
    %6421 = vmatpush1.msra.mxu0 0.0
    %6422 = vmatprep.subr.mxu0 0.0
    %6423 = vmatpush1.msra.mxu0 0.0
    %6424 = vmatprep.subr.mxu0 0.0
    %6425 = vmatpush1.msra.mxu0 0.0
    %6426 = vmatprep.subr.mxu0 0.0
    %6427 = vmatpush1.msra.mxu0 0.0
    %6428 = vmatprep.subr.mxu0 0.0
    %6429 = vmatpush1.msra.mxu0 0.0
    %6430 = vmatprep.subr.mxu0 0.0
    %6431 = vmatpush1.msra.mxu0 0.0
    %6432 = vmatprep.subr.mxu0 0.0
    %6433 = vmatpush1.msra.mxu0 0.0
    %6434 = vmatprep.subr.mxu0 0.0
    %6435 = vmatpush1.msra.mxu0 0.0
    %6436 = vmatprep.subr.mxu0 0.0
    %6437 = vmatpush1.msra.mxu0 0.0
    %6438 = vmatprep.mubr.f32.mxu0 0.0
    %6439 = vmatmul.mubr.f32.gmra.mrb[0].mxu0 %v6293
    %v6440 = vpop.f32.mrb[0].mxu0
    %v6441 = vadd.f32 0.0, %v6440
    %v6442 = vpop.f32.mrb[0].mxu0
    %v6443 = vadd.f32 0.0, %v6442
    %6444 = vdwg.mxu0
    %s6445 = scalar_lea.vmem %s7, 96
    %v6446 = vld [vmem:[%s6445] ss:$8 sm:$0xf]
    %v6448 = vlaneseq
    %v6449 = vshrl.u32 %v6448, 7
    %v6450 = vsub.s32 0, %v6449
    %v6451 = vrot.slane %v6446, %v6450
    %v6452 = vlaneseq
    %v6453 = vshrl.u32 %v6452, 7
    %v6454 = vsub.s32 1, %v6453
    %v6455 = vrot.slane %v6446, %v6454
    %v6456 = vlaneseq
    %v6457 = vshrl.u32 %v6456, 7
    %v6458 = vsub.s32 2, %v6457
    %v6459 = vrot.slane %v6446, %v6458
    %v6460 = vlaneseq
    %v6461 = vshrl.u32 %v6460, 7
    %v6462 = vsub.s32 3, %v6461
    %v6463 = vrot.slane %v6446, %v6462
    %v6468 = vmul.f32 %v6370, %v6451
    %v6469 = vmul.f32 %v6372, %v6455
    %v6470 = vmul.f32 %v6441, %v6459
    %v6471 = vmul.f32 %v6443, %v6463
    %v6472 = vadd.f32 %v6253, %v6468
    %v6473 = vadd.f32 %v6254, %v6469
    %v6474 = vadd.f32 %v6255, %v6470
    %v6475 = vadd.f32 %v6256, %v6471
    %6476 = vset.pattern.permute.xlu0 2
    %6477 = vperm.xlu0 %6476, %v44
    %v6478 = vpop.permute.xlu0 %6477
    %v6480 = vadd.f32 %v6472, %v6478
    %v6481 = vadd.f32 %v6473, %v6478
    %v6482 = vadd.f32 %v6474, %v6478
    %v6483 = vadd.f32 %v6475, %v6478
    %vm6484 = vcmp.ge.f32.partialorder %v6480, 0.0
    %vm6485 = vcmp.ge.f32.partialorder %v6481, 0.0
    %vm6486 = vcmp.ge.f32.partialorder %v6482, 0.0
    %vm6487 = vcmp.ge.f32.partialorder %v6483, 0.0
    %6488 = vset.pattern.permute.xlu0 3
    %6489 = vperm.xlu0 %6488, %v44
    %v6490 = vpop.permute.xlu0 %6489
    %v6492 = vmul.f32 %v6490, %v6480
    %v6493 = vmul.f32 %v6490, %v6481
    %v6494 = vmul.f32 %v6490, %v6482
    %v6495 = vmul.f32 %v6490, %v6483
    %v6496 = vsel %vm6484, %v6480, %v6492
    %v6497 = vsel %vm6485, %v6481, %v6493
    %v6498 = vsel %vm6486, %v6482, %v6494
    %v6499 = vsel %vm6487, %v6483, %v6495
    %v6500 = vadd.f32 %v6496, %v1026
    %v6501 = vadd.f32 %v6497, %v1027
    %v6502 = vadd.f32 %v6498, %v1028
    %v6503 = vadd.f32 %v6499, %v1029
    %v6504 = vld [vmem:[%s5] sm:$0xf]
    %6506 = vset.pattern.permute.xlu0 4
    %6507 = vperm.xlu0 %6506, %v45
    %v6508 = vpop.permute.xlu0 %6507
    %v6511 = vsel %vm55, %v6504, 0
    %6513 = vmatprep.subr.mxu0 %v6501
    %6514 = vmatpush1.msra.mxu0 %v6500
    %6515 = vmatprep.subr.mxu0 0.0
    %6516 = vmatpush1.msra.mxu0 0.0
    %6517 = vmatprep.subr.mxu0 0.0
    %6518 = vmatpush1.msra.mxu0 0.0
    %6519 = vmatprep.subr.mxu0 0.0
    %6520 = vmatpush1.msra.mxu0 0.0
    %6521 = vmatprep.subr.mxu0 0.0
    %6522 = vmatpush1.msra.mxu0 0.0
    %6523 = vmatprep.subr.mxu0 0.0
    %6524 = vmatpush1.msra.mxu0 0.0
    %6525 = vmatprep.subr.mxu0 0.0
    %6526 = vmatpush1.msra.mxu0 0.0
    %6527 = vmatprep.subr.mxu0 0.0
    %6528 = vmatpush1.msra.mxu0 0.0
    %6529 = vmatprep.subr.mxu0 0.0
    %6530 = vmatpush1.msra.mxu0 0.0
    %6531 = vmatprep.subr.mxu0 0.0
    %6532 = vmatpush1.msra.mxu0 0.0
    %6533 = vmatprep.subr.mxu0 0.0
    %6534 = vmatpush1.msra.mxu0 0.0
    %6535 = vmatprep.subr.mxu0 0.0
    %6536 = vmatpush1.msra.mxu0 0.0
    %6537 = vmatprep.subr.mxu0 0.0
    %6538 = vmatpush1.msra.mxu0 0.0
    %6539 = vmatprep.subr.mxu0 0.0
    %6540 = vmatpush1.msra.mxu0 0.0
    %6541 = vmatprep.subr.mxu0 0.0
    %6542 = vmatpush1.msra.mxu0 0.0
    %6543 = vmatprep.subr.mxu0 0.0
    %6544 = vmatpush1.msra.mxu0 0.0
    %6545 = vmatprep.subr.mxu0 0.0
    %6546 = vmatpush1.msra.mxu0 0.0
    %6547 = vmatprep.subr.mxu0 0.0
    %6548 = vmatpush1.msra.mxu0 0.0
    %6549 = vmatprep.subr.mxu0 0.0
    %6550 = vmatpush1.msra.mxu0 0.0
    %6551 = vmatprep.subr.mxu0 0.0
    %6552 = vmatpush1.msra.mxu0 0.0
    %6553 = vmatprep.subr.mxu0 0.0
    %6554 = vmatpush1.msra.mxu0 0.0
    %6555 = vmatprep.subr.mxu0 0.0
    %6556 = vmatpush1.msra.mxu0 0.0
    %6557 = vmatprep.subr.mxu0 0.0
    %6558 = vmatpush1.msra.mxu0 0.0
    %6559 = vmatprep.subr.mxu0 0.0
    %6560 = vmatpush1.msra.mxu0 0.0
    %6561 = vmatprep.subr.mxu0 0.0
    %6562 = vmatpush1.msra.mxu0 0.0
    %6563 = vmatprep.subr.mxu0 0.0
    %6564 = vmatpush1.msra.mxu0 0.0
    %6565 = vmatprep.subr.mxu0 0.0
    %6566 = vmatpush1.msra.mxu0 0.0
    %6567 = vmatprep.subr.mxu0 0.0
    %6568 = vmatpush1.msra.mxu0 0.0
    %6569 = vmatprep.subr.mxu0 0.0
    %6570 = vmatpush1.msra.mxu0 0.0
    %6571 = vmatprep.subr.mxu0 0.0
    %6572 = vmatpush1.msra.mxu0 0.0
    %6573 = vmatprep.subr.mxu0 0.0
    %6574 = vmatpush1.msra.mxu0 0.0
    %6575 = vmatprep.subr.mxu0 0.0
    %6576 = vmatpush1.msra.mxu0 0.0
    %6577 = vmatprep.mubr.f32.mxu0 0.0
    %6578 = vmatmul.mubr.f32.gmra.mrb[0].mxu0 %v6511
    %v6579 = vpop.f32.mrb[0].mxu0
    %v6580 = vadd.f32 %v6508, %v6579
    %v6581 = vpop.f32.mrb[0].mxu0
    %v6582 = vadd.f32 %v6508, %v6581
    %6583 = vdwg.mxu0
    %6584 = vmatprep.subr.mxu0 %v6503
    %6585 = vmatpush1.msra.mxu0 %v6502
    %6586 = vmatprep.subr.mxu0 0.0
    %6587 = vmatpush1.msra.mxu0 0.0
    %6588 = vmatprep.subr.mxu0 0.0
    %6589 = vmatpush1.msra.mxu0 0.0
    %6590 = vmatprep.subr.mxu0 0.0
    %6591 = vmatpush1.msra.mxu0 0.0
    %6592 = vmatprep.subr.mxu0 0.0
    %6593 = vmatpush1.msra.mxu0 0.0
    %6594 = vmatprep.subr.mxu0 0.0
    %6595 = vmatpush1.msra.mxu0 0.0
    %6596 = vmatprep.subr.mxu0 0.0
    %6597 = vmatpush1.msra.mxu0 0.0
    %6598 = vmatprep.subr.mxu0 0.0
    %6599 = vmatpush1.msra.mxu0 0.0
    %6600 = vmatprep.subr.mxu0 0.0
    %6601 = vmatpush1.msra.mxu0 0.0
    %6602 = vmatprep.subr.mxu0 0.0
    %6603 = vmatpush1.msra.mxu0 0.0
    %6604 = vmatprep.subr.mxu0 0.0
    %6605 = vmatpush1.msra.mxu0 0.0
    %6606 = vmatprep.subr.mxu0 0.0
    %6607 = vmatpush1.msra.mxu0 0.0
    %6608 = vmatprep.subr.mxu0 0.0
    %6609 = vmatpush1.msra.mxu0 0.0
    %6610 = vmatprep.subr.mxu0 0.0
    %6611 = vmatpush1.msra.mxu0 0.0
    %6612 = vmatprep.subr.mxu0 0.0
    %6613 = vmatpush1.msra.mxu0 0.0
    %6614 = vmatprep.subr.mxu0 0.0
    %6615 = vmatpush1.msra.mxu0 0.0
    %6616 = vmatprep.subr.mxu0 0.0
    %6617 = vmatpush1.msra.mxu0 0.0
    %6618 = vmatprep.subr.mxu0 0.0
    %6619 = vmatpush1.msra.mxu0 0.0
    %6620 = vmatprep.subr.mxu0 0.0
    %6621 = vmatpush1.msra.mxu0 0.0
    %6622 = vmatprep.subr.mxu0 0.0
    %6623 = vmatpush1.msra.mxu0 0.0
    %6624 = vmatprep.subr.mxu0 0.0
    %6625 = vmatpush1.msra.mxu0 0.0
    %6626 = vmatprep.subr.mxu0 0.0
    %6627 = vmatpush1.msra.mxu0 0.0
    %6628 = vmatprep.subr.mxu0 0.0
    %6629 = vmatpush1.msra.mxu0 0.0
    %6630 = vmatprep.subr.mxu0 0.0
    %6631 = vmatpush1.msra.mxu0 0.0
    %6632 = vmatprep.subr.mxu0 0.0
    %6633 = vmatpush1.msra.mxu0 0.0
    %6634 = vmatprep.subr.mxu0 0.0
    %6635 = vmatpush1.msra.mxu0 0.0
    %6636 = vmatprep.subr.mxu0 0.0
    %6637 = vmatpush1.msra.mxu0 0.0
    %6638 = vmatprep.subr.mxu0 0.0
    %6639 = vmatpush1.msra.mxu0 0.0
    %6640 = vmatprep.subr.mxu0 0.0
    %6641 = vmatpush1.msra.mxu0 0.0
    %6642 = vmatprep.subr.mxu0 0.0
    %6643 = vmatpush1.msra.mxu0 0.0
    %6644 = vmatprep.subr.mxu0 0.0
    %6645 = vmatpush1.msra.mxu0 0.0
    %6646 = vmatprep.subr.mxu0 0.0
    %6647 = vmatpush1.msra.mxu0 0.0
    %6648 = vmatprep.mubr.f32.mxu0 0.0
    %6649 = vmatmul.mubr.f32.gmra.mrb[0].mxu0 %v6511
    %v6650 = vpop.f32.mrb[0].mxu0
    %v6651 = vadd.f32 %v6508, %v6650
    %v6652 = vpop.f32.mrb[0].mxu0
    %v6653 = vadd.f32 %v6508, %v6652
    %6654 = vdwg.mxu0
    %vm6655 = vcmp.ge.f32.partialorder %v6580, 0.0
    %vm6656 = vcmp.ge.f32.partialorder %v6582, 0.0
    %vm6657 = vcmp.ge.f32.partialorder %v6651, 0.0
    %vm6658 = vcmp.ge.f32.partialorder %v6653, 0.0
    %6659 = vset.pattern.permute.xlu0 5
    %6660 = vperm.xlu0 %6659, %v45
    %v6661 = vpop.permute.xlu0 %6660
    %v6663 = vmul.f32 %v6661, %v6580
    %v6664 = vmul.f32 %v6661, %v6582
    %v6665 = vmul.f32 %v6661, %v6651
    %v6666 = vmul.f32 %v6661, %v6653
    %v6667 = vsel %vm6655, %v6580, %v6663
    %v6668 = vsel %vm6656, %v6582, %v6664
    %v6669 = vsel %vm6657, %v6651, %v6665
    %v6670 = vsel %vm6658, %v6653, %v6666
    %v6673 = vcombine.low %v6667, %v6668
    %6675 = vst [vmem:[#allocation6] sm:$0xff] %v6673
    %v6678 = vcombine.low %v6669, %v6670
    %s6680 = scalar_lea.vmem [#allocation6], 8
    %6681 = vst [vmem:[%s6680] sm:$0xff] %v6678
    // Predicated region
    $region38: #{tpu_custom_call.1} parent=1 // pred_check
      _
    $region39: #{tpu_custom_call.1} parent=1 // pred_check_branch
      %6683 = sbr.rel (0) target = $region41
    $region40: #{tpu_custom_call.1} parent=1 // pred_region
      %s6685 = ssub.s32 256, 256
      %6686 = vsyncadd [#allocation5], %s6685
      %s6687 = sshll.u32 [#allocation6], 4
      %s6688 = int_to_ptr.vmem [resolvable:$true] %s6687
      %6693 = dma.vmem_to_hbm [thread:$0]  %s6688, 256, %s8, [#allocation5], 128, 128, 8
    $region41: #{tpu_custom_call.1} parent=1 // pred_fallthru
      _
    // Predicated region
    $region42: #{tpu_custom_call.1} parent=1 // pred_check
      _
    $region43: #{tpu_custom_call.1} parent=1 // pred_check_branch
      %6695 = sbr.rel (0) target = $region45
    $region44: #{tpu_custom_call.1} parent=1 // pred_region
      %6696 = dma.done [#allocation5], 256
    $region45: #{tpu_custom_call.1} parent=1 // pred_fallthru
      _
    %6697 = vsyncpa [#allocation4], 1
    %6698 = vsyncpa [#allocation5], 1

</llo_original>
